<compile_context>
chip_gen: v5e
topology: v5e:2x2
jax: 0.10.0
libtpu: 0.0.40
codegen_flags: <defaults>
</compile_context>

<pallas_src>
import functools

import jax
import jax.numpy as jnp
from jax.experimental import pallas as pl
from jax.experimental.pallas import tpu as pltpu

_BN_EPS = 1e-5
_LRELU_SLOPE = 0.2


# ---------------------------------------------------------------------------
# Pallas kernels (matmul + BN + activation fully fused, bf16 stores)
# ---------------------------------------------------------------------------
def _conv_lrelu_kernel(p_ref, w_ref, o_ref):
    y = jnp.dot(p_ref[...], w_ref[...], preferred_element_type=jnp.float32)
    a = jnp.maximum(y, _LRELU_SLOPE * y)
    o_ref[...] = a.astype(o_ref.dtype)


def _conv_bn_lrelu_kernel(p_ref, w_ref, g_ref, b_ref, o_ref):
    y = jnp.dot(p_ref[...], w_ref[...], preferred_element_type=jnp.float32)
    # training-mode BatchNorm2d: biased batch stats over rows (= N,H,W), f32.
    mean = jnp.mean(y, axis=0, keepdims=True)
    var = jnp.maximum(jnp.mean(y * y, axis=0, keepdims=True) - mean * mean, 0.0)
    yn = (y - mean) * jax.lax.rsqrt(var + _BN_EPS)
    yn = yn * g_ref[...] + b_ref[...]
    a = jnp.maximum(yn, _LRELU_SLOPE * yn)
    o_ref[...] = a.astype(o_ref.dtype)


def _conv_bn_lrelu_head_kernel(p_ref, w_ref, g_ref, b_ref, w4_ref, o_ref):
    """Conv3 + BN3 + LeakyReLU + Conv4(whole 4x4 map) + Sigmoid, one kernel.

    p_ref : (N*16, K3) bf16 patches of layer-3 conv
    w_ref : (K3, 4d)   bf16
    w4_ref: (16, 4d)   f32, final conv weight in (oh*4+ow, ci) order
    o_ref : (N, 1)     f32 sigmoid logits
    """
    y = jnp.dot(p_ref[...], w_ref[...], preferred_element_type=jnp.float32)
    mean = jnp.mean(y, axis=0, keepdims=True)
    var = jnp.maximum(jnp.mean(y * y, axis=0, keepdims=True) - mean * mean, 0.0)
    yn = (y - mean) * jax.lax.rsqrt(var + _BN_EPS)
    yn = yn * g_ref[...] + b_ref[...]
    act = jnp.maximum(yn, _LRELU_SLOPE * yn)          # (N*16, 4d) f32, in VMEM

    n = o_ref.shape[0]
    act3 = act.reshape(n, 16, act.shape[-1])          # sublane-split, lane dim kept
    prod = act3 * w4_ref[...]                         # broadcast over batch dim
    s = jnp.sum(prod, axis=-1)                        # (N, 16)  lane reduce
    logit = jnp.sum(s, axis=-1, keepdims=True)        # (N, 1)
    o_ref[...] = jax.nn.sigmoid(logit)


def fused_conv_lrelu(P, W, tm=256):
    M, K = P.shape
    Co = W.shape[1]
    if M % tm != 0:
        tm = M                                         # fallback: single block
    return pl.pallas_call(
        _conv_lrelu_kernel,
        out_shape=jax.ShapeDtypeStruct((M, Co), jnp.bfloat16),
        grid=(M // tm,),
        in_specs=[pl.BlockSpec((tm, K), lambda i: (i, 0)),
                  pl.BlockSpec((K, Co), lambda i: (0, 0))],
        out_specs=pl.BlockSpec((tm, Co), lambda i: (i, 0)),
        compiler_params=pltpu.CompilerParams(
            dimension_semantics=("parallel",)),
    )(P, W)


def fused_conv_bn_lrelu(P, W, gamma, beta):
    M, K = P.shape
    Co = W.shape[1]
    # TODO(synk): for large batch, tile M and accumulate partial sum/sum-sq
    # across tiles (BN stats must span all rows per channel); at these shapes
    # everything fits comfortably in scoped VMEM with grid=(1,).
    return pl.pallas_call(
        _conv_bn_lrelu_kernel,
        out_shape=jax.ShapeDtypeStruct((M, Co), jnp.bfloat16),
        grid=(1,),
        in_specs=[pl.BlockSpec((M, K), lambda i: (0, 0)),
                  pl.BlockSpec((K, Co), lambda i: (0, 0)),
                  pl.BlockSpec((1, Co), lambda i: (0, 0)),
                  pl.BlockSpec((1, Co), lambda i: (0, 0))],
        out_specs=pl.BlockSpec((M, Co), lambda i: (0, 0)),
        compiler_params=pltpu.CompilerParams(
            dimension_semantics=("arbitrary",)),
    )(P, W, gamma, beta)


def fused_conv_bn_lrelu_head(P, W, gamma, beta, W4, N):
    M, K = P.shape
    Co = W.shape[1]
    assert M == N * 16
    return pl.pallas_call(
        _conv_bn_lrelu_head_kernel,
        out_shape=jax.ShapeDtypeStruct((N, 1), jnp.float32),
        grid=(1,),
        in_specs=[pl.BlockSpec((M, K), lambda i: (0, 0)),
                  pl.BlockSpec((K, Co), lambda i: (0, 0)),
                  pl.BlockSpec((1, Co), lambda i: (0, 0)),
                  pl.BlockSpec((1, Co), lambda i: (0, 0)),
                  pl.BlockSpec((16, Co), lambda i: (0, 0))],
        out_specs=pl.BlockSpec((N, 1), lambda i: (0, 0)),
        compiler_params=pltpu.CompilerParams(
            dimension_semantics=("arbitrary",)),
    )(P, W, gamma, beta, W4)


# ---------------------------------------------------------------------------
# JAX glue: im2col (channels-last) + weight-matrix prep
# ---------------------------------------------------------------------------
def conv_patches_nhwc(x, k, s, p):
    """im2col for Conv2d(kernel=k, stride=s, pad=p) on an NHWC input.

    Returns (patches (N*OH*OW, k*k*C), (N, OH, OW)); feature order (kh, kw, c).
    """
    N, H, W, C = x.shape
    OH = (H + 2 * p - k) // s + 1
    OW = (W + 2 * p - k) // s + 1
    xp = jnp.pad(x, ((0, 0), (p, p), (p, p), (0, 0)))
    cols = []
    for kh in range(k):
        for kw in range(k):
            cols.append(xp[:, kh:kh + (OH - 1) * s + 1:s,
                           kw:kw + (OW - 1) * s + 1:s, :])
    patches = jnp.concatenate(cols, axis=-1)           # (N, OH, OW, k*k*C)
    return patches.reshape(N * OH * OW, k * k * C), (N, OH, OW)


def conv_weight_matrix(w):
    """PyTorch Conv2d weight (Co, Ci, k, k) -> (k*k*Ci, Co), rows in (kh,kw,ci)."""
    Co, Ci, k, _ = w.shape
    return w.transpose(2, 3, 1, 0).reshape(k * k * Ci, Co)


def prepare_params(raw):
    """Pre-bake matmul-ready bf16 weight matrices (once, outside the hot path)."""
    w_x, w_y = raw["w_x"], raw["w_y"]                  # (d/2,1,4,4), (d/2,nc,4,4)
    d2 = w_x.shape[0]
    nc = w_y.shape[1]
    k = w_x.shape[2]
    # Block-diagonal weight so x_conv and y_conv run as one 2*d2-lane matmul.
    wb = jnp.zeros((k, k, 1 + nc, 2 * d2), jnp.float32)
    wb = wb.at[:, :, :1, :d2].set(w_x.transpose(2, 3, 1, 0))
    wb = wb.at[:, :, 1:, d2:].set(w_y.transpose(2, 3, 1, 0))
    W1 = wb.reshape(k * k * (1 + nc), 2 * d2)

    # Final conv (1, 4d, 4, 4): the 4x4 kernel covers the whole 4x4 map, so
    # arrange it as (oh*4+ow, ci) to match the (n, oh, ow)-ordered rows.
    w4 = raw["w4"]
    W4 = w4[0].transpose(1, 2, 0).reshape(16, w4.shape[1])

    return {
        "W1": W1.astype(jnp.bfloat16),
        "W2": conv_weight_matrix(raw["w2"]).astype(jnp.bfloat16),
        "W3": conv_weight_matrix(raw["w3"]).astype(jnp.bfloat16),
        "W4": W4.astype(jnp.float32),
        "g2": raw["g2"], "b2": raw["b2"],
        "g3": raw["g3"], "b3": raw["b3"],
    }


# ---------------------------------------------------------------------------
# Model forward
# ---------------------------------------------------------------------------
def cdcgan_discriminator_forward(x_nchw, label_nchw, prep):
    """x: (N,1,H,W); label: (N,num_class,H,W) spatially expanded one-hot maps."""
    # single NCHW -> NHWC transpose; everything downstream stays channels-last bf16.
    xy = jnp.concatenate(
        [x_nchw.transpose(0, 2, 3, 1), label_nchw.transpose(0, 2, 3, 1)], axis=-1
    ).astype(jnp.bfloat16)

    # x_conv + y_conv (fused, block-diagonal weight) + LeakyReLU(0.2)
    P, (N, OH, OW) = conv_patches_nhwc(xy, 4, 2, 1)
    h = fused_conv_lrelu(P, prep["W1"])                                   # (N*16*16, d) bf16

    # main[0..2]: Conv(d -> 2d, 4, 2, 1) + BN + LeakyReLU
    h = h.reshape(N, OH, OW, -1)
    P, (N, OH, OW) = conv_patches_nhwc(h, 4, 2, 1)
    h = fused_conv_bn_lrelu(P, prep["W2"], prep["g2"], prep["b2"])        # (N*8*8, 2d) bf16

    # main[3..7]: Conv(2d -> 4d, 4, 2, 1) + BN + LeakyReLU
    #           + Conv(4d -> 1, 4, 1, 0) + Sigmoid, all in one kernel
    #           (layer-3 activations never leave VMEM).
    h = h.reshape(N, OH, OW, -1)
    P, (N, OH, OW) = conv_patches_nhwc(h, 4, 2, 1)
    out = fused_conv_bn_lrelu_head(P, prep["W3"], prep["g3"], prep["b3"],
                                   prep["W4"], N)                         # (N, 1) f32
    return out.reshape(N, 1, 1, 1)


def init_params(key, num_class, depth):
    d = depth
    d2 = d // 2
    ks = jax.random.split(key, 5)
    std = 0.02

    def bn(c):
        # PyTorch BatchNorm2d default init: gamma=1, beta=0 (shaped (1,C) for lanes)
        return jnp.ones((1, c), jnp.float32), jnp.zeros((1, c), jnp.float32)

    g2, b2 = bn(2 * d)
    g3, b3 = bn(4 * d)
    return {
        "w_x": std * jax.random.normal(ks[0], (d2, 1, 4, 4), jnp.float32),
        "w_y": std * jax.random.normal(ks[1], (d2, num_class, 4, 4), jnp.float32),
        "w2": std * jax.random.normal(ks[2], (2 * d, d, 4, 4), jnp.float32),
        "w3": std * jax.random.normal(ks[3], (4 * d, 2 * d, 4, 4), jnp.float32),
        "w4": std * jax.random.normal(ks[4], (1, 4 * d, 4, 4), jnp.float32),
        "g2": g2, "b2": b2, "g3": g3, "b3": b3,
    }


if __name__ == "__main__":
    num_class, depth, N = 4, 128, 2   # module-default depth; small batch, 32x32 input

    key = jax.random.PRNGKey(0)
    k_params, k_x, k_lbl = jax.random.split(key, 3)
    raw = init_params(k_params, num_class, depth)
    prep = prepare_params(raw)

    # single-channel image + label conditioning as spatially expanded one-hot maps
    x = jax.random.normal(k_x, (N, 1, 32, 32), jnp.float32)
    lbl_idx = jax.random.randint(k_lbl, (N,), 0, num_class)
    label = jax.nn.one_hot(lbl_idx, num_class, dtype=jnp.float32)         # (N, nc)
    label = jnp.broadcast_to(label[:, :, None, None], (N, num_class, 32, 32))

    fwd = jax.jit(functools.partial(cdcgan_discriminator_forward, prep=prep))
    out = fwd(x, label)
    jax.block_until_ready(out)

    assert out.shape == (N, 1, 1, 1), out.shape
    assert out.dtype == jnp.float32
    assert bool(jnp.all(jnp.isfinite(out)))
    assert bool(jnp.all((out >= 0.0) & (out <= 1.0)))  # sigmoid range
    print("KERNEL_OK")
</pallas_src>

<mosaic_0001>
module attributes {stable_mosaic.version = 11 : i64} {
  func.func @_conv_lrelu_kernel(%arg0: i32, %arg1: memref<256x80xbf16, #tpu.memory_space<vmem>>, %arg2: memref<80x128xbf16, #tpu.memory_space<vmem>>, %arg3: memref<256x128xbf16, #tpu.memory_space<vmem>>) attributes {dimension_semantics = [#tpu.dimension_semantics<parallel>], iteration_bounds = array<i64: 2>, scalar_prefetch = 0 : i64, scratch_operands = 0 : i64, tpu.core_type = #tpu.core_type<tc>, window_params = [{transform_indices = @transform_0, window_bounds = array<i64: 256, 80>}, {pipeline_mode = #tpu.pipeline_mode<synchronous>, transform_indices = @transform_1, window_bounds = array<i64: 80, 128>}, {transform_indices = @transform_2, window_bounds = array<i64: 256, 128>}]} {
    %c0 = arith.constant 0 : index
    %c0_0 = arith.constant 0 : index
    %0 = vector.load %arg1[%c0, %c0_0] : memref<256x80xbf16, #tpu.memory_space<vmem>>, vector<256x80xbf16>
    %c0_1 = arith.constant 0 : index
    %c0_2 = arith.constant 0 : index
    %1 = vector.load %arg2[%c0_1, %c0_2] : memref<80x128xbf16, #tpu.memory_space<vmem>>, vector<80x128xbf16>
    %cst = arith.constant dense<0.000000e+00> : vector<256x128xf32>
    %2 = tpu.matmul %0, %1, %cst {dimension_numbers = #tpu.dot_dimension_numbers<[1], [0], [0], [1], [0, 0, 1, 1], [], []>} : vector<256x80xbf16>, vector<80x128xbf16>, vector<256x128xf32> -> vector<256x128xf32>
    %cst_3 = arith.constant 2.000000e-01 : f32
    %3 = vector.broadcast %cst_3 : f32 to vector<256x128xf32>
    %4 = arith.mulf %3, %2 : vector<256x128xf32>
    %5 = arith.maximumf %2, %4 : vector<256x128xf32>
    %6 = arith.truncf %5 : vector<256x128xf32> to vector<256x128xbf16>
    %c0_4 = arith.constant 0 : index
    %c0_5 = arith.constant 0 : index
    %7 = vector.load %arg3[%c0_4, %c0_5] : memref<256x128xbf16, #tpu.memory_space<vmem>>, vector<256x128xbf16>
    tpu.vector_store %arg3[%c0_4, %c0_5], %6 {strides = array<i32>} : memref<256x128xbf16, #tpu.memory_space<vmem>>, vector<256x128xbf16>,
    return
  }
  func.func @transform_0(%arg0: i32) -> (i32, i32) {
    %c0_i32 = arith.constant 0 : i32
    %c0_i32_0 = arith.constant 0 : i32
    return %arg0, %c0_i32 : i32, i32
  }
  func.func @transform_1(%arg0: i32) -> (i32, i32) {
    %c0_i32 = arith.constant 0 : i32
    %c0_i32_0 = arith.constant 0 : i32
    %c0_i32_1 = arith.constant 0 : i32
    return %c0_i32, %c0_i32_0 : i32, i32
  }
  func.func @transform_2(%arg0: i32) -> (i32, i32) {
    %c0_i32 = arith.constant 0 : i32
    %c0_i32_0 = arith.constant 0 : i32
    return %arg0, %c0_i32 : i32, i32
  }
}

module attributes {stable_mosaic.version = 11 : i64} {
  func.func @_conv_bn_lrelu_kernel(%arg0: i32, %arg1: memref<128x2048xbf16, #tpu.memory_space<vmem>>, %arg2: memref<2048x256xbf16, #tpu.memory_space<vmem>>, %arg3: memref<1x256xf32, #tpu.memory_space<vmem>>, %arg4: memref<1x256xf32, #tpu.memory_space<vmem>>, %arg5: memref<128x256xbf16, #tpu.memory_space<vmem>>) attributes {dimension_semantics = [#tpu.dimension_semantics<arbitrary>], iteration_bounds = array<i64: 1>, scalar_prefetch = 0 : i64, scratch_operands = 0 : i64, tpu.core_type = #tpu.core_type<tc>, window_params = [{pipeline_mode = #tpu.pipeline_mode<synchronous>, transform_indices = @transform_0, window_bounds = array<i64: 128, 2048>}, {pipeline_mode = #tpu.pipeline_mode<synchronous>, transform_indices = @transform_1, window_bounds = array<i64: 2048, 256>}, {pipeline_mode = #tpu.pipeline_mode<synchronous>, transform_indices = @transform_2, window_bounds = array<i64: 1, 256>}, {pipeline_mode = #tpu.pipeline_mode<synchronous>, transform_indices = @transform_3, window_bounds = array<i64: 1, 256>}, {pipeline_mode = #tpu.pipeline_mode<synchronous>, transform_indices = @transform_4, window_bounds = array<i64: 128, 256>}]} {
    %c0 = arith.constant 0 : index
    %c0_0 = arith.constant 0 : index
    %0 = vector.load %arg1[%c0, %c0_0] : memref<128x2048xbf16, #tpu.memory_space<vmem>>, vector<128x2048xbf16>
    %c0_1 = arith.constant 0 : index
    %c0_2 = arith.constant 0 : index
    %1 = vector.load %arg2[%c0_1, %c0_2] : memref<2048x256xbf16, #tpu.memory_space<vmem>>, vector<2048x256xbf16>
    %cst = arith.constant dense<0.000000e+00> : vector<128x256xf32>
    %2 = tpu.matmul %0, %1, %cst {dimension_numbers = #tpu.dot_dimension_numbers<[1], [0], [0], [1], [0, 0, 1, 1], [], []>} : vector<128x2048xbf16>, vector<2048x256xbf16>, vector<128x256xf32> -> vector<128x256xf32>
    %cst_3 = arith.constant dense<0.000000e+00> : vector<256xf32>
    %3 = vector.multi_reduction <add>, %2, %cst_3 [0] : vector<128x256xf32> to vector<256xf32>
    %4 = vector.shape_cast %3 : vector<256xf32> to vector<1x256xf32>
    %cst_4 = arith.constant 1.280000e+02 : f32
    %5 = vector.broadcast %cst_4 : f32 to vector<1x256xf32>
    %6 = arith.divf %4, %5 : vector<1x256xf32>
    %7 = arith.mulf %2, %2 : vector<128x256xf32>
    %cst_5 = arith.constant dense<0.000000e+00> : vector<256xf32>
    %8 = vector.multi_reduction <add>, %7, %cst_5 [0] : vector<128x256xf32> to vector<256xf32>
    %9 = vector.shape_cast %8 : vector<256xf32> to vector<1x256xf32>
    %cst_6 = arith.constant 1.280000e+02 : f32
    %10 = vector.broadcast %cst_6 : f32 to vector<1x256xf32>
    %11 = arith.divf %9, %10 : vector<1x256xf32>
    %12 = arith.mulf %6, %6 : vector<1x256xf32>
    %13 = arith.subf %11, %12 : vector<1x256xf32>
    %cst_7 = arith.constant 0.000000e+00 : f32
    %14 = vector.broadcast %cst_7 : f32 to vector<1x256xf32>
    %15 = arith.maximumf %13, %14 : vector<1x256xf32>
    %16 = vector.broadcast %6 : vector<1x256xf32> to vector<128x256xf32>
    %17 = arith.subf %2, %16 : vector<128x256xf32>
    %cst_8 = arith.constant 9.99999974E-6 : f32
    %18 = vector.broadcast %cst_8 : f32 to vector<1x256xf32>
    %19 = arith.addf %15, %18 : vector<1x256xf32>
    %20 = math.rsqrt %19 : vector<1x256xf32>
    %21 = vector.broadcast %20 : vector<1x256xf32> to vector<128x256xf32>
    %22 = arith.mulf %17, %21 : vector<128x256xf32>
    %c0_9 = arith.constant 0 : index
    %c0_10 = arith.constant 0 : index
    %23 = vector.load %arg3[%c0_9, %c0_10] : memref<1x256xf32, #tpu.memory_space<vmem>>, vector<1x256xf32>
    %24 = vector.broadcast %23 : vector<1x256xf32> to vector<128x256xf32>
    %25 = arith.mulf %22, %24 : vector<128x256xf32>
    %c0_11 = arith.constant 0 : index
    %c0_12 = arith.constant 0 : index
    %26 = vector.load %arg4[%c0_11, %c0_12] : memref<1x256xf32, #tpu.memory_space<vmem>>, vector<1x256xf32>
    %27 = vector.broadcast %26 : vector<1x256xf32> to vector<128x256xf32>
    %28 = arith.addf %25, %27 : vector<128x256xf32>
    %cst_13 = arith.constant 2.000000e-01 : f32
    %29 = vector.broadcast %cst_13 : f32 to vector<128x256xf32>
    %30 = arith.mulf %29, %28 : vector<128x256xf32>
    %31 = arith.maximumf %28, %30 : vector<128x256xf32>
    %32 = arith.truncf %31 : vector<128x256xf32> to vector<128x256xbf16>
    %c0_14 = arith.constant 0 : index
    %c0_15 = arith.constant 0 : index
    %33 = vector.load %arg5[%c0_14, %c0_15] : memref<128x256xbf16, #tpu.memory_space<vmem>>, vector<128x256xbf16>
    tpu.vector_store %arg5[%c0_14, %c0_15], %32 {strides = array<i32>} : memref<128x256xbf16, #tpu.memory_space<vmem>>, vector<128x256xbf16>,
    return
  }
  func.func @transform_0(%arg0: i32) -> (i32, i32) {
    %c0_i32 = arith.constant 0 : i32
    %c0_i32_0 = arith.constant 0 : i32
    %c0_i32_1 = arith.constant 0 : i32
    return %c0_i32, %c0_i32_0 : i32, i32
  }
  func.func @transform_1(%arg0: i32) -> (i32, i32) {
    %c0_i32 = arith.constant 0 : i32
    %c0_i32_0 = arith.constant 0 : i32
    %c0_i32_1 = arith.constant 0 : i32
    return %c0_i32, %c0_i32_0 : i32, i32
  }
  func.func @transform_2(%arg0: i32) -> (i32, i32) {
    %c0_i32 = arith.constant 0 : i32
    %c0_i32_0 = arith.constant 0 : i32
    %c0_i32_1 = arith.constant 0 : i32
    return %c0_i32, %c0_i32_0 : i32, i32
  }
  func.func @transform_3(%arg0: i32) -> (i32, i32) {
    %c0_i32 = arith.constant 0 : i32
    %c0_i32_0 = arith.constant 0 : i32
    %c0_i32_1 = arith.constant 0 : i32
    return %c0_i32, %c0_i32_0 : i32, i32
  }
  func.func @transform_4(%arg0: i32) -> (i32, i32) {
    %c0_i32 = arith.constant 0 : i32
    %c0_i32_0 = arith.constant 0 : i32
    %c0_i32_1 = arith.constant 0 : i32
    return %c0_i32, %c0_i32_0 : i32, i32
  }
}

module attributes {stable_mosaic.version = 11 : i64} {
  func.func @_conv_bn_lrelu_head_kernel(%arg0: i32, %arg1: memref<32x4096xbf16, #tpu.memory_space<vmem>>, %arg2: memref<4096x512xbf16, #tpu.memory_space<vmem>>, %arg3: memref<1x512xf32, #tpu.memory_space<vmem>>, %arg4: memref<1x512xf32, #tpu.memory_space<vmem>>, %arg5: memref<16x512xf32, #tpu.memory_space<vmem>>, %arg6: memref<2x1xf32, #tpu.memory_space<vmem>>) attributes {dimension_semantics = [#tpu.dimension_semantics<arbitrary>], iteration_bounds = array<i64: 1>, scalar_prefetch = 0 : i64, scratch_operands = 0 : i64, tpu.core_type = #tpu.core_type<tc>, window_params = [{pipeline_mode = #tpu.pipeline_mode<synchronous>, transform_indices = @transform_0, window_bounds = array<i64: 32, 4096>}, {pipeline_mode = #tpu.pipeline_mode<synchronous>, transform_indices = @transform_1, window_bounds = array<i64: 4096, 512>}, {pipeline_mode = #tpu.pipeline_mode<synchronous>, transform_indices = @transform_2, window_bounds = array<i64: 1, 512>}, {pipeline_mode = #tpu.pipeline_mode<synchronous>, transform_indices = @transform_3, window_bounds = array<i64: 1, 512>}, {pipeline_mode = #tpu.pipeline_mode<synchronous>, transform_indices = @transform_4, window_bounds = array<i64: 16, 512>}, {pipeline_mode = #tpu.pipeline_mode<synchronous>, transform_indices = @transform_5, window_bounds = array<i64: 2, 1>}]} {
    %c0 = arith.constant 0 : index
    %c0_0 = arith.constant 0 : index
    %0 = vector.load %arg1[%c0, %c0_0] : memref<32x4096xbf16, #tpu.memory_space<vmem>>, vector<32x4096xbf16>
    %c0_1 = arith.constant 0 : index
    %c0_2 = arith.constant 0 : index
    %1 = vector.load %arg2[%c0_1, %c0_2] : memref<4096x512xbf16, #tpu.memory_space<vmem>>, vector<4096x512xbf16>
    %cst = arith.constant dense<0.000000e+00> : vector<32x512xf32>
    %2 = tpu.matmul %0, %1, %cst {dimension_numbers = #tpu.dot_dimension_numbers<[1], [0], [0], [1], [0, 0, 1, 1], [], []>} : vector<32x4096xbf16>, vector<4096x512xbf16>, vector<32x512xf32> -> vector<32x512xf32>
    %cst_3 = arith.constant dense<0.000000e+00> : vector<512xf32>
    %3 = vector.multi_reduction <add>, %2, %cst_3 [0] : vector<32x512xf32> to vector<512xf32>
    %4 = vector.shape_cast %3 : vector<512xf32> to vector<1x512xf32>
    %cst_4 = arith.constant 3.200000e+01 : f32
    %5 = vector.broadcast %cst_4 : f32 to vector<1x512xf32>
    %6 = arith.divf %4, %5 : vector<1x512xf32>
    %7 = arith.mulf %2, %2 : vector<32x512xf32>
    %cst_5 = arith.constant dense<0.000000e+00> : vector<512xf32>
    %8 = vector.multi_reduction <add>, %7, %cst_5 [0] : vector<32x512xf32> to vector<512xf32>
    %9 = vector.shape_cast %8 : vector<512xf32> to vector<1x512xf32>
    %cst_6 = arith.constant 3.200000e+01 : f32
    %10 = vector.broadcast %cst_6 : f32 to vector<1x512xf32>
    %11 = arith.divf %9, %10 : vector<1x512xf32>
    %12 = arith.mulf %6, %6 : vector<1x512xf32>
    %13 = arith.subf %11, %12 : vector<1x512xf32>
    %cst_7 = arith.constant 0.000000e+00 : f32
    %14 = vector.broadcast %cst_7 : f32 to vector<1x512xf32>
    %15 = arith.maximumf %13, %14 : vector<1x512xf32>
    %16 = vector.broadcast %6 : vector<1x512xf32> to vector<32x512xf32>
    %17 = arith.subf %2, %16 : vector<32x512xf32>
    %cst_8 = arith.constant 9.99999974E-6 : f32
    %18 = vector.broadcast %cst_8 : f32 to vector<1x512xf32>
    %19 = arith.addf %15, %18 : vector<1x512xf32>
    %20 = math.rsqrt %19 : vector<1x512xf32>
    %21 = vector.broadcast %20 : vector<1x512xf32> to vector<32x512xf32>
    %22 = arith.mulf %17, %21 : vector<32x512xf32>
    %c0_9 = arith.constant 0 : index
    %c0_10 = arith.constant 0 : index
    %23 = vector.load %arg3[%c0_9, %c0_10] : memref<1x512xf32, #tpu.memory_space<vmem>>, vector<1x512xf32>
    %24 = vector.broadcast %23 : vector<1x512xf32> to vector<32x512xf32>
    %25 = arith.mulf %22, %24 : vector<32x512xf32>
    %c0_11 = arith.constant 0 : index
    %c0_12 = arith.constant 0 : index
    %26 = vector.load %arg4[%c0_11, %c0_12] : memref<1x512xf32, #tpu.memory_space<vmem>>, vector<1x512xf32>
    %27 = vector.broadcast %26 : vector<1x512xf32> to vector<32x512xf32>
    %28 = arith.addf %25, %27 : vector<32x512xf32>
    %cst_13 = arith.constant 2.000000e-01 : f32
    %29 = vector.broadcast %cst_13 : f32 to vector<32x512xf32>
    %30 = arith.mulf %29, %28 : vector<32x512xf32>
    %31 = arith.maximumf %28, %30 : vector<32x512xf32>
    %32 = vector.shape_cast %31 : vector<32x512xf32> to vector<2x16x512xf32>
    %c0_14 = arith.constant 0 : index
    %c0_15 = arith.constant 0 : index
    %33 = vector.load %arg5[%c0_14, %c0_15] : memref<16x512xf32, #tpu.memory_space<vmem>>, vector<16x512xf32>
    %34 = vector.shape_cast %33 : vector<16x512xf32> to vector<1x16x512xf32>
    %35 = vector.broadcast %34 : vector<1x16x512xf32> to vector<2x16x512xf32>
    %36 = arith.mulf %32, %35 : vector<2x16x512xf32>
    %cst_16 = arith.constant dense<0.000000e+00> : vector<2x16xf32>
    %37 = vector.multi_reduction <add>, %36, %cst_16 [2] : vector<2x16x512xf32> to vector<2x16xf32>
    %cst_17 = arith.constant dense<0.000000e+00> : vector<2xf32>
    %38 = vector.multi_reduction <add>, %37, %cst_17 [1] : vector<2x16xf32> to vector<2xf32>
    %39 = vector.shape_cast %38 : vector<2xf32> to vector<2x1xf32>
    %40 = arith.negf %39 : vector<2x1xf32>
    %41 = math.exp %40 : vector<2x1xf32>
    %cst_18 = arith.constant 1.000000e+00 : f32
    %42 = vector.broadcast %cst_18 : f32 to vector<2x1xf32>
    %43 = arith.addf %42, %41 : vector<2x1xf32>
    %44 = arith.divf %42, %43 : vector<2x1xf32>
    %c0_19 = arith.constant 0 : index
    %c0_20 = arith.constant 0 : index
    %45 = vector.load %arg6[%c0_19, %c0_20] : memref<2x1xf32, #tpu.memory_space<vmem>>, vector<2x1xf32>
    tpu.vector_store %arg6[%c0_19, %c0_20], %44 {strides = array<i32>} : memref<2x1xf32, #tpu.memory_space<vmem>>, vector<2x1xf32>,
    return
  }
  func.func @transform_0(%arg0: i32) -> (i32, i32) {
    %c0_i32 = arith.constant 0 : i32
    %c0_i32_0 = arith.constant 0 : i32
    %c0_i32_1 = arith.constant 0 : i32
    return %c0_i32, %c0_i32_0 : i32, i32
  }
  func.func @transform_1(%arg0: i32) -> (i32, i32) {
    %c0_i32 = arith.constant 0 : i32
    %c0_i32_0 = arith.constant 0 : i32
    %c0_i32_1 = arith.constant 0 : i32
    return %c0_i32, %c0_i32_0 : i32, i32
  }
  func.func @transform_2(%arg0: i32) -> (i32, i32) {
    %c0_i32 = arith.constant 0 : i32
    %c0_i32_0 = arith.constant 0 : i32
    %c0_i32_1 = arith.constant 0 : i32
    return %c0_i32, %c0_i32_0 : i32, i32
  }
  func.func @transform_3(%arg0: i32) -> (i32, i32) {
    %c0_i32 = arith.constant 0 : i32
    %c0_i32_0 = arith.constant 0 : i32
    %c0_i32_1 = arith.constant 0 : i32
    return %c0_i32, %c0_i32_0 : i32, i32
  }
  func.func @transform_4(%arg0: i32) -> (i32, i32) {
    %c0_i32 = arith.constant 0 : i32
    %c0_i32_0 = arith.constant 0 : i32
    %c0_i32_1 = arith.constant 0 : i32
    return %c0_i32, %c0_i32_0 : i32, i32
  }
  func.func @transform_5(%arg0: i32) -> (i32, i32) {
    %c0_i32 = arith.constant 0 : i32
    %c0_i32_0 = arith.constant 0 : i32
    %c0_i32_1 = arith.constant 0 : i32
    return %c0_i32, %c0_i32_0 : i32, i32
  }
}

</mosaic_0001>

<llo_original>
// kernel: cdcgan_discriminator_forward.3
$region0: #{cdcgan_discriminator_forward.3}
  #allocation0 [shape = 'u32[]', space=smem, size = 0x4, offset = 0x4, fixed_abs, tag = 'smem constant byte address 0x4 - core index']
  #allocation1 [shape = 'u32[72,128]{1,0:T(1,128)}', space=vmem, size = 0x9000, scoped, tag = 'internal scratch']
  %s0 = inlined_call_operand.vmem [shape: bf16[512,80], index: 0, kind: input, shape index: {}]
  %s1 = inlined_call_operand.vmem [shape: bf16[80,128], index: 1, kind: input, shape index: {}]
  %s2 = inlined_call_operand.vmem [shape: bf16[512,128], index: 2, kind: output, shape index: {}]
  %s3 = sld [smem:[#allocation0]]
  $region41: #{cdcgan_discriminator_forward.3} parent=0
    _
  %s5 = ssub.s32 1, %s3
  %s6 = scalar_select 0, %s5, %s3
  loop: start=0, step=1, limit=4
  $region2: #{cdcgan_discriminator_forward.3} parent=0 // loop_pre_header
    _
  $region3: #{cdcgan_discriminator_forward.3} parent=0 // loop_header
    %s8 = sphi 0, %s12
    %p9 = scmp.ge.s32.totalorder %s8, 4
    %s18 = sphi 0, %s20
    %s21 = sphi 0, %s18
    %s22 = sphi 0, %s21
    %s38 = sphi 0, %s22
    %s42 = sphi 0, %s42
    %s44 = sphi 0, %s42
    %s45 = sphi 0, %s44
    %s59 = sphi 0, %s45
    %s65 = sphi 0, %s67
    %s68 = sphi 0, %s65
    %s69 = sphi 0, %s68
    %s85 = sphi 0, %s69
  $region4: #{cdcgan_discriminator_forward.3} parent=0 // loop_header_branch
    %11 = sbr.rel (%p9) target = $region8
  $region5: #{cdcgan_discriminator_forward.3} parent=0 // loop_body
    %s13 = ssub.s32 %s8, 1
    %s14 = ssub.s32 %s8, 2
    %s15 = sadd.s32 %s8, 1
    %s16 = ssub.s32 %s8, %s15
    %p17 = scmp.eq.s32.totalorder %s16, 0
    %s19 = sadd.s32 %s18, 1
    %s20 = scalar_select %p17, %s18, %s19
    %p23 = pneg %p17
    %p24 = scmp.eq.s32.totalorder %s8, 1
    %p25 = por %p23, %p24
    %p26 = scmp.ne.s32.totalorder %s18, %s21
    %p27 = scmp.eq.s32.totalorder %s8, 0
    %p28 = por %p26, %p27
    %p29 = scmp.ne.s32.totalorder %s18, %s21
    %p30 = scmp.eq.s32.totalorder %s13, 1
    %p31 = por %p29, %p30
    %p32 = scmp.ne.s32.totalorder %s21, %s22
    %p33 = scmp.eq.s32.totalorder %s13, 0
    %p34 = por %p32, %p33
    %p35 = scmp.ne.s32.totalorder %s21, %s22
    %p36 = scmp.eq.s32.totalorder %s14, 1
    %p37 = por %p35, %p36
    %p39 = scmp.ne.s32.totalorder %s22, %s38
    %p40 = scmp.eq.s32.totalorder %s14, 0
    %p41 = por %p39, %p40
    %s43 = sadd.s32 %s42, 1
    %p46 = scmp.eq.s32.totalorder %s8, 1
    %p47 = scmp.ne.s32.totalorder %s42, %s44
    %p48 = scmp.eq.s32.totalorder %s8, 0
    %p49 = por %p47, %p48
    %p50 = scmp.ne.s32.totalorder %s42, %s44
    %p51 = scmp.eq.s32.totalorder %s13, 1
    %p52 = por %p50, %p51
    %p53 = scmp.ne.s32.totalorder %s44, %s45
    %p54 = scmp.eq.s32.totalorder %s13, 0
    %p55 = por %p53, %p54
    %p56 = scmp.ne.s32.totalorder %s44, %s45
    %p57 = scmp.eq.s32.totalorder %s14, 1
    %p58 = por %p56, %p57
    %p60 = scmp.ne.s32.totalorder %s45, %s59
    %p61 = scmp.eq.s32.totalorder %s14, 0
    %p62 = por %p60, %p61
    %s63 = ssub.s32 %s8, %s15
    %p64 = scmp.eq.s32.totalorder %s63, 0
    %s66 = sadd.s32 %s65, 1
    %s67 = scalar_select %p64, %s65, %s66
    %p70 = pneg %p64
    %p71 = scmp.eq.s32.totalorder %s8, 1
    %p72 = por %p70, %p71
    %p73 = scmp.ne.s32.totalorder %s65, %s68
    %p74 = scmp.eq.s32.totalorder %s8, 0
    %p75 = por %p73, %p74
    %p76 = scmp.ne.s32.totalorder %s65, %s68
    %p77 = scmp.eq.s32.totalorder %s13, 1
    %p78 = por %p76, %p77
    %p79 = scmp.ne.s32.totalorder %s68, %s69
    %p80 = scmp.eq.s32.totalorder %s13, 0
    %p81 = por %p79, %p80
    %p82 = scmp.ne.s32.totalorder %s68, %s69
    %p83 = scmp.eq.s32.totalorder %s14, 1
    %p84 = por %p82, %p83
    %p86 = scmp.ne.s32.totalorder %s69, %s85
    %p87 = scmp.eq.s32.totalorder %s14, 0
    %p88 = por %p86, %p87
    %p89 = scmp.le.s32.totalorder 1, %s8
    %p90 = scmp.lt.s32.totalorder %s8, 3
    %p91 = pnand %p89, %p90
    %p92 = pneg %p91
    // Predicated region
    $region9: #{cdcgan_discriminator_forward.3} parent=5 // pred_check
      _
    $region10: #{cdcgan_discriminator_forward.3} parent=5 // pred_check_branch
      %94 = sbr.rel (%p91) target = $region12
    $region11: #{cdcgan_discriminator_forward.3} parent=5 // pred_region
      %s95 = ssub.s32 %s8, 1
      // Predicated region
      $region13: #{cdcgan_discriminator_forward.3} parent=11 // pred_check
        %p96 = pneg %p55
      $region14: #{cdcgan_discriminator_forward.3} parent=11 // pred_check_branch
        %98 = sbr.rel (%p96) target = $region16
      $region15: #{cdcgan_discriminator_forward.3} parent=11 // pred_region
        _
      $region16: #{cdcgan_discriminator_forward.3} parent=11 // pred_fallthru
        _
    $region12: #{cdcgan_discriminator_forward.3} parent=5 // pred_fallthru
      _
    %p99 = scmp.lt.s32.totalorder %s8, 2
    // Predicated region
    $region17: #{cdcgan_discriminator_forward.3} parent=5 // pred_check
      %p100 = pneg %p99
    $region18: #{cdcgan_discriminator_forward.3} parent=5 // pred_check_branch
      %102 = sbr.rel (%p100) target = $region20
    $region19: #{cdcgan_discriminator_forward.3} parent=5 // pred_region
      // Predicated region
      $region21: #{cdcgan_discriminator_forward.3} parent=19 // pred_check
        %p103 = pneg %p28
      $region22: #{cdcgan_discriminator_forward.3} parent=19 // pred_check_branch
        %105 = sbr.rel (%p103) target = $region24
      $region23: #{cdcgan_discriminator_forward.3} parent=19 // pred_region
        %s106 = smul.u32 32, %s8
        %p107 = scmp.lt.s32.totalorder %s106, 63
        %s108 = scalar_select %p107, %s106, 63
        %s109 = smul.addr %s108, 4
        %s110 = scalar_lea.vmem %s0, %s109
        %s111 = smul.u32 32, %s8
      $region24: #{cdcgan_discriminator_forward.3} parent=19 // pred_fallthru
        _
    $region20: #{cdcgan_discriminator_forward.3} parent=5 // pred_fallthru
      _
    %p112 = scmp.le.s32.totalorder 1, %s8
    %p113 = scmp.lt.s32.totalorder %s8, 3
    %p114 = pnand %p112, %p113
    %p115 = pneg %p114
    // Predicated region
    $region25: #{cdcgan_discriminator_forward.3} parent=5 // pred_check
      _
    $region26: #{cdcgan_discriminator_forward.3} parent=5 // pred_check_branch
      %117 = sbr.rel (%p114) target = $region28
    $region27: #{cdcgan_discriminator_forward.3} parent=5 // pred_region
      %s118 = ssub.s32 %s8, 1
      %s119 = smul.u32 32, %s13
      %p120 = scmp.lt.s32.totalorder %s119, 63
      %s121 = scalar_select %p120, %s119, 63
      %s122 = smul.addr %s121, 4
      %s123 = scalar_lea.vmem %s0, %s122
      %p124 = pneg %p34
      %p125 = pneg %p31
      %p126 = pneg %p55
      %p127 = pneg %p52
      %p128 = pneg %p81
      %p129 = pneg %p78
      %s130 = smul.u32 32, %s13
      %p131 = scmp.lt.s32.totalorder %s130, 63
      %s132 = scalar_select %p131, %s130, 63
      %s133 = smul.addr %s132, 4
      %s134 = scalar_lea.vmem %s2, %s133
      %s135 = smul.u32 32, %s13
      %p136 = scmp.lt.s32.totalorder %s135, 63
      %s137 = scalar_select %p136, %s135, 63
      %s138 = smul.addr %s137, 4
      %s139 = scalar_lea.vmem %s0, %s138
      %s140 = smul.u32 32, %s13
      %s141 = smul.u32 32, %s13
      %p142 = scmp.lt.s32.totalorder %s141, 63
      %s143 = scalar_select %p142, %s141, 63
      %s144 = smul.addr %s143, 4
      %s145 = scalar_lea.vmem %s2, %s144
      %s146 = smul.u32 32, %s13
      %v148 = vld [vmem:[%s139] sm:$0xf]
      %v149 = vld [vmem:[%s139 + $0x4] sm:$0xf]
      %v150 = vld [vmem:[%s139 + $0x8] sm:$0xf]
      %v151 = vld [vmem:[%s139 + $0xc] sm:$0xf]
      %v152 = vld [vmem:[%s139 + $0x10] sm:$0xf]
      %v153 = vld [vmem:[%s139 + $0x14] sm:$0xf]
      %v154 = vld [vmem:[%s139 + $0x18] sm:$0xf]
      %v155 = vld [vmem:[%s139 + $0x1c] sm:$0xf]
      %v156 = vld [vmem:[%s139 + $0x20] sm:$0xf]
      %v157 = vld [vmem:[%s139 + $0x24] sm:$0xf]
      %v158 = vld [vmem:[%s139 + $0x28] sm:$0xf]
      %v159 = vld [vmem:[%s139 + $0x2c] sm:$0xf]
      %v160 = vld [vmem:[%s139 + $0x30] sm:$0xf]
      %v161 = vld [vmem:[%s139 + $0x34] sm:$0xf]
      %v162 = vld [vmem:[%s139 + $0x38] sm:$0xf]
      %v163 = vld [vmem:[%s139 + $0x3c] sm:$0xf]
      %v164 = vld [vmem:[%s139 + $0x40] sm:$0xf]
      %v165 = vld [vmem:[%s139 + $0x44] sm:$0xf]
      %v166 = vld [vmem:[%s139 + $0x48] sm:$0xf]
      %v167 = vld [vmem:[%s139 + $0x4c] sm:$0xf]
      %v168 = vld [vmem:[%s139 + $0x50] sm:$0xf]
      %v169 = vld [vmem:[%s139 + $0x54] sm:$0xf]
      %v170 = vld [vmem:[%s139 + $0x58] sm:$0xf]
      %v171 = vld [vmem:[%s139 + $0x5c] sm:$0xf]
      %v172 = vld [vmem:[%s139 + $0x60] sm:$0xf]
      %v173 = vld [vmem:[%s139 + $0x64] sm:$0xf]
      %v174 = vld [vmem:[%s139 + $0x68] sm:$0xf]
      %v175 = vld [vmem:[%s139 + $0x6c] sm:$0xf]
      %v176 = vld [vmem:[%s139 + $0x70] sm:$0xf]
      %v177 = vld [vmem:[%s139 + $0x74] sm:$0xf]
      %v178 = vld [vmem:[%s139 + $0x78] sm:$0xf]
      %v179 = vld [vmem:[%s139 + $0x7c] sm:$0xf]
      %v180 = vld [vmem:[%s1] sm:$0xf]
      %v181 = vld [vmem:[%s1 + $0x4] sm:$0xf]
      %v182 = vld [vmem:[%s1 + $0x8] sm:$0xf]
      %v183 = vld [vmem:[%s1 + $0xc] sm:$0xf]
      %v184 = vld [vmem:[%s1 + $0x10] sm:$0xf]
      %v185 = vld [vmem:[%s1 + $0x14] sm:$0xf]
      %v186 = vld [vmem:[%s1 + $0x18] sm:$0xf]
      %v187 = vld [vmem:[%s1 + $0x1c] sm:$0xf]
      %v188 = vld [vmem:[%s1 + $0x20] sm:$0xf]
      %v189 = vld [vmem:[%s1 + $0x24] sm:$0xf]
      %v222 = vunpack.c.l.b16 %v148
      %v223 = vunpack.c.l.b16 %v149
      %v224 = vunpack.c.l.b16 %v150
      %v225 = vunpack.c.l.b16 %v151
      %v226 = vunpack.c.l.b16 %v152
      %v227 = vunpack.c.l.b16 %v153
      %v228 = vunpack.c.l.b16 %v154
      %v229 = vunpack.c.l.b16 %v155
      %v230 = vunpack.c.l.b16 %v156
      %v231 = vunpack.c.l.b16 %v157
      %v232 = vunpack.c.l.b16 %v158
      %v233 = vunpack.c.l.b16 %v159
      %v234 = vunpack.c.l.b16 %v160
      %v235 = vunpack.c.l.b16 %v161
      %v236 = vunpack.c.l.b16 %v162
      %v237 = vunpack.c.l.b16 %v163
      %v238 = vunpack.c.l.b16 %v164
      %v239 = vunpack.c.l.b16 %v165
      %v240 = vunpack.c.l.b16 %v166
      %v241 = vunpack.c.l.b16 %v167
      %v242 = vunpack.c.l.b16 %v168
      %v243 = vunpack.c.l.b16 %v169
      %v244 = vunpack.c.l.b16 %v170
      %v245 = vunpack.c.l.b16 %v171
      %v246 = vunpack.c.l.b16 %v172
      %v247 = vunpack.c.l.b16 %v173
      %v248 = vunpack.c.l.b16 %v174
      %v249 = vunpack.c.l.b16 %v175
      %v250 = vunpack.c.l.b16 %v176
      %v251 = vunpack.c.l.b16 %v177
      %v252 = vunpack.c.l.b16 %v178
      %v253 = vunpack.c.l.b16 %v179
      %v254 = vpack.c.b16 %v223, %v222
      %v255 = vpack.c.b16 %v225, %v224
      %v256 = vpack.c.b16 %v227, %v226
      %v257 = vpack.c.b16 %v229, %v228
      %v258 = vpack.c.b16 %v231, %v230
      %v259 = vpack.c.b16 %v233, %v232
      %v260 = vpack.c.b16 %v235, %v234
      %v261 = vpack.c.b16 %v237, %v236
      %v262 = vpack.c.b16 %v239, %v238
      %v263 = vpack.c.b16 %v241, %v240
      %v264 = vpack.c.b16 %v243, %v242
      %v265 = vpack.c.b16 %v245, %v244
      %v266 = vpack.c.b16 %v247, %v246
      %v267 = vpack.c.b16 %v249, %v248
      %v268 = vpack.c.b16 %v251, %v250
      %v269 = vpack.c.b16 %v253, %v252
      %v280 = vunpack.c.l.b16 %v180
      %v281 = vunpack.c.l.b16 %v181
      %v282 = vunpack.c.l.b16 %v182
      %v283 = vunpack.c.l.b16 %v183
      %v284 = vunpack.c.l.b16 %v184
      %v285 = vunpack.c.l.b16 %v185
      %v286 = vunpack.c.l.b16 %v186
      %v287 = vunpack.c.l.b16 %v187
      %v288 = vunpack.c.l.b16 %v188
      %v289 = vunpack.c.l.b16 %v189
      %v290 = vpack.c.b16 %v281, %v280
      %v291 = vpack.c.b16 %v283, %v282
      %v292 = vpack.c.b16 %v285, %v284
      %v293 = vpack.c.b16 %v287, %v286
      %v294 = vpack.c.b16 %v289, %v288
      %vm300 = vcmask 654336
      %v302 = vsel %vm300, %v254, 0
      %v305 = vsel %vm300, %v255, 0
      %v308 = vsel %vm300, %v256, 0
      %v311 = vsel %vm300, %v257, 0
      %v314 = vsel %vm300, %v258, 0
      %v317 = vsel %vm300, %v259, 0
      %v320 = vsel %vm300, %v260, 0
      %v323 = vsel %vm300, %v261, 0
      %v326 = vsel %vm300, %v262, 0
      %v329 = vsel %vm300, %v263, 0
      %v332 = vsel %vm300, %v264, 0
      %v335 = vsel %vm300, %v265, 0
      %v338 = vsel %vm300, %v266, 0
      %v341 = vsel %vm300, %v267, 0
      %v344 = vsel %vm300, %v268, 0
      %v347 = vsel %vm300, %v269, 0
      %349 = vmatpush.bf16.msra.mxu0 0
      %350 = vmatpush.bf16.msra.mxu0 0
      %351 = vmatpush.bf16.msra.mxu0 0
      %352 = vmatpush.bf16.msra.mxu0 %v294
      %353 = vmatpush.bf16.msra.mxu0 %v293
      %354 = vmatpush.bf16.msra.mxu0 %v292
      %355 = vmatpush.bf16.msra.mxu0 %v291
      %356 = vmatpush.bf16.msra.mxu0 %v290
      %357 = vmatmul.bf16.gmra.mxu0 %v302
      %v358 = vpop.f32.mrf.mxu0
      %v359 = vadd.f32 0.0, %v358
      %v360 = vpop.f32.mrf.mxu0
      %v361 = vadd.f32 0.0, %v360
      %362 = vmatmul.bf16.gmra.mxu0 %v305
      %v363 = vpop.f32.mrf.mxu0
      %v364 = vadd.f32 0.0, %v363
      %v365 = vpop.f32.mrf.mxu0
      %v366 = vadd.f32 0.0, %v365
      %367 = vmatmul.bf16.gmra.mxu0 %v308
      %v368 = vpop.f32.mrf.mxu0
      %v369 = vadd.f32 0.0, %v368
      %v370 = vpop.f32.mrf.mxu0
      %v371 = vadd.f32 0.0, %v370
      %372 = vmatmul.bf16.gmra.mxu0 %v311
      %v373 = vpop.f32.mrf.mxu0
      %v374 = vadd.f32 0.0, %v373
      %v375 = vpop.f32.mrf.mxu0
      %v376 = vadd.f32 0.0, %v375
      %377 = vmatmul.bf16.gmra.mxu0 %v314
      %v378 = vpop.f32.mrf.mxu0
      %v379 = vadd.f32 0.0, %v378
      %v380 = vpop.f32.mrf.mxu0
      %v381 = vadd.f32 0.0, %v380
      %382 = vmatmul.bf16.gmra.mxu0 %v317
      %v383 = vpop.f32.mrf.mxu0
      %v384 = vadd.f32 0.0, %v383
      %v385 = vpop.f32.mrf.mxu0
      %v386 = vadd.f32 0.0, %v385
      %387 = vmatmul.bf16.gmra.mxu0 %v320
      %v388 = vpop.f32.mrf.mxu0
      %v389 = vadd.f32 0.0, %v388
      %v390 = vpop.f32.mrf.mxu0
      %v391 = vadd.f32 0.0, %v390
      %392 = vmatmul.bf16.gmra.mxu0 %v323
      %v393 = vpop.f32.mrf.mxu0
      %v394 = vadd.f32 0.0, %v393
      %v395 = vpop.f32.mrf.mxu0
      %v396 = vadd.f32 0.0, %v395
      %397 = vmatmul.bf16.gmra.mxu0 %v326
      %v398 = vpop.f32.mrf.mxu0
      %v399 = vadd.f32 0.0, %v398
      %v400 = vpop.f32.mrf.mxu0
      %v401 = vadd.f32 0.0, %v400
      %402 = vmatmul.bf16.gmra.mxu0 %v329
      %v403 = vpop.f32.mrf.mxu0
      %v404 = vadd.f32 0.0, %v403
      %v405 = vpop.f32.mrf.mxu0
      %v406 = vadd.f32 0.0, %v405
      %407 = vmatmul.bf16.gmra.mxu0 %v332
      %v408 = vpop.f32.mrf.mxu0
      %v409 = vadd.f32 0.0, %v408
      %v410 = vpop.f32.mrf.mxu0
      %v411 = vadd.f32 0.0, %v410
      %412 = vmatmul.bf16.gmra.mxu0 %v335
      %v413 = vpop.f32.mrf.mxu0
      %v414 = vadd.f32 0.0, %v413
      %v415 = vpop.f32.mrf.mxu0
      %v416 = vadd.f32 0.0, %v415
      %417 = vmatmul.bf16.gmra.mxu0 %v338
      %v418 = vpop.f32.mrf.mxu0
      %v419 = vadd.f32 0.0, %v418
      %v420 = vpop.f32.mrf.mxu0
      %v421 = vadd.f32 0.0, %v420
      %422 = vmatmul.bf16.gmra.mxu0 %v341
      %v423 = vpop.f32.mrf.mxu0
      %v424 = vadd.f32 0.0, %v423
      %v425 = vpop.f32.mrf.mxu0
      %v426 = vadd.f32 0.0, %v425
      %427 = vmatmul.bf16.gmra.mxu0 %v344
      %v428 = vpop.f32.mrf.mxu0
      %v429 = vadd.f32 0.0, %v428
      %v430 = vpop.f32.mrf.mxu0
      %v431 = vadd.f32 0.0, %v430
      %432 = vmatmul.bf16.gmra.mxu0 %v347
      %v433 = vpop.f32.mrf.mxu0
      %v434 = vadd.f32 0.0, %v433
      %v435 = vpop.f32.mrf.mxu0
      %v436 = vadd.f32 0.0, %v435
      %437 = vdwg.mxu0
      %v438 = vmul.f32 %v359, 0.2
      %v439 = vmul.f32 %v361, 0.2
      %v440 = vmul.f32 %v364, 0.2
      %v441 = vmul.f32 %v366, 0.2
      %v442 = vmul.f32 %v369, 0.2
      %v443 = vmul.f32 %v371, 0.2
      %v444 = vmul.f32 %v374, 0.2
      %v445 = vmul.f32 %v376, 0.2
      %v446 = vmul.f32 %v379, 0.2
      %v447 = vmul.f32 %v381, 0.2
      %v448 = vmul.f32 %v384, 0.2
      %v449 = vmul.f32 %v386, 0.2
      %v450 = vmul.f32 %v389, 0.2
      %v451 = vmul.f32 %v391, 0.2
      %v452 = vmul.f32 %v394, 0.2
      %v453 = vmul.f32 %v396, 0.2
      %v454 = vmul.f32 %v399, 0.2
      %v455 = vmul.f32 %v401, 0.2
      %v456 = vmul.f32 %v404, 0.2
      %v457 = vmul.f32 %v406, 0.2
      %v458 = vmul.f32 %v409, 0.2
      %v459 = vmul.f32 %v411, 0.2
      %v460 = vmul.f32 %v414, 0.2
      %v461 = vmul.f32 %v416, 0.2
      %v462 = vmul.f32 %v419, 0.2
      %v463 = vmul.f32 %v421, 0.2
      %v464 = vmul.f32 %v424, 0.2
      %v465 = vmul.f32 %v426, 0.2
      %v466 = vmul.f32 %v429, 0.2
      %v467 = vmul.f32 %v431, 0.2
      %v468 = vmul.f32 %v434, 0.2
      %v469 = vmul.f32 %v436, 0.2
      %v470 = vmax.f32 %v359, %v438
      %v471 = vmax.f32 %v361, %v439
      %v472 = vmax.f32 %v364, %v440
      %v473 = vmax.f32 %v366, %v441
      %v474 = vmax.f32 %v369, %v442
      %v475 = vmax.f32 %v371, %v443
      %v476 = vmax.f32 %v374, %v444
      %v477 = vmax.f32 %v376, %v445
      %v478 = vmax.f32 %v379, %v446
      %v479 = vmax.f32 %v381, %v447
      %v480 = vmax.f32 %v384, %v448
      %v481 = vmax.f32 %v386, %v449
      %v482 = vmax.f32 %v389, %v450
      %v483 = vmax.f32 %v391, %v451
      %v484 = vmax.f32 %v394, %v452
      %v485 = vmax.f32 %v396, %v453
      %v486 = vmax.f32 %v399, %v454
      %v487 = vmax.f32 %v401, %v455
      %v488 = vmax.f32 %v404, %v456
      %v489 = vmax.f32 %v406, %v457
      %v490 = vmax.f32 %v409, %v458
      %v491 = vmax.f32 %v411, %v459
      %v492 = vmax.f32 %v414, %v460
      %v493 = vmax.f32 %v416, %v461
      %v494 = vmax.f32 %v419, %v462
      %v495 = vmax.f32 %v421, %v463
      %v496 = vmax.f32 %v424, %v464
      %v497 = vmax.f32 %v426, %v465
      %v498 = vmax.f32 %v429, %v466
      %v499 = vmax.f32 %v431, %v467
      %v500 = vmax.f32 %v434, %v468
      %v501 = vmax.f32 %v436, %v469
      %v502 = vpack.c.bf16 %v470, %v470
      %v503 = vpack.c.bf16 %v471, %v471
      %v504 = vpack.c.bf16 %v472, %v472
      %v505 = vpack.c.bf16 %v473, %v473
      %v506 = vpack.c.bf16 %v474, %v474
      %v507 = vpack.c.bf16 %v475, %v475
      %v508 = vpack.c.bf16 %v476, %v476
      %v509 = vpack.c.bf16 %v477, %v477
      %v510 = vpack.c.bf16 %v478, %v478
      %v511 = vpack.c.bf16 %v479, %v479
      %v512 = vpack.c.bf16 %v480, %v480
      %v513 = vpack.c.bf16 %v481, %v481
      %v514 = vpack.c.bf16 %v482, %v482
      %v515 = vpack.c.bf16 %v483, %v483
      %v516 = vpack.c.bf16 %v484, %v484
      %v517 = vpack.c.bf16 %v485, %v485
      %v518 = vpack.c.bf16 %v486, %v486
      %v519 = vpack.c.bf16 %v487, %v487
      %v520 = vpack.c.bf16 %v488, %v488
      %v521 = vpack.c.bf16 %v489, %v489
      %v522 = vpack.c.bf16 %v490, %v490
      %v523 = vpack.c.bf16 %v491, %v491
      %v524 = vpack.c.bf16 %v492, %v492
      %v525 = vpack.c.bf16 %v493, %v493
      %v526 = vpack.c.bf16 %v494, %v494
      %v527 = vpack.c.bf16 %v495, %v495
      %v528 = vpack.c.bf16 %v496, %v496
      %v529 = vpack.c.bf16 %v497, %v497
      %v530 = vpack.c.bf16 %v498, %v498
      %v531 = vpack.c.bf16 %v499, %v499
      %v532 = vpack.c.bf16 %v500, %v500
      %v533 = vpack.c.bf16 %v501, %v501
      %534 = vst [vmem:[%s145] sm:$0xf] %v502
      %535 = vst [vmem:[%s145 + $0x4] sm:$0xf] %v503
      %536 = vst [vmem:[%s145 + $0x8] sm:$0xf] %v504
      %537 = vst [vmem:[%s145 + $0xc] sm:$0xf] %v505
      %538 = vst [vmem:[%s145 + $0x10] sm:$0xf] %v506
      %539 = vst [vmem:[%s145 + $0x14] sm:$0xf] %v507
      %540 = vst [vmem:[%s145 + $0x18] sm:$0xf] %v508
      %541 = vst [vmem:[%s145 + $0x1c] sm:$0xf] %v509
      %542 = vst [vmem:[%s145 + $0x20] sm:$0xf] %v510
      %543 = vst [vmem:[%s145 + $0x24] sm:$0xf] %v511
      %544 = vst [vmem:[%s145 + $0x28] sm:$0xf] %v512
      %545 = vst [vmem:[%s145 + $0x2c] sm:$0xf] %v513
      %546 = vst [vmem:[%s145 + $0x30] sm:$0xf] %v514
      %547 = vst [vmem:[%s145 + $0x34] sm:$0xf] %v515
      %548 = vst [vmem:[%s145 + $0x38] sm:$0xf] %v516
      %549 = vst [vmem:[%s145 + $0x3c] sm:$0xf] %v517
      %550 = vst [vmem:[%s145 + $0x40] sm:$0xf] %v518
      %551 = vst [vmem:[%s145 + $0x44] sm:$0xf] %v519
      %552 = vst [vmem:[%s145 + $0x48] sm:$0xf] %v520
      %553 = vst [vmem:[%s145 + $0x4c] sm:$0xf] %v521
      %554 = vst [vmem:[%s145 + $0x50] sm:$0xf] %v522
      %555 = vst [vmem:[%s145 + $0x54] sm:$0xf] %v523
      %556 = vst [vmem:[%s145 + $0x58] sm:$0xf] %v524
      %557 = vst [vmem:[%s145 + $0x5c] sm:$0xf] %v525
      %558 = vst [vmem:[%s145 + $0x60] sm:$0xf] %v526
      %559 = vst [vmem:[%s145 + $0x64] sm:$0xf] %v527
      %560 = vst [vmem:[%s145 + $0x68] sm:$0xf] %v528
      %561 = vst [vmem:[%s145 + $0x6c] sm:$0xf] %v529
      %562 = vst [vmem:[%s145 + $0x70] sm:$0xf] %v530
      %563 = vst [vmem:[%s145 + $0x74] sm:$0xf] %v531
      %564 = vst [vmem:[%s145 + $0x78] sm:$0xf] %v532
      %565 = vst [vmem:[%s145 + $0x7c] sm:$0xf] %v533
      %s566 = smul.u32 32, %s13
      %p567 = scmp.lt.s32.totalorder %s566, 63
      %s568 = scalar_select %p567, %s566, 63
      %s569 = smul.addr %s568, 4
      %s570 = scalar_lea.vmem %s2, %s569
      // Predicated region
      $region29: #{cdcgan_discriminator_forward.3} parent=27 // pred_check
        %p571 = pneg %p78
      $region30: #{cdcgan_discriminator_forward.3} parent=27 // pred_check_branch
        %573 = sbr.rel (%p571) target = $region32
      $region31: #{cdcgan_discriminator_forward.3} parent=27 // pred_region
        %s574 = smul.u32 32, %s13
      $region32: #{cdcgan_discriminator_forward.3} parent=27 // pred_fallthru
        _
    $region28: #{cdcgan_discriminator_forward.3} parent=5 // pred_fallthru
      _
    %p575 = scmp.le.s32.totalorder 2, %s8
    // Predicated region
    $region33: #{cdcgan_discriminator_forward.3} parent=5 // pred_check
      %p576 = pneg %p575
    $region34: #{cdcgan_discriminator_forward.3} parent=5 // pred_check_branch
      %578 = sbr.rel (%p576) target = $region36
    $region35: #{cdcgan_discriminator_forward.3} parent=5 // pred_region
      %s579 = ssub.s32 %s8, 2
      // Predicated region
      $region37: #{cdcgan_discriminator_forward.3} parent=35 // pred_check
        %p580 = pneg %p84
      $region38: #{cdcgan_discriminator_forward.3} parent=35 // pred_check_branch
        %582 = sbr.rel (%p580) target = $region40
      $region39: #{cdcgan_discriminator_forward.3} parent=35 // pred_region
        %s583 = smul.u32 32, %s14
        %p584 = scmp.lt.s32.totalorder %s583, 63
        %s585 = scalar_select %p584, %s583, 63
        %s586 = smul.addr %s585, 4
        %s587 = scalar_lea.vmem %s2, %s586
      $region40: #{cdcgan_discriminator_forward.3} parent=35 // pred_fallthru
        _
    $region36: #{cdcgan_discriminator_forward.3} parent=5 // pred_fallthru
      _
  $region6: #{cdcgan_discriminator_forward.3} parent=0 // loop_footer
    %s12 = sadd.s32 1, %s8
  $region7: #{cdcgan_discriminator_forward.3} parent=0 // loop_footer_branch
    %7 = sbr.rel target = $region3
  $region8: #{cdcgan_discriminator_forward.3} parent=0 // loop_exit
    _

// kernel: cdcgan_discriminator_forward.4
$region0: #{cdcgan_discriminator_forward.4}
  #allocation0 [shape = 'u32[]', space=smem, size = 0x4, offset = 0x4, fixed_abs, tag = 'smem constant byte address 0x4 - core index']
  #allocation1 [shape = 'u32[72,128]{1,0:T(1,128)}', space=vmem, size = 0x9000, scoped, tag = 'internal scratch']
  %s0 = inlined_call_operand.vmem [shape: bf16[128,2048], index: 0, kind: input, shape index: {}]
  %s1 = inlined_call_operand.vmem [shape: bf16[2048,256], index: 1, kind: input, shape index: {}]
  %s2 = inlined_call_operand.vmem [shape: f32[1,256], index: 2, kind: input, shape index: {}]
  %s3 = inlined_call_operand.vmem [shape: f32[1,256], index: 3, kind: input, shape index: {}]
  %s4 = inlined_call_operand.vmem [shape: bf16[128,256], index: 4, kind: output, shape index: {}]
  %s5 = sld [smem:[#allocation0]]
  $region26: #{cdcgan_discriminator_forward.4} parent=0
    _
  %s7 = ssub.s32 1, %s5
  %s8 = scalar_select 0, %s7, %s5
  // Predicated region
  $region2: #{cdcgan_discriminator_forward.4} parent=0 // pred_check
    _
  $region3: #{cdcgan_discriminator_forward.4} parent=0 // pred_check_branch
    %10 = sbr.rel (0) target = $region5
  $region4: #{cdcgan_discriminator_forward.4} parent=0 // pred_region
    _
  $region5: #{cdcgan_discriminator_forward.4} parent=0 // pred_fallthru
    _
  // Predicated region
  $region6: #{cdcgan_discriminator_forward.4} parent=0 // pred_check
    _
  $region7: #{cdcgan_discriminator_forward.4} parent=0 // pred_check_branch
    %12 = sbr.rel (0) target = $region9
  $region8: #{cdcgan_discriminator_forward.4} parent=0 // pred_region
    _
  $region9: #{cdcgan_discriminator_forward.4} parent=0 // pred_fallthru
    _
  // Predicated region
  $region10: #{cdcgan_discriminator_forward.4} parent=0 // pred_check
    _
  $region11: #{cdcgan_discriminator_forward.4} parent=0 // pred_check_branch
    %14 = sbr.rel (0) target = $region13
  $region12: #{cdcgan_discriminator_forward.4} parent=0 // pred_region
    _
  $region13: #{cdcgan_discriminator_forward.4} parent=0 // pred_fallthru
    _
  // Predicated region
  $region14: #{cdcgan_discriminator_forward.4} parent=0 // pred_check
    _
  $region15: #{cdcgan_discriminator_forward.4} parent=0 // pred_check_branch
    %16 = sbr.rel (0) target = $region17
  $region16: #{cdcgan_discriminator_forward.4} parent=0 // pred_region
    _
  $region17: #{cdcgan_discriminator_forward.4} parent=0 // pred_fallthru
    _
  %v17 = vld [vmem:[%s0] sm:$0xff]
  %v18 = vld [vmem:[%s0 + $0x8] sm:$0xff]
  %v19 = vld [vmem:[%s0 + $0x10] sm:$0xff]
  %v20 = vld [vmem:[%s0 + $0x18] sm:$0xff]
  %v21 = vld [vmem:[%s0 + $0x20] sm:$0xff]
  %v22 = vld [vmem:[%s0 + $0x28] sm:$0xff]
  %v23 = vld [vmem:[%s0 + $0x30] sm:$0xff]
  %v24 = vld [vmem:[%s0 + $0x38] sm:$0xff]
  %v25 = vld [vmem:[%s0 + $0x40] sm:$0xff]
  %v26 = vld [vmem:[%s0 + $0x48] sm:$0xff]
  %v27 = vld [vmem:[%s0 + $0x50] sm:$0xff]
  %v28 = vld [vmem:[%s0 + $0x58] sm:$0xff]
  %v29 = vld [vmem:[%s0 + $0x60] sm:$0xff]
  %v30 = vld [vmem:[%s0 + $0x68] sm:$0xff]
  %v31 = vld [vmem:[%s0 + $0x70] sm:$0xff]
  %v32 = vld [vmem:[%s0 + $0x78] sm:$0xff]
  %v33 = vld [vmem:[%s0 + $0x80] sm:$0xff]
  %v34 = vld [vmem:[%s0 + $0x88] sm:$0xff]
  %v35 = vld [vmem:[%s0 + $0x90] sm:$0xff]
  %v36 = vld [vmem:[%s0 + $0x98] sm:$0xff]
  %v37 = vld [vmem:[%s0 + $0xa0] sm:$0xff]
  %v38 = vld [vmem:[%s0 + $0xa8] sm:$0xff]
  %v39 = vld [vmem:[%s0 + $0xb0] sm:$0xff]
  %v40 = vld [vmem:[%s0 + $0xb8] sm:$0xff]
  %v41 = vld [vmem:[%s0 + $0xc0] sm:$0xff]
  %v42 = vld [vmem:[%s0 + $0xc8] sm:$0xff]
  %v43 = vld [vmem:[%s0 + $0xd0] sm:$0xff]
  %v44 = vld [vmem:[%s0 + $0xd8] sm:$0xff]
  %v45 = vld [vmem:[%s0 + $0xe0] sm:$0xff]
  %v46 = vld [vmem:[%s0 + $0xe8] sm:$0xff]
  %v47 = vld [vmem:[%s0 + $0xf0] sm:$0xff]
  %v48 = vld [vmem:[%s0 + $0xf8] sm:$0xff]
  %v49 = vld [vmem:[%s0 + $0x100] sm:$0xff]
  %v50 = vld [vmem:[%s0 + $0x108] sm:$0xff]
  %v51 = vld [vmem:[%s0 + $0x110] sm:$0xff]
  %v52 = vld [vmem:[%s0 + $0x118] sm:$0xff]
  %v53 = vld [vmem:[%s0 + $0x120] sm:$0xff]
  %v54 = vld [vmem:[%s0 + $0x128] sm:$0xff]
  %v55 = vld [vmem:[%s0 + $0x130] sm:$0xff]
  %v56 = vld [vmem:[%s0 + $0x138] sm:$0xff]
  %v57 = vld [vmem:[%s0 + $0x140] sm:$0xff]
  %v58 = vld [vmem:[%s0 + $0x148] sm:$0xff]
  %v59 = vld [vmem:[%s0 + $0x150] sm:$0xff]
  %v60 = vld [vmem:[%s0 + $0x158] sm:$0xff]
  %v61 = vld [vmem:[%s0 + $0x160] sm:$0xff]
  %v62 = vld [vmem:[%s0 + $0x168] sm:$0xff]
  %v63 = vld [vmem:[%s0 + $0x170] sm:$0xff]
  %v64 = vld [vmem:[%s0 + $0x178] sm:$0xff]
  %v65 = vld [vmem:[%s0 + $0x180] sm:$0xff]
  %v66 = vld [vmem:[%s0 + $0x188] sm:$0xff]
  %v67 = vld [vmem:[%s0 + $0x190] sm:$0xff]
  %v68 = vld [vmem:[%s0 + $0x198] sm:$0xff]
  %v69 = vld [vmem:[%s0 + $0x1a0] sm:$0xff]
  %v70 = vld [vmem:[%s0 + $0x1a8] sm:$0xff]
  %v71 = vld [vmem:[%s0 + $0x1b0] sm:$0xff]
  %v72 = vld [vmem:[%s0 + $0x1b8] sm:$0xff]
  %v73 = vld [vmem:[%s0 + $0x1c0] sm:$0xff]
  %v74 = vld [vmem:[%s0 + $0x1c8] sm:$0xff]
  %v75 = vld [vmem:[%s0 + $0x1d0] sm:$0xff]
  %v76 = vld [vmem:[%s0 + $0x1d8] sm:$0xff]
  %v77 = vld [vmem:[%s0 + $0x1e0] sm:$0xff]
  %v78 = vld [vmem:[%s0 + $0x1e8] sm:$0xff]
  %v79 = vld [vmem:[%s0 + $0x1f0] sm:$0xff]
  %v80 = vld [vmem:[%s0 + $0x1f8] sm:$0xff]
  %v81 = vld [vmem:[%s0 + $0x200] sm:$0xff]
  %v82 = vld [vmem:[%s0 + $0x208] sm:$0xff]
  %v83 = vld [vmem:[%s0 + $0x210] sm:$0xff]
  %v84 = vld [vmem:[%s0 + $0x218] sm:$0xff]
  %v85 = vld [vmem:[%s0 + $0x220] sm:$0xff]
  %v86 = vld [vmem:[%s0 + $0x228] sm:$0xff]
  %v87 = vld [vmem:[%s0 + $0x230] sm:$0xff]
  %v88 = vld [vmem:[%s0 + $0x238] sm:$0xff]
  %v89 = vld [vmem:[%s0 + $0x240] sm:$0xff]
  %v90 = vld [vmem:[%s0 + $0x248] sm:$0xff]
  %v91 = vld [vmem:[%s0 + $0x250] sm:$0xff]
  %v92 = vld [vmem:[%s0 + $0x258] sm:$0xff]
  %v93 = vld [vmem:[%s0 + $0x260] sm:$0xff]
  %v94 = vld [vmem:[%s0 + $0x268] sm:$0xff]
  %v95 = vld [vmem:[%s0 + $0x270] sm:$0xff]
  %v96 = vld [vmem:[%s0 + $0x278] sm:$0xff]
  %v97 = vld [vmem:[%s0 + $0x280] sm:$0xff]
  %v98 = vld [vmem:[%s0 + $0x288] sm:$0xff]
  %v99 = vld [vmem:[%s0 + $0x290] sm:$0xff]
  %v100 = vld [vmem:[%s0 + $0x298] sm:$0xff]
  %v101 = vld [vmem:[%s0 + $0x2a0] sm:$0xff]
  %v102 = vld [vmem:[%s0 + $0x2a8] sm:$0xff]
  %v103 = vld [vmem:[%s0 + $0x2b0] sm:$0xff]
  %v104 = vld [vmem:[%s0 + $0x2b8] sm:$0xff]
  %v105 = vld [vmem:[%s0 + $0x2c0] sm:$0xff]
  %v106 = vld [vmem:[%s0 + $0x2c8] sm:$0xff]
  %v107 = vld [vmem:[%s0 + $0x2d0] sm:$0xff]
  %v108 = vld [vmem:[%s0 + $0x2d8] sm:$0xff]
  %v109 = vld [vmem:[%s0 + $0x2e0] sm:$0xff]
  %v110 = vld [vmem:[%s0 + $0x2e8] sm:$0xff]
  %v111 = vld [vmem:[%s0 + $0x2f0] sm:$0xff]
  %v112 = vld [vmem:[%s0 + $0x2f8] sm:$0xff]
  %v113 = vld [vmem:[%s0 + $0x300] sm:$0xff]
  %v114 = vld [vmem:[%s0 + $0x308] sm:$0xff]
  %v115 = vld [vmem:[%s0 + $0x310] sm:$0xff]
  %v116 = vld [vmem:[%s0 + $0x318] sm:$0xff]
  %v117 = vld [vmem:[%s0 + $0x320] sm:$0xff]
  %v118 = vld [vmem:[%s0 + $0x328] sm:$0xff]
  %v119 = vld [vmem:[%s0 + $0x330] sm:$0xff]
  %v120 = vld [vmem:[%s0 + $0x338] sm:$0xff]
  %v121 = vld [vmem:[%s0 + $0x340] sm:$0xff]
  %v122 = vld [vmem:[%s0 + $0x348] sm:$0xff]
  %v123 = vld [vmem:[%s0 + $0x350] sm:$0xff]
  %v124 = vld [vmem:[%s0 + $0x358] sm:$0xff]
  %v125 = vld [vmem:[%s0 + $0x360] sm:$0xff]
  %v126 = vld [vmem:[%s0 + $0x368] sm:$0xff]
  %v127 = vld [vmem:[%s0 + $0x370] sm:$0xff]
  %v128 = vld [vmem:[%s0 + $0x378] sm:$0xff]
  %v129 = vld [vmem:[%s0 + $0x380] sm:$0xff]
  %v130 = vld [vmem:[%s0 + $0x388] sm:$0xff]
  %v131 = vld [vmem:[%s0 + $0x390] sm:$0xff]
  %v132 = vld [vmem:[%s0 + $0x398] sm:$0xff]
  %v133 = vld [vmem:[%s0 + $0x3a0] sm:$0xff]
  %v134 = vld [vmem:[%s0 + $0x3a8] sm:$0xff]
  %v135 = vld [vmem:[%s0 + $0x3b0] sm:$0xff]
  %v136 = vld [vmem:[%s0 + $0x3b8] sm:$0xff]
  %v137 = vld [vmem:[%s0 + $0x3c0] sm:$0xff]
  %v138 = vld [vmem:[%s0 + $0x3c8] sm:$0xff]
  %v139 = vld [vmem:[%s0 + $0x3d0] sm:$0xff]
  %v140 = vld [vmem:[%s0 + $0x3d8] sm:$0xff]
  %v141 = vld [vmem:[%s0 + $0x3e0] sm:$0xff]
  %v142 = vld [vmem:[%s0 + $0x3e8] sm:$0xff]
  %v143 = vld [vmem:[%s0 + $0x3f0] sm:$0xff]
  %v144 = vld [vmem:[%s0 + $0x3f8] sm:$0xff]
  %v145 = vld [vmem:[%s1] sm:$0xff]
  %v146 = vld [vmem:[%s1 + $0x8] sm:$0xff]
  %v147 = vld [vmem:[%s1 + $0x10] sm:$0xff]
  %v148 = vld [vmem:[%s1 + $0x18] sm:$0xff]
  %v149 = vld [vmem:[%s1 + $0x20] sm:$0xff]
  %v150 = vld [vmem:[%s1 + $0x28] sm:$0xff]
  %v151 = vld [vmem:[%s1 + $0x30] sm:$0xff]
  %v152 = vld [vmem:[%s1 + $0x38] sm:$0xff]
  %v153 = vld [vmem:[%s1 + $0x40] sm:$0xff]
  %v154 = vld [vmem:[%s1 + $0x48] sm:$0xff]
  %v155 = vld [vmem:[%s1 + $0x50] sm:$0xff]
  %v156 = vld [vmem:[%s1 + $0x58] sm:$0xff]
  %v157 = vld [vmem:[%s1 + $0x60] sm:$0xff]
  %v158 = vld [vmem:[%s1 + $0x68] sm:$0xff]
  %v159 = vld [vmem:[%s1 + $0x70] sm:$0xff]
  %v160 = vld [vmem:[%s1 + $0x78] sm:$0xff]
  %v161 = vld [vmem:[%s1 + $0x80] sm:$0xff]
  %v162 = vld [vmem:[%s1 + $0x88] sm:$0xff]
  %v163 = vld [vmem:[%s1 + $0x90] sm:$0xff]
  %v164 = vld [vmem:[%s1 + $0x98] sm:$0xff]
  %v165 = vld [vmem:[%s1 + $0xa0] sm:$0xff]
  %v166 = vld [vmem:[%s1 + $0xa8] sm:$0xff]
  %v167 = vld [vmem:[%s1 + $0xb0] sm:$0xff]
  %v168 = vld [vmem:[%s1 + $0xb8] sm:$0xff]
  %v169 = vld [vmem:[%s1 + $0xc0] sm:$0xff]
  %v170 = vld [vmem:[%s1 + $0xc8] sm:$0xff]
  %v171 = vld [vmem:[%s1 + $0xd0] sm:$0xff]
  %v172 = vld [vmem:[%s1 + $0xd8] sm:$0xff]
  %v173 = vld [vmem:[%s1 + $0xe0] sm:$0xff]
  %v174 = vld [vmem:[%s1 + $0xe8] sm:$0xff]
  %v175 = vld [vmem:[%s1 + $0xf0] sm:$0xff]
  %v176 = vld [vmem:[%s1 + $0xf8] sm:$0xff]
  %v177 = vld [vmem:[%s1 + $0x100] sm:$0xff]
  %v178 = vld [vmem:[%s1 + $0x108] sm:$0xff]
  %v179 = vld [vmem:[%s1 + $0x110] sm:$0xff]
  %v180 = vld [vmem:[%s1 + $0x118] sm:$0xff]
  %v181 = vld [vmem:[%s1 + $0x120] sm:$0xff]
  %v182 = vld [vmem:[%s1 + $0x128] sm:$0xff]
  %v183 = vld [vmem:[%s1 + $0x130] sm:$0xff]
  %v184 = vld [vmem:[%s1 + $0x138] sm:$0xff]
  %v185 = vld [vmem:[%s1 + $0x140] sm:$0xff]
  %v186 = vld [vmem:[%s1 + $0x148] sm:$0xff]
  %v187 = vld [vmem:[%s1 + $0x150] sm:$0xff]
  %v188 = vld [vmem:[%s1 + $0x158] sm:$0xff]
  %v189 = vld [vmem:[%s1 + $0x160] sm:$0xff]
  %v190 = vld [vmem:[%s1 + $0x168] sm:$0xff]
  %v191 = vld [vmem:[%s1 + $0x170] sm:$0xff]
  %v192 = vld [vmem:[%s1 + $0x178] sm:$0xff]
  %v193 = vld [vmem:[%s1 + $0x180] sm:$0xff]
  %v194 = vld [vmem:[%s1 + $0x188] sm:$0xff]
  %v195 = vld [vmem:[%s1 + $0x190] sm:$0xff]
  %v196 = vld [vmem:[%s1 + $0x198] sm:$0xff]
  %v197 = vld [vmem:[%s1 + $0x1a0] sm:$0xff]
  %v198 = vld [vmem:[%s1 + $0x1a8] sm:$0xff]
  %v199 = vld [vmem:[%s1 + $0x1b0] sm:$0xff]
  %v200 = vld [vmem:[%s1 + $0x1b8] sm:$0xff]
  %v201 = vld [vmem:[%s1 + $0x1c0] sm:$0xff]
  %v202 = vld [vmem:[%s1 + $0x1c8] sm:$0xff]
  %v203 = vld [vmem:[%s1 + $0x1d0] sm:$0xff]
  %v204 = vld [vmem:[%s1 + $0x1d8] sm:$0xff]
  %v205 = vld [vmem:[%s1 + $0x1e0] sm:$0xff]
  %v206 = vld [vmem:[%s1 + $0x1e8] sm:$0xff]
  %v207 = vld [vmem:[%s1 + $0x1f0] sm:$0xff]
  %v208 = vld [vmem:[%s1 + $0x1f8] sm:$0xff]
  %v209 = vld [vmem:[%s1 + $0x200] sm:$0xff]
  %v210 = vld [vmem:[%s1 + $0x208] sm:$0xff]
  %v211 = vld [vmem:[%s1 + $0x210] sm:$0xff]
  %v212 = vld [vmem:[%s1 + $0x218] sm:$0xff]
  %v213 = vld [vmem:[%s1 + $0x220] sm:$0xff]
  %v214 = vld [vmem:[%s1 + $0x228] sm:$0xff]
  %v215 = vld [vmem:[%s1 + $0x230] sm:$0xff]
  %v216 = vld [vmem:[%s1 + $0x238] sm:$0xff]
  %v217 = vld [vmem:[%s1 + $0x240] sm:$0xff]
  %v218 = vld [vmem:[%s1 + $0x248] sm:$0xff]
  %v219 = vld [vmem:[%s1 + $0x250] sm:$0xff]
  %v220 = vld [vmem:[%s1 + $0x258] sm:$0xff]
  %v221 = vld [vmem:[%s1 + $0x260] sm:$0xff]
  %v222 = vld [vmem:[%s1 + $0x268] sm:$0xff]
  %v223 = vld [vmem:[%s1 + $0x270] sm:$0xff]
  %v224 = vld [vmem:[%s1 + $0x278] sm:$0xff]
  %v225 = vld [vmem:[%s1 + $0x280] sm:$0xff]
  %v226 = vld [vmem:[%s1 + $0x288] sm:$0xff]
  %v227 = vld [vmem:[%s1 + $0x290] sm:$0xff]
  %v228 = vld [vmem:[%s1 + $0x298] sm:$0xff]
  %v229 = vld [vmem:[%s1 + $0x2a0] sm:$0xff]
  %v230 = vld [vmem:[%s1 + $0x2a8] sm:$0xff]
  %v231 = vld [vmem:[%s1 + $0x2b0] sm:$0xff]
  %v232 = vld [vmem:[%s1 + $0x2b8] sm:$0xff]
  %v233 = vld [vmem:[%s1 + $0x2c0] sm:$0xff]
  %v234 = vld [vmem:[%s1 + $0x2c8] sm:$0xff]
  %v235 = vld [vmem:[%s1 + $0x2d0] sm:$0xff]
  %v236 = vld [vmem:[%s1 + $0x2d8] sm:$0xff]
  %v237 = vld [vmem:[%s1 + $0x2e0] sm:$0xff]
  %v238 = vld [vmem:[%s1 + $0x2e8] sm:$0xff]
  %v239 = vld [vmem:[%s1 + $0x2f0] sm:$0xff]
  %v240 = vld [vmem:[%s1 + $0x2f8] sm:$0xff]
  %v241 = vld [vmem:[%s1 + $0x300] sm:$0xff]
  %v242 = vld [vmem:[%s1 + $0x308] sm:$0xff]
  %v243 = vld [vmem:[%s1 + $0x310] sm:$0xff]
  %v244 = vld [vmem:[%s1 + $0x318] sm:$0xff]
  %v245 = vld [vmem:[%s1 + $0x320] sm:$0xff]
  %v246 = vld [vmem:[%s1 + $0x328] sm:$0xff]
  %v247 = vld [vmem:[%s1 + $0x330] sm:$0xff]
  %v248 = vld [vmem:[%s1 + $0x338] sm:$0xff]
  %v249 = vld [vmem:[%s1 + $0x340] sm:$0xff]
  %v250 = vld [vmem:[%s1 + $0x348] sm:$0xff]
  %v251 = vld [vmem:[%s1 + $0x350] sm:$0xff]
  %v252 = vld [vmem:[%s1 + $0x358] sm:$0xff]
  %v253 = vld [vmem:[%s1 + $0x360] sm:$0xff]
  %v254 = vld [vmem:[%s1 + $0x368] sm:$0xff]
  %v255 = vld [vmem:[%s1 + $0x370] sm:$0xff]
  %v256 = vld [vmem:[%s1 + $0x378] sm:$0xff]
  %v257 = vld [vmem:[%s1 + $0x380] sm:$0xff]
  %v258 = vld [vmem:[%s1 + $0x388] sm:$0xff]
  %v259 = vld [vmem:[%s1 + $0x390] sm:$0xff]
  %v260 = vld [vmem:[%s1 + $0x398] sm:$0xff]
  %v261 = vld [vmem:[%s1 + $0x3a0] sm:$0xff]
  %v262 = vld [vmem:[%s1 + $0x3a8] sm:$0xff]
  %v263 = vld [vmem:[%s1 + $0x3b0] sm:$0xff]
  %v264 = vld [vmem:[%s1 + $0x3b8] sm:$0xff]
  %v265 = vld [vmem:[%s1 + $0x3c0] sm:$0xff]
  %v266 = vld [vmem:[%s1 + $0x3c8] sm:$0xff]
  %v267 = vld [vmem:[%s1 + $0x3d0] sm:$0xff]
  %v268 = vld [vmem:[%s1 + $0x3d8] sm:$0xff]
  %v269 = vld [vmem:[%s1 + $0x3e0] sm:$0xff]
  %v270 = vld [vmem:[%s1 + $0x3e8] sm:$0xff]
  %v271 = vld [vmem:[%s1 + $0x3f0] sm:$0xff]
  %v272 = vld [vmem:[%s1 + $0x3f8] sm:$0xff]
  %v273 = vld [vmem:[%s1 + $0x400] sm:$0xff]
  %v274 = vld [vmem:[%s1 + $0x408] sm:$0xff]
  %v275 = vld [vmem:[%s1 + $0x410] sm:$0xff]
  %v276 = vld [vmem:[%s1 + $0x418] sm:$0xff]
  %v277 = vld [vmem:[%s1 + $0x420] sm:$0xff]
  %v278 = vld [vmem:[%s1 + $0x428] sm:$0xff]
  %v279 = vld [vmem:[%s1 + $0x430] sm:$0xff]
  %v280 = vld [vmem:[%s1 + $0x438] sm:$0xff]
  %v281 = vld [vmem:[%s1 + $0x440] sm:$0xff]
  %v282 = vld [vmem:[%s1 + $0x448] sm:$0xff]
  %v283 = vld [vmem:[%s1 + $0x450] sm:$0xff]
  %v284 = vld [vmem:[%s1 + $0x458] sm:$0xff]
  %v285 = vld [vmem:[%s1 + $0x460] sm:$0xff]
  %v286 = vld [vmem:[%s1 + $0x468] sm:$0xff]
  %v287 = vld [vmem:[%s1 + $0x470] sm:$0xff]
  %v288 = vld [vmem:[%s1 + $0x478] sm:$0xff]
  %v289 = vld [vmem:[%s1 + $0x480] sm:$0xff]
  %v290 = vld [vmem:[%s1 + $0x488] sm:$0xff]
  %v291 = vld [vmem:[%s1 + $0x490] sm:$0xff]
  %v292 = vld [vmem:[%s1 + $0x498] sm:$0xff]
  %v293 = vld [vmem:[%s1 + $0x4a0] sm:$0xff]
  %v294 = vld [vmem:[%s1 + $0x4a8] sm:$0xff]
  %v295 = vld [vmem:[%s1 + $0x4b0] sm:$0xff]
  %v296 = vld [vmem:[%s1 + $0x4b8] sm:$0xff]
  %v297 = vld [vmem:[%s1 + $0x4c0] sm:$0xff]
  %v298 = vld [vmem:[%s1 + $0x4c8] sm:$0xff]
  %v299 = vld [vmem:[%s1 + $0x4d0] sm:$0xff]
  %v300 = vld [vmem:[%s1 + $0x4d8] sm:$0xff]
  %v301 = vld [vmem:[%s1 + $0x4e0] sm:$0xff]
  %v302 = vld [vmem:[%s1 + $0x4e8] sm:$0xff]
  %v303 = vld [vmem:[%s1 + $0x4f0] sm:$0xff]
  %v304 = vld [vmem:[%s1 + $0x4f8] sm:$0xff]
  %v305 = vld [vmem:[%s1 + $0x500] sm:$0xff]
  %v306 = vld [vmem:[%s1 + $0x508] sm:$0xff]
  %v307 = vld [vmem:[%s1 + $0x510] sm:$0xff]
  %v308 = vld [vmem:[%s1 + $0x518] sm:$0xff]
  %v309 = vld [vmem:[%s1 + $0x520] sm:$0xff]
  %v310 = vld [vmem:[%s1 + $0x528] sm:$0xff]
  %v311 = vld [vmem:[%s1 + $0x530] sm:$0xff]
  %v312 = vld [vmem:[%s1 + $0x538] sm:$0xff]
  %v313 = vld [vmem:[%s1 + $0x540] sm:$0xff]
  %v314 = vld [vmem:[%s1 + $0x548] sm:$0xff]
  %v315 = vld [vmem:[%s1 + $0x550] sm:$0xff]
  %v316 = vld [vmem:[%s1 + $0x558] sm:$0xff]
  %v317 = vld [vmem:[%s1 + $0x560] sm:$0xff]
  %v318 = vld [vmem:[%s1 + $0x568] sm:$0xff]
  %v319 = vld [vmem:[%s1 + $0x570] sm:$0xff]
  %v320 = vld [vmem:[%s1 + $0x578] sm:$0xff]
  %v321 = vld [vmem:[%s1 + $0x580] sm:$0xff]
  %v322 = vld [vmem:[%s1 + $0x588] sm:$0xff]
  %v323 = vld [vmem:[%s1 + $0x590] sm:$0xff]
  %v324 = vld [vmem:[%s1 + $0x598] sm:$0xff]
  %v325 = vld [vmem:[%s1 + $0x5a0] sm:$0xff]
  %v326 = vld [vmem:[%s1 + $0x5a8] sm:$0xff]
  %v327 = vld [vmem:[%s1 + $0x5b0] sm:$0xff]
  %v328 = vld [vmem:[%s1 + $0x5b8] sm:$0xff]
  %v329 = vld [vmem:[%s1 + $0x5c0] sm:$0xff]
  %v330 = vld [vmem:[%s1 + $0x5c8] sm:$0xff]
  %v331 = vld [vmem:[%s1 + $0x5d0] sm:$0xff]
  %v332 = vld [vmem:[%s1 + $0x5d8] sm:$0xff]
  %v333 = vld [vmem:[%s1 + $0x5e0] sm:$0xff]
  %v334 = vld [vmem:[%s1 + $0x5e8] sm:$0xff]
  %v335 = vld [vmem:[%s1 + $0x5f0] sm:$0xff]
  %v336 = vld [vmem:[%s1 + $0x5f8] sm:$0xff]
  %v337 = vld [vmem:[%s1 + $0x600] sm:$0xff]
  %v338 = vld [vmem:[%s1 + $0x608] sm:$0xff]
  %v339 = vld [vmem:[%s1 + $0x610] sm:$0xff]
  %v340 = vld [vmem:[%s1 + $0x618] sm:$0xff]
  %v341 = vld [vmem:[%s1 + $0x620] sm:$0xff]
  %v342 = vld [vmem:[%s1 + $0x628] sm:$0xff]
  %v343 = vld [vmem:[%s1 + $0x630] sm:$0xff]
  %v344 = vld [vmem:[%s1 + $0x638] sm:$0xff]
  %v345 = vld [vmem:[%s1 + $0x640] sm:$0xff]
  %v346 = vld [vmem:[%s1 + $0x648] sm:$0xff]
  %v347 = vld [vmem:[%s1 + $0x650] sm:$0xff]
  %v348 = vld [vmem:[%s1 + $0x658] sm:$0xff]
  %v349 = vld [vmem:[%s1 + $0x660] sm:$0xff]
  %v350 = vld [vmem:[%s1 + $0x668] sm:$0xff]
  %v351 = vld [vmem:[%s1 + $0x670] sm:$0xff]
  %v352 = vld [vmem:[%s1 + $0x678] sm:$0xff]
  %v353 = vld [vmem:[%s1 + $0x680] sm:$0xff]
  %v354 = vld [vmem:[%s1 + $0x688] sm:$0xff]
  %v355 = vld [vmem:[%s1 + $0x690] sm:$0xff]
  %v356 = vld [vmem:[%s1 + $0x698] sm:$0xff]
  %v357 = vld [vmem:[%s1 + $0x6a0] sm:$0xff]
  %v358 = vld [vmem:[%s1 + $0x6a8] sm:$0xff]
  %v359 = vld [vmem:[%s1 + $0x6b0] sm:$0xff]
  %v360 = vld [vmem:[%s1 + $0x6b8] sm:$0xff]
  %v361 = vld [vmem:[%s1 + $0x6c0] sm:$0xff]
  %v362 = vld [vmem:[%s1 + $0x6c8] sm:$0xff]
  %v363 = vld [vmem:[%s1 + $0x6d0] sm:$0xff]
  %v364 = vld [vmem:[%s1 + $0x6d8] sm:$0xff]
  %v365 = vld [vmem:[%s1 + $0x6e0] sm:$0xff]
  %v366 = vld [vmem:[%s1 + $0x6e8] sm:$0xff]
  %v367 = vld [vmem:[%s1 + $0x6f0] sm:$0xff]
  %v368 = vld [vmem:[%s1 + $0x6f8] sm:$0xff]
  %v369 = vld [vmem:[%s1 + $0x700] sm:$0xff]
  %v370 = vld [vmem:[%s1 + $0x708] sm:$0xff]
  %v371 = vld [vmem:[%s1 + $0x710] sm:$0xff]
  %v372 = vld [vmem:[%s1 + $0x718] sm:$0xff]
  %v373 = vld [vmem:[%s1 + $0x720] sm:$0xff]
  %v374 = vld [vmem:[%s1 + $0x728] sm:$0xff]
  %v375 = vld [vmem:[%s1 + $0x730] sm:$0xff]
  %v376 = vld [vmem:[%s1 + $0x738] sm:$0xff]
  %v377 = vld [vmem:[%s1 + $0x740] sm:$0xff]
  %v378 = vld [vmem:[%s1 + $0x748] sm:$0xff]
  %v379 = vld [vmem:[%s1 + $0x750] sm:$0xff]
  %v380 = vld [vmem:[%s1 + $0x758] sm:$0xff]
  %v381 = vld [vmem:[%s1 + $0x760] sm:$0xff]
  %v382 = vld [vmem:[%s1 + $0x768] sm:$0xff]
  %v383 = vld [vmem:[%s1 + $0x770] sm:$0xff]
  %v384 = vld [vmem:[%s1 + $0x778] sm:$0xff]
  %v385 = vld [vmem:[%s1 + $0x780] sm:$0xff]
  %v386 = vld [vmem:[%s1 + $0x788] sm:$0xff]
  %v387 = vld [vmem:[%s1 + $0x790] sm:$0xff]
  %v388 = vld [vmem:[%s1 + $0x798] sm:$0xff]
  %v389 = vld [vmem:[%s1 + $0x7a0] sm:$0xff]
  %v390 = vld [vmem:[%s1 + $0x7a8] sm:$0xff]
  %v391 = vld [vmem:[%s1 + $0x7b0] sm:$0xff]
  %v392 = vld [vmem:[%s1 + $0x7b8] sm:$0xff]
  %v393 = vld [vmem:[%s1 + $0x7c0] sm:$0xff]
  %v394 = vld [vmem:[%s1 + $0x7c8] sm:$0xff]
  %v395 = vld [vmem:[%s1 + $0x7d0] sm:$0xff]
  %v396 = vld [vmem:[%s1 + $0x7d8] sm:$0xff]
  %v397 = vld [vmem:[%s1 + $0x7e0] sm:$0xff]
  %v398 = vld [vmem:[%s1 + $0x7e8] sm:$0xff]
  %v399 = vld [vmem:[%s1 + $0x7f0] sm:$0xff]
  %v400 = vld [vmem:[%s1 + $0x7f8] sm:$0xff]
  %v529 = vunpack.c.l.b16 %v17
  %v530 = vunpack.c.h.b16 %v17
  %v531 = vunpack.c.l.b16 %v18
  %v532 = vunpack.c.h.b16 %v18
  %v533 = vunpack.c.l.b16 %v19
  %v534 = vunpack.c.h.b16 %v19
  %v535 = vunpack.c.l.b16 %v20
  %v536 = vunpack.c.h.b16 %v20
  %v537 = vunpack.c.l.b16 %v21
  %v538 = vunpack.c.h.b16 %v21
  %v539 = vunpack.c.l.b16 %v22
  %v540 = vunpack.c.h.b16 %v22
  %v541 = vunpack.c.l.b16 %v23
  %v542 = vunpack.c.h.b16 %v23
  %v543 = vunpack.c.l.b16 %v24
  %v544 = vunpack.c.h.b16 %v24
  %v545 = vunpack.c.l.b16 %v25
  %v546 = vunpack.c.h.b16 %v25
  %v547 = vunpack.c.l.b16 %v26
  %v548 = vunpack.c.h.b16 %v26
  %v549 = vunpack.c.l.b16 %v27
  %v550 = vunpack.c.h.b16 %v27
  %v551 = vunpack.c.l.b16 %v28
  %v552 = vunpack.c.h.b16 %v28
  %v553 = vunpack.c.l.b16 %v29
  %v554 = vunpack.c.h.b16 %v29
  %v555 = vunpack.c.l.b16 %v30
  %v556 = vunpack.c.h.b16 %v30
  %v557 = vunpack.c.l.b16 %v31
  %v558 = vunpack.c.h.b16 %v31
  %v559 = vunpack.c.l.b16 %v32
  %v560 = vunpack.c.h.b16 %v32
  %v561 = vunpack.c.l.b16 %v33
  %v562 = vunpack.c.h.b16 %v33
  %v563 = vunpack.c.l.b16 %v34
  %v564 = vunpack.c.h.b16 %v34
  %v565 = vunpack.c.l.b16 %v35
  %v566 = vunpack.c.h.b16 %v35
  %v567 = vunpack.c.l.b16 %v36
  %v568 = vunpack.c.h.b16 %v36
  %v569 = vunpack.c.l.b16 %v37
  %v570 = vunpack.c.h.b16 %v37
  %v571 = vunpack.c.l.b16 %v38
  %v572 = vunpack.c.h.b16 %v38
  %v573 = vunpack.c.l.b16 %v39
  %v574 = vunpack.c.h.b16 %v39
  %v575 = vunpack.c.l.b16 %v40
  %v576 = vunpack.c.h.b16 %v40
  %v577 = vunpack.c.l.b16 %v41
  %v578 = vunpack.c.h.b16 %v41
  %v579 = vunpack.c.l.b16 %v42
  %v580 = vunpack.c.h.b16 %v42
  %v581 = vunpack.c.l.b16 %v43
  %v582 = vunpack.c.h.b16 %v43
  %v583 = vunpack.c.l.b16 %v44
  %v584 = vunpack.c.h.b16 %v44
  %v585 = vunpack.c.l.b16 %v45
  %v586 = vunpack.c.h.b16 %v45
  %v587 = vunpack.c.l.b16 %v46
  %v588 = vunpack.c.h.b16 %v46
  %v589 = vunpack.c.l.b16 %v47
  %v590 = vunpack.c.h.b16 %v47
  %v591 = vunpack.c.l.b16 %v48
  %v592 = vunpack.c.h.b16 %v48
  %v593 = vunpack.c.l.b16 %v49
  %v594 = vunpack.c.h.b16 %v49
  %v595 = vunpack.c.l.b16 %v50
  %v596 = vunpack.c.h.b16 %v50
  %v597 = vunpack.c.l.b16 %v51
  %v598 = vunpack.c.h.b16 %v51
  %v599 = vunpack.c.l.b16 %v52
  %v600 = vunpack.c.h.b16 %v52
  %v601 = vunpack.c.l.b16 %v53
  %v602 = vunpack.c.h.b16 %v53
  %v603 = vunpack.c.l.b16 %v54
  %v604 = vunpack.c.h.b16 %v54
  %v605 = vunpack.c.l.b16 %v55
  %v606 = vunpack.c.h.b16 %v55
  %v607 = vunpack.c.l.b16 %v56
  %v608 = vunpack.c.h.b16 %v56
  %v609 = vunpack.c.l.b16 %v57
  %v610 = vunpack.c.h.b16 %v57
  %v611 = vunpack.c.l.b16 %v58
  %v612 = vunpack.c.h.b16 %v58
  %v613 = vunpack.c.l.b16 %v59
  %v614 = vunpack.c.h.b16 %v59
  %v615 = vunpack.c.l.b16 %v60
  %v616 = vunpack.c.h.b16 %v60
  %v617 = vunpack.c.l.b16 %v61
  %v618 = vunpack.c.h.b16 %v61
  %v619 = vunpack.c.l.b16 %v62
  %v620 = vunpack.c.h.b16 %v62
  %v621 = vunpack.c.l.b16 %v63
  %v622 = vunpack.c.h.b16 %v63
  %v623 = vunpack.c.l.b16 %v64
  %v624 = vunpack.c.h.b16 %v64
  %v625 = vunpack.c.l.b16 %v65
  %v626 = vunpack.c.h.b16 %v65
  %v627 = vunpack.c.l.b16 %v66
  %v628 = vunpack.c.h.b16 %v66
  %v629 = vunpack.c.l.b16 %v67
  %v630 = vunpack.c.h.b16 %v67
  %v631 = vunpack.c.l.b16 %v68
  %v632 = vunpack.c.h.b16 %v68
  %v633 = vunpack.c.l.b16 %v69
  %v634 = vunpack.c.h.b16 %v69
  %v635 = vunpack.c.l.b16 %v70
  %v636 = vunpack.c.h.b16 %v70
  %v637 = vunpack.c.l.b16 %v71
  %v638 = vunpack.c.h.b16 %v71
  %v639 = vunpack.c.l.b16 %v72
  %v640 = vunpack.c.h.b16 %v72
  %v641 = vunpack.c.l.b16 %v73
  %v642 = vunpack.c.h.b16 %v73
  %v643 = vunpack.c.l.b16 %v74
  %v644 = vunpack.c.h.b16 %v74
  %v645 = vunpack.c.l.b16 %v75
  %v646 = vunpack.c.h.b16 %v75
  %v647 = vunpack.c.l.b16 %v76
  %v648 = vunpack.c.h.b16 %v76
  %v649 = vunpack.c.l.b16 %v77
  %v650 = vunpack.c.h.b16 %v77
  %v651 = vunpack.c.l.b16 %v78
  %v652 = vunpack.c.h.b16 %v78
  %v653 = vunpack.c.l.b16 %v79
  %v654 = vunpack.c.h.b16 %v79
  %v655 = vunpack.c.l.b16 %v80
  %v656 = vunpack.c.h.b16 %v80
  %v657 = vunpack.c.l.b16 %v81
  %v658 = vunpack.c.h.b16 %v81
  %v659 = vunpack.c.l.b16 %v82
  %v660 = vunpack.c.h.b16 %v82
  %v661 = vunpack.c.l.b16 %v83
  %v662 = vunpack.c.h.b16 %v83
  %v663 = vunpack.c.l.b16 %v84
  %v664 = vunpack.c.h.b16 %v84
  %v665 = vunpack.c.l.b16 %v85
  %v666 = vunpack.c.h.b16 %v85
  %v667 = vunpack.c.l.b16 %v86
  %v668 = vunpack.c.h.b16 %v86
  %v669 = vunpack.c.l.b16 %v87
  %v670 = vunpack.c.h.b16 %v87
  %v671 = vunpack.c.l.b16 %v88
  %v672 = vunpack.c.h.b16 %v88
  %v673 = vunpack.c.l.b16 %v89
  %v674 = vunpack.c.h.b16 %v89
  %v675 = vunpack.c.l.b16 %v90
  %v676 = vunpack.c.h.b16 %v90
  %v677 = vunpack.c.l.b16 %v91
  %v678 = vunpack.c.h.b16 %v91
  %v679 = vunpack.c.l.b16 %v92
  %v680 = vunpack.c.h.b16 %v92
  %v681 = vunpack.c.l.b16 %v93
  %v682 = vunpack.c.h.b16 %v93
  %v683 = vunpack.c.l.b16 %v94
  %v684 = vunpack.c.h.b16 %v94
  %v685 = vunpack.c.l.b16 %v95
  %v686 = vunpack.c.h.b16 %v95
  %v687 = vunpack.c.l.b16 %v96
  %v688 = vunpack.c.h.b16 %v96
  %v689 = vunpack.c.l.b16 %v97
  %v690 = vunpack.c.h.b16 %v97
  %v691 = vunpack.c.l.b16 %v98
  %v692 = vunpack.c.h.b16 %v98
  %v693 = vunpack.c.l.b16 %v99
  %v694 = vunpack.c.h.b16 %v99
  %v695 = vunpack.c.l.b16 %v100
  %v696 = vunpack.c.h.b16 %v100
  %v697 = vunpack.c.l.b16 %v101
  %v698 = vunpack.c.h.b16 %v101
  %v699 = vunpack.c.l.b16 %v102
  %v700 = vunpack.c.h.b16 %v102
  %v701 = vunpack.c.l.b16 %v103
  %v702 = vunpack.c.h.b16 %v103
  %v703 = vunpack.c.l.b16 %v104
  %v704 = vunpack.c.h.b16 %v104
  %v705 = vunpack.c.l.b16 %v105
  %v706 = vunpack.c.h.b16 %v105
  %v707 = vunpack.c.l.b16 %v106
  %v708 = vunpack.c.h.b16 %v106
  %v709 = vunpack.c.l.b16 %v107
  %v710 = vunpack.c.h.b16 %v107
  %v711 = vunpack.c.l.b16 %v108
  %v712 = vunpack.c.h.b16 %v108
  %v713 = vunpack.c.l.b16 %v109
  %v714 = vunpack.c.h.b16 %v109
  %v715 = vunpack.c.l.b16 %v110
  %v716 = vunpack.c.h.b16 %v110
  %v717 = vunpack.c.l.b16 %v111
  %v718 = vunpack.c.h.b16 %v111
  %v719 = vunpack.c.l.b16 %v112
  %v720 = vunpack.c.h.b16 %v112
  %v721 = vunpack.c.l.b16 %v113
  %v722 = vunpack.c.h.b16 %v113
  %v723 = vunpack.c.l.b16 %v114
  %v724 = vunpack.c.h.b16 %v114
  %v725 = vunpack.c.l.b16 %v115
  %v726 = vunpack.c.h.b16 %v115
  %v727 = vunpack.c.l.b16 %v116
  %v728 = vunpack.c.h.b16 %v116
  %v729 = vunpack.c.l.b16 %v117
  %v730 = vunpack.c.h.b16 %v117
  %v731 = vunpack.c.l.b16 %v118
  %v732 = vunpack.c.h.b16 %v118
  %v733 = vunpack.c.l.b16 %v119
  %v734 = vunpack.c.h.b16 %v119
  %v735 = vunpack.c.l.b16 %v120
  %v736 = vunpack.c.h.b16 %v120
  %v737 = vunpack.c.l.b16 %v121
  %v738 = vunpack.c.h.b16 %v121
  %v739 = vunpack.c.l.b16 %v122
  %v740 = vunpack.c.h.b16 %v122
  %v741 = vunpack.c.l.b16 %v123
  %v742 = vunpack.c.h.b16 %v123
  %v743 = vunpack.c.l.b16 %v124
  %v744 = vunpack.c.h.b16 %v124
  %v745 = vunpack.c.l.b16 %v125
  %v746 = vunpack.c.h.b16 %v125
  %v747 = vunpack.c.l.b16 %v126
  %v748 = vunpack.c.h.b16 %v126
  %v749 = vunpack.c.l.b16 %v127
  %v750 = vunpack.c.h.b16 %v127
  %v751 = vunpack.c.l.b16 %v128
  %v752 = vunpack.c.h.b16 %v128
  %v753 = vunpack.c.l.b16 %v129
  %v754 = vunpack.c.h.b16 %v129
  %v755 = vunpack.c.l.b16 %v130
  %v756 = vunpack.c.h.b16 %v130
  %v757 = vunpack.c.l.b16 %v131
  %v758 = vunpack.c.h.b16 %v131
  %v759 = vunpack.c.l.b16 %v132
  %v760 = vunpack.c.h.b16 %v132
  %v761 = vunpack.c.l.b16 %v133
  %v762 = vunpack.c.h.b16 %v133
  %v763 = vunpack.c.l.b16 %v134
  %v764 = vunpack.c.h.b16 %v134
  %v765 = vunpack.c.l.b16 %v135
  %v766 = vunpack.c.h.b16 %v135
  %v767 = vunpack.c.l.b16 %v136
  %v768 = vunpack.c.h.b16 %v136
  %v769 = vunpack.c.l.b16 %v137
  %v770 = vunpack.c.h.b16 %v137
  %v771 = vunpack.c.l.b16 %v138
  %v772 = vunpack.c.h.b16 %v138
  %v773 = vunpack.c.l.b16 %v139
  %v774 = vunpack.c.h.b16 %v139
  %v775 = vunpack.c.l.b16 %v140
  %v776 = vunpack.c.h.b16 %v140
  %v777 = vunpack.c.l.b16 %v141
  %v778 = vunpack.c.h.b16 %v141
  %v779 = vunpack.c.l.b16 %v142
  %v780 = vunpack.c.h.b16 %v142
  %v781 = vunpack.c.l.b16 %v143
  %v782 = vunpack.c.h.b16 %v143
  %v783 = vunpack.c.l.b16 %v144
  %v784 = vunpack.c.h.b16 %v144
  %v785 = vpack.c.b16 %v545, %v529
  %v786 = vpack.c.b16 %v546, %v530
  %v787 = vpack.c.b16 %v547, %v531
  %v788 = vpack.c.b16 %v548, %v532
  %v789 = vpack.c.b16 %v549, %v533
  %v790 = vpack.c.b16 %v550, %v534
  %v791 = vpack.c.b16 %v551, %v535
  %v792 = vpack.c.b16 %v552, %v536
  %v793 = vpack.c.b16 %v553, %v537
  %v794 = vpack.c.b16 %v554, %v538
  %v795 = vpack.c.b16 %v555, %v539
  %v796 = vpack.c.b16 %v556, %v540
  %v797 = vpack.c.b16 %v557, %v541
  %v798 = vpack.c.b16 %v558, %v542
  %v799 = vpack.c.b16 %v559, %v543
  %v800 = vpack.c.b16 %v560, %v544
  %v801 = vpack.c.b16 %v577, %v561
  %v802 = vpack.c.b16 %v578, %v562
  %v803 = vpack.c.b16 %v579, %v563
  %v804 = vpack.c.b16 %v580, %v564
  %v805 = vpack.c.b16 %v581, %v565
  %v806 = vpack.c.b16 %v582, %v566
  %v807 = vpack.c.b16 %v583, %v567
  %v808 = vpack.c.b16 %v584, %v568
  %v809 = vpack.c.b16 %v585, %v569
  %v810 = vpack.c.b16 %v586, %v570
  %v811 = vpack.c.b16 %v587, %v571
  %v812 = vpack.c.b16 %v588, %v572
  %v813 = vpack.c.b16 %v589, %v573
  %v814 = vpack.c.b16 %v590, %v574
  %v815 = vpack.c.b16 %v591, %v575
  %v816 = vpack.c.b16 %v592, %v576
  %v817 = vpack.c.b16 %v609, %v593
  %v818 = vpack.c.b16 %v610, %v594
  %v819 = vpack.c.b16 %v611, %v595
  %v820 = vpack.c.b16 %v612, %v596
  %v821 = vpack.c.b16 %v613, %v597
  %v822 = vpack.c.b16 %v614, %v598
  %v823 = vpack.c.b16 %v615, %v599
  %v824 = vpack.c.b16 %v616, %v600
  %v825 = vpack.c.b16 %v617, %v601
  %v826 = vpack.c.b16 %v618, %v602
  %v827 = vpack.c.b16 %v619, %v603
  %v828 = vpack.c.b16 %v620, %v604
  %v829 = vpack.c.b16 %v621, %v605
  %v830 = vpack.c.b16 %v622, %v606
  %v831 = vpack.c.b16 %v623, %v607
  %v832 = vpack.c.b16 %v624, %v608
  %v833 = vpack.c.b16 %v641, %v625
  %v834 = vpack.c.b16 %v642, %v626
  %v835 = vpack.c.b16 %v643, %v627
  %v836 = vpack.c.b16 %v644, %v628
  %v837 = vpack.c.b16 %v645, %v629
  %v838 = vpack.c.b16 %v646, %v630
  %v839 = vpack.c.b16 %v647, %v631
  %v840 = vpack.c.b16 %v648, %v632
  %v841 = vpack.c.b16 %v649, %v633
  %v842 = vpack.c.b16 %v650, %v634
  %v843 = vpack.c.b16 %v651, %v635
  %v844 = vpack.c.b16 %v652, %v636
  %v845 = vpack.c.b16 %v653, %v637
  %v846 = vpack.c.b16 %v654, %v638
  %v847 = vpack.c.b16 %v655, %v639
  %v848 = vpack.c.b16 %v656, %v640
  %v849 = vpack.c.b16 %v673, %v657
  %v850 = vpack.c.b16 %v674, %v658
  %v851 = vpack.c.b16 %v675, %v659
  %v852 = vpack.c.b16 %v676, %v660
  %v853 = vpack.c.b16 %v677, %v661
  %v854 = vpack.c.b16 %v678, %v662
  %v855 = vpack.c.b16 %v679, %v663
  %v856 = vpack.c.b16 %v680, %v664
  %v857 = vpack.c.b16 %v681, %v665
  %v858 = vpack.c.b16 %v682, %v666
  %v859 = vpack.c.b16 %v683, %v667
  %v860 = vpack.c.b16 %v684, %v668
  %v861 = vpack.c.b16 %v685, %v669
  %v862 = vpack.c.b16 %v686, %v670
  %v863 = vpack.c.b16 %v687, %v671
  %v864 = vpack.c.b16 %v688, %v672
  %v865 = vpack.c.b16 %v705, %v689
  %v866 = vpack.c.b16 %v706, %v690
  %v867 = vpack.c.b16 %v707, %v691
  %v868 = vpack.c.b16 %v708, %v692
  %v869 = vpack.c.b16 %v709, %v693
  %v870 = vpack.c.b16 %v710, %v694
  %v871 = vpack.c.b16 %v711, %v695
  %v872 = vpack.c.b16 %v712, %v696
  %v873 = vpack.c.b16 %v713, %v697
  %v874 = vpack.c.b16 %v714, %v698
  %v875 = vpack.c.b16 %v715, %v699
  %v876 = vpack.c.b16 %v716, %v700
  %v877 = vpack.c.b16 %v717, %v701
  %v878 = vpack.c.b16 %v718, %v702
  %v879 = vpack.c.b16 %v719, %v703
  %v880 = vpack.c.b16 %v720, %v704
  %v881 = vpack.c.b16 %v737, %v721
  %v882 = vpack.c.b16 %v738, %v722
  %v883 = vpack.c.b16 %v739, %v723
  %v884 = vpack.c.b16 %v740, %v724
  %v885 = vpack.c.b16 %v741, %v725
  %v886 = vpack.c.b16 %v742, %v726
  %v887 = vpack.c.b16 %v743, %v727
  %v888 = vpack.c.b16 %v744, %v728
  %v889 = vpack.c.b16 %v745, %v729
  %v890 = vpack.c.b16 %v746, %v730
  %v891 = vpack.c.b16 %v747, %v731
  %v892 = vpack.c.b16 %v748, %v732
  %v893 = vpack.c.b16 %v749, %v733
  %v894 = vpack.c.b16 %v750, %v734
  %v895 = vpack.c.b16 %v751, %v735
  %v896 = vpack.c.b16 %v752, %v736
  %v897 = vpack.c.b16 %v769, %v753
  %v898 = vpack.c.b16 %v770, %v754
  %v899 = vpack.c.b16 %v771, %v755
  %v900 = vpack.c.b16 %v772, %v756
  %v901 = vpack.c.b16 %v773, %v757
  %v902 = vpack.c.b16 %v774, %v758
  %v903 = vpack.c.b16 %v775, %v759
  %v904 = vpack.c.b16 %v776, %v760
  %v905 = vpack.c.b16 %v777, %v761
  %v906 = vpack.c.b16 %v778, %v762
  %v907 = vpack.c.b16 %v779, %v763
  %v908 = vpack.c.b16 %v780, %v764
  %v909 = vpack.c.b16 %v781, %v765
  %v910 = vpack.c.b16 %v782, %v766
  %v911 = vpack.c.b16 %v783, %v767
  %v912 = vpack.c.b16 %v784, %v768
  %v1297 = vunpack.c.l.b16 %v145
  %v1298 = vunpack.c.h.b16 %v145
  %v1299 = vunpack.c.l.b16 %v146
  %v1300 = vunpack.c.h.b16 %v146
  %v1301 = vunpack.c.l.b16 %v147
  %v1302 = vunpack.c.h.b16 %v147
  %v1303 = vunpack.c.l.b16 %v148
  %v1304 = vunpack.c.h.b16 %v148
  %v1305 = vunpack.c.l.b16 %v149
  %v1306 = vunpack.c.h.b16 %v149
  %v1307 = vunpack.c.l.b16 %v150
  %v1308 = vunpack.c.h.b16 %v150
  %v1309 = vunpack.c.l.b16 %v151
  %v1310 = vunpack.c.h.b16 %v151
  %v1311 = vunpack.c.l.b16 %v152
  %v1312 = vunpack.c.h.b16 %v152
  %v1313 = vunpack.c.l.b16 %v153
  %v1314 = vunpack.c.h.b16 %v153
  %v1315 = vunpack.c.l.b16 %v154
  %v1316 = vunpack.c.h.b16 %v154
  %v1317 = vunpack.c.l.b16 %v155
  %v1318 = vunpack.c.h.b16 %v155
  %v1319 = vunpack.c.l.b16 %v156
  %v1320 = vunpack.c.h.b16 %v156
  %v1321 = vunpack.c.l.b16 %v157
  %v1322 = vunpack.c.h.b16 %v157
  %v1323 = vunpack.c.l.b16 %v158
  %v1324 = vunpack.c.h.b16 %v158
  %v1325 = vunpack.c.l.b16 %v159
  %v1326 = vunpack.c.h.b16 %v159
  %v1327 = vunpack.c.l.b16 %v160
  %v1328 = vunpack.c.h.b16 %v160
  %v1329 = vunpack.c.l.b16 %v161
  %v1330 = vunpack.c.h.b16 %v161
  %v1331 = vunpack.c.l.b16 %v162
  %v1332 = vunpack.c.h.b16 %v162
  %v1333 = vunpack.c.l.b16 %v163
  %v1334 = vunpack.c.h.b16 %v163
  %v1335 = vunpack.c.l.b16 %v164
  %v1336 = vunpack.c.h.b16 %v164
  %v1337 = vunpack.c.l.b16 %v165
  %v1338 = vunpack.c.h.b16 %v165
  %v1339 = vunpack.c.l.b16 %v166
  %v1340 = vunpack.c.h.b16 %v166
  %v1341 = vunpack.c.l.b16 %v167
  %v1342 = vunpack.c.h.b16 %v167
  %v1343 = vunpack.c.l.b16 %v168
  %v1344 = vunpack.c.h.b16 %v168
  %v1345 = vunpack.c.l.b16 %v169
  %v1346 = vunpack.c.h.b16 %v169
  %v1347 = vunpack.c.l.b16 %v170
  %v1348 = vunpack.c.h.b16 %v170
  %v1349 = vunpack.c.l.b16 %v171
  %v1350 = vunpack.c.h.b16 %v171
  %v1351 = vunpack.c.l.b16 %v172
  %v1352 = vunpack.c.h.b16 %v172
  %v1353 = vunpack.c.l.b16 %v173
  %v1354 = vunpack.c.h.b16 %v173
  %v1355 = vunpack.c.l.b16 %v174
  %v1356 = vunpack.c.h.b16 %v174
  %v1357 = vunpack.c.l.b16 %v175
  %v1358 = vunpack.c.h.b16 %v175
  %v1359 = vunpack.c.l.b16 %v176
  %v1360 = vunpack.c.h.b16 %v176
  %v1361 = vunpack.c.l.b16 %v177
  %v1362 = vunpack.c.h.b16 %v177
  %v1363 = vunpack.c.l.b16 %v178
  %v1364 = vunpack.c.h.b16 %v178
  %v1365 = vunpack.c.l.b16 %v179
  %v1366 = vunpack.c.h.b16 %v179
  %v1367 = vunpack.c.l.b16 %v180
  %v1368 = vunpack.c.h.b16 %v180
  %v1369 = vunpack.c.l.b16 %v181
  %v1370 = vunpack.c.h.b16 %v181
  %v1371 = vunpack.c.l.b16 %v182
  %v1372 = vunpack.c.h.b16 %v182
  %v1373 = vunpack.c.l.b16 %v183
  %v1374 = vunpack.c.h.b16 %v183
  %v1375 = vunpack.c.l.b16 %v184
  %v1376 = vunpack.c.h.b16 %v184
  %v1377 = vunpack.c.l.b16 %v185
  %v1378 = vunpack.c.h.b16 %v185
  %v1379 = vunpack.c.l.b16 %v186
  %v1380 = vunpack.c.h.b16 %v186
  %v1381 = vunpack.c.l.b16 %v187
  %v1382 = vunpack.c.h.b16 %v187
  %v1383 = vunpack.c.l.b16 %v188
  %v1384 = vunpack.c.h.b16 %v188
  %v1385 = vunpack.c.l.b16 %v189
  %v1386 = vunpack.c.h.b16 %v189
  %v1387 = vunpack.c.l.b16 %v190
  %v1388 = vunpack.c.h.b16 %v190
  %v1389 = vunpack.c.l.b16 %v191
  %v1390 = vunpack.c.h.b16 %v191
  %v1391 = vunpack.c.l.b16 %v192
  %v1392 = vunpack.c.h.b16 %v192
  %v1393 = vunpack.c.l.b16 %v193
  %v1394 = vunpack.c.h.b16 %v193
  %v1395 = vunpack.c.l.b16 %v194
  %v1396 = vunpack.c.h.b16 %v194
  %v1397 = vunpack.c.l.b16 %v195
  %v1398 = vunpack.c.h.b16 %v195
  %v1399 = vunpack.c.l.b16 %v196
  %v1400 = vunpack.c.h.b16 %v196
  %v1401 = vunpack.c.l.b16 %v197
  %v1402 = vunpack.c.h.b16 %v197
  %v1403 = vunpack.c.l.b16 %v198
  %v1404 = vunpack.c.h.b16 %v198
  %v1405 = vunpack.c.l.b16 %v199
  %v1406 = vunpack.c.h.b16 %v199
  %v1407 = vunpack.c.l.b16 %v200
  %v1408 = vunpack.c.h.b16 %v200
  %v1409 = vunpack.c.l.b16 %v201
  %v1410 = vunpack.c.h.b16 %v201
  %v1411 = vunpack.c.l.b16 %v202
  %v1412 = vunpack.c.h.b16 %v202
  %v1413 = vunpack.c.l.b16 %v203
  %v1414 = vunpack.c.h.b16 %v203
  %v1415 = vunpack.c.l.b16 %v204
  %v1416 = vunpack.c.h.b16 %v204
  %v1417 = vunpack.c.l.b16 %v205
  %v1418 = vunpack.c.h.b16 %v205
  %v1419 = vunpack.c.l.b16 %v206
  %v1420 = vunpack.c.h.b16 %v206
  %v1421 = vunpack.c.l.b16 %v207
  %v1422 = vunpack.c.h.b16 %v207
  %v1423 = vunpack.c.l.b16 %v208
  %v1424 = vunpack.c.h.b16 %v208
  %v1425 = vunpack.c.l.b16 %v209
  %v1426 = vunpack.c.h.b16 %v209
  %v1427 = vunpack.c.l.b16 %v210
  %v1428 = vunpack.c.h.b16 %v210
  %v1429 = vunpack.c.l.b16 %v211
  %v1430 = vunpack.c.h.b16 %v211
  %v1431 = vunpack.c.l.b16 %v212
  %v1432 = vunpack.c.h.b16 %v212
  %v1433 = vunpack.c.l.b16 %v213
  %v1434 = vunpack.c.h.b16 %v213
  %v1435 = vunpack.c.l.b16 %v214
  %v1436 = vunpack.c.h.b16 %v214
  %v1437 = vunpack.c.l.b16 %v215
  %v1438 = vunpack.c.h.b16 %v215
  %v1439 = vunpack.c.l.b16 %v216
  %v1440 = vunpack.c.h.b16 %v216
  %v1441 = vunpack.c.l.b16 %v217
  %v1442 = vunpack.c.h.b16 %v217
  %v1443 = vunpack.c.l.b16 %v218
  %v1444 = vunpack.c.h.b16 %v218
  %v1445 = vunpack.c.l.b16 %v219
  %v1446 = vunpack.c.h.b16 %v219
  %v1447 = vunpack.c.l.b16 %v220
  %v1448 = vunpack.c.h.b16 %v220
  %v1449 = vunpack.c.l.b16 %v221
  %v1450 = vunpack.c.h.b16 %v221
  %v1451 = vunpack.c.l.b16 %v222
  %v1452 = vunpack.c.h.b16 %v222
  %v1453 = vunpack.c.l.b16 %v223
  %v1454 = vunpack.c.h.b16 %v223
  %v1455 = vunpack.c.l.b16 %v224
  %v1456 = vunpack.c.h.b16 %v224
  %v1457 = vunpack.c.l.b16 %v225
  %v1458 = vunpack.c.h.b16 %v225
  %v1459 = vunpack.c.l.b16 %v226
  %v1460 = vunpack.c.h.b16 %v226
  %v1461 = vunpack.c.l.b16 %v227
  %v1462 = vunpack.c.h.b16 %v227
  %v1463 = vunpack.c.l.b16 %v228
  %v1464 = vunpack.c.h.b16 %v228
  %v1465 = vunpack.c.l.b16 %v229
  %v1466 = vunpack.c.h.b16 %v229
  %v1467 = vunpack.c.l.b16 %v230
  %v1468 = vunpack.c.h.b16 %v230
  %v1469 = vunpack.c.l.b16 %v231
  %v1470 = vunpack.c.h.b16 %v231
  %v1471 = vunpack.c.l.b16 %v232
  %v1472 = vunpack.c.h.b16 %v232
  %v1473 = vunpack.c.l.b16 %v233
  %v1474 = vunpack.c.h.b16 %v233
  %v1475 = vunpack.c.l.b16 %v234
  %v1476 = vunpack.c.h.b16 %v234
  %v1477 = vunpack.c.l.b16 %v235
  %v1478 = vunpack.c.h.b16 %v235
  %v1479 = vunpack.c.l.b16 %v236
  %v1480 = vunpack.c.h.b16 %v236
  %v1481 = vunpack.c.l.b16 %v237
  %v1482 = vunpack.c.h.b16 %v237
  %v1483 = vunpack.c.l.b16 %v238
  %v1484 = vunpack.c.h.b16 %v238
  %v1485 = vunpack.c.l.b16 %v239
  %v1486 = vunpack.c.h.b16 %v239
  %v1487 = vunpack.c.l.b16 %v240
  %v1488 = vunpack.c.h.b16 %v240
  %v1489 = vunpack.c.l.b16 %v241
  %v1490 = vunpack.c.h.b16 %v241
  %v1491 = vunpack.c.l.b16 %v242
  %v1492 = vunpack.c.h.b16 %v242
  %v1493 = vunpack.c.l.b16 %v243
  %v1494 = vunpack.c.h.b16 %v243
  %v1495 = vunpack.c.l.b16 %v244
  %v1496 = vunpack.c.h.b16 %v244
  %v1497 = vunpack.c.l.b16 %v245
  %v1498 = vunpack.c.h.b16 %v245
  %v1499 = vunpack.c.l.b16 %v246
  %v1500 = vunpack.c.h.b16 %v246
  %v1501 = vunpack.c.l.b16 %v247
  %v1502 = vunpack.c.h.b16 %v247
  %v1503 = vunpack.c.l.b16 %v248
  %v1504 = vunpack.c.h.b16 %v248
  %v1505 = vunpack.c.l.b16 %v249
  %v1506 = vunpack.c.h.b16 %v249
  %v1507 = vunpack.c.l.b16 %v250
  %v1508 = vunpack.c.h.b16 %v250
  %v1509 = vunpack.c.l.b16 %v251
  %v1510 = vunpack.c.h.b16 %v251
  %v1511 = vunpack.c.l.b16 %v252
  %v1512 = vunpack.c.h.b16 %v252
  %v1513 = vunpack.c.l.b16 %v253
  %v1514 = vunpack.c.h.b16 %v253
  %v1515 = vunpack.c.l.b16 %v254
  %v1516 = vunpack.c.h.b16 %v254
  %v1517 = vunpack.c.l.b16 %v255
  %v1518 = vunpack.c.h.b16 %v255
  %v1519 = vunpack.c.l.b16 %v256
  %v1520 = vunpack.c.h.b16 %v256
  %v1521 = vunpack.c.l.b16 %v257
  %v1522 = vunpack.c.h.b16 %v257
  %v1523 = vunpack.c.l.b16 %v258
  %v1524 = vunpack.c.h.b16 %v258
  %v1525 = vunpack.c.l.b16 %v259
  %v1526 = vunpack.c.h.b16 %v259
  %v1527 = vunpack.c.l.b16 %v260
  %v1528 = vunpack.c.h.b16 %v260
  %v1529 = vunpack.c.l.b16 %v261
  %v1530 = vunpack.c.h.b16 %v261
  %v1531 = vunpack.c.l.b16 %v262
  %v1532 = vunpack.c.h.b16 %v262
  %v1533 = vunpack.c.l.b16 %v263
  %v1534 = vunpack.c.h.b16 %v263
  %v1535 = vunpack.c.l.b16 %v264
  %v1536 = vunpack.c.h.b16 %v264
  %v1537 = vunpack.c.l.b16 %v265
  %v1538 = vunpack.c.h.b16 %v265
  %v1539 = vunpack.c.l.b16 %v266
  %v1540 = vunpack.c.h.b16 %v266
  %v1541 = vunpack.c.l.b16 %v267
  %v1542 = vunpack.c.h.b16 %v267
  %v1543 = vunpack.c.l.b16 %v268
  %v1544 = vunpack.c.h.b16 %v268
  %v1545 = vunpack.c.l.b16 %v269
  %v1546 = vunpack.c.h.b16 %v269
  %v1547 = vunpack.c.l.b16 %v270
  %v1548 = vunpack.c.h.b16 %v270
  %v1549 = vunpack.c.l.b16 %v271
  %v1550 = vunpack.c.h.b16 %v271
  %v1551 = vunpack.c.l.b16 %v272
  %v1552 = vunpack.c.h.b16 %v272
  %v1553 = vunpack.c.l.b16 %v273
  %v1554 = vunpack.c.h.b16 %v273
  %v1555 = vunpack.c.l.b16 %v274
  %v1556 = vunpack.c.h.b16 %v274
  %v1557 = vunpack.c.l.b16 %v275
  %v1558 = vunpack.c.h.b16 %v275
  %v1559 = vunpack.c.l.b16 %v276
  %v1560 = vunpack.c.h.b16 %v276
  %v1561 = vunpack.c.l.b16 %v277
  %v1562 = vunpack.c.h.b16 %v277
  %v1563 = vunpack.c.l.b16 %v278
  %v1564 = vunpack.c.h.b16 %v278
  %v1565 = vunpack.c.l.b16 %v279
  %v1566 = vunpack.c.h.b16 %v279
  %v1567 = vunpack.c.l.b16 %v280
  %v1568 = vunpack.c.h.b16 %v280
  %v1569 = vunpack.c.l.b16 %v281
  %v1570 = vunpack.c.h.b16 %v281
  %v1571 = vunpack.c.l.b16 %v282
  %v1572 = vunpack.c.h.b16 %v282
  %v1573 = vunpack.c.l.b16 %v283
  %v1574 = vunpack.c.h.b16 %v283
  %v1575 = vunpack.c.l.b16 %v284
  %v1576 = vunpack.c.h.b16 %v284
  %v1577 = vunpack.c.l.b16 %v285
  %v1578 = vunpack.c.h.b16 %v285
  %v1579 = vunpack.c.l.b16 %v286
  %v1580 = vunpack.c.h.b16 %v286
  %v1581 = vunpack.c.l.b16 %v287
  %v1582 = vunpack.c.h.b16 %v287
  %v1583 = vunpack.c.l.b16 %v288
  %v1584 = vunpack.c.h.b16 %v288
  %v1585 = vunpack.c.l.b16 %v289
  %v1586 = vunpack.c.h.b16 %v289
  %v1587 = vunpack.c.l.b16 %v290
  %v1588 = vunpack.c.h.b16 %v290
  %v1589 = vunpack.c.l.b16 %v291
  %v1590 = vunpack.c.h.b16 %v291
  %v1591 = vunpack.c.l.b16 %v292
  %v1592 = vunpack.c.h.b16 %v292
  %v1593 = vunpack.c.l.b16 %v293
  %v1594 = vunpack.c.h.b16 %v293
  %v1595 = vunpack.c.l.b16 %v294
  %v1596 = vunpack.c.h.b16 %v294
  %v1597 = vunpack.c.l.b16 %v295
  %v1598 = vunpack.c.h.b16 %v295
  %v1599 = vunpack.c.l.b16 %v296
  %v1600 = vunpack.c.h.b16 %v296
  %v1601 = vunpack.c.l.b16 %v297
  %v1602 = vunpack.c.h.b16 %v297
  %v1603 = vunpack.c.l.b16 %v298
  %v1604 = vunpack.c.h.b16 %v298
  %v1605 = vunpack.c.l.b16 %v299
  %v1606 = vunpack.c.h.b16 %v299
  %v1607 = vunpack.c.l.b16 %v300
  %v1608 = vunpack.c.h.b16 %v300
  %v1609 = vunpack.c.l.b16 %v301
  %v1610 = vunpack.c.h.b16 %v301
  %v1611 = vunpack.c.l.b16 %v302
  %v1612 = vunpack.c.h.b16 %v302
  %v1613 = vunpack.c.l.b16 %v303
  %v1614 = vunpack.c.h.b16 %v303
  %v1615 = vunpack.c.l.b16 %v304
  %v1616 = vunpack.c.h.b16 %v304
  %v1617 = vunpack.c.l.b16 %v305
  %v1618 = vunpack.c.h.b16 %v305
  %v1619 = vunpack.c.l.b16 %v306
  %v1620 = vunpack.c.h.b16 %v306
  %v1621 = vunpack.c.l.b16 %v307
  %v1622 = vunpack.c.h.b16 %v307
  %v1623 = vunpack.c.l.b16 %v308
  %v1624 = vunpack.c.h.b16 %v308
  %v1625 = vunpack.c.l.b16 %v309
  %v1626 = vunpack.c.h.b16 %v309
  %v1627 = vunpack.c.l.b16 %v310
  %v1628 = vunpack.c.h.b16 %v310
  %v1629 = vunpack.c.l.b16 %v311
  %v1630 = vunpack.c.h.b16 %v311
  %v1631 = vunpack.c.l.b16 %v312
  %v1632 = vunpack.c.h.b16 %v312
  %v1633 = vunpack.c.l.b16 %v313
  %v1634 = vunpack.c.h.b16 %v313
  %v1635 = vunpack.c.l.b16 %v314
  %v1636 = vunpack.c.h.b16 %v314
  %v1637 = vunpack.c.l.b16 %v315
  %v1638 = vunpack.c.h.b16 %v315
  %v1639 = vunpack.c.l.b16 %v316
  %v1640 = vunpack.c.h.b16 %v316
  %v1641 = vunpack.c.l.b16 %v317
  %v1642 = vunpack.c.h.b16 %v317
  %v1643 = vunpack.c.l.b16 %v318
  %v1644 = vunpack.c.h.b16 %v318
  %v1645 = vunpack.c.l.b16 %v319
  %v1646 = vunpack.c.h.b16 %v319
  %v1647 = vunpack.c.l.b16 %v320
  %v1648 = vunpack.c.h.b16 %v320
  %v1649 = vunpack.c.l.b16 %v321
  %v1650 = vunpack.c.h.b16 %v321
  %v1651 = vunpack.c.l.b16 %v322
  %v1652 = vunpack.c.h.b16 %v322
  %v1653 = vunpack.c.l.b16 %v323
  %v1654 = vunpack.c.h.b16 %v323
  %v1655 = vunpack.c.l.b16 %v324
  %v1656 = vunpack.c.h.b16 %v324
  %v1657 = vunpack.c.l.b16 %v325
  %v1658 = vunpack.c.h.b16 %v325
  %v1659 = vunpack.c.l.b16 %v326
  %v1660 = vunpack.c.h.b16 %v326
  %v1661 = vunpack.c.l.b16 %v327
  %v1662 = vunpack.c.h.b16 %v327
  %v1663 = vunpack.c.l.b16 %v328
  %v1664 = vunpack.c.h.b16 %v328
  %v1665 = vunpack.c.l.b16 %v329
  %v1666 = vunpack.c.h.b16 %v329
  %v1667 = vunpack.c.l.b16 %v330
  %v1668 = vunpack.c.h.b16 %v330
  %v1669 = vunpack.c.l.b16 %v331
  %v1670 = vunpack.c.h.b16 %v331
  %v1671 = vunpack.c.l.b16 %v332
  %v1672 = vunpack.c.h.b16 %v332
  %v1673 = vunpack.c.l.b16 %v333
  %v1674 = vunpack.c.h.b16 %v333
  %v1675 = vunpack.c.l.b16 %v334
  %v1676 = vunpack.c.h.b16 %v334
  %v1677 = vunpack.c.l.b16 %v335
  %v1678 = vunpack.c.h.b16 %v335
  %v1679 = vunpack.c.l.b16 %v336
  %v1680 = vunpack.c.h.b16 %v336
  %v1681 = vunpack.c.l.b16 %v337
  %v1682 = vunpack.c.h.b16 %v337
  %v1683 = vunpack.c.l.b16 %v338
  %v1684 = vunpack.c.h.b16 %v338
  %v1685 = vunpack.c.l.b16 %v339
  %v1686 = vunpack.c.h.b16 %v339
  %v1687 = vunpack.c.l.b16 %v340
  %v1688 = vunpack.c.h.b16 %v340
  %v1689 = vunpack.c.l.b16 %v341
  %v1690 = vunpack.c.h.b16 %v341
  %v1691 = vunpack.c.l.b16 %v342
  %v1692 = vunpack.c.h.b16 %v342
  %v1693 = vunpack.c.l.b16 %v343
  %v1694 = vunpack.c.h.b16 %v343
  %v1695 = vunpack.c.l.b16 %v344
  %v1696 = vunpack.c.h.b16 %v344
  %v1697 = vunpack.c.l.b16 %v345
  %v1698 = vunpack.c.h.b16 %v345
  %v1699 = vunpack.c.l.b16 %v346
  %v1700 = vunpack.c.h.b16 %v346
  %v1701 = vunpack.c.l.b16 %v347
  %v1702 = vunpack.c.h.b16 %v347
  %v1703 = vunpack.c.l.b16 %v348
  %v1704 = vunpack.c.h.b16 %v348
  %v1705 = vunpack.c.l.b16 %v349
  %v1706 = vunpack.c.h.b16 %v349
  %v1707 = vunpack.c.l.b16 %v350
  %v1708 = vunpack.c.h.b16 %v350
  %v1709 = vunpack.c.l.b16 %v351
  %v1710 = vunpack.c.h.b16 %v351
  %v1711 = vunpack.c.l.b16 %v352
  %v1712 = vunpack.c.h.b16 %v352
  %v1713 = vunpack.c.l.b16 %v353
  %v1714 = vunpack.c.h.b16 %v353
  %v1715 = vunpack.c.l.b16 %v354
  %v1716 = vunpack.c.h.b16 %v354
  %v1717 = vunpack.c.l.b16 %v355
  %v1718 = vunpack.c.h.b16 %v355
  %v1719 = vunpack.c.l.b16 %v356
  %v1720 = vunpack.c.h.b16 %v356
  %v1721 = vunpack.c.l.b16 %v357
  %v1722 = vunpack.c.h.b16 %v357
  %v1723 = vunpack.c.l.b16 %v358
  %v1724 = vunpack.c.h.b16 %v358
  %v1725 = vunpack.c.l.b16 %v359
  %v1726 = vunpack.c.h.b16 %v359
  %v1727 = vunpack.c.l.b16 %v360
  %v1728 = vunpack.c.h.b16 %v360
  %v1729 = vunpack.c.l.b16 %v361
  %v1730 = vunpack.c.h.b16 %v361
  %v1731 = vunpack.c.l.b16 %v362
  %v1732 = vunpack.c.h.b16 %v362
  %v1733 = vunpack.c.l.b16 %v363
  %v1734 = vunpack.c.h.b16 %v363
  %v1735 = vunpack.c.l.b16 %v364
  %v1736 = vunpack.c.h.b16 %v364
  %v1737 = vunpack.c.l.b16 %v365
  %v1738 = vunpack.c.h.b16 %v365
  %v1739 = vunpack.c.l.b16 %v366
  %v1740 = vunpack.c.h.b16 %v366
  %v1741 = vunpack.c.l.b16 %v367
  %v1742 = vunpack.c.h.b16 %v367
  %v1743 = vunpack.c.l.b16 %v368
  %v1744 = vunpack.c.h.b16 %v368
  %v1745 = vunpack.c.l.b16 %v369
  %v1746 = vunpack.c.h.b16 %v369
  %v1747 = vunpack.c.l.b16 %v370
  %v1748 = vunpack.c.h.b16 %v370
  %v1749 = vunpack.c.l.b16 %v371
  %v1750 = vunpack.c.h.b16 %v371
  %v1751 = vunpack.c.l.b16 %v372
  %v1752 = vunpack.c.h.b16 %v372
  %v1753 = vunpack.c.l.b16 %v373
  %v1754 = vunpack.c.h.b16 %v373
  %v1755 = vunpack.c.l.b16 %v374
  %v1756 = vunpack.c.h.b16 %v374
  %v1757 = vunpack.c.l.b16 %v375
  %v1758 = vunpack.c.h.b16 %v375
  %v1759 = vunpack.c.l.b16 %v376
  %v1760 = vunpack.c.h.b16 %v376
  %v1761 = vunpack.c.l.b16 %v377
  %v1762 = vunpack.c.h.b16 %v377
  %v1763 = vunpack.c.l.b16 %v378
  %v1764 = vunpack.c.h.b16 %v378
  %v1765 = vunpack.c.l.b16 %v379
  %v1766 = vunpack.c.h.b16 %v379
  %v1767 = vunpack.c.l.b16 %v380
  %v1768 = vunpack.c.h.b16 %v380
  %v1769 = vunpack.c.l.b16 %v381
  %v1770 = vunpack.c.h.b16 %v381
  %v1771 = vunpack.c.l.b16 %v382
  %v1772 = vunpack.c.h.b16 %v382
  %v1773 = vunpack.c.l.b16 %v383
  %v1774 = vunpack.c.h.b16 %v383
  %v1775 = vunpack.c.l.b16 %v384
  %v1776 = vunpack.c.h.b16 %v384
  %v1777 = vunpack.c.l.b16 %v385
  %v1778 = vunpack.c.h.b16 %v385
  %v1779 = vunpack.c.l.b16 %v386
  %v1780 = vunpack.c.h.b16 %v386
  %v1781 = vunpack.c.l.b16 %v387
  %v1782 = vunpack.c.h.b16 %v387
  %v1783 = vunpack.c.l.b16 %v388
  %v1784 = vunpack.c.h.b16 %v388
  %v1785 = vunpack.c.l.b16 %v389
  %v1786 = vunpack.c.h.b16 %v389
  %v1787 = vunpack.c.l.b16 %v390
  %v1788 = vunpack.c.h.b16 %v390
  %v1789 = vunpack.c.l.b16 %v391
  %v1790 = vunpack.c.h.b16 %v391
  %v1791 = vunpack.c.l.b16 %v392
  %v1792 = vunpack.c.h.b16 %v392
  %v1793 = vunpack.c.l.b16 %v393
  %v1794 = vunpack.c.h.b16 %v393
  %v1795 = vunpack.c.l.b16 %v394
  %v1796 = vunpack.c.h.b16 %v394
  %v1797 = vunpack.c.l.b16 %v395
  %v1798 = vunpack.c.h.b16 %v395
  %v1799 = vunpack.c.l.b16 %v396
  %v1800 = vunpack.c.h.b16 %v396
  %v1801 = vunpack.c.l.b16 %v397
  %v1802 = vunpack.c.h.b16 %v397
  %v1803 = vunpack.c.l.b16 %v398
  %v1804 = vunpack.c.h.b16 %v398
  %v1805 = vunpack.c.l.b16 %v399
  %v1806 = vunpack.c.h.b16 %v399
  %v1807 = vunpack.c.l.b16 %v400
  %v1808 = vunpack.c.h.b16 %v400
  %v1809 = vpack.c.b16 %v1299, %v1297
  %v1810 = vpack.c.b16 %v1300, %v1298
  %v1811 = vpack.c.b16 %v1303, %v1301
  %v1812 = vpack.c.b16 %v1304, %v1302
  %v1813 = vpack.c.b16 %v1307, %v1305
  %v1814 = vpack.c.b16 %v1308, %v1306
  %v1815 = vpack.c.b16 %v1311, %v1309
  %v1816 = vpack.c.b16 %v1312, %v1310
  %v1817 = vpack.c.b16 %v1315, %v1313
  %v1818 = vpack.c.b16 %v1316, %v1314
  %v1819 = vpack.c.b16 %v1319, %v1317
  %v1820 = vpack.c.b16 %v1320, %v1318
  %v1821 = vpack.c.b16 %v1323, %v1321
  %v1822 = vpack.c.b16 %v1324, %v1322
  %v1823 = vpack.c.b16 %v1327, %v1325
  %v1824 = vpack.c.b16 %v1328, %v1326
  %v1825 = vpack.c.b16 %v1331, %v1329
  %v1826 = vpack.c.b16 %v1332, %v1330
  %v1827 = vpack.c.b16 %v1335, %v1333
  %v1828 = vpack.c.b16 %v1336, %v1334
  %v1829 = vpack.c.b16 %v1339, %v1337
  %v1830 = vpack.c.b16 %v1340, %v1338
  %v1831 = vpack.c.b16 %v1343, %v1341
  %v1832 = vpack.c.b16 %v1344, %v1342
  %v1833 = vpack.c.b16 %v1347, %v1345
  %v1834 = vpack.c.b16 %v1348, %v1346
  %v1835 = vpack.c.b16 %v1351, %v1349
  %v1836 = vpack.c.b16 %v1352, %v1350
  %v1837 = vpack.c.b16 %v1355, %v1353
  %v1838 = vpack.c.b16 %v1356, %v1354
  %v1839 = vpack.c.b16 %v1359, %v1357
  %v1840 = vpack.c.b16 %v1360, %v1358
  %v1841 = vpack.c.b16 %v1363, %v1361
  %v1842 = vpack.c.b16 %v1364, %v1362
  %v1843 = vpack.c.b16 %v1367, %v1365
  %v1844 = vpack.c.b16 %v1368, %v1366
  %v1845 = vpack.c.b16 %v1371, %v1369
  %v1846 = vpack.c.b16 %v1372, %v1370
  %v1847 = vpack.c.b16 %v1375, %v1373
  %v1848 = vpack.c.b16 %v1376, %v1374
  %v1849 = vpack.c.b16 %v1379, %v1377
  %v1850 = vpack.c.b16 %v1380, %v1378
  %v1851 = vpack.c.b16 %v1383, %v1381
  %v1852 = vpack.c.b16 %v1384, %v1382
  %v1853 = vpack.c.b16 %v1387, %v1385
  %v1854 = vpack.c.b16 %v1388, %v1386
  %v1855 = vpack.c.b16 %v1391, %v1389
  %v1856 = vpack.c.b16 %v1392, %v1390
  %v1857 = vpack.c.b16 %v1395, %v1393
  %v1858 = vpack.c.b16 %v1396, %v1394
  %v1859 = vpack.c.b16 %v1399, %v1397
  %v1860 = vpack.c.b16 %v1400, %v1398
  %v1861 = vpack.c.b16 %v1403, %v1401
  %v1862 = vpack.c.b16 %v1404, %v1402
  %v1863 = vpack.c.b16 %v1407, %v1405
  %v1864 = vpack.c.b16 %v1408, %v1406
  %v1865 = vpack.c.b16 %v1411, %v1409
  %v1866 = vpack.c.b16 %v1412, %v1410
  %v1867 = vpack.c.b16 %v1415, %v1413
  %v1868 = vpack.c.b16 %v1416, %v1414
  %v1869 = vpack.c.b16 %v1419, %v1417
  %v1870 = vpack.c.b16 %v1420, %v1418
  %v1871 = vpack.c.b16 %v1423, %v1421
  %v1872 = vpack.c.b16 %v1424, %v1422
  %v1873 = vpack.c.b16 %v1427, %v1425
  %v1874 = vpack.c.b16 %v1428, %v1426
  %v1875 = vpack.c.b16 %v1431, %v1429
  %v1876 = vpack.c.b16 %v1432, %v1430
  %v1877 = vpack.c.b16 %v1435, %v1433
  %v1878 = vpack.c.b16 %v1436, %v1434
  %v1879 = vpack.c.b16 %v1439, %v1437
  %v1880 = vpack.c.b16 %v1440, %v1438
  %v1881 = vpack.c.b16 %v1443, %v1441
  %v1882 = vpack.c.b16 %v1444, %v1442
  %v1883 = vpack.c.b16 %v1447, %v1445
  %v1884 = vpack.c.b16 %v1448, %v1446
  %v1885 = vpack.c.b16 %v1451, %v1449
  %v1886 = vpack.c.b16 %v1452, %v1450
  %v1887 = vpack.c.b16 %v1455, %v1453
  %v1888 = vpack.c.b16 %v1456, %v1454
  %v1889 = vpack.c.b16 %v1459, %v1457
  %v1890 = vpack.c.b16 %v1460, %v1458
  %v1891 = vpack.c.b16 %v1463, %v1461
  %v1892 = vpack.c.b16 %v1464, %v1462
  %v1893 = vpack.c.b16 %v1467, %v1465
  %v1894 = vpack.c.b16 %v1468, %v1466
  %v1895 = vpack.c.b16 %v1471, %v1469
  %v1896 = vpack.c.b16 %v1472, %v1470
  %v1897 = vpack.c.b16 %v1475, %v1473
  %v1898 = vpack.c.b16 %v1476, %v1474
  %v1899 = vpack.c.b16 %v1479, %v1477
  %v1900 = vpack.c.b16 %v1480, %v1478
  %v1901 = vpack.c.b16 %v1483, %v1481
  %v1902 = vpack.c.b16 %v1484, %v1482
  %v1903 = vpack.c.b16 %v1487, %v1485
  %v1904 = vpack.c.b16 %v1488, %v1486
  %v1905 = vpack.c.b16 %v1491, %v1489
  %v1906 = vpack.c.b16 %v1492, %v1490
  %v1907 = vpack.c.b16 %v1495, %v1493
  %v1908 = vpack.c.b16 %v1496, %v1494
  %v1909 = vpack.c.b16 %v1499, %v1497
  %v1910 = vpack.c.b16 %v1500, %v1498
  %v1911 = vpack.c.b16 %v1503, %v1501
  %v1912 = vpack.c.b16 %v1504, %v1502
  %v1913 = vpack.c.b16 %v1507, %v1505
  %v1914 = vpack.c.b16 %v1508, %v1506
  %v1915 = vpack.c.b16 %v1511, %v1509
  %v1916 = vpack.c.b16 %v1512, %v1510
  %v1917 = vpack.c.b16 %v1515, %v1513
  %v1918 = vpack.c.b16 %v1516, %v1514
  %v1919 = vpack.c.b16 %v1519, %v1517
  %v1920 = vpack.c.b16 %v1520, %v1518
  %v1921 = vpack.c.b16 %v1523, %v1521
  %v1922 = vpack.c.b16 %v1524, %v1522
  %v1923 = vpack.c.b16 %v1527, %v1525
  %v1924 = vpack.c.b16 %v1528, %v1526
  %v1925 = vpack.c.b16 %v1531, %v1529
  %v1926 = vpack.c.b16 %v1532, %v1530
  %v1927 = vpack.c.b16 %v1535, %v1533
  %v1928 = vpack.c.b16 %v1536, %v1534
  %v1929 = vpack.c.b16 %v1539, %v1537
  %v1930 = vpack.c.b16 %v1540, %v1538
  %v1931 = vpack.c.b16 %v1543, %v1541
  %v1932 = vpack.c.b16 %v1544, %v1542
  %v1933 = vpack.c.b16 %v1547, %v1545
  %v1934 = vpack.c.b16 %v1548, %v1546
  %v1935 = vpack.c.b16 %v1551, %v1549
  %v1936 = vpack.c.b16 %v1552, %v1550
  %v1937 = vpack.c.b16 %v1555, %v1553
  %v1938 = vpack.c.b16 %v1556, %v1554
  %v1939 = vpack.c.b16 %v1559, %v1557
  %v1940 = vpack.c.b16 %v1560, %v1558
  %v1941 = vpack.c.b16 %v1563, %v1561
  %v1942 = vpack.c.b16 %v1564, %v1562
  %v1943 = vpack.c.b16 %v1567, %v1565
  %v1944 = vpack.c.b16 %v1568, %v1566
  %v1945 = vpack.c.b16 %v1571, %v1569
  %v1946 = vpack.c.b16 %v1572, %v1570
  %v1947 = vpack.c.b16 %v1575, %v1573
  %v1948 = vpack.c.b16 %v1576, %v1574
  %v1949 = vpack.c.b16 %v1579, %v1577
  %v1950 = vpack.c.b16 %v1580, %v1578
  %v1951 = vpack.c.b16 %v1583, %v1581
  %v1952 = vpack.c.b16 %v1584, %v1582
  %v1953 = vpack.c.b16 %v1587, %v1585
  %v1954 = vpack.c.b16 %v1588, %v1586
  %v1955 = vpack.c.b16 %v1591, %v1589
  %v1956 = vpack.c.b16 %v1592, %v1590
  %v1957 = vpack.c.b16 %v1595, %v1593
  %v1958 = vpack.c.b16 %v1596, %v1594
  %v1959 = vpack.c.b16 %v1599, %v1597
  %v1960 = vpack.c.b16 %v1600, %v1598
  %v1961 = vpack.c.b16 %v1603, %v1601
  %v1962 = vpack.c.b16 %v1604, %v1602
  %v1963 = vpack.c.b16 %v1607, %v1605
  %v1964 = vpack.c.b16 %v1608, %v1606
  %v1965 = vpack.c.b16 %v1611, %v1609
  %v1966 = vpack.c.b16 %v1612, %v1610
  %v1967 = vpack.c.b16 %v1615, %v1613
  %v1968 = vpack.c.b16 %v1616, %v1614
  %v1969 = vpack.c.b16 %v1619, %v1617
  %v1970 = vpack.c.b16 %v1620, %v1618
  %v1971 = vpack.c.b16 %v1623, %v1621
  %v1972 = vpack.c.b16 %v1624, %v1622
  %v1973 = vpack.c.b16 %v1627, %v1625
  %v1974 = vpack.c.b16 %v1628, %v1626
  %v1975 = vpack.c.b16 %v1631, %v1629
  %v1976 = vpack.c.b16 %v1632, %v1630
  %v1977 = vpack.c.b16 %v1635, %v1633
  %v1978 = vpack.c.b16 %v1636, %v1634
  %v1979 = vpack.c.b16 %v1639, %v1637
  %v1980 = vpack.c.b16 %v1640, %v1638
  %v1981 = vpack.c.b16 %v1643, %v1641
  %v1982 = vpack.c.b16 %v1644, %v1642
  %v1983 = vpack.c.b16 %v1647, %v1645
  %v1984 = vpack.c.b16 %v1648, %v1646
  %v1985 = vpack.c.b16 %v1651, %v1649
  %v1986 = vpack.c.b16 %v1652, %v1650
  %v1987 = vpack.c.b16 %v1655, %v1653
  %v1988 = vpack.c.b16 %v1656, %v1654
  %v1989 = vpack.c.b16 %v1659, %v1657
  %v1990 = vpack.c.b16 %v1660, %v1658
  %v1991 = vpack.c.b16 %v1663, %v1661
  %v1992 = vpack.c.b16 %v1664, %v1662
  %v1993 = vpack.c.b16 %v1667, %v1665
  %v1994 = vpack.c.b16 %v1668, %v1666
  %v1995 = vpack.c.b16 %v1671, %v1669
  %v1996 = vpack.c.b16 %v1672, %v1670
  %v1997 = vpack.c.b16 %v1675, %v1673
  %v1998 = vpack.c.b16 %v1676, %v1674
  %v1999 = vpack.c.b16 %v1679, %v1677
  %v2000 = vpack.c.b16 %v1680, %v1678
  %v2001 = vpack.c.b16 %v1683, %v1681
  %v2002 = vpack.c.b16 %v1684, %v1682
  %v2003 = vpack.c.b16 %v1687, %v1685
  %v2004 = vpack.c.b16 %v1688, %v1686
  %v2005 = vpack.c.b16 %v1691, %v1689
  %v2006 = vpack.c.b16 %v1692, %v1690
  %v2007 = vpack.c.b16 %v1695, %v1693
  %v2008 = vpack.c.b16 %v1696, %v1694
  %v2009 = vpack.c.b16 %v1699, %v1697
  %v2010 = vpack.c.b16 %v1700, %v1698
  %v2011 = vpack.c.b16 %v1703, %v1701
  %v2012 = vpack.c.b16 %v1704, %v1702
  %v2013 = vpack.c.b16 %v1707, %v1705
  %v2014 = vpack.c.b16 %v1708, %v1706
  %v2015 = vpack.c.b16 %v1711, %v1709
  %v2016 = vpack.c.b16 %v1712, %v1710
  %v2017 = vpack.c.b16 %v1715, %v1713
  %v2018 = vpack.c.b16 %v1716, %v1714
  %v2019 = vpack.c.b16 %v1719, %v1717
  %v2020 = vpack.c.b16 %v1720, %v1718
  %v2021 = vpack.c.b16 %v1723, %v1721
  %v2022 = vpack.c.b16 %v1724, %v1722
  %v2023 = vpack.c.b16 %v1727, %v1725
  %v2024 = vpack.c.b16 %v1728, %v1726
  %v2025 = vpack.c.b16 %v1731, %v1729
  %v2026 = vpack.c.b16 %v1732, %v1730
  %v2027 = vpack.c.b16 %v1735, %v1733
  %v2028 = vpack.c.b16 %v1736, %v1734
  %v2029 = vpack.c.b16 %v1739, %v1737
  %v2030 = vpack.c.b16 %v1740, %v1738
  %v2031 = vpack.c.b16 %v1743, %v1741
  %v2032 = vpack.c.b16 %v1744, %v1742
  %v2033 = vpack.c.b16 %v1747, %v1745
  %v2034 = vpack.c.b16 %v1748, %v1746
  %v2035 = vpack.c.b16 %v1751, %v1749
  %v2036 = vpack.c.b16 %v1752, %v1750
  %v2037 = vpack.c.b16 %v1755, %v1753
  %v2038 = vpack.c.b16 %v1756, %v1754
  %v2039 = vpack.c.b16 %v1759, %v1757
  %v2040 = vpack.c.b16 %v1760, %v1758
  %v2041 = vpack.c.b16 %v1763, %v1761
  %v2042 = vpack.c.b16 %v1764, %v1762
  %v2043 = vpack.c.b16 %v1767, %v1765
  %v2044 = vpack.c.b16 %v1768, %v1766
  %v2045 = vpack.c.b16 %v1771, %v1769
  %v2046 = vpack.c.b16 %v1772, %v1770
  %v2047 = vpack.c.b16 %v1775, %v1773
  %v2048 = vpack.c.b16 %v1776, %v1774
  %v2049 = vpack.c.b16 %v1779, %v1777
  %v2050 = vpack.c.b16 %v1780, %v1778
  %v2051 = vpack.c.b16 %v1783, %v1781
  %v2052 = vpack.c.b16 %v1784, %v1782
  %v2053 = vpack.c.b16 %v1787, %v1785
  %v2054 = vpack.c.b16 %v1788, %v1786
  %v2055 = vpack.c.b16 %v1791, %v1789
  %v2056 = vpack.c.b16 %v1792, %v1790
  %v2057 = vpack.c.b16 %v1795, %v1793
  %v2058 = vpack.c.b16 %v1796, %v1794
  %v2059 = vpack.c.b16 %v1799, %v1797
  %v2060 = vpack.c.b16 %v1800, %v1798
  %v2061 = vpack.c.b16 %v1803, %v1801
  %v2062 = vpack.c.b16 %v1804, %v1802
  %v2063 = vpack.c.b16 %v1807, %v1805
  %v2064 = vpack.c.b16 %v1808, %v1806
  %2321 = vmatpush.bf16.msra.mxu0 %v1823
  %2322 = vmatpush.bf16.msra.mxu0 %v1821
  %2323 = vmatpush.bf16.msra.mxu0 %v1819
  %2324 = vmatpush.bf16.msra.mxu0 %v1817
  %2325 = vmatpush.bf16.msra.mxu0 %v1815
  %2326 = vmatpush.bf16.msra.mxu0 %v1813
  %2327 = vmatpush.bf16.msra.mxu0 %v1811
  %2328 = vmatpush.bf16.msra.mxu0 %v1809
  %2329 = vmatmul.bf16.gmra.mxu0 %v785
  %v2330 = vpop.f32.mrf.mxu0
  %v2331 = vadd.f32 0.0, %v2330
  %v2332 = vpop.f32.mrf.mxu0
  %v2333 = vadd.f32 0.0, %v2332
  %2334 = vmatmul.bf16.gmra.mxu0 %v801
  %v2335 = vpop.f32.mrf.mxu0
  %v2336 = vadd.f32 0.0, %v2335
  %v2337 = vpop.f32.mrf.mxu0
  %v2338 = vadd.f32 0.0, %v2337
  %2339 = vmatmul.bf16.gmra.mxu0 %v817
  %v2340 = vpop.f32.mrf.mxu0
  %v2341 = vadd.f32 0.0, %v2340
  %v2342 = vpop.f32.mrf.mxu0
  %v2343 = vadd.f32 0.0, %v2342
  %2344 = vmatmul.bf16.gmra.mxu0 %v833
  %v2345 = vpop.f32.mrf.mxu0
  %v2346 = vadd.f32 0.0, %v2345
  %v2347 = vpop.f32.mrf.mxu0
  %v2348 = vadd.f32 0.0, %v2347
  %2349 = vmatmul.bf16.gmra.mxu0 %v849
  %v2350 = vpop.f32.mrf.mxu0
  %v2351 = vadd.f32 0.0, %v2350
  %v2352 = vpop.f32.mrf.mxu0
  %v2353 = vadd.f32 0.0, %v2352
  %2354 = vmatmul.bf16.gmra.mxu0 %v865
  %v2355 = vpop.f32.mrf.mxu0
  %v2356 = vadd.f32 0.0, %v2355
  %v2357 = vpop.f32.mrf.mxu0
  %v2358 = vadd.f32 0.0, %v2357
  %2359 = vmatmul.bf16.gmra.mxu0 %v881
  %v2360 = vpop.f32.mrf.mxu0
  %v2361 = vadd.f32 0.0, %v2360
  %v2362 = vpop.f32.mrf.mxu0
  %v2363 = vadd.f32 0.0, %v2362
  %2364 = vmatmul.bf16.gmra.mxu0 %v897
  %v2365 = vpop.f32.mrf.mxu0
  %v2366 = vadd.f32 0.0, %v2365
  %v2367 = vpop.f32.mrf.mxu0
  %v2368 = vadd.f32 0.0, %v2367
  %2369 = vdwg.mxu0
  %2370 = vmatpush.bf16.msra.mxu0 %v1839
  %2371 = vmatpush.bf16.msra.mxu0 %v1837
  %2372 = vmatpush.bf16.msra.mxu0 %v1835
  %2373 = vmatpush.bf16.msra.mxu0 %v1833
  %2374 = vmatpush.bf16.msra.mxu0 %v1831
  %2375 = vmatpush.bf16.msra.mxu0 %v1829
  %2376 = vmatpush.bf16.msra.mxu0 %v1827
  %2377 = vmatpush.bf16.msra.mxu0 %v1825
  %2378 = vmatmul.bf16.gmra.mxu0 %v786
  %v2379 = vpop.f32.mrf.mxu0
  %v2380 = vadd.f32 %v2331, %v2379
  %v2381 = vpop.f32.mrf.mxu0
  %v2382 = vadd.f32 %v2333, %v2381
  %2383 = vmatmul.bf16.gmra.mxu0 %v802
  %v2384 = vpop.f32.mrf.mxu0
  %v2385 = vadd.f32 %v2336, %v2384
  %v2386 = vpop.f32.mrf.mxu0
  %v2387 = vadd.f32 %v2338, %v2386
  %2388 = vmatmul.bf16.gmra.mxu0 %v818
  %v2389 = vpop.f32.mrf.mxu0
  %v2390 = vadd.f32 %v2341, %v2389
  %v2391 = vpop.f32.mrf.mxu0
  %v2392 = vadd.f32 %v2343, %v2391
  %2393 = vmatmul.bf16.gmra.mxu0 %v834
  %v2394 = vpop.f32.mrf.mxu0
  %v2395 = vadd.f32 %v2346, %v2394
  %v2396 = vpop.f32.mrf.mxu0
  %v2397 = vadd.f32 %v2348, %v2396
  %2398 = vmatmul.bf16.gmra.mxu0 %v850
  %v2399 = vpop.f32.mrf.mxu0
  %v2400 = vadd.f32 %v2351, %v2399
  %v2401 = vpop.f32.mrf.mxu0
  %v2402 = vadd.f32 %v2353, %v2401
  %2403 = vmatmul.bf16.gmra.mxu0 %v866
  %v2404 = vpop.f32.mrf.mxu0
  %v2405 = vadd.f32 %v2356, %v2404
  %v2406 = vpop.f32.mrf.mxu0
  %v2407 = vadd.f32 %v2358, %v2406
  %2408 = vmatmul.bf16.gmra.mxu0 %v882
  %v2409 = vpop.f32.mrf.mxu0
  %v2410 = vadd.f32 %v2361, %v2409
  %v2411 = vpop.f32.mrf.mxu0
  %v2412 = vadd.f32 %v2363, %v2411
  %2413 = vmatmul.bf16.gmra.mxu0 %v898
  %v2414 = vpop.f32.mrf.mxu0
  %v2415 = vadd.f32 %v2366, %v2414
  %v2416 = vpop.f32.mrf.mxu0
  %v2417 = vadd.f32 %v2368, %v2416
  %2418 = vdwg.mxu0
  %2419 = vmatpush.bf16.msra.mxu0 %v1855
  %2420 = vmatpush.bf16.msra.mxu0 %v1853
  %2421 = vmatpush.bf16.msra.mxu0 %v1851
  %2422 = vmatpush.bf16.msra.mxu0 %v1849
  %2423 = vmatpush.bf16.msra.mxu0 %v1847
  %2424 = vmatpush.bf16.msra.mxu0 %v1845
  %2425 = vmatpush.bf16.msra.mxu0 %v1843
  %2426 = vmatpush.bf16.msra.mxu0 %v1841
  %2427 = vmatmul.bf16.gmra.mxu0 %v787
  %v2428 = vpop.f32.mrf.mxu0
  %v2429 = vadd.f32 %v2380, %v2428
  %v2430 = vpop.f32.mrf.mxu0
  %v2431 = vadd.f32 %v2382, %v2430
  %2432 = vmatmul.bf16.gmra.mxu0 %v803
  %v2433 = vpop.f32.mrf.mxu0
  %v2434 = vadd.f32 %v2385, %v2433
  %v2435 = vpop.f32.mrf.mxu0
  %v2436 = vadd.f32 %v2387, %v2435
  %2437 = vmatmul.bf16.gmra.mxu0 %v819
  %v2438 = vpop.f32.mrf.mxu0
  %v2439 = vadd.f32 %v2390, %v2438
  %v2440 = vpop.f32.mrf.mxu0
  %v2441 = vadd.f32 %v2392, %v2440
  %2442 = vmatmul.bf16.gmra.mxu0 %v835
  %v2443 = vpop.f32.mrf.mxu0
  %v2444 = vadd.f32 %v2395, %v2443
  %v2445 = vpop.f32.mrf.mxu0
  %v2446 = vadd.f32 %v2397, %v2445
  %2447 = vmatmul.bf16.gmra.mxu0 %v851
  %v2448 = vpop.f32.mrf.mxu0
  %v2449 = vadd.f32 %v2400, %v2448
  %v2450 = vpop.f32.mrf.mxu0
  %v2451 = vadd.f32 %v2402, %v2450
  %2452 = vmatmul.bf16.gmra.mxu0 %v867
  %v2453 = vpop.f32.mrf.mxu0
  %v2454 = vadd.f32 %v2405, %v2453
  %v2455 = vpop.f32.mrf.mxu0
  %v2456 = vadd.f32 %v2407, %v2455
  %2457 = vmatmul.bf16.gmra.mxu0 %v883
  %v2458 = vpop.f32.mrf.mxu0
  %v2459 = vadd.f32 %v2410, %v2458
  %v2460 = vpop.f32.mrf.mxu0
  %v2461 = vadd.f32 %v2412, %v2460
  %2462 = vmatmul.bf16.gmra.mxu0 %v899
  %v2463 = vpop.f32.mrf.mxu0
  %v2464 = vadd.f32 %v2415, %v2463
  %v2465 = vpop.f32.mrf.mxu0
  %v2466 = vadd.f32 %v2417, %v2465
  %2467 = vdwg.mxu0
  %2468 = vmatpush.bf16.msra.mxu0 %v1871
  %2469 = vmatpush.bf16.msra.mxu0 %v1869
  %2470 = vmatpush.bf16.msra.mxu0 %v1867
  %2471 = vmatpush.bf16.msra.mxu0 %v1865
  %2472 = vmatpush.bf16.msra.mxu0 %v1863
  %2473 = vmatpush.bf16.msra.mxu0 %v1861
  %2474 = vmatpush.bf16.msra.mxu0 %v1859
  %2475 = vmatpush.bf16.msra.mxu0 %v1857
  %2476 = vmatmul.bf16.gmra.mxu0 %v788
  %v2477 = vpop.f32.mrf.mxu0
  %v2478 = vadd.f32 %v2429, %v2477
  %v2479 = vpop.f32.mrf.mxu0
  %v2480 = vadd.f32 %v2431, %v2479
  %2481 = vmatmul.bf16.gmra.mxu0 %v804
  %v2482 = vpop.f32.mrf.mxu0
  %v2483 = vadd.f32 %v2434, %v2482
  %v2484 = vpop.f32.mrf.mxu0
  %v2485 = vadd.f32 %v2436, %v2484
  %2486 = vmatmul.bf16.gmra.mxu0 %v820
  %v2487 = vpop.f32.mrf.mxu0
  %v2488 = vadd.f32 %v2439, %v2487
  %v2489 = vpop.f32.mrf.mxu0
  %v2490 = vadd.f32 %v2441, %v2489
  %2491 = vmatmul.bf16.gmra.mxu0 %v836
  %v2492 = vpop.f32.mrf.mxu0
  %v2493 = vadd.f32 %v2444, %v2492
  %v2494 = vpop.f32.mrf.mxu0
  %v2495 = vadd.f32 %v2446, %v2494
  %2496 = vmatmul.bf16.gmra.mxu0 %v852
  %v2497 = vpop.f32.mrf.mxu0
  %v2498 = vadd.f32 %v2449, %v2497
  %v2499 = vpop.f32.mrf.mxu0
  %v2500 = vadd.f32 %v2451, %v2499
  %2501 = vmatmul.bf16.gmra.mxu0 %v868
  %v2502 = vpop.f32.mrf.mxu0
  %v2503 = vadd.f32 %v2454, %v2502
  %v2504 = vpop.f32.mrf.mxu0
  %v2505 = vadd.f32 %v2456, %v2504
  %2506 = vmatmul.bf16.gmra.mxu0 %v884
  %v2507 = vpop.f32.mrf.mxu0
  %v2508 = vadd.f32 %v2459, %v2507
  %v2509 = vpop.f32.mrf.mxu0
  %v2510 = vadd.f32 %v2461, %v2509
  %2511 = vmatmul.bf16.gmra.mxu0 %v900
  %v2512 = vpop.f32.mrf.mxu0
  %v2513 = vadd.f32 %v2464, %v2512
  %v2514 = vpop.f32.mrf.mxu0
  %v2515 = vadd.f32 %v2466, %v2514
  %2516 = vdwg.mxu0
  %2517 = vmatpush.bf16.msra.mxu0 %v1887
  %2518 = vmatpush.bf16.msra.mxu0 %v1885
  %2519 = vmatpush.bf16.msra.mxu0 %v1883
  %2520 = vmatpush.bf16.msra.mxu0 %v1881
  %2521 = vmatpush.bf16.msra.mxu0 %v1879
  %2522 = vmatpush.bf16.msra.mxu0 %v1877
  %2523 = vmatpush.bf16.msra.mxu0 %v1875
  %2524 = vmatpush.bf16.msra.mxu0 %v1873
  %2525 = vmatmul.bf16.gmra.mxu0 %v789
  %v2526 = vpop.f32.mrf.mxu0
  %v2527 = vadd.f32 %v2478, %v2526
  %v2528 = vpop.f32.mrf.mxu0
  %v2529 = vadd.f32 %v2480, %v2528
  %2530 = vmatmul.bf16.gmra.mxu0 %v805
  %v2531 = vpop.f32.mrf.mxu0
  %v2532 = vadd.f32 %v2483, %v2531
  %v2533 = vpop.f32.mrf.mxu0
  %v2534 = vadd.f32 %v2485, %v2533
  %2535 = vmatmul.bf16.gmra.mxu0 %v821
  %v2536 = vpop.f32.mrf.mxu0
  %v2537 = vadd.f32 %v2488, %v2536
  %v2538 = vpop.f32.mrf.mxu0
  %v2539 = vadd.f32 %v2490, %v2538
  %2540 = vmatmul.bf16.gmra.mxu0 %v837
  %v2541 = vpop.f32.mrf.mxu0
  %v2542 = vadd.f32 %v2493, %v2541
  %v2543 = vpop.f32.mrf.mxu0
  %v2544 = vadd.f32 %v2495, %v2543
  %2545 = vmatmul.bf16.gmra.mxu0 %v853
  %v2546 = vpop.f32.mrf.mxu0
  %v2547 = vadd.f32 %v2498, %v2546
  %v2548 = vpop.f32.mrf.mxu0
  %v2549 = vadd.f32 %v2500, %v2548
  %2550 = vmatmul.bf16.gmra.mxu0 %v869
  %v2551 = vpop.f32.mrf.mxu0
  %v2552 = vadd.f32 %v2503, %v2551
  %v2553 = vpop.f32.mrf.mxu0
  %v2554 = vadd.f32 %v2505, %v2553
  %2555 = vmatmul.bf16.gmra.mxu0 %v885
  %v2556 = vpop.f32.mrf.mxu0
  %v2557 = vadd.f32 %v2508, %v2556
  %v2558 = vpop.f32.mrf.mxu0
  %v2559 = vadd.f32 %v2510, %v2558
  %2560 = vmatmul.bf16.gmra.mxu0 %v901
  %v2561 = vpop.f32.mrf.mxu0
  %v2562 = vadd.f32 %v2513, %v2561
  %v2563 = vpop.f32.mrf.mxu0
  %v2564 = vadd.f32 %v2515, %v2563
  %2565 = vdwg.mxu0
  %2566 = vmatpush.bf16.msra.mxu0 %v1903
  %2567 = vmatpush.bf16.msra.mxu0 %v1901
  %2568 = vmatpush.bf16.msra.mxu0 %v1899
  %2569 = vmatpush.bf16.msra.mxu0 %v1897
  %2570 = vmatpush.bf16.msra.mxu0 %v1895
  %2571 = vmatpush.bf16.msra.mxu0 %v1893
  %2572 = vmatpush.bf16.msra.mxu0 %v1891
  %2573 = vmatpush.bf16.msra.mxu0 %v1889
  %2574 = vmatmul.bf16.gmra.mxu0 %v790
  %v2575 = vpop.f32.mrf.mxu0
  %v2576 = vadd.f32 %v2527, %v2575
  %v2577 = vpop.f32.mrf.mxu0
  %v2578 = vadd.f32 %v2529, %v2577
  %2579 = vmatmul.bf16.gmra.mxu0 %v806
  %v2580 = vpop.f32.mrf.mxu0
  %v2581 = vadd.f32 %v2532, %v2580
  %v2582 = vpop.f32.mrf.mxu0
  %v2583 = vadd.f32 %v2534, %v2582
  %2584 = vmatmul.bf16.gmra.mxu0 %v822
  %v2585 = vpop.f32.mrf.mxu0
  %v2586 = vadd.f32 %v2537, %v2585
  %v2587 = vpop.f32.mrf.mxu0
  %v2588 = vadd.f32 %v2539, %v2587
  %2589 = vmatmul.bf16.gmra.mxu0 %v838
  %v2590 = vpop.f32.mrf.mxu0
  %v2591 = vadd.f32 %v2542, %v2590
  %v2592 = vpop.f32.mrf.mxu0
  %v2593 = vadd.f32 %v2544, %v2592
  %2594 = vmatmul.bf16.gmra.mxu0 %v854
  %v2595 = vpop.f32.mrf.mxu0
  %v2596 = vadd.f32 %v2547, %v2595
  %v2597 = vpop.f32.mrf.mxu0
  %v2598 = vadd.f32 %v2549, %v2597
  %2599 = vmatmul.bf16.gmra.mxu0 %v870
  %v2600 = vpop.f32.mrf.mxu0
  %v2601 = vadd.f32 %v2552, %v2600
  %v2602 = vpop.f32.mrf.mxu0
  %v2603 = vadd.f32 %v2554, %v2602
  %2604 = vmatmul.bf16.gmra.mxu0 %v886
  %v2605 = vpop.f32.mrf.mxu0
  %v2606 = vadd.f32 %v2557, %v2605
  %v2607 = vpop.f32.mrf.mxu0
  %v2608 = vadd.f32 %v2559, %v2607
  %2609 = vmatmul.bf16.gmra.mxu0 %v902
  %v2610 = vpop.f32.mrf.mxu0
  %v2611 = vadd.f32 %v2562, %v2610
  %v2612 = vpop.f32.mrf.mxu0
  %v2613 = vadd.f32 %v2564, %v2612
  %2614 = vdwg.mxu0
  %2615 = vmatpush.bf16.msra.mxu0 %v1919
  %2616 = vmatpush.bf16.msra.mxu0 %v1917
  %2617 = vmatpush.bf16.msra.mxu0 %v1915
  %2618 = vmatpush.bf16.msra.mxu0 %v1913
  %2619 = vmatpush.bf16.msra.mxu0 %v1911
  %2620 = vmatpush.bf16.msra.mxu0 %v1909
  %2621 = vmatpush.bf16.msra.mxu0 %v1907
  %2622 = vmatpush.bf16.msra.mxu0 %v1905
  %2623 = vmatmul.bf16.gmra.mxu0 %v791
  %v2624 = vpop.f32.mrf.mxu0
  %v2625 = vadd.f32 %v2576, %v2624
  %v2626 = vpop.f32.mrf.mxu0
  %v2627 = vadd.f32 %v2578, %v2626
  %2628 = vmatmul.bf16.gmra.mxu0 %v807
  %v2629 = vpop.f32.mrf.mxu0
  %v2630 = vadd.f32 %v2581, %v2629
  %v2631 = vpop.f32.mrf.mxu0
  %v2632 = vadd.f32 %v2583, %v2631
  %2633 = vmatmul.bf16.gmra.mxu0 %v823
  %v2634 = vpop.f32.mrf.mxu0
  %v2635 = vadd.f32 %v2586, %v2634
  %v2636 = vpop.f32.mrf.mxu0
  %v2637 = vadd.f32 %v2588, %v2636
  %2638 = vmatmul.bf16.gmra.mxu0 %v839
  %v2639 = vpop.f32.mrf.mxu0
  %v2640 = vadd.f32 %v2591, %v2639
  %v2641 = vpop.f32.mrf.mxu0
  %v2642 = vadd.f32 %v2593, %v2641
  %2643 = vmatmul.bf16.gmra.mxu0 %v855
  %v2644 = vpop.f32.mrf.mxu0
  %v2645 = vadd.f32 %v2596, %v2644
  %v2646 = vpop.f32.mrf.mxu0
  %v2647 = vadd.f32 %v2598, %v2646
  %2648 = vmatmul.bf16.gmra.mxu0 %v871
  %v2649 = vpop.f32.mrf.mxu0
  %v2650 = vadd.f32 %v2601, %v2649
  %v2651 = vpop.f32.mrf.mxu0
  %v2652 = vadd.f32 %v2603, %v2651
  %2653 = vmatmul.bf16.gmra.mxu0 %v887
  %v2654 = vpop.f32.mrf.mxu0
  %v2655 = vadd.f32 %v2606, %v2654
  %v2656 = vpop.f32.mrf.mxu0
  %v2657 = vadd.f32 %v2608, %v2656
  %2658 = vmatmul.bf16.gmra.mxu0 %v903
  %v2659 = vpop.f32.mrf.mxu0
  %v2660 = vadd.f32 %v2611, %v2659
  %v2661 = vpop.f32.mrf.mxu0
  %v2662 = vadd.f32 %v2613, %v2661
  %2663 = vdwg.mxu0
  %2664 = vmatpush.bf16.msra.mxu0 %v1935
  %2665 = vmatpush.bf16.msra.mxu0 %v1933
  %2666 = vmatpush.bf16.msra.mxu0 %v1931
  %2667 = vmatpush.bf16.msra.mxu0 %v1929
  %2668 = vmatpush.bf16.msra.mxu0 %v1927
  %2669 = vmatpush.bf16.msra.mxu0 %v1925
  %2670 = vmatpush.bf16.msra.mxu0 %v1923
  %2671 = vmatpush.bf16.msra.mxu0 %v1921
  %2672 = vmatmul.bf16.gmra.mxu0 %v792
  %v2673 = vpop.f32.mrf.mxu0
  %v2674 = vadd.f32 %v2625, %v2673
  %v2675 = vpop.f32.mrf.mxu0
  %v2676 = vadd.f32 %v2627, %v2675
  %2677 = vmatmul.bf16.gmra.mxu0 %v808
  %v2678 = vpop.f32.mrf.mxu0
  %v2679 = vadd.f32 %v2630, %v2678
  %v2680 = vpop.f32.mrf.mxu0
  %v2681 = vadd.f32 %v2632, %v2680
  %2682 = vmatmul.bf16.gmra.mxu0 %v824
  %v2683 = vpop.f32.mrf.mxu0
  %v2684 = vadd.f32 %v2635, %v2683
  %v2685 = vpop.f32.mrf.mxu0
  %v2686 = vadd.f32 %v2637, %v2685
  %2687 = vmatmul.bf16.gmra.mxu0 %v840
  %v2688 = vpop.f32.mrf.mxu0
  %v2689 = vadd.f32 %v2640, %v2688
  %v2690 = vpop.f32.mrf.mxu0
  %v2691 = vadd.f32 %v2642, %v2690
  %2692 = vmatmul.bf16.gmra.mxu0 %v856
  %v2693 = vpop.f32.mrf.mxu0
  %v2694 = vadd.f32 %v2645, %v2693
  %v2695 = vpop.f32.mrf.mxu0
  %v2696 = vadd.f32 %v2647, %v2695
  %2697 = vmatmul.bf16.gmra.mxu0 %v872
  %v2698 = vpop.f32.mrf.mxu0
  %v2699 = vadd.f32 %v2650, %v2698
  %v2700 = vpop.f32.mrf.mxu0
  %v2701 = vadd.f32 %v2652, %v2700
  %2702 = vmatmul.bf16.gmra.mxu0 %v888
  %v2703 = vpop.f32.mrf.mxu0
  %v2704 = vadd.f32 %v2655, %v2703
  %v2705 = vpop.f32.mrf.mxu0
  %v2706 = vadd.f32 %v2657, %v2705
  %2707 = vmatmul.bf16.gmra.mxu0 %v904
  %v2708 = vpop.f32.mrf.mxu0
  %v2709 = vadd.f32 %v2660, %v2708
  %v2710 = vpop.f32.mrf.mxu0
  %v2711 = vadd.f32 %v2662, %v2710
  %2712 = vdwg.mxu0
  %2713 = vmatpush.bf16.msra.mxu0 %v1951
  %2714 = vmatpush.bf16.msra.mxu0 %v1949
  %2715 = vmatpush.bf16.msra.mxu0 %v1947
  %2716 = vmatpush.bf16.msra.mxu0 %v1945
  %2717 = vmatpush.bf16.msra.mxu0 %v1943
  %2718 = vmatpush.bf16.msra.mxu0 %v1941
  %2719 = vmatpush.bf16.msra.mxu0 %v1939
  %2720 = vmatpush.bf16.msra.mxu0 %v1937
  %2721 = vmatmul.bf16.gmra.mxu0 %v793
  %v2722 = vpop.f32.mrf.mxu0
  %v2723 = vadd.f32 %v2674, %v2722
  %v2724 = vpop.f32.mrf.mxu0
  %v2725 = vadd.f32 %v2676, %v2724
  %2726 = vmatmul.bf16.gmra.mxu0 %v809
  %v2727 = vpop.f32.mrf.mxu0
  %v2728 = vadd.f32 %v2679, %v2727
  %v2729 = vpop.f32.mrf.mxu0
  %v2730 = vadd.f32 %v2681, %v2729
  %2731 = vmatmul.bf16.gmra.mxu0 %v825
  %v2732 = vpop.f32.mrf.mxu0
  %v2733 = vadd.f32 %v2684, %v2732
  %v2734 = vpop.f32.mrf.mxu0
  %v2735 = vadd.f32 %v2686, %v2734
  %2736 = vmatmul.bf16.gmra.mxu0 %v841
  %v2737 = vpop.f32.mrf.mxu0
  %v2738 = vadd.f32 %v2689, %v2737
  %v2739 = vpop.f32.mrf.mxu0
  %v2740 = vadd.f32 %v2691, %v2739
  %2741 = vmatmul.bf16.gmra.mxu0 %v857
  %v2742 = vpop.f32.mrf.mxu0
  %v2743 = vadd.f32 %v2694, %v2742
  %v2744 = vpop.f32.mrf.mxu0
  %v2745 = vadd.f32 %v2696, %v2744
  %2746 = vmatmul.bf16.gmra.mxu0 %v873
  %v2747 = vpop.f32.mrf.mxu0
  %v2748 = vadd.f32 %v2699, %v2747
  %v2749 = vpop.f32.mrf.mxu0
  %v2750 = vadd.f32 %v2701, %v2749
  %2751 = vmatmul.bf16.gmra.mxu0 %v889
  %v2752 = vpop.f32.mrf.mxu0
  %v2753 = vadd.f32 %v2704, %v2752
  %v2754 = vpop.f32.mrf.mxu0
  %v2755 = vadd.f32 %v2706, %v2754
  %2756 = vmatmul.bf16.gmra.mxu0 %v905
  %v2757 = vpop.f32.mrf.mxu0
  %v2758 = vadd.f32 %v2709, %v2757
  %v2759 = vpop.f32.mrf.mxu0
  %v2760 = vadd.f32 %v2711, %v2759
  %2761 = vdwg.mxu0
  %2762 = vmatpush.bf16.msra.mxu0 %v1967
  %2763 = vmatpush.bf16.msra.mxu0 %v1965
  %2764 = vmatpush.bf16.msra.mxu0 %v1963
  %2765 = vmatpush.bf16.msra.mxu0 %v1961
  %2766 = vmatpush.bf16.msra.mxu0 %v1959
  %2767 = vmatpush.bf16.msra.mxu0 %v1957
  %2768 = vmatpush.bf16.msra.mxu0 %v1955
  %2769 = vmatpush.bf16.msra.mxu0 %v1953
  %2770 = vmatmul.bf16.gmra.mxu0 %v794
  %v2771 = vpop.f32.mrf.mxu0
  %v2772 = vadd.f32 %v2723, %v2771
  %v2773 = vpop.f32.mrf.mxu0
  %v2774 = vadd.f32 %v2725, %v2773
  %2775 = vmatmul.bf16.gmra.mxu0 %v810
  %v2776 = vpop.f32.mrf.mxu0
  %v2777 = vadd.f32 %v2728, %v2776
  %v2778 = vpop.f32.mrf.mxu0
  %v2779 = vadd.f32 %v2730, %v2778
  %2780 = vmatmul.bf16.gmra.mxu0 %v826
  %v2781 = vpop.f32.mrf.mxu0
  %v2782 = vadd.f32 %v2733, %v2781
  %v2783 = vpop.f32.mrf.mxu0
  %v2784 = vadd.f32 %v2735, %v2783
  %2785 = vmatmul.bf16.gmra.mxu0 %v842
  %v2786 = vpop.f32.mrf.mxu0
  %v2787 = vadd.f32 %v2738, %v2786
  %v2788 = vpop.f32.mrf.mxu0
  %v2789 = vadd.f32 %v2740, %v2788
  %2790 = vmatmul.bf16.gmra.mxu0 %v858
  %v2791 = vpop.f32.mrf.mxu0
  %v2792 = vadd.f32 %v2743, %v2791
  %v2793 = vpop.f32.mrf.mxu0
  %v2794 = vadd.f32 %v2745, %v2793
  %2795 = vmatmul.bf16.gmra.mxu0 %v874
  %v2796 = vpop.f32.mrf.mxu0
  %v2797 = vadd.f32 %v2748, %v2796
  %v2798 = vpop.f32.mrf.mxu0
  %v2799 = vadd.f32 %v2750, %v2798
  %2800 = vmatmul.bf16.gmra.mxu0 %v890
  %v2801 = vpop.f32.mrf.mxu0
  %v2802 = vadd.f32 %v2753, %v2801
  %v2803 = vpop.f32.mrf.mxu0
  %v2804 = vadd.f32 %v2755, %v2803
  %2805 = vmatmul.bf16.gmra.mxu0 %v906
  %v2806 = vpop.f32.mrf.mxu0
  %v2807 = vadd.f32 %v2758, %v2806
  %v2808 = vpop.f32.mrf.mxu0
  %v2809 = vadd.f32 %v2760, %v2808
  %2810 = vdwg.mxu0
  %2811 = vmatpush.bf16.msra.mxu0 %v1983
  %2812 = vmatpush.bf16.msra.mxu0 %v1981
  %2813 = vmatpush.bf16.msra.mxu0 %v1979
  %2814 = vmatpush.bf16.msra.mxu0 %v1977
  %2815 = vmatpush.bf16.msra.mxu0 %v1975
  %2816 = vmatpush.bf16.msra.mxu0 %v1973
  %2817 = vmatpush.bf16.msra.mxu0 %v1971
  %2818 = vmatpush.bf16.msra.mxu0 %v1969
  %2819 = vmatmul.bf16.gmra.mxu0 %v795
  %v2820 = vpop.f32.mrf.mxu0
  %v2821 = vadd.f32 %v2772, %v2820
  %v2822 = vpop.f32.mrf.mxu0
  %v2823 = vadd.f32 %v2774, %v2822
  %2824 = vmatmul.bf16.gmra.mxu0 %v811
  %v2825 = vpop.f32.mrf.mxu0
  %v2826 = vadd.f32 %v2777, %v2825
  %v2827 = vpop.f32.mrf.mxu0
  %v2828 = vadd.f32 %v2779, %v2827
  %2829 = vmatmul.bf16.gmra.mxu0 %v827
  %v2830 = vpop.f32.mrf.mxu0
  %v2831 = vadd.f32 %v2782, %v2830
  %v2832 = vpop.f32.mrf.mxu0
  %v2833 = vadd.f32 %v2784, %v2832
  %2834 = vmatmul.bf16.gmra.mxu0 %v843
  %v2835 = vpop.f32.mrf.mxu0
  %v2836 = vadd.f32 %v2787, %v2835
  %v2837 = vpop.f32.mrf.mxu0
  %v2838 = vadd.f32 %v2789, %v2837
  %2839 = vmatmul.bf16.gmra.mxu0 %v859
  %v2840 = vpop.f32.mrf.mxu0
  %v2841 = vadd.f32 %v2792, %v2840
  %v2842 = vpop.f32.mrf.mxu0
  %v2843 = vadd.f32 %v2794, %v2842
  %2844 = vmatmul.bf16.gmra.mxu0 %v875
  %v2845 = vpop.f32.mrf.mxu0
  %v2846 = vadd.f32 %v2797, %v2845
  %v2847 = vpop.f32.mrf.mxu0
  %v2848 = vadd.f32 %v2799, %v2847
  %2849 = vmatmul.bf16.gmra.mxu0 %v891
  %v2850 = vpop.f32.mrf.mxu0
  %v2851 = vadd.f32 %v2802, %v2850
  %v2852 = vpop.f32.mrf.mxu0
  %v2853 = vadd.f32 %v2804, %v2852
  %2854 = vmatmul.bf16.gmra.mxu0 %v907
  %v2855 = vpop.f32.mrf.mxu0
  %v2856 = vadd.f32 %v2807, %v2855
  %v2857 = vpop.f32.mrf.mxu0
  %v2858 = vadd.f32 %v2809, %v2857
  %2859 = vdwg.mxu0
  %2860 = vmatpush.bf16.msra.mxu0 %v1999
  %2861 = vmatpush.bf16.msra.mxu0 %v1997
  %2862 = vmatpush.bf16.msra.mxu0 %v1995
  %2863 = vmatpush.bf16.msra.mxu0 %v1993
  %2864 = vmatpush.bf16.msra.mxu0 %v1991
  %2865 = vmatpush.bf16.msra.mxu0 %v1989
  %2866 = vmatpush.bf16.msra.mxu0 %v1987
  %2867 = vmatpush.bf16.msra.mxu0 %v1985
  %2868 = vmatmul.bf16.gmra.mxu0 %v796
  %v2869 = vpop.f32.mrf.mxu0
  %v2870 = vadd.f32 %v2821, %v2869
  %v2871 = vpop.f32.mrf.mxu0
  %v2872 = vadd.f32 %v2823, %v2871
  %2873 = vmatmul.bf16.gmra.mxu0 %v812
  %v2874 = vpop.f32.mrf.mxu0
  %v2875 = vadd.f32 %v2826, %v2874
  %v2876 = vpop.f32.mrf.mxu0
  %v2877 = vadd.f32 %v2828, %v2876
  %2878 = vmatmul.bf16.gmra.mxu0 %v828
  %v2879 = vpop.f32.mrf.mxu0
  %v2880 = vadd.f32 %v2831, %v2879
  %v2881 = vpop.f32.mrf.mxu0
  %v2882 = vadd.f32 %v2833, %v2881
  %2883 = vmatmul.bf16.gmra.mxu0 %v844
  %v2884 = vpop.f32.mrf.mxu0
  %v2885 = vadd.f32 %v2836, %v2884
  %v2886 = vpop.f32.mrf.mxu0
  %v2887 = vadd.f32 %v2838, %v2886
  %2888 = vmatmul.bf16.gmra.mxu0 %v860
  %v2889 = vpop.f32.mrf.mxu0
  %v2890 = vadd.f32 %v2841, %v2889
  %v2891 = vpop.f32.mrf.mxu0
  %v2892 = vadd.f32 %v2843, %v2891
  %2893 = vmatmul.bf16.gmra.mxu0 %v876
  %v2894 = vpop.f32.mrf.mxu0
  %v2895 = vadd.f32 %v2846, %v2894
  %v2896 = vpop.f32.mrf.mxu0
  %v2897 = vadd.f32 %v2848, %v2896
  %2898 = vmatmul.bf16.gmra.mxu0 %v892
  %v2899 = vpop.f32.mrf.mxu0
  %v2900 = vadd.f32 %v2851, %v2899
  %v2901 = vpop.f32.mrf.mxu0
  %v2902 = vadd.f32 %v2853, %v2901
  %2903 = vmatmul.bf16.gmra.mxu0 %v908
  %v2904 = vpop.f32.mrf.mxu0
  %v2905 = vadd.f32 %v2856, %v2904
  %v2906 = vpop.f32.mrf.mxu0
  %v2907 = vadd.f32 %v2858, %v2906
  %2908 = vdwg.mxu0
  %2909 = vmatpush.bf16.msra.mxu0 %v2015
  %2910 = vmatpush.bf16.msra.mxu0 %v2013
  %2911 = vmatpush.bf16.msra.mxu0 %v2011
  %2912 = vmatpush.bf16.msra.mxu0 %v2009
  %2913 = vmatpush.bf16.msra.mxu0 %v2007
  %2914 = vmatpush.bf16.msra.mxu0 %v2005
  %2915 = vmatpush.bf16.msra.mxu0 %v2003
  %2916 = vmatpush.bf16.msra.mxu0 %v2001
  %2917 = vmatmul.bf16.gmra.mxu0 %v797
  %v2918 = vpop.f32.mrf.mxu0
  %v2919 = vadd.f32 %v2870, %v2918
  %v2920 = vpop.f32.mrf.mxu0
  %v2921 = vadd.f32 %v2872, %v2920
  %2922 = vmatmul.bf16.gmra.mxu0 %v813
  %v2923 = vpop.f32.mrf.mxu0
  %v2924 = vadd.f32 %v2875, %v2923
  %v2925 = vpop.f32.mrf.mxu0
  %v2926 = vadd.f32 %v2877, %v2925
  %2927 = vmatmul.bf16.gmra.mxu0 %v829
  %v2928 = vpop.f32.mrf.mxu0
  %v2929 = vadd.f32 %v2880, %v2928
  %v2930 = vpop.f32.mrf.mxu0
  %v2931 = vadd.f32 %v2882, %v2930
  %2932 = vmatmul.bf16.gmra.mxu0 %v845
  %v2933 = vpop.f32.mrf.mxu0
  %v2934 = vadd.f32 %v2885, %v2933
  %v2935 = vpop.f32.mrf.mxu0
  %v2936 = vadd.f32 %v2887, %v2935
  %2937 = vmatmul.bf16.gmra.mxu0 %v861
  %v2938 = vpop.f32.mrf.mxu0
  %v2939 = vadd.f32 %v2890, %v2938
  %v2940 = vpop.f32.mrf.mxu0
  %v2941 = vadd.f32 %v2892, %v2940
  %2942 = vmatmul.bf16.gmra.mxu0 %v877
  %v2943 = vpop.f32.mrf.mxu0
  %v2944 = vadd.f32 %v2895, %v2943
  %v2945 = vpop.f32.mrf.mxu0
  %v2946 = vadd.f32 %v2897, %v2945
  %2947 = vmatmul.bf16.gmra.mxu0 %v893
  %v2948 = vpop.f32.mrf.mxu0
  %v2949 = vadd.f32 %v2900, %v2948
  %v2950 = vpop.f32.mrf.mxu0
  %v2951 = vadd.f32 %v2902, %v2950
  %2952 = vmatmul.bf16.gmra.mxu0 %v909
  %v2953 = vpop.f32.mrf.mxu0
  %v2954 = vadd.f32 %v2905, %v2953
  %v2955 = vpop.f32.mrf.mxu0
  %v2956 = vadd.f32 %v2907, %v2955
  %2957 = vdwg.mxu0
  %2958 = vmatpush.bf16.msra.mxu0 %v2031
  %2959 = vmatpush.bf16.msra.mxu0 %v2029
  %2960 = vmatpush.bf16.msra.mxu0 %v2027
  %2961 = vmatpush.bf16.msra.mxu0 %v2025
  %2962 = vmatpush.bf16.msra.mxu0 %v2023
  %2963 = vmatpush.bf16.msra.mxu0 %v2021
  %2964 = vmatpush.bf16.msra.mxu0 %v2019
  %2965 = vmatpush.bf16.msra.mxu0 %v2017
  %2966 = vmatmul.bf16.gmra.mxu0 %v798
  %v2967 = vpop.f32.mrf.mxu0
  %v2968 = vadd.f32 %v2919, %v2967
  %v2969 = vpop.f32.mrf.mxu0
  %v2970 = vadd.f32 %v2921, %v2969
  %2971 = vmatmul.bf16.gmra.mxu0 %v814
  %v2972 = vpop.f32.mrf.mxu0
  %v2973 = vadd.f32 %v2924, %v2972
  %v2974 = vpop.f32.mrf.mxu0
  %v2975 = vadd.f32 %v2926, %v2974
  %2976 = vmatmul.bf16.gmra.mxu0 %v830
  %v2977 = vpop.f32.mrf.mxu0
  %v2978 = vadd.f32 %v2929, %v2977
  %v2979 = vpop.f32.mrf.mxu0
  %v2980 = vadd.f32 %v2931, %v2979
  %2981 = vmatmul.bf16.gmra.mxu0 %v846
  %v2982 = vpop.f32.mrf.mxu0
  %v2983 = vadd.f32 %v2934, %v2982
  %v2984 = vpop.f32.mrf.mxu0
  %v2985 = vadd.f32 %v2936, %v2984
  %2986 = vmatmul.bf16.gmra.mxu0 %v862
  %v2987 = vpop.f32.mrf.mxu0
  %v2988 = vadd.f32 %v2939, %v2987
  %v2989 = vpop.f32.mrf.mxu0
  %v2990 = vadd.f32 %v2941, %v2989
  %2991 = vmatmul.bf16.gmra.mxu0 %v878
  %v2992 = vpop.f32.mrf.mxu0
  %v2993 = vadd.f32 %v2944, %v2992
  %v2994 = vpop.f32.mrf.mxu0
  %v2995 = vadd.f32 %v2946, %v2994
  %2996 = vmatmul.bf16.gmra.mxu0 %v894
  %v2997 = vpop.f32.mrf.mxu0
  %v2998 = vadd.f32 %v2949, %v2997
  %v2999 = vpop.f32.mrf.mxu0
  %v3000 = vadd.f32 %v2951, %v2999
  %3001 = vmatmul.bf16.gmra.mxu0 %v910
  %v3002 = vpop.f32.mrf.mxu0
  %v3003 = vadd.f32 %v2954, %v3002
  %v3004 = vpop.f32.mrf.mxu0
  %v3005 = vadd.f32 %v2956, %v3004
  %3006 = vdwg.mxu0
  %3007 = vmatpush.bf16.msra.mxu0 %v2047
  %3008 = vmatpush.bf16.msra.mxu0 %v2045
  %3009 = vmatpush.bf16.msra.mxu0 %v2043
  %3010 = vmatpush.bf16.msra.mxu0 %v2041
  %3011 = vmatpush.bf16.msra.mxu0 %v2039
  %3012 = vmatpush.bf16.msra.mxu0 %v2037
  %3013 = vmatpush.bf16.msra.mxu0 %v2035
  %3014 = vmatpush.bf16.msra.mxu0 %v2033
  %3015 = vmatmul.bf16.gmra.mxu0 %v799
  %v3016 = vpop.f32.mrf.mxu0
  %v3017 = vadd.f32 %v2968, %v3016
  %v3018 = vpop.f32.mrf.mxu0
  %v3019 = vadd.f32 %v2970, %v3018
  %3020 = vmatmul.bf16.gmra.mxu0 %v815
  %v3021 = vpop.f32.mrf.mxu0
  %v3022 = vadd.f32 %v2973, %v3021
  %v3023 = vpop.f32.mrf.mxu0
  %v3024 = vadd.f32 %v2975, %v3023
  %3025 = vmatmul.bf16.gmra.mxu0 %v831
  %v3026 = vpop.f32.mrf.mxu0
  %v3027 = vadd.f32 %v2978, %v3026
  %v3028 = vpop.f32.mrf.mxu0
  %v3029 = vadd.f32 %v2980, %v3028
  %3030 = vmatmul.bf16.gmra.mxu0 %v847
  %v3031 = vpop.f32.mrf.mxu0
  %v3032 = vadd.f32 %v2983, %v3031
  %v3033 = vpop.f32.mrf.mxu0
  %v3034 = vadd.f32 %v2985, %v3033
  %3035 = vmatmul.bf16.gmra.mxu0 %v863
  %v3036 = vpop.f32.mrf.mxu0
  %v3037 = vadd.f32 %v2988, %v3036
  %v3038 = vpop.f32.mrf.mxu0
  %v3039 = vadd.f32 %v2990, %v3038
  %3040 = vmatmul.bf16.gmra.mxu0 %v879
  %v3041 = vpop.f32.mrf.mxu0
  %v3042 = vadd.f32 %v2993, %v3041
  %v3043 = vpop.f32.mrf.mxu0
  %v3044 = vadd.f32 %v2995, %v3043
  %3045 = vmatmul.bf16.gmra.mxu0 %v895
  %v3046 = vpop.f32.mrf.mxu0
  %v3047 = vadd.f32 %v2998, %v3046
  %v3048 = vpop.f32.mrf.mxu0
  %v3049 = vadd.f32 %v3000, %v3048
  %3050 = vmatmul.bf16.gmra.mxu0 %v911
  %v3051 = vpop.f32.mrf.mxu0
  %v3052 = vadd.f32 %v3003, %v3051
  %v3053 = vpop.f32.mrf.mxu0
  %v3054 = vadd.f32 %v3005, %v3053
  %3055 = vdwg.mxu0
  %3056 = vmatpush.bf16.msra.mxu0 %v2063
  %3057 = vmatpush.bf16.msra.mxu0 %v2061
  %3058 = vmatpush.bf16.msra.mxu0 %v2059
  %3059 = vmatpush.bf16.msra.mxu0 %v2057
  %3060 = vmatpush.bf16.msra.mxu0 %v2055
  %3061 = vmatpush.bf16.msra.mxu0 %v2053
  %3062 = vmatpush.bf16.msra.mxu0 %v2051
  %3063 = vmatpush.bf16.msra.mxu0 %v2049
  %3064 = vmatmul.bf16.gmra.mxu0 %v800
  %v3065 = vpop.f32.mrf.mxu0
  %v3066 = vadd.f32 %v3017, %v3065
  %v3067 = vpop.f32.mrf.mxu0
  %v3068 = vadd.f32 %v3019, %v3067
  %3069 = vmatmul.bf16.gmra.mxu0 %v816
  %v3070 = vpop.f32.mrf.mxu0
  %v3071 = vadd.f32 %v3022, %v3070
  %v3072 = vpop.f32.mrf.mxu0
  %v3073 = vadd.f32 %v3024, %v3072
  %3074 = vmatmul.bf16.gmra.mxu0 %v832
  %v3075 = vpop.f32.mrf.mxu0
  %v3076 = vadd.f32 %v3027, %v3075
  %v3077 = vpop.f32.mrf.mxu0
  %v3078 = vadd.f32 %v3029, %v3077
  %3079 = vmatmul.bf16.gmra.mxu0 %v848
  %v3080 = vpop.f32.mrf.mxu0
  %v3081 = vadd.f32 %v3032, %v3080
  %v3082 = vpop.f32.mrf.mxu0
  %v3083 = vadd.f32 %v3034, %v3082
  %3084 = vmatmul.bf16.gmra.mxu0 %v864
  %v3085 = vpop.f32.mrf.mxu0
  %v3086 = vadd.f32 %v3037, %v3085
  %v3087 = vpop.f32.mrf.mxu0
  %v3088 = vadd.f32 %v3039, %v3087
  %3089 = vmatmul.bf16.gmra.mxu0 %v880
  %v3090 = vpop.f32.mrf.mxu0
  %v3091 = vadd.f32 %v3042, %v3090
  %v3092 = vpop.f32.mrf.mxu0
  %v3093 = vadd.f32 %v3044, %v3092
  %3094 = vmatmul.bf16.gmra.mxu0 %v896
  %v3095 = vpop.f32.mrf.mxu0
  %v3096 = vadd.f32 %v3047, %v3095
  %v3097 = vpop.f32.mrf.mxu0
  %v3098 = vadd.f32 %v3049, %v3097
  %3099 = vmatmul.bf16.gmra.mxu0 %v912
  %v3100 = vpop.f32.mrf.mxu0
  %v3101 = vadd.f32 %v3052, %v3100
  %v3102 = vpop.f32.mrf.mxu0
  %v3103 = vadd.f32 %v3054, %v3102
  %3104 = vdwg.mxu0
  %3105 = vmatpush.bf16.msra.mxu0 %v1824
  %3106 = vmatpush.bf16.msra.mxu0 %v1822
  %3107 = vmatpush.bf16.msra.mxu0 %v1820
  %3108 = vmatpush.bf16.msra.mxu0 %v1818
  %3109 = vmatpush.bf16.msra.mxu0 %v1816
  %3110 = vmatpush.bf16.msra.mxu0 %v1814
  %3111 = vmatpush.bf16.msra.mxu0 %v1812
  %3112 = vmatpush.bf16.msra.mxu0 %v1810
  %3113 = vmatmul.bf16.gmra.mxu0 %v785
  %v3114 = vpop.f32.mrf.mxu0
  %v3115 = vadd.f32 0.0, %v3114
  %v3116 = vpop.f32.mrf.mxu0
  %v3117 = vadd.f32 0.0, %v3116
  %3118 = vmatmul.bf16.gmra.mxu0 %v801
  %v3119 = vpop.f32.mrf.mxu0
  %v3120 = vadd.f32 0.0, %v3119
  %v3121 = vpop.f32.mrf.mxu0
  %v3122 = vadd.f32 0.0, %v3121
  %3123 = vmatmul.bf16.gmra.mxu0 %v817
  %v3124 = vpop.f32.mrf.mxu0
  %v3125 = vadd.f32 0.0, %v3124
  %v3126 = vpop.f32.mrf.mxu0
  %v3127 = vadd.f32 0.0, %v3126
  %3128 = vmatmul.bf16.gmra.mxu0 %v833
  %v3129 = vpop.f32.mrf.mxu0
  %v3130 = vadd.f32 0.0, %v3129
  %v3131 = vpop.f32.mrf.mxu0
  %v3132 = vadd.f32 0.0, %v3131
  %3133 = vmatmul.bf16.gmra.mxu0 %v849
  %v3134 = vpop.f32.mrf.mxu0
  %v3135 = vadd.f32 0.0, %v3134
  %v3136 = vpop.f32.mrf.mxu0
  %v3137 = vadd.f32 0.0, %v3136
  %3138 = vmatmul.bf16.gmra.mxu0 %v865
  %v3139 = vpop.f32.mrf.mxu0
  %v3140 = vadd.f32 0.0, %v3139
  %v3141 = vpop.f32.mrf.mxu0
  %v3142 = vadd.f32 0.0, %v3141
  %3143 = vmatmul.bf16.gmra.mxu0 %v881
  %v3144 = vpop.f32.mrf.mxu0
  %v3145 = vadd.f32 0.0, %v3144
  %v3146 = vpop.f32.mrf.mxu0
  %v3147 = vadd.f32 0.0, %v3146
  %3148 = vmatmul.bf16.gmra.mxu0 %v897
  %v3149 = vpop.f32.mrf.mxu0
  %v3150 = vadd.f32 0.0, %v3149
  %v3151 = vpop.f32.mrf.mxu0
  %v3152 = vadd.f32 0.0, %v3151
  %3153 = vdwg.mxu0
  %3154 = vmatpush.bf16.msra.mxu0 %v1840
  %3155 = vmatpush.bf16.msra.mxu0 %v1838
  %3156 = vmatpush.bf16.msra.mxu0 %v1836
  %3157 = vmatpush.bf16.msra.mxu0 %v1834
  %3158 = vmatpush.bf16.msra.mxu0 %v1832
  %3159 = vmatpush.bf16.msra.mxu0 %v1830
  %3160 = vmatpush.bf16.msra.mxu0 %v1828
  %3161 = vmatpush.bf16.msra.mxu0 %v1826
  %3162 = vmatmul.bf16.gmra.mxu0 %v786
  %v3163 = vpop.f32.mrf.mxu0
  %v3164 = vadd.f32 %v3115, %v3163
  %v3165 = vpop.f32.mrf.mxu0
  %v3166 = vadd.f32 %v3117, %v3165
  %3167 = vmatmul.bf16.gmra.mxu0 %v802
  %v3168 = vpop.f32.mrf.mxu0
  %v3169 = vadd.f32 %v3120, %v3168
  %v3170 = vpop.f32.mrf.mxu0
  %v3171 = vadd.f32 %v3122, %v3170
  %3172 = vmatmul.bf16.gmra.mxu0 %v818
  %v3173 = vpop.f32.mrf.mxu0
  %v3174 = vadd.f32 %v3125, %v3173
  %v3175 = vpop.f32.mrf.mxu0
  %v3176 = vadd.f32 %v3127, %v3175
  %3177 = vmatmul.bf16.gmra.mxu0 %v834
  %v3178 = vpop.f32.mrf.mxu0
  %v3179 = vadd.f32 %v3130, %v3178
  %v3180 = vpop.f32.mrf.mxu0
  %v3181 = vadd.f32 %v3132, %v3180
  %3182 = vmatmul.bf16.gmra.mxu0 %v850
  %v3183 = vpop.f32.mrf.mxu0
  %v3184 = vadd.f32 %v3135, %v3183
  %v3185 = vpop.f32.mrf.mxu0
  %v3186 = vadd.f32 %v3137, %v3185
  %3187 = vmatmul.bf16.gmra.mxu0 %v866
  %v3188 = vpop.f32.mrf.mxu0
  %v3189 = vadd.f32 %v3140, %v3188
  %v3190 = vpop.f32.mrf.mxu0
  %v3191 = vadd.f32 %v3142, %v3190
  %3192 = vmatmul.bf16.gmra.mxu0 %v882
  %v3193 = vpop.f32.mrf.mxu0
  %v3194 = vadd.f32 %v3145, %v3193
  %v3195 = vpop.f32.mrf.mxu0
  %v3196 = vadd.f32 %v3147, %v3195
  %3197 = vmatmul.bf16.gmra.mxu0 %v898
  %v3198 = vpop.f32.mrf.mxu0
  %v3199 = vadd.f32 %v3150, %v3198
  %v3200 = vpop.f32.mrf.mxu0
  %v3201 = vadd.f32 %v3152, %v3200
  %3202 = vdwg.mxu0
  %3203 = vmatpush.bf16.msra.mxu0 %v1856
  %3204 = vmatpush.bf16.msra.mxu0 %v1854
  %3205 = vmatpush.bf16.msra.mxu0 %v1852
  %3206 = vmatpush.bf16.msra.mxu0 %v1850
  %3207 = vmatpush.bf16.msra.mxu0 %v1848
  %3208 = vmatpush.bf16.msra.mxu0 %v1846
  %3209 = vmatpush.bf16.msra.mxu0 %v1844
  %3210 = vmatpush.bf16.msra.mxu0 %v1842
  %3211 = vmatmul.bf16.gmra.mxu0 %v787
  %v3212 = vpop.f32.mrf.mxu0
  %v3213 = vadd.f32 %v3164, %v3212
  %v3214 = vpop.f32.mrf.mxu0
  %v3215 = vadd.f32 %v3166, %v3214
  %3216 = vmatmul.bf16.gmra.mxu0 %v803
  %v3217 = vpop.f32.mrf.mxu0
  %v3218 = vadd.f32 %v3169, %v3217
  %v3219 = vpop.f32.mrf.mxu0
  %v3220 = vadd.f32 %v3171, %v3219
  %3221 = vmatmul.bf16.gmra.mxu0 %v819
  %v3222 = vpop.f32.mrf.mxu0
  %v3223 = vadd.f32 %v3174, %v3222
  %v3224 = vpop.f32.mrf.mxu0
  %v3225 = vadd.f32 %v3176, %v3224
  %3226 = vmatmul.bf16.gmra.mxu0 %v835
  %v3227 = vpop.f32.mrf.mxu0
  %v3228 = vadd.f32 %v3179, %v3227
  %v3229 = vpop.f32.mrf.mxu0
  %v3230 = vadd.f32 %v3181, %v3229
  %3231 = vmatmul.bf16.gmra.mxu0 %v851
  %v3232 = vpop.f32.mrf.mxu0
  %v3233 = vadd.f32 %v3184, %v3232
  %v3234 = vpop.f32.mrf.mxu0
  %v3235 = vadd.f32 %v3186, %v3234
  %3236 = vmatmul.bf16.gmra.mxu0 %v867
  %v3237 = vpop.f32.mrf.mxu0
  %v3238 = vadd.f32 %v3189, %v3237
  %v3239 = vpop.f32.mrf.mxu0
  %v3240 = vadd.f32 %v3191, %v3239
  %3241 = vmatmul.bf16.gmra.mxu0 %v883
  %v3242 = vpop.f32.mrf.mxu0
  %v3243 = vadd.f32 %v3194, %v3242
  %v3244 = vpop.f32.mrf.mxu0
  %v3245 = vadd.f32 %v3196, %v3244
  %3246 = vmatmul.bf16.gmra.mxu0 %v899
  %v3247 = vpop.f32.mrf.mxu0
  %v3248 = vadd.f32 %v3199, %v3247
  %v3249 = vpop.f32.mrf.mxu0
  %v3250 = vadd.f32 %v3201, %v3249
  %3251 = vdwg.mxu0
  %3252 = vmatpush.bf16.msra.mxu0 %v1872
  %3253 = vmatpush.bf16.msra.mxu0 %v1870
  %3254 = vmatpush.bf16.msra.mxu0 %v1868
  %3255 = vmatpush.bf16.msra.mxu0 %v1866
  %3256 = vmatpush.bf16.msra.mxu0 %v1864
  %3257 = vmatpush.bf16.msra.mxu0 %v1862
  %3258 = vmatpush.bf16.msra.mxu0 %v1860
  %3259 = vmatpush.bf16.msra.mxu0 %v1858
  %3260 = vmatmul.bf16.gmra.mxu0 %v788
  %v3261 = vpop.f32.mrf.mxu0
  %v3262 = vadd.f32 %v3213, %v3261
  %v3263 = vpop.f32.mrf.mxu0
  %v3264 = vadd.f32 %v3215, %v3263
  %3265 = vmatmul.bf16.gmra.mxu0 %v804
  %v3266 = vpop.f32.mrf.mxu0
  %v3267 = vadd.f32 %v3218, %v3266
  %v3268 = vpop.f32.mrf.mxu0
  %v3269 = vadd.f32 %v3220, %v3268
  %3270 = vmatmul.bf16.gmra.mxu0 %v820
  %v3271 = vpop.f32.mrf.mxu0
  %v3272 = vadd.f32 %v3223, %v3271
  %v3273 = vpop.f32.mrf.mxu0
  %v3274 = vadd.f32 %v3225, %v3273
  %3275 = vmatmul.bf16.gmra.mxu0 %v836
  %v3276 = vpop.f32.mrf.mxu0
  %v3277 = vadd.f32 %v3228, %v3276
  %v3278 = vpop.f32.mrf.mxu0
  %v3279 = vadd.f32 %v3230, %v3278
  %3280 = vmatmul.bf16.gmra.mxu0 %v852
  %v3281 = vpop.f32.mrf.mxu0
  %v3282 = vadd.f32 %v3233, %v3281
  %v3283 = vpop.f32.mrf.mxu0
  %v3284 = vadd.f32 %v3235, %v3283
  %3285 = vmatmul.bf16.gmra.mxu0 %v868
  %v3286 = vpop.f32.mrf.mxu0
  %v3287 = vadd.f32 %v3238, %v3286
  %v3288 = vpop.f32.mrf.mxu0
  %v3289 = vadd.f32 %v3240, %v3288
  %3290 = vmatmul.bf16.gmra.mxu0 %v884
  %v3291 = vpop.f32.mrf.mxu0
  %v3292 = vadd.f32 %v3243, %v3291
  %v3293 = vpop.f32.mrf.mxu0
  %v3294 = vadd.f32 %v3245, %v3293
  %3295 = vmatmul.bf16.gmra.mxu0 %v900
  %v3296 = vpop.f32.mrf.mxu0
  %v3297 = vadd.f32 %v3248, %v3296
  %v3298 = vpop.f32.mrf.mxu0
  %v3299 = vadd.f32 %v3250, %v3298
  %3300 = vdwg.mxu0
  %3301 = vmatpush.bf16.msra.mxu0 %v1888
  %3302 = vmatpush.bf16.msra.mxu0 %v1886
  %3303 = vmatpush.bf16.msra.mxu0 %v1884
  %3304 = vmatpush.bf16.msra.mxu0 %v1882
  %3305 = vmatpush.bf16.msra.mxu0 %v1880
  %3306 = vmatpush.bf16.msra.mxu0 %v1878
  %3307 = vmatpush.bf16.msra.mxu0 %v1876
  %3308 = vmatpush.bf16.msra.mxu0 %v1874
  %3309 = vmatmul.bf16.gmra.mxu0 %v789
  %v3310 = vpop.f32.mrf.mxu0
  %v3311 = vadd.f32 %v3262, %v3310
  %v3312 = vpop.f32.mrf.mxu0
  %v3313 = vadd.f32 %v3264, %v3312
  %3314 = vmatmul.bf16.gmra.mxu0 %v805
  %v3315 = vpop.f32.mrf.mxu0
  %v3316 = vadd.f32 %v3267, %v3315
  %v3317 = vpop.f32.mrf.mxu0
  %v3318 = vadd.f32 %v3269, %v3317
  %3319 = vmatmul.bf16.gmra.mxu0 %v821
  %v3320 = vpop.f32.mrf.mxu0
  %v3321 = vadd.f32 %v3272, %v3320
  %v3322 = vpop.f32.mrf.mxu0
  %v3323 = vadd.f32 %v3274, %v3322
  %3324 = vmatmul.bf16.gmra.mxu0 %v837
  %v3325 = vpop.f32.mrf.mxu0
  %v3326 = vadd.f32 %v3277, %v3325
  %v3327 = vpop.f32.mrf.mxu0
  %v3328 = vadd.f32 %v3279, %v3327
  %3329 = vmatmul.bf16.gmra.mxu0 %v853
  %v3330 = vpop.f32.mrf.mxu0
  %v3331 = vadd.f32 %v3282, %v3330
  %v3332 = vpop.f32.mrf.mxu0
  %v3333 = vadd.f32 %v3284, %v3332
  %3334 = vmatmul.bf16.gmra.mxu0 %v869
  %v3335 = vpop.f32.mrf.mxu0
  %v3336 = vadd.f32 %v3287, %v3335
  %v3337 = vpop.f32.mrf.mxu0
  %v3338 = vadd.f32 %v3289, %v3337
  %3339 = vmatmul.bf16.gmra.mxu0 %v885
  %v3340 = vpop.f32.mrf.mxu0
  %v3341 = vadd.f32 %v3292, %v3340
  %v3342 = vpop.f32.mrf.mxu0
  %v3343 = vadd.f32 %v3294, %v3342
  %3344 = vmatmul.bf16.gmra.mxu0 %v901
  %v3345 = vpop.f32.mrf.mxu0
  %v3346 = vadd.f32 %v3297, %v3345
  %v3347 = vpop.f32.mrf.mxu0
  %v3348 = vadd.f32 %v3299, %v3347
  %3349 = vdwg.mxu0
  %3350 = vmatpush.bf16.msra.mxu0 %v1904
  %3351 = vmatpush.bf16.msra.mxu0 %v1902
  %3352 = vmatpush.bf16.msra.mxu0 %v1900
  %3353 = vmatpush.bf16.msra.mxu0 %v1898
  %3354 = vmatpush.bf16.msra.mxu0 %v1896
  %3355 = vmatpush.bf16.msra.mxu0 %v1894
  %3356 = vmatpush.bf16.msra.mxu0 %v1892
  %3357 = vmatpush.bf16.msra.mxu0 %v1890
  %3358 = vmatmul.bf16.gmra.mxu0 %v790
  %v3359 = vpop.f32.mrf.mxu0
  %v3360 = vadd.f32 %v3311, %v3359
  %v3361 = vpop.f32.mrf.mxu0
  %v3362 = vadd.f32 %v3313, %v3361
  %3363 = vmatmul.bf16.gmra.mxu0 %v806
  %v3364 = vpop.f32.mrf.mxu0
  %v3365 = vadd.f32 %v3316, %v3364
  %v3366 = vpop.f32.mrf.mxu0
  %v3367 = vadd.f32 %v3318, %v3366
  %3368 = vmatmul.bf16.gmra.mxu0 %v822
  %v3369 = vpop.f32.mrf.mxu0
  %v3370 = vadd.f32 %v3321, %v3369
  %v3371 = vpop.f32.mrf.mxu0
  %v3372 = vadd.f32 %v3323, %v3371
  %3373 = vmatmul.bf16.gmra.mxu0 %v838
  %v3374 = vpop.f32.mrf.mxu0
  %v3375 = vadd.f32 %v3326, %v3374
  %v3376 = vpop.f32.mrf.mxu0
  %v3377 = vadd.f32 %v3328, %v3376
  %3378 = vmatmul.bf16.gmra.mxu0 %v854
  %v3379 = vpop.f32.mrf.mxu0
  %v3380 = vadd.f32 %v3331, %v3379
  %v3381 = vpop.f32.mrf.mxu0
  %v3382 = vadd.f32 %v3333, %v3381
  %3383 = vmatmul.bf16.gmra.mxu0 %v870
  %v3384 = vpop.f32.mrf.mxu0
  %v3385 = vadd.f32 %v3336, %v3384
  %v3386 = vpop.f32.mrf.mxu0
  %v3387 = vadd.f32 %v3338, %v3386
  %3388 = vmatmul.bf16.gmra.mxu0 %v886
  %v3389 = vpop.f32.mrf.mxu0
  %v3390 = vadd.f32 %v3341, %v3389
  %v3391 = vpop.f32.mrf.mxu0
  %v3392 = vadd.f32 %v3343, %v3391
  %3393 = vmatmul.bf16.gmra.mxu0 %v902
  %v3394 = vpop.f32.mrf.mxu0
  %v3395 = vadd.f32 %v3346, %v3394
  %v3396 = vpop.f32.mrf.mxu0
  %v3397 = vadd.f32 %v3348, %v3396
  %3398 = vdwg.mxu0
  %3399 = vmatpush.bf16.msra.mxu0 %v1920
  %3400 = vmatpush.bf16.msra.mxu0 %v1918
  %3401 = vmatpush.bf16.msra.mxu0 %v1916
  %3402 = vmatpush.bf16.msra.mxu0 %v1914
  %3403 = vmatpush.bf16.msra.mxu0 %v1912
  %3404 = vmatpush.bf16.msra.mxu0 %v1910
  %3405 = vmatpush.bf16.msra.mxu0 %v1908
  %3406 = vmatpush.bf16.msra.mxu0 %v1906
  %3407 = vmatmul.bf16.gmra.mxu0 %v791
  %v3408 = vpop.f32.mrf.mxu0
  %v3409 = vadd.f32 %v3360, %v3408
  %v3410 = vpop.f32.mrf.mxu0
  %v3411 = vadd.f32 %v3362, %v3410
  %3412 = vmatmul.bf16.gmra.mxu0 %v807
  %v3413 = vpop.f32.mrf.mxu0
  %v3414 = vadd.f32 %v3365, %v3413
  %v3415 = vpop.f32.mrf.mxu0
  %v3416 = vadd.f32 %v3367, %v3415
  %3417 = vmatmul.bf16.gmra.mxu0 %v823
  %v3418 = vpop.f32.mrf.mxu0
  %v3419 = vadd.f32 %v3370, %v3418
  %v3420 = vpop.f32.mrf.mxu0
  %v3421 = vadd.f32 %v3372, %v3420
  %3422 = vmatmul.bf16.gmra.mxu0 %v839
  %v3423 = vpop.f32.mrf.mxu0
  %v3424 = vadd.f32 %v3375, %v3423
  %v3425 = vpop.f32.mrf.mxu0
  %v3426 = vadd.f32 %v3377, %v3425
  %3427 = vmatmul.bf16.gmra.mxu0 %v855
  %v3428 = vpop.f32.mrf.mxu0
  %v3429 = vadd.f32 %v3380, %v3428
  %v3430 = vpop.f32.mrf.mxu0
  %v3431 = vadd.f32 %v3382, %v3430
  %3432 = vmatmul.bf16.gmra.mxu0 %v871
  %v3433 = vpop.f32.mrf.mxu0
  %v3434 = vadd.f32 %v3385, %v3433
  %v3435 = vpop.f32.mrf.mxu0
  %v3436 = vadd.f32 %v3387, %v3435
  %3437 = vmatmul.bf16.gmra.mxu0 %v887
  %v3438 = vpop.f32.mrf.mxu0
  %v3439 = vadd.f32 %v3390, %v3438
  %v3440 = vpop.f32.mrf.mxu0
  %v3441 = vadd.f32 %v3392, %v3440
  %3442 = vmatmul.bf16.gmra.mxu0 %v903
  %v3443 = vpop.f32.mrf.mxu0
  %v3444 = vadd.f32 %v3395, %v3443
  %v3445 = vpop.f32.mrf.mxu0
  %v3446 = vadd.f32 %v3397, %v3445
  %3447 = vdwg.mxu0
  %3448 = vmatpush.bf16.msra.mxu0 %v1936
  %3449 = vmatpush.bf16.msra.mxu0 %v1934
  %3450 = vmatpush.bf16.msra.mxu0 %v1932
  %3451 = vmatpush.bf16.msra.mxu0 %v1930
  %3452 = vmatpush.bf16.msra.mxu0 %v1928
  %3453 = vmatpush.bf16.msra.mxu0 %v1926
  %3454 = vmatpush.bf16.msra.mxu0 %v1924
  %3455 = vmatpush.bf16.msra.mxu0 %v1922
  %3456 = vmatmul.bf16.gmra.mxu0 %v792
  %v3457 = vpop.f32.mrf.mxu0
  %v3458 = vadd.f32 %v3409, %v3457
  %v3459 = vpop.f32.mrf.mxu0
  %v3460 = vadd.f32 %v3411, %v3459
  %3461 = vmatmul.bf16.gmra.mxu0 %v808
  %v3462 = vpop.f32.mrf.mxu0
  %v3463 = vadd.f32 %v3414, %v3462
  %v3464 = vpop.f32.mrf.mxu0
  %v3465 = vadd.f32 %v3416, %v3464
  %3466 = vmatmul.bf16.gmra.mxu0 %v824
  %v3467 = vpop.f32.mrf.mxu0
  %v3468 = vadd.f32 %v3419, %v3467
  %v3469 = vpop.f32.mrf.mxu0
  %v3470 = vadd.f32 %v3421, %v3469
  %3471 = vmatmul.bf16.gmra.mxu0 %v840
  %v3472 = vpop.f32.mrf.mxu0
  %v3473 = vadd.f32 %v3424, %v3472
  %v3474 = vpop.f32.mrf.mxu0
  %v3475 = vadd.f32 %v3426, %v3474
  %3476 = vmatmul.bf16.gmra.mxu0 %v856
  %v3477 = vpop.f32.mrf.mxu0
  %v3478 = vadd.f32 %v3429, %v3477
  %v3479 = vpop.f32.mrf.mxu0
  %v3480 = vadd.f32 %v3431, %v3479
  %3481 = vmatmul.bf16.gmra.mxu0 %v872
  %v3482 = vpop.f32.mrf.mxu0
  %v3483 = vadd.f32 %v3434, %v3482
  %v3484 = vpop.f32.mrf.mxu0
  %v3485 = vadd.f32 %v3436, %v3484
  %3486 = vmatmul.bf16.gmra.mxu0 %v888
  %v3487 = vpop.f32.mrf.mxu0
  %v3488 = vadd.f32 %v3439, %v3487
  %v3489 = vpop.f32.mrf.mxu0
  %v3490 = vadd.f32 %v3441, %v3489
  %3491 = vmatmul.bf16.gmra.mxu0 %v904
  %v3492 = vpop.f32.mrf.mxu0
  %v3493 = vadd.f32 %v3444, %v3492
  %v3494 = vpop.f32.mrf.mxu0
  %v3495 = vadd.f32 %v3446, %v3494
  %3496 = vdwg.mxu0
  %3497 = vmatpush.bf16.msra.mxu0 %v1952
  %3498 = vmatpush.bf16.msra.mxu0 %v1950
  %3499 = vmatpush.bf16.msra.mxu0 %v1948
  %3500 = vmatpush.bf16.msra.mxu0 %v1946
  %3501 = vmatpush.bf16.msra.mxu0 %v1944
  %3502 = vmatpush.bf16.msra.mxu0 %v1942
  %3503 = vmatpush.bf16.msra.mxu0 %v1940
  %3504 = vmatpush.bf16.msra.mxu0 %v1938
  %3505 = vmatmul.bf16.gmra.mxu0 %v793
  %v3506 = vpop.f32.mrf.mxu0
  %v3507 = vadd.f32 %v3458, %v3506
  %v3508 = vpop.f32.mrf.mxu0
  %v3509 = vadd.f32 %v3460, %v3508
  %3510 = vmatmul.bf16.gmra.mxu0 %v809
  %v3511 = vpop.f32.mrf.mxu0
  %v3512 = vadd.f32 %v3463, %v3511
  %v3513 = vpop.f32.mrf.mxu0
  %v3514 = vadd.f32 %v3465, %v3513
  %3515 = vmatmul.bf16.gmra.mxu0 %v825
  %v3516 = vpop.f32.mrf.mxu0
  %v3517 = vadd.f32 %v3468, %v3516
  %v3518 = vpop.f32.mrf.mxu0
  %v3519 = vadd.f32 %v3470, %v3518
  %3520 = vmatmul.bf16.gmra.mxu0 %v841
  %v3521 = vpop.f32.mrf.mxu0
  %v3522 = vadd.f32 %v3473, %v3521
  %v3523 = vpop.f32.mrf.mxu0
  %v3524 = vadd.f32 %v3475, %v3523
  %3525 = vmatmul.bf16.gmra.mxu0 %v857
  %v3526 = vpop.f32.mrf.mxu0
  %v3527 = vadd.f32 %v3478, %v3526
  %v3528 = vpop.f32.mrf.mxu0
  %v3529 = vadd.f32 %v3480, %v3528
  %3530 = vmatmul.bf16.gmra.mxu0 %v873
  %v3531 = vpop.f32.mrf.mxu0
  %v3532 = vadd.f32 %v3483, %v3531
  %v3533 = vpop.f32.mrf.mxu0
  %v3534 = vadd.f32 %v3485, %v3533
  %3535 = vmatmul.bf16.gmra.mxu0 %v889
  %v3536 = vpop.f32.mrf.mxu0
  %v3537 = vadd.f32 %v3488, %v3536
  %v3538 = vpop.f32.mrf.mxu0
  %v3539 = vadd.f32 %v3490, %v3538
  %3540 = vmatmul.bf16.gmra.mxu0 %v905
  %v3541 = vpop.f32.mrf.mxu0
  %v3542 = vadd.f32 %v3493, %v3541
  %v3543 = vpop.f32.mrf.mxu0
  %v3544 = vadd.f32 %v3495, %v3543
  %3545 = vdwg.mxu0
  %3546 = vmatpush.bf16.msra.mxu0 %v1968
  %3547 = vmatpush.bf16.msra.mxu0 %v1966
  %3548 = vmatpush.bf16.msra.mxu0 %v1964
  %3549 = vmatpush.bf16.msra.mxu0 %v1962
  %3550 = vmatpush.bf16.msra.mxu0 %v1960
  %3551 = vmatpush.bf16.msra.mxu0 %v1958
  %3552 = vmatpush.bf16.msra.mxu0 %v1956
  %3553 = vmatpush.bf16.msra.mxu0 %v1954
  %3554 = vmatmul.bf16.gmra.mxu0 %v794
  %v3555 = vpop.f32.mrf.mxu0
  %v3556 = vadd.f32 %v3507, %v3555
  %v3557 = vpop.f32.mrf.mxu0
  %v3558 = vadd.f32 %v3509, %v3557
  %3559 = vmatmul.bf16.gmra.mxu0 %v810
  %v3560 = vpop.f32.mrf.mxu0
  %v3561 = vadd.f32 %v3512, %v3560
  %v3562 = vpop.f32.mrf.mxu0
  %v3563 = vadd.f32 %v3514, %v3562
  %3564 = vmatmul.bf16.gmra.mxu0 %v826
  %v3565 = vpop.f32.mrf.mxu0
  %v3566 = vadd.f32 %v3517, %v3565
  %v3567 = vpop.f32.mrf.mxu0
  %v3568 = vadd.f32 %v3519, %v3567
  %3569 = vmatmul.bf16.gmra.mxu0 %v842
  %v3570 = vpop.f32.mrf.mxu0
  %v3571 = vadd.f32 %v3522, %v3570
  %v3572 = vpop.f32.mrf.mxu0
  %v3573 = vadd.f32 %v3524, %v3572
  %3574 = vmatmul.bf16.gmra.mxu0 %v858
  %v3575 = vpop.f32.mrf.mxu0
  %v3576 = vadd.f32 %v3527, %v3575
  %v3577 = vpop.f32.mrf.mxu0
  %v3578 = vadd.f32 %v3529, %v3577
  %3579 = vmatmul.bf16.gmra.mxu0 %v874
  %v3580 = vpop.f32.mrf.mxu0
  %v3581 = vadd.f32 %v3532, %v3580
  %v3582 = vpop.f32.mrf.mxu0
  %v3583 = vadd.f32 %v3534, %v3582
  %3584 = vmatmul.bf16.gmra.mxu0 %v890
  %v3585 = vpop.f32.mrf.mxu0
  %v3586 = vadd.f32 %v3537, %v3585
  %v3587 = vpop.f32.mrf.mxu0
  %v3588 = vadd.f32 %v3539, %v3587
  %3589 = vmatmul.bf16.gmra.mxu0 %v906
  %v3590 = vpop.f32.mrf.mxu0
  %v3591 = vadd.f32 %v3542, %v3590
  %v3592 = vpop.f32.mrf.mxu0
  %v3593 = vadd.f32 %v3544, %v3592
  %3594 = vdwg.mxu0
  %3595 = vmatpush.bf16.msra.mxu0 %v1984
  %3596 = vmatpush.bf16.msra.mxu0 %v1982
  %3597 = vmatpush.bf16.msra.mxu0 %v1980
  %3598 = vmatpush.bf16.msra.mxu0 %v1978
  %3599 = vmatpush.bf16.msra.mxu0 %v1976
  %3600 = vmatpush.bf16.msra.mxu0 %v1974
  %3601 = vmatpush.bf16.msra.mxu0 %v1972
  %3602 = vmatpush.bf16.msra.mxu0 %v1970
  %3603 = vmatmul.bf16.gmra.mxu0 %v795
  %v3604 = vpop.f32.mrf.mxu0
  %v3605 = vadd.f32 %v3556, %v3604
  %v3606 = vpop.f32.mrf.mxu0
  %v3607 = vadd.f32 %v3558, %v3606
  %3608 = vmatmul.bf16.gmra.mxu0 %v811
  %v3609 = vpop.f32.mrf.mxu0
  %v3610 = vadd.f32 %v3561, %v3609
  %v3611 = vpop.f32.mrf.mxu0
  %v3612 = vadd.f32 %v3563, %v3611
  %3613 = vmatmul.bf16.gmra.mxu0 %v827
  %v3614 = vpop.f32.mrf.mxu0
  %v3615 = vadd.f32 %v3566, %v3614
  %v3616 = vpop.f32.mrf.mxu0
  %v3617 = vadd.f32 %v3568, %v3616
  %3618 = vmatmul.bf16.gmra.mxu0 %v843
  %v3619 = vpop.f32.mrf.mxu0
  %v3620 = vadd.f32 %v3571, %v3619
  %v3621 = vpop.f32.mrf.mxu0
  %v3622 = vadd.f32 %v3573, %v3621
  %3623 = vmatmul.bf16.gmra.mxu0 %v859
  %v3624 = vpop.f32.mrf.mxu0
  %v3625 = vadd.f32 %v3576, %v3624
  %v3626 = vpop.f32.mrf.mxu0
  %v3627 = vadd.f32 %v3578, %v3626
  %3628 = vmatmul.bf16.gmra.mxu0 %v875
  %v3629 = vpop.f32.mrf.mxu0
  %v3630 = vadd.f32 %v3581, %v3629
  %v3631 = vpop.f32.mrf.mxu0
  %v3632 = vadd.f32 %v3583, %v3631
  %3633 = vmatmul.bf16.gmra.mxu0 %v891
  %v3634 = vpop.f32.mrf.mxu0
  %v3635 = vadd.f32 %v3586, %v3634
  %v3636 = vpop.f32.mrf.mxu0
  %v3637 = vadd.f32 %v3588, %v3636
  %3638 = vmatmul.bf16.gmra.mxu0 %v907
  %v3639 = vpop.f32.mrf.mxu0
  %v3640 = vadd.f32 %v3591, %v3639
  %v3641 = vpop.f32.mrf.mxu0
  %v3642 = vadd.f32 %v3593, %v3641
  %3643 = vdwg.mxu0
  %3644 = vmatpush.bf16.msra.mxu0 %v2000
  %3645 = vmatpush.bf16.msra.mxu0 %v1998
  %3646 = vmatpush.bf16.msra.mxu0 %v1996
  %3647 = vmatpush.bf16.msra.mxu0 %v1994
  %3648 = vmatpush.bf16.msra.mxu0 %v1992
  %3649 = vmatpush.bf16.msra.mxu0 %v1990
  %3650 = vmatpush.bf16.msra.mxu0 %v1988
  %3651 = vmatpush.bf16.msra.mxu0 %v1986
  %3652 = vmatmul.bf16.gmra.mxu0 %v796
  %v3653 = vpop.f32.mrf.mxu0
  %v3654 = vadd.f32 %v3605, %v3653
  %v3655 = vpop.f32.mrf.mxu0
  %v3656 = vadd.f32 %v3607, %v3655
  %3657 = vmatmul.bf16.gmra.mxu0 %v812
  %v3658 = vpop.f32.mrf.mxu0
  %v3659 = vadd.f32 %v3610, %v3658
  %v3660 = vpop.f32.mrf.mxu0
  %v3661 = vadd.f32 %v3612, %v3660
  %3662 = vmatmul.bf16.gmra.mxu0 %v828
  %v3663 = vpop.f32.mrf.mxu0
  %v3664 = vadd.f32 %v3615, %v3663
  %v3665 = vpop.f32.mrf.mxu0
  %v3666 = vadd.f32 %v3617, %v3665
  %3667 = vmatmul.bf16.gmra.mxu0 %v844
  %v3668 = vpop.f32.mrf.mxu0
  %v3669 = vadd.f32 %v3620, %v3668
  %v3670 = vpop.f32.mrf.mxu0
  %v3671 = vadd.f32 %v3622, %v3670
  %3672 = vmatmul.bf16.gmra.mxu0 %v860
  %v3673 = vpop.f32.mrf.mxu0
  %v3674 = vadd.f32 %v3625, %v3673
  %v3675 = vpop.f32.mrf.mxu0
  %v3676 = vadd.f32 %v3627, %v3675
  %3677 = vmatmul.bf16.gmra.mxu0 %v876
  %v3678 = vpop.f32.mrf.mxu0
  %v3679 = vadd.f32 %v3630, %v3678
  %v3680 = vpop.f32.mrf.mxu0
  %v3681 = vadd.f32 %v3632, %v3680
  %3682 = vmatmul.bf16.gmra.mxu0 %v892
  %v3683 = vpop.f32.mrf.mxu0
  %v3684 = vadd.f32 %v3635, %v3683
  %v3685 = vpop.f32.mrf.mxu0
  %v3686 = vadd.f32 %v3637, %v3685
  %3687 = vmatmul.bf16.gmra.mxu0 %v908
  %v3688 = vpop.f32.mrf.mxu0
  %v3689 = vadd.f32 %v3640, %v3688
  %v3690 = vpop.f32.mrf.mxu0
  %v3691 = vadd.f32 %v3642, %v3690
  %3692 = vdwg.mxu0
  %3693 = vmatpush.bf16.msra.mxu0 %v2016
  %3694 = vmatpush.bf16.msra.mxu0 %v2014
  %3695 = vmatpush.bf16.msra.mxu0 %v2012
  %3696 = vmatpush.bf16.msra.mxu0 %v2010
  %3697 = vmatpush.bf16.msra.mxu0 %v2008
  %3698 = vmatpush.bf16.msra.mxu0 %v2006
  %3699 = vmatpush.bf16.msra.mxu0 %v2004
  %3700 = vmatpush.bf16.msra.mxu0 %v2002
  %3701 = vmatmul.bf16.gmra.mxu0 %v797
  %v3702 = vpop.f32.mrf.mxu0
  %v3703 = vadd.f32 %v3654, %v3702
  %v3704 = vpop.f32.mrf.mxu0
  %v3705 = vadd.f32 %v3656, %v3704
  %3706 = vmatmul.bf16.gmra.mxu0 %v813
  %v3707 = vpop.f32.mrf.mxu0
  %v3708 = vadd.f32 %v3659, %v3707
  %v3709 = vpop.f32.mrf.mxu0
  %v3710 = vadd.f32 %v3661, %v3709
  %3711 = vmatmul.bf16.gmra.mxu0 %v829
  %v3712 = vpop.f32.mrf.mxu0
  %v3713 = vadd.f32 %v3664, %v3712
  %v3714 = vpop.f32.mrf.mxu0
  %v3715 = vadd.f32 %v3666, %v3714
  %3716 = vmatmul.bf16.gmra.mxu0 %v845
  %v3717 = vpop.f32.mrf.mxu0
  %v3718 = vadd.f32 %v3669, %v3717
  %v3719 = vpop.f32.mrf.mxu0
  %v3720 = vadd.f32 %v3671, %v3719
  %3721 = vmatmul.bf16.gmra.mxu0 %v861
  %v3722 = vpop.f32.mrf.mxu0
  %v3723 = vadd.f32 %v3674, %v3722
  %v3724 = vpop.f32.mrf.mxu0
  %v3725 = vadd.f32 %v3676, %v3724
  %3726 = vmatmul.bf16.gmra.mxu0 %v877
  %v3727 = vpop.f32.mrf.mxu0
  %v3728 = vadd.f32 %v3679, %v3727
  %v3729 = vpop.f32.mrf.mxu0
  %v3730 = vadd.f32 %v3681, %v3729
  %3731 = vmatmul.bf16.gmra.mxu0 %v893
  %v3732 = vpop.f32.mrf.mxu0
  %v3733 = vadd.f32 %v3684, %v3732
  %v3734 = vpop.f32.mrf.mxu0
  %v3735 = vadd.f32 %v3686, %v3734
  %3736 = vmatmul.bf16.gmra.mxu0 %v909
  %v3737 = vpop.f32.mrf.mxu0
  %v3738 = vadd.f32 %v3689, %v3737
  %v3739 = vpop.f32.mrf.mxu0
  %v3740 = vadd.f32 %v3691, %v3739
  %3741 = vdwg.mxu0
  %3742 = vmatpush.bf16.msra.mxu0 %v2032
  %3743 = vmatpush.bf16.msra.mxu0 %v2030
  %3744 = vmatpush.bf16.msra.mxu0 %v2028
  %3745 = vmatpush.bf16.msra.mxu0 %v2026
  %3746 = vmatpush.bf16.msra.mxu0 %v2024
  %3747 = vmatpush.bf16.msra.mxu0 %v2022
  %3748 = vmatpush.bf16.msra.mxu0 %v2020
  %3749 = vmatpush.bf16.msra.mxu0 %v2018
  %3750 = vmatmul.bf16.gmra.mxu0 %v798
  %v3751 = vpop.f32.mrf.mxu0
  %v3752 = vadd.f32 %v3703, %v3751
  %v3753 = vpop.f32.mrf.mxu0
  %v3754 = vadd.f32 %v3705, %v3753
  %3755 = vmatmul.bf16.gmra.mxu0 %v814
  %v3756 = vpop.f32.mrf.mxu0
  %v3757 = vadd.f32 %v3708, %v3756
  %v3758 = vpop.f32.mrf.mxu0
  %v3759 = vadd.f32 %v3710, %v3758
  %3760 = vmatmul.bf16.gmra.mxu0 %v830
  %v3761 = vpop.f32.mrf.mxu0
  %v3762 = vadd.f32 %v3713, %v3761
  %v3763 = vpop.f32.mrf.mxu0
  %v3764 = vadd.f32 %v3715, %v3763
  %3765 = vmatmul.bf16.gmra.mxu0 %v846
  %v3766 = vpop.f32.mrf.mxu0
  %v3767 = vadd.f32 %v3718, %v3766
  %v3768 = vpop.f32.mrf.mxu0
  %v3769 = vadd.f32 %v3720, %v3768
  %3770 = vmatmul.bf16.gmra.mxu0 %v862
  %v3771 = vpop.f32.mrf.mxu0
  %v3772 = vadd.f32 %v3723, %v3771
  %v3773 = vpop.f32.mrf.mxu0
  %v3774 = vadd.f32 %v3725, %v3773
  %3775 = vmatmul.bf16.gmra.mxu0 %v878
  %v3776 = vpop.f32.mrf.mxu0
  %v3777 = vadd.f32 %v3728, %v3776
  %v3778 = vpop.f32.mrf.mxu0
  %v3779 = vadd.f32 %v3730, %v3778
  %3780 = vmatmul.bf16.gmra.mxu0 %v894
  %v3781 = vpop.f32.mrf.mxu0
  %v3782 = vadd.f32 %v3733, %v3781
  %v3783 = vpop.f32.mrf.mxu0
  %v3784 = vadd.f32 %v3735, %v3783
  %3785 = vmatmul.bf16.gmra.mxu0 %v910
  %v3786 = vpop.f32.mrf.mxu0
  %v3787 = vadd.f32 %v3738, %v3786
  %v3788 = vpop.f32.mrf.mxu0
  %v3789 = vadd.f32 %v3740, %v3788
  %3790 = vdwg.mxu0
  %3791 = vmatpush.bf16.msra.mxu0 %v2048
  %3792 = vmatpush.bf16.msra.mxu0 %v2046
  %3793 = vmatpush.bf16.msra.mxu0 %v2044
  %3794 = vmatpush.bf16.msra.mxu0 %v2042
  %3795 = vmatpush.bf16.msra.mxu0 %v2040
  %3796 = vmatpush.bf16.msra.mxu0 %v2038
  %3797 = vmatpush.bf16.msra.mxu0 %v2036
  %3798 = vmatpush.bf16.msra.mxu0 %v2034
  %3799 = vmatmul.bf16.gmra.mxu0 %v799
  %v3800 = vpop.f32.mrf.mxu0
  %v3801 = vadd.f32 %v3752, %v3800
  %v3802 = vpop.f32.mrf.mxu0
  %v3803 = vadd.f32 %v3754, %v3802
  %3804 = vmatmul.bf16.gmra.mxu0 %v815
  %v3805 = vpop.f32.mrf.mxu0
  %v3806 = vadd.f32 %v3757, %v3805
  %v3807 = vpop.f32.mrf.mxu0
  %v3808 = vadd.f32 %v3759, %v3807
  %3809 = vmatmul.bf16.gmra.mxu0 %v831
  %v3810 = vpop.f32.mrf.mxu0
  %v3811 = vadd.f32 %v3762, %v3810
  %v3812 = vpop.f32.mrf.mxu0
  %v3813 = vadd.f32 %v3764, %v3812
  %3814 = vmatmul.bf16.gmra.mxu0 %v847
  %v3815 = vpop.f32.mrf.mxu0
  %v3816 = vadd.f32 %v3767, %v3815
  %v3817 = vpop.f32.mrf.mxu0
  %v3818 = vadd.f32 %v3769, %v3817
  %3819 = vmatmul.bf16.gmra.mxu0 %v863
  %v3820 = vpop.f32.mrf.mxu0
  %v3821 = vadd.f32 %v3772, %v3820
  %v3822 = vpop.f32.mrf.mxu0
  %v3823 = vadd.f32 %v3774, %v3822
  %3824 = vmatmul.bf16.gmra.mxu0 %v879
  %v3825 = vpop.f32.mrf.mxu0
  %v3826 = vadd.f32 %v3777, %v3825
  %v3827 = vpop.f32.mrf.mxu0
  %v3828 = vadd.f32 %v3779, %v3827
  %3829 = vmatmul.bf16.gmra.mxu0 %v895
  %v3830 = vpop.f32.mrf.mxu0
  %v3831 = vadd.f32 %v3782, %v3830
  %v3832 = vpop.f32.mrf.mxu0
  %v3833 = vadd.f32 %v3784, %v3832
  %3834 = vmatmul.bf16.gmra.mxu0 %v911
  %v3835 = vpop.f32.mrf.mxu0
  %v3836 = vadd.f32 %v3787, %v3835
  %v3837 = vpop.f32.mrf.mxu0
  %v3838 = vadd.f32 %v3789, %v3837
  %3839 = vdwg.mxu0
  %3840 = vmatpush.bf16.msra.mxu0 %v2064
  %3841 = vmatpush.bf16.msra.mxu0 %v2062
  %3842 = vmatpush.bf16.msra.mxu0 %v2060
  %3843 = vmatpush.bf16.msra.mxu0 %v2058
  %3844 = vmatpush.bf16.msra.mxu0 %v2056
  %3845 = vmatpush.bf16.msra.mxu0 %v2054
  %3846 = vmatpush.bf16.msra.mxu0 %v2052
  %3847 = vmatpush.bf16.msra.mxu0 %v2050
  %3848 = vmatmul.bf16.gmra.mxu0 %v800
  %v3849 = vpop.f32.mrf.mxu0
  %v3850 = vadd.f32 %v3801, %v3849
  %v3851 = vpop.f32.mrf.mxu0
  %v3852 = vadd.f32 %v3803, %v3851
  %3853 = vmatmul.bf16.gmra.mxu0 %v816
  %v3854 = vpop.f32.mrf.mxu0
  %v3855 = vadd.f32 %v3806, %v3854
  %v3856 = vpop.f32.mrf.mxu0
  %v3857 = vadd.f32 %v3808, %v3856
  %3858 = vmatmul.bf16.gmra.mxu0 %v832
  %v3859 = vpop.f32.mrf.mxu0
  %v3860 = vadd.f32 %v3811, %v3859
  %v3861 = vpop.f32.mrf.mxu0
  %v3862 = vadd.f32 %v3813, %v3861
  %3863 = vmatmul.bf16.gmra.mxu0 %v848
  %v3864 = vpop.f32.mrf.mxu0
  %v3865 = vadd.f32 %v3816, %v3864
  %v3866 = vpop.f32.mrf.mxu0
  %v3867 = vadd.f32 %v3818, %v3866
  %3868 = vmatmul.bf16.gmra.mxu0 %v864
  %v3869 = vpop.f32.mrf.mxu0
  %v3870 = vadd.f32 %v3821, %v3869
  %v3871 = vpop.f32.mrf.mxu0
  %v3872 = vadd.f32 %v3823, %v3871
  %3873 = vmatmul.bf16.gmra.mxu0 %v880
  %v3874 = vpop.f32.mrf.mxu0
  %v3875 = vadd.f32 %v3826, %v3874
  %v3876 = vpop.f32.mrf.mxu0
  %v3877 = vadd.f32 %v3828, %v3876
  %3878 = vmatmul.bf16.gmra.mxu0 %v896
  %v3879 = vpop.f32.mrf.mxu0
  %v3880 = vadd.f32 %v3831, %v3879
  %v3881 = vpop.f32.mrf.mxu0
  %v3882 = vadd.f32 %v3833, %v3881
  %3883 = vmatmul.bf16.gmra.mxu0 %v912
  %v3884 = vpop.f32.mrf.mxu0
  %v3885 = vadd.f32 %v3836, %v3884
  %v3886 = vpop.f32.mrf.mxu0
  %v3887 = vadd.f32 %v3838, %v3886
  %3888 = vdwg.mxu0
  %v3889 = vadd.f32 %v3066, %v3068
  %v3890 = vadd.f32 %v3889, %v3071
  %v3891 = vadd.f32 %v3890, %v3073
  %v3892 = vadd.f32 %v3891, %v3076
  %v3893 = vadd.f32 %v3892, %v3078
  %v3894 = vadd.f32 %v3893, %v3081
  %v3895 = vadd.f32 %v3894, %v3083
  %v3896 = vadd.f32 %v3895, %v3086
  %v3897 = vadd.f32 %v3896, %v3088
  %v3898 = vadd.f32 %v3897, %v3091
  %v3899 = vadd.f32 %v3898, %v3093
  %v3900 = vadd.f32 %v3899, %v3096
  %v3901 = vadd.f32 %v3900, %v3098
  %v3902 = vadd.f32 %v3901, %v3101
  %v3903 = vadd.f32 %v3902, %v3103
  %v3904 = vrot.slane %v3903, 4
  %v3905 = vadd.f32 %v3903, %v3904
  %v3906 = vrot.slane %v3905, 2
  %v3907 = vadd.f32 %v3905, %v3906
  %v3908 = vrot.slane %v3907, 1
  %v3909 = vadd.f32 %v3907, %v3908
  %v3910 = vadd.f32 %v3850, %v3852
  %v3911 = vadd.f32 %v3910, %v3855
  %v3912 = vadd.f32 %v3911, %v3857
  %v3913 = vadd.f32 %v3912, %v3860
  %v3914 = vadd.f32 %v3913, %v3862
  %v3915 = vadd.f32 %v3914, %v3865
  %v3916 = vadd.f32 %v3915, %v3867
  %v3917 = vadd.f32 %v3916, %v3870
  %v3918 = vadd.f32 %v3917, %v3872
  %v3919 = vadd.f32 %v3918, %v3875
  %v3920 = vadd.f32 %v3919, %v3877
  %v3921 = vadd.f32 %v3920, %v3880
  %v3922 = vadd.f32 %v3921, %v3882
  %v3923 = vadd.f32 %v3922, %v3885
  %v3924 = vadd.f32 %v3923, %v3887
  %v3925 = vrot.slane %v3924, 4
  %v3926 = vadd.f32 %v3924, %v3925
  %v3927 = vrot.slane %v3926, 2
  %v3928 = vadd.f32 %v3926, %v3927
  %v3929 = vrot.slane %v3928, 1
  %v3930 = vadd.f32 %v3928, %v3929
  %v3931 = vrcp.pop 128.0
  %v3932 = vmul.f32 128.0, %v3931
  %v3933 = vsub.f32 1.0, %v3932
  %v3934 = vmul.f32 %v3931, %v3933
  %v3935 = vadd.f32 %v3931, %v3934
  %vm3936 = vweird.f32 %v3931
  %v3937 = vsel %vm3936, %v3931, %v3935
  %v3938 = vmul.f32 %v3909, %v3937
  %v3939 = vmul.f32 %v3930, %v3937
  %v3940 = vmul.f32 %v3066, %v3066
  %v3941 = vmul.f32 %v3850, %v3850
  %v3942 = vmul.f32 %v3068, %v3068
  %v3943 = vmul.f32 %v3852, %v3852
  %v3944 = vmul.f32 %v3071, %v3071
  %v3945 = vmul.f32 %v3855, %v3855
  %v3946 = vmul.f32 %v3073, %v3073
  %v3947 = vmul.f32 %v3857, %v3857
  %v3948 = vmul.f32 %v3076, %v3076
  %v3949 = vmul.f32 %v3860, %v3860
  %v3950 = vmul.f32 %v3078, %v3078
  %v3951 = vmul.f32 %v3862, %v3862
  %v3952 = vmul.f32 %v3081, %v3081
  %v3953 = vmul.f32 %v3865, %v3865
  %v3954 = vmul.f32 %v3083, %v3083
  %v3955 = vmul.f32 %v3867, %v3867
  %v3956 = vmul.f32 %v3086, %v3086
  %v3957 = vmul.f32 %v3870, %v3870
  %v3958 = vmul.f32 %v3088, %v3088
  %v3959 = vmul.f32 %v3872, %v3872
  %v3960 = vmul.f32 %v3091, %v3091
  %v3961 = vmul.f32 %v3875, %v3875
  %v3962 = vmul.f32 %v3093, %v3093
  %v3963 = vmul.f32 %v3877, %v3877
  %v3964 = vmul.f32 %v3096, %v3096
  %v3965 = vmul.f32 %v3880, %v3880
  %v3966 = vmul.f32 %v3098, %v3098
  %v3967 = vmul.f32 %v3882, %v3882
  %v3968 = vmul.f32 %v3101, %v3101
  %v3969 = vmul.f32 %v3885, %v3885
  %v3970 = vmul.f32 %v3103, %v3103
  %v3971 = vmul.f32 %v3887, %v3887
  %v3972 = vadd.f32 %v3940, %v3942
  %v3973 = vadd.f32 %v3972, %v3944
  %v3974 = vadd.f32 %v3973, %v3946
  %v3975 = vadd.f32 %v3974, %v3948
  %v3976 = vadd.f32 %v3975, %v3950
  %v3977 = vadd.f32 %v3976, %v3952
  %v3978 = vadd.f32 %v3977, %v3954
  %v3979 = vadd.f32 %v3978, %v3956
  %v3980 = vadd.f32 %v3979, %v3958
  %v3981 = vadd.f32 %v3980, %v3960
  %v3982 = vadd.f32 %v3981, %v3962
  %v3983 = vadd.f32 %v3982, %v3964
  %v3984 = vadd.f32 %v3983, %v3966
  %v3985 = vadd.f32 %v3984, %v3968
  %v3986 = vadd.f32 %v3985, %v3970
  %v3987 = vrot.slane %v3986, 4
  %v3988 = vadd.f32 %v3986, %v3987
  %v3989 = vrot.slane %v3988, 2
  %v3990 = vadd.f32 %v3988, %v3989
  %v3991 = vrot.slane %v3990, 1
  %v3992 = vadd.f32 %v3990, %v3991
  %v3993 = vadd.f32 %v3941, %v3943
  %v3994 = vadd.f32 %v3993, %v3945
  %v3995 = vadd.f32 %v3994, %v3947
  %v3996 = vadd.f32 %v3995, %v3949
  %v3997 = vadd.f32 %v3996, %v3951
  %v3998 = vadd.f32 %v3997, %v3953
  %v3999 = vadd.f32 %v3998, %v3955
  %v4000 = vadd.f32 %v3999, %v3957
  %v4001 = vadd.f32 %v4000, %v3959
  %v4002 = vadd.f32 %v4001, %v3961
  %v4003 = vadd.f32 %v4002, %v3963
  %v4004 = vadd.f32 %v4003, %v3965
  %v4005 = vadd.f32 %v4004, %v3967
  %v4006 = vadd.f32 %v4005, %v3969
  %v4007 = vadd.f32 %v4006, %v3971
  %v4008 = vrot.slane %v4007, 4
  %v4009 = vadd.f32 %v4007, %v4008
  %v4010 = vrot.slane %v4009, 2
  %v4011 = vadd.f32 %v4009, %v4010
  %v4012 = vrot.slane %v4011, 1
  %v4013 = vadd.f32 %v4011, %v4012
  %v4014 = vmul.f32 %v3992, %v3937
  %v4015 = vmul.f32 %v4013, %v3937
  %v4016 = vmul.f32 %v3938, %v3938
  %v4017 = vmul.f32 %v3939, %v3939
  %v4018 = vsub.f32 %v4014, %v4016
  %v4019 = vsub.f32 %v4015, %v4017
  %v4020 = vmax.f32 %v4018, 0.0
  %v4021 = vmax.f32 %v4019, 0.0
  %v4022 = vsub.f32 %v3066, %v3938
  %v4023 = vsub.f32 %v3850, %v3939
  %v4024 = vsub.f32 %v3068, %v3938
  %v4025 = vsub.f32 %v3852, %v3939
  %v4026 = vsub.f32 %v3071, %v3938
  %v4027 = vsub.f32 %v3855, %v3939
  %v4028 = vsub.f32 %v3073, %v3938
  %v4029 = vsub.f32 %v3857, %v3939
  %v4030 = vsub.f32 %v3076, %v3938
  %v4031 = vsub.f32 %v3860, %v3939
  %v4032 = vsub.f32 %v3078, %v3938
  %v4033 = vsub.f32 %v3862, %v3939
  %v4034 = vsub.f32 %v3081, %v3938
  %v4035 = vsub.f32 %v3865, %v3939
  %v4036 = vsub.f32 %v3083, %v3938
  %v4037 = vsub.f32 %v3867, %v3939
  %v4038 = vsub.f32 %v3086, %v3938
  %v4039 = vsub.f32 %v3870, %v3939
  %v4040 = vsub.f32 %v3088, %v3938
  %v4041 = vsub.f32 %v3872, %v3939
  %v4042 = vsub.f32 %v3091, %v3938
  %v4043 = vsub.f32 %v3875, %v3939
  %v4044 = vsub.f32 %v3093, %v3938
  %v4045 = vsub.f32 %v3877, %v3939
  %v4046 = vsub.f32 %v3096, %v3938
  %v4047 = vsub.f32 %v3880, %v3939
  %v4048 = vsub.f32 %v3098, %v3938
  %v4049 = vsub.f32 %v3882, %v3939
  %v4050 = vsub.f32 %v3101, %v3938
  %v4051 = vsub.f32 %v3885, %v3939
  %v4052 = vsub.f32 %v3103, %v3938
  %v4053 = vsub.f32 %v3887, %v3939
  %v4054 = vadd.f32 %v4020, 1e-05
  %v4055 = vadd.f32 %v4021, 1e-05
  %v4056 = vrsqrt.pop %v4054
  %v4057 = vmul.f32 %v4056, %v4054
  %v4058 = vmul.f32 %v4057, %v4056
  %v4059 = vmul.f32 0.5, %v4058
  %v4060 = vsub.f32 1.5, %v4059
  %v4061 = vmul.f32 %v4056, %v4060
  %vm4062 = vweird.f32 %v4054
  %vm4063 = vweird.f32 %v4056
  %vm4064 = vmor %vm4062, %vm4063
  %v4065 = vsel %vm4064, %v4056, %v4061
  %v4066 = vrsqrt.pop %v4055
  %v4067 = vmul.f32 %v4066, %v4055
  %v4068 = vmul.f32 %v4067, %v4066
  %v4069 = vmul.f32 0.5, %v4068
  %v4070 = vsub.f32 1.5, %v4069
  %v4071 = vmul.f32 %v4066, %v4070
  %vm4072 = vweird.f32 %v4055
  %vm4073 = vweird.f32 %v4066
  %vm4074 = vmor %vm4072, %vm4073
  %v4075 = vsel %vm4074, %v4066, %v4071
  %v4076 = vmul.f32 %v4022, %v4065
  %v4077 = vmul.f32 %v4023, %v4075
  %v4078 = vmul.f32 %v4024, %v4065
  %v4079 = vmul.f32 %v4025, %v4075
  %v4080 = vmul.f32 %v4026, %v4065
  %v4081 = vmul.f32 %v4027, %v4075
  %v4082 = vmul.f32 %v4028, %v4065
  %v4083 = vmul.f32 %v4029, %v4075
  %v4084 = vmul.f32 %v4030, %v4065
  %v4085 = vmul.f32 %v4031, %v4075
  %v4086 = vmul.f32 %v4032, %v4065
  %v4087 = vmul.f32 %v4033, %v4075
  %v4088 = vmul.f32 %v4034, %v4065
  %v4089 = vmul.f32 %v4035, %v4075
  %v4090 = vmul.f32 %v4036, %v4065
  %v4091 = vmul.f32 %v4037, %v4075
  %v4092 = vmul.f32 %v4038, %v4065
  %v4093 = vmul.f32 %v4039, %v4075
  %v4094 = vmul.f32 %v4040, %v4065
  %v4095 = vmul.f32 %v4041, %v4075
  %v4096 = vmul.f32 %v4042, %v4065
  %v4097 = vmul.f32 %v4043, %v4075
  %v4098 = vmul.f32 %v4044, %v4065
  %v4099 = vmul.f32 %v4045, %v4075
  %v4100 = vmul.f32 %v4046, %v4065
  %v4101 = vmul.f32 %v4047, %v4075
  %v4102 = vmul.f32 %v4048, %v4065
  %v4103 = vmul.f32 %v4049, %v4075
  %v4104 = vmul.f32 %v4050, %v4065
  %v4105 = vmul.f32 %v4051, %v4075
  %v4106 = vmul.f32 %v4052, %v4065
  %v4107 = vmul.f32 %v4053, %v4075
  %v4108 = vld [vmem:[%s2] sm:$0x3]
  %v4110 = vperm.slane %v4108, 0
  %v4111 = vperm.slane %v4108, 1
  %v4114 = vmul.f32 %v4076, %v4110
  %v4115 = vmul.f32 %v4077, %v4111
  %v4116 = vmul.f32 %v4078, %v4110
  %v4117 = vmul.f32 %v4079, %v4111
  %v4118 = vmul.f32 %v4080, %v4110
  %v4119 = vmul.f32 %v4081, %v4111
  %v4120 = vmul.f32 %v4082, %v4110
  %v4121 = vmul.f32 %v4083, %v4111
  %v4122 = vmul.f32 %v4084, %v4110
  %v4123 = vmul.f32 %v4085, %v4111
  %v4124 = vmul.f32 %v4086, %v4110
  %v4125 = vmul.f32 %v4087, %v4111
  %v4126 = vmul.f32 %v4088, %v4110
  %v4127 = vmul.f32 %v4089, %v4111
  %v4128 = vmul.f32 %v4090, %v4110
  %v4129 = vmul.f32 %v4091, %v4111
  %v4130 = vmul.f32 %v4092, %v4110
  %v4131 = vmul.f32 %v4093, %v4111
  %v4132 = vmul.f32 %v4094, %v4110
  %v4133 = vmul.f32 %v4095, %v4111
  %v4134 = vmul.f32 %v4096, %v4110
  %v4135 = vmul.f32 %v4097, %v4111
  %v4136 = vmul.f32 %v4098, %v4110
  %v4137 = vmul.f32 %v4099, %v4111
  %v4138 = vmul.f32 %v4100, %v4110
  %v4139 = vmul.f32 %v4101, %v4111
  %v4140 = vmul.f32 %v4102, %v4110
  %v4141 = vmul.f32 %v4103, %v4111
  %v4142 = vmul.f32 %v4104, %v4110
  %v4143 = vmul.f32 %v4105, %v4111
  %v4144 = vmul.f32 %v4106, %v4110
  %v4145 = vmul.f32 %v4107, %v4111
  %v4146 = vld [vmem:[%s3] sm:$0x3]
  %v4148 = vperm.slane %v4146, 0
  %v4149 = vperm.slane %v4146, 1
  %v4152 = vadd.f32 %v4114, %v4148
  %v4153 = vadd.f32 %v4115, %v4149
  %v4154 = vadd.f32 %v4116, %v4148
  %v4155 = vadd.f32 %v4117, %v4149
  %v4156 = vadd.f32 %v4118, %v4148
  %v4157 = vadd.f32 %v4119, %v4149
  %v4158 = vadd.f32 %v4120, %v4148
  %v4159 = vadd.f32 %v4121, %v4149
  %v4160 = vadd.f32 %v4122, %v4148
  %v4161 = vadd.f32 %v4123, %v4149
  %v4162 = vadd.f32 %v4124, %v4148
  %v4163 = vadd.f32 %v4125, %v4149
  %v4164 = vadd.f32 %v4126, %v4148
  %v4165 = vadd.f32 %v4127, %v4149
  %v4166 = vadd.f32 %v4128, %v4148
  %v4167 = vadd.f32 %v4129, %v4149
  %v4168 = vadd.f32 %v4130, %v4148
  %v4169 = vadd.f32 %v4131, %v4149
  %v4170 = vadd.f32 %v4132, %v4148
  %v4171 = vadd.f32 %v4133, %v4149
  %v4172 = vadd.f32 %v4134, %v4148
  %v4173 = vadd.f32 %v4135, %v4149
  %v4174 = vadd.f32 %v4136, %v4148
  %v4175 = vadd.f32 %v4137, %v4149
  %v4176 = vadd.f32 %v4138, %v4148
  %v4177 = vadd.f32 %v4139, %v4149
  %v4178 = vadd.f32 %v4140, %v4148
  %v4179 = vadd.f32 %v4141, %v4149
  %v4180 = vadd.f32 %v4142, %v4148
  %v4181 = vadd.f32 %v4143, %v4149
  %v4182 = vadd.f32 %v4144, %v4148
  %v4183 = vadd.f32 %v4145, %v4149
  %v4184 = vmul.f32 %v4152, 0.2
  %v4185 = vmul.f32 %v4153, 0.2
  %v4186 = vmul.f32 %v4154, 0.2
  %v4187 = vmul.f32 %v4155, 0.2
  %v4188 = vmul.f32 %v4156, 0.2
  %v4189 = vmul.f32 %v4157, 0.2
  %v4190 = vmul.f32 %v4158, 0.2
  %v4191 = vmul.f32 %v4159, 0.2
  %v4192 = vmul.f32 %v4160, 0.2
  %v4193 = vmul.f32 %v4161, 0.2
  %v4194 = vmul.f32 %v4162, 0.2
  %v4195 = vmul.f32 %v4163, 0.2
  %v4196 = vmul.f32 %v4164, 0.2
  %v4197 = vmul.f32 %v4165, 0.2
  %v4198 = vmul.f32 %v4166, 0.2
  %v4199 = vmul.f32 %v4167, 0.2
  %v4200 = vmul.f32 %v4168, 0.2
  %v4201 = vmul.f32 %v4169, 0.2
  %v4202 = vmul.f32 %v4170, 0.2
  %v4203 = vmul.f32 %v4171, 0.2
  %v4204 = vmul.f32 %v4172, 0.2
  %v4205 = vmul.f32 %v4173, 0.2
  %v4206 = vmul.f32 %v4174, 0.2
  %v4207 = vmul.f32 %v4175, 0.2
  %v4208 = vmul.f32 %v4176, 0.2
  %v4209 = vmul.f32 %v4177, 0.2
  %v4210 = vmul.f32 %v4178, 0.2
  %v4211 = vmul.f32 %v4179, 0.2
  %v4212 = vmul.f32 %v4180, 0.2
  %v4213 = vmul.f32 %v4181, 0.2
  %v4214 = vmul.f32 %v4182, 0.2
  %v4215 = vmul.f32 %v4183, 0.2
  %v4216 = vmax.f32 %v4152, %v4184
  %v4217 = vmax.f32 %v4153, %v4185
  %v4218 = vmax.f32 %v4154, %v4186
  %v4219 = vmax.f32 %v4155, %v4187
  %v4220 = vmax.f32 %v4156, %v4188
  %v4221 = vmax.f32 %v4157, %v4189
  %v4222 = vmax.f32 %v4158, %v4190
  %v4223 = vmax.f32 %v4159, %v4191
  %v4224 = vmax.f32 %v4160, %v4192
  %v4225 = vmax.f32 %v4161, %v4193
  %v4226 = vmax.f32 %v4162, %v4194
  %v4227 = vmax.f32 %v4163, %v4195
  %v4228 = vmax.f32 %v4164, %v4196
  %v4229 = vmax.f32 %v4165, %v4197
  %v4230 = vmax.f32 %v4166, %v4198
  %v4231 = vmax.f32 %v4167, %v4199
  %v4232 = vmax.f32 %v4168, %v4200
  %v4233 = vmax.f32 %v4169, %v4201
  %v4234 = vmax.f32 %v4170, %v4202
  %v4235 = vmax.f32 %v4171, %v4203
  %v4236 = vmax.f32 %v4172, %v4204
  %v4237 = vmax.f32 %v4173, %v4205
  %v4238 = vmax.f32 %v4174, %v4206
  %v4239 = vmax.f32 %v4175, %v4207
  %v4240 = vmax.f32 %v4176, %v4208
  %v4241 = vmax.f32 %v4177, %v4209
  %v4242 = vmax.f32 %v4178, %v4210
  %v4243 = vmax.f32 %v4179, %v4211
  %v4244 = vmax.f32 %v4180, %v4212
  %v4245 = vmax.f32 %v4181, %v4213
  %v4246 = vmax.f32 %v4182, %v4214
  %v4247 = vmax.f32 %v4183, %v4215
  %v4248 = vpack.c.bf16 %v4217, %v4216
  %v4249 = vpack.c.bf16 %v4219, %v4218
  %v4250 = vpack.c.bf16 %v4221, %v4220
  %v4251 = vpack.c.bf16 %v4223, %v4222
  %v4252 = vpack.c.bf16 %v4225, %v4224
  %v4253 = vpack.c.bf16 %v4227, %v4226
  %v4254 = vpack.c.bf16 %v4229, %v4228
  %v4255 = vpack.c.bf16 %v4231, %v4230
  %v4256 = vpack.c.bf16 %v4233, %v4232
  %v4257 = vpack.c.bf16 %v4235, %v4234
  %v4258 = vpack.c.bf16 %v4237, %v4236
  %v4259 = vpack.c.bf16 %v4239, %v4238
  %v4260 = vpack.c.bf16 %v4241, %v4240
  %v4261 = vpack.c.bf16 %v4243, %v4242
  %v4262 = vpack.c.bf16 %v4245, %v4244
  %v4263 = vpack.c.bf16 %v4247, %v4246
  %4264 = vst [vmem:[%s4] sm:$0xff] %v4248
  %4265 = vst [vmem:[%s4 + $0x8] sm:$0xff] %v4249
  %4266 = vst [vmem:[%s4 + $0x10] sm:$0xff] %v4250
  %4267 = vst [vmem:[%s4 + $0x18] sm:$0xff] %v4251
  %4268 = vst [vmem:[%s4 + $0x20] sm:$0xff] %v4252
  %4269 = vst [vmem:[%s4 + $0x28] sm:$0xff] %v4253
  %4270 = vst [vmem:[%s4 + $0x30] sm:$0xff] %v4254
  %4271 = vst [vmem:[%s4 + $0x38] sm:$0xff] %v4255
  %4272 = vst [vmem:[%s4 + $0x40] sm:$0xff] %v4256
  %4273 = vst [vmem:[%s4 + $0x48] sm:$0xff] %v4257
  %4274 = vst [vmem:[%s4 + $0x50] sm:$0xff] %v4258
  %4275 = vst [vmem:[%s4 + $0x58] sm:$0xff] %v4259
  %4276 = vst [vmem:[%s4 + $0x60] sm:$0xff] %v4260
  %4277 = vst [vmem:[%s4 + $0x68] sm:$0xff] %v4261
  %4278 = vst [vmem:[%s4 + $0x70] sm:$0xff] %v4262
  %4279 = vst [vmem:[%s4 + $0x78] sm:$0xff] %v4263
  // Predicated region
  $region18: #{cdcgan_discriminator_forward.4} parent=0 // pred_check
    _
  $region19: #{cdcgan_discriminator_forward.4} parent=0 // pred_check_branch
    %4281 = sbr.rel (0) target = $region21
  $region20: #{cdcgan_discriminator_forward.4} parent=0 // pred_region
    _
  $region21: #{cdcgan_discriminator_forward.4} parent=0 // pred_fallthru
    _
  // Predicated region
  $region22: #{cdcgan_discriminator_forward.4} parent=0 // pred_check
    _
  $region23: #{cdcgan_discriminator_forward.4} parent=0 // pred_check_branch
    %4283 = sbr.rel (0) target = $region25
  $region24: #{cdcgan_discriminator_forward.4} parent=0 // pred_region
    _
  $region25: #{cdcgan_discriminator_forward.4} parent=0 // pred_fallthru
    _

// kernel: cdcgan_discriminator_forward.5
$region0: #{cdcgan_discriminator_forward.5}
  #allocation0 [shape = 'u32[]', space=smem, size = 0x4, offset = 0x4, fixed_abs, tag = 'smem constant byte address 0x4 - core index']
  #allocation1 [shape = 'u32[72,128]{1,0:T(1,128)}', space=vmem, size = 0x9000, scoped, tag = 'internal scratch']
  %s0 = inlined_call_operand.vmem [shape: bf16[32,4096], index: 0, kind: input, shape index: {}]
  %s1 = inlined_call_operand.vmem [shape: bf16[4096,512], index: 1, kind: input, shape index: {}]
  %s2 = inlined_call_operand.vmem [shape: f32[1,512], index: 2, kind: input, shape index: {}]
  %s3 = inlined_call_operand.vmem [shape: f32[1,512], index: 3, kind: input, shape index: {}]
  %s4 = inlined_call_operand.vmem [shape: f32[16,512], index: 4, kind: input, shape index: {}]
  %s5 = inlined_call_operand.vmem [shape: f32[2,1], index: 5, kind: output, shape index: {}]
  %s6 = sld [smem:[#allocation0]]
  $region30: #{cdcgan_discriminator_forward.5} parent=0
    _
  %s8 = ssub.s32 1, %s6
  %s9 = scalar_select 0, %s8, %s6
  // Predicated region
  $region2: #{cdcgan_discriminator_forward.5} parent=0 // pred_check
    _
  $region3: #{cdcgan_discriminator_forward.5} parent=0 // pred_check_branch
    %11 = sbr.rel (0) target = $region5
  $region4: #{cdcgan_discriminator_forward.5} parent=0 // pred_region
    _
  $region5: #{cdcgan_discriminator_forward.5} parent=0 // pred_fallthru
    _
  // Predicated region
  $region6: #{cdcgan_discriminator_forward.5} parent=0 // pred_check
    _
  $region7: #{cdcgan_discriminator_forward.5} parent=0 // pred_check_branch
    %13 = sbr.rel (0) target = $region9
  $region8: #{cdcgan_discriminator_forward.5} parent=0 // pred_region
    _
  $region9: #{cdcgan_discriminator_forward.5} parent=0 // pred_fallthru
    _
  // Predicated region
  $region10: #{cdcgan_discriminator_forward.5} parent=0 // pred_check
    _
  $region11: #{cdcgan_discriminator_forward.5} parent=0 // pred_check_branch
    %15 = sbr.rel (0) target = $region13
  $region12: #{cdcgan_discriminator_forward.5} parent=0 // pred_region
    _
  $region13: #{cdcgan_discriminator_forward.5} parent=0 // pred_fallthru
    _
  // Predicated region
  $region14: #{cdcgan_discriminator_forward.5} parent=0 // pred_check
    _
  $region15: #{cdcgan_discriminator_forward.5} parent=0 // pred_check_branch
    %17 = sbr.rel (0) target = $region17
  $region16: #{cdcgan_discriminator_forward.5} parent=0 // pred_region
    _
  $region17: #{cdcgan_discriminator_forward.5} parent=0 // pred_fallthru
    _
  // Predicated region
  $region18: #{cdcgan_discriminator_forward.5} parent=0 // pred_check
    _
  $region19: #{cdcgan_discriminator_forward.5} parent=0 // pred_check_branch
    %19 = sbr.rel (0) target = $region21
  $region20: #{cdcgan_discriminator_forward.5} parent=0 // pred_region
    _
  $region21: #{cdcgan_discriminator_forward.5} parent=0 // pred_fallthru
    _
  %v20 = vld [vmem:[%s0] sm:$0xff]
  %v21 = vld [vmem:[%s0 + $0x8] sm:$0xff]
  %v22 = vld [vmem:[%s0 + $0x10] sm:$0xff]
  %v23 = vld [vmem:[%s0 + $0x18] sm:$0xff]
  %v24 = vld [vmem:[%s0 + $0x20] sm:$0xff]
  %v25 = vld [vmem:[%s0 + $0x28] sm:$0xff]
  %v26 = vld [vmem:[%s0 + $0x30] sm:$0xff]
  %v27 = vld [vmem:[%s0 + $0x38] sm:$0xff]
  %v28 = vld [vmem:[%s0 + $0x40] sm:$0xff]
  %v29 = vld [vmem:[%s0 + $0x48] sm:$0xff]
  %v30 = vld [vmem:[%s0 + $0x50] sm:$0xff]
  %v31 = vld [vmem:[%s0 + $0x58] sm:$0xff]
  %v32 = vld [vmem:[%s0 + $0x60] sm:$0xff]
  %v33 = vld [vmem:[%s0 + $0x68] sm:$0xff]
  %v34 = vld [vmem:[%s0 + $0x70] sm:$0xff]
  %v35 = vld [vmem:[%s0 + $0x78] sm:$0xff]
  %v36 = vld [vmem:[%s0 + $0x80] sm:$0xff]
  %v37 = vld [vmem:[%s0 + $0x88] sm:$0xff]
  %v38 = vld [vmem:[%s0 + $0x90] sm:$0xff]
  %v39 = vld [vmem:[%s0 + $0x98] sm:$0xff]
  %v40 = vld [vmem:[%s0 + $0xa0] sm:$0xff]
  %v41 = vld [vmem:[%s0 + $0xa8] sm:$0xff]
  %v42 = vld [vmem:[%s0 + $0xb0] sm:$0xff]
  %v43 = vld [vmem:[%s0 + $0xb8] sm:$0xff]
  %v44 = vld [vmem:[%s0 + $0xc0] sm:$0xff]
  %v45 = vld [vmem:[%s0 + $0xc8] sm:$0xff]
  %v46 = vld [vmem:[%s0 + $0xd0] sm:$0xff]
  %v47 = vld [vmem:[%s0 + $0xd8] sm:$0xff]
  %v48 = vld [vmem:[%s0 + $0xe0] sm:$0xff]
  %v49 = vld [vmem:[%s0 + $0xe8] sm:$0xff]
  %v50 = vld [vmem:[%s0 + $0xf0] sm:$0xff]
  %v51 = vld [vmem:[%s0 + $0xf8] sm:$0xff]
  %v52 = vld [vmem:[%s0 + $0x100] sm:$0xff]
  %v53 = vld [vmem:[%s0 + $0x108] sm:$0xff]
  %v54 = vld [vmem:[%s0 + $0x110] sm:$0xff]
  %v55 = vld [vmem:[%s0 + $0x118] sm:$0xff]
  %v56 = vld [vmem:[%s0 + $0x120] sm:$0xff]
  %v57 = vld [vmem:[%s0 + $0x128] sm:$0xff]
  %v58 = vld [vmem:[%s0 + $0x130] sm:$0xff]
  %v59 = vld [vmem:[%s0 + $0x138] sm:$0xff]
  %v60 = vld [vmem:[%s0 + $0x140] sm:$0xff]
  %v61 = vld [vmem:[%s0 + $0x148] sm:$0xff]
  %v62 = vld [vmem:[%s0 + $0x150] sm:$0xff]
  %v63 = vld [vmem:[%s0 + $0x158] sm:$0xff]
  %v64 = vld [vmem:[%s0 + $0x160] sm:$0xff]
  %v65 = vld [vmem:[%s0 + $0x168] sm:$0xff]
  %v66 = vld [vmem:[%s0 + $0x170] sm:$0xff]
  %v67 = vld [vmem:[%s0 + $0x178] sm:$0xff]
  %v68 = vld [vmem:[%s0 + $0x180] sm:$0xff]
  %v69 = vld [vmem:[%s0 + $0x188] sm:$0xff]
  %v70 = vld [vmem:[%s0 + $0x190] sm:$0xff]
  %v71 = vld [vmem:[%s0 + $0x198] sm:$0xff]
  %v72 = vld [vmem:[%s0 + $0x1a0] sm:$0xff]
  %v73 = vld [vmem:[%s0 + $0x1a8] sm:$0xff]
  %v74 = vld [vmem:[%s0 + $0x1b0] sm:$0xff]
  %v75 = vld [vmem:[%s0 + $0x1b8] sm:$0xff]
  %v76 = vld [vmem:[%s0 + $0x1c0] sm:$0xff]
  %v77 = vld [vmem:[%s0 + $0x1c8] sm:$0xff]
  %v78 = vld [vmem:[%s0 + $0x1d0] sm:$0xff]
  %v79 = vld [vmem:[%s0 + $0x1d8] sm:$0xff]
  %v80 = vld [vmem:[%s0 + $0x1e0] sm:$0xff]
  %v81 = vld [vmem:[%s0 + $0x1e8] sm:$0xff]
  %v82 = vld [vmem:[%s0 + $0x1f0] sm:$0xff]
  %v83 = vld [vmem:[%s0 + $0x1f8] sm:$0xff]
  %v84 = vld [vmem:[%s1] sm:$0xff]
  %v85 = vld [vmem:[%s1 + $0x8] sm:$0xff]
  %v86 = vld [vmem:[%s1 + $0x10] sm:$0xff]
  %v87 = vld [vmem:[%s1 + $0x18] sm:$0xff]
  %v88 = vld [vmem:[%s1 + $0x20] sm:$0xff]
  %v89 = vld [vmem:[%s1 + $0x28] sm:$0xff]
  %v90 = vld [vmem:[%s1 + $0x30] sm:$0xff]
  %v91 = vld [vmem:[%s1 + $0x38] sm:$0xff]
  %v92 = vld [vmem:[%s1 + $0x40] sm:$0xff]
  %v93 = vld [vmem:[%s1 + $0x48] sm:$0xff]
  %v94 = vld [vmem:[%s1 + $0x50] sm:$0xff]
  %v95 = vld [vmem:[%s1 + $0x58] sm:$0xff]
  %v96 = vld [vmem:[%s1 + $0x60] sm:$0xff]
  %v97 = vld [vmem:[%s1 + $0x68] sm:$0xff]
  %v98 = vld [vmem:[%s1 + $0x70] sm:$0xff]
  %v99 = vld [vmem:[%s1 + $0x78] sm:$0xff]
  %v100 = vld [vmem:[%s1 + $0x80] sm:$0xff]
  %v101 = vld [vmem:[%s1 + $0x88] sm:$0xff]
  %v102 = vld [vmem:[%s1 + $0x90] sm:$0xff]
  %v103 = vld [vmem:[%s1 + $0x98] sm:$0xff]
  %v104 = vld [vmem:[%s1 + $0xa0] sm:$0xff]
  %v105 = vld [vmem:[%s1 + $0xa8] sm:$0xff]
  %v106 = vld [vmem:[%s1 + $0xb0] sm:$0xff]
  %v107 = vld [vmem:[%s1 + $0xb8] sm:$0xff]
  %v108 = vld [vmem:[%s1 + $0xc0] sm:$0xff]
  %v109 = vld [vmem:[%s1 + $0xc8] sm:$0xff]
  %v110 = vld [vmem:[%s1 + $0xd0] sm:$0xff]
  %v111 = vld [vmem:[%s1 + $0xd8] sm:$0xff]
  %v112 = vld [vmem:[%s1 + $0xe0] sm:$0xff]
  %v113 = vld [vmem:[%s1 + $0xe8] sm:$0xff]
  %v114 = vld [vmem:[%s1 + $0xf0] sm:$0xff]
  %v115 = vld [vmem:[%s1 + $0xf8] sm:$0xff]
  %v116 = vld [vmem:[%s1 + $0x100] sm:$0xff]
  %v117 = vld [vmem:[%s1 + $0x108] sm:$0xff]
  %v118 = vld [vmem:[%s1 + $0x110] sm:$0xff]
  %v119 = vld [vmem:[%s1 + $0x118] sm:$0xff]
  %v120 = vld [vmem:[%s1 + $0x120] sm:$0xff]
  %v121 = vld [vmem:[%s1 + $0x128] sm:$0xff]
  %v122 = vld [vmem:[%s1 + $0x130] sm:$0xff]
  %v123 = vld [vmem:[%s1 + $0x138] sm:$0xff]
  %v124 = vld [vmem:[%s1 + $0x140] sm:$0xff]
  %v125 = vld [vmem:[%s1 + $0x148] sm:$0xff]
  %v126 = vld [vmem:[%s1 + $0x150] sm:$0xff]
  %v127 = vld [vmem:[%s1 + $0x158] sm:$0xff]
  %v128 = vld [vmem:[%s1 + $0x160] sm:$0xff]
  %v129 = vld [vmem:[%s1 + $0x168] sm:$0xff]
  %v130 = vld [vmem:[%s1 + $0x170] sm:$0xff]
  %v131 = vld [vmem:[%s1 + $0x178] sm:$0xff]
  %v132 = vld [vmem:[%s1 + $0x180] sm:$0xff]
  %v133 = vld [vmem:[%s1 + $0x188] sm:$0xff]
  %v134 = vld [vmem:[%s1 + $0x190] sm:$0xff]
  %v135 = vld [vmem:[%s1 + $0x198] sm:$0xff]
  %v136 = vld [vmem:[%s1 + $0x1a0] sm:$0xff]
  %v137 = vld [vmem:[%s1 + $0x1a8] sm:$0xff]
  %v138 = vld [vmem:[%s1 + $0x1b0] sm:$0xff]
  %v139 = vld [vmem:[%s1 + $0x1b8] sm:$0xff]
  %v140 = vld [vmem:[%s1 + $0x1c0] sm:$0xff]
  %v141 = vld [vmem:[%s1 + $0x1c8] sm:$0xff]
  %v142 = vld [vmem:[%s1 + $0x1d0] sm:$0xff]
  %v143 = vld [vmem:[%s1 + $0x1d8] sm:$0xff]
  %v144 = vld [vmem:[%s1 + $0x1e0] sm:$0xff]
  %v145 = vld [vmem:[%s1 + $0x1e8] sm:$0xff]
  %v146 = vld [vmem:[%s1 + $0x1f0] sm:$0xff]
  %v147 = vld [vmem:[%s1 + $0x1f8] sm:$0xff]
  %v148 = vld [vmem:[%s1 + $0x200] sm:$0xff]
  %v149 = vld [vmem:[%s1 + $0x208] sm:$0xff]
  %v150 = vld [vmem:[%s1 + $0x210] sm:$0xff]
  %v151 = vld [vmem:[%s1 + $0x218] sm:$0xff]
  %v152 = vld [vmem:[%s1 + $0x220] sm:$0xff]
  %v153 = vld [vmem:[%s1 + $0x228] sm:$0xff]
  %v154 = vld [vmem:[%s1 + $0x230] sm:$0xff]
  %v155 = vld [vmem:[%s1 + $0x238] sm:$0xff]
  %v156 = vld [vmem:[%s1 + $0x240] sm:$0xff]
  %v157 = vld [vmem:[%s1 + $0x248] sm:$0xff]
  %v158 = vld [vmem:[%s1 + $0x250] sm:$0xff]
  %v159 = vld [vmem:[%s1 + $0x258] sm:$0xff]
  %v160 = vld [vmem:[%s1 + $0x260] sm:$0xff]
  %v161 = vld [vmem:[%s1 + $0x268] sm:$0xff]
  %v162 = vld [vmem:[%s1 + $0x270] sm:$0xff]
  %v163 = vld [vmem:[%s1 + $0x278] sm:$0xff]
  %v164 = vld [vmem:[%s1 + $0x280] sm:$0xff]
  %v165 = vld [vmem:[%s1 + $0x288] sm:$0xff]
  %v166 = vld [vmem:[%s1 + $0x290] sm:$0xff]
  %v167 = vld [vmem:[%s1 + $0x298] sm:$0xff]
  %v168 = vld [vmem:[%s1 + $0x2a0] sm:$0xff]
  %v169 = vld [vmem:[%s1 + $0x2a8] sm:$0xff]
  %v170 = vld [vmem:[%s1 + $0x2b0] sm:$0xff]
  %v171 = vld [vmem:[%s1 + $0x2b8] sm:$0xff]
  %v172 = vld [vmem:[%s1 + $0x2c0] sm:$0xff]
  %v173 = vld [vmem:[%s1 + $0x2c8] sm:$0xff]
  %v174 = vld [vmem:[%s1 + $0x2d0] sm:$0xff]
  %v175 = vld [vmem:[%s1 + $0x2d8] sm:$0xff]
  %v176 = vld [vmem:[%s1 + $0x2e0] sm:$0xff]
  %v177 = vld [vmem:[%s1 + $0x2e8] sm:$0xff]
  %v178 = vld [vmem:[%s1 + $0x2f0] sm:$0xff]
  %v179 = vld [vmem:[%s1 + $0x2f8] sm:$0xff]
  %v180 = vld [vmem:[%s1 + $0x300] sm:$0xff]
  %v181 = vld [vmem:[%s1 + $0x308] sm:$0xff]
  %v182 = vld [vmem:[%s1 + $0x310] sm:$0xff]
  %v183 = vld [vmem:[%s1 + $0x318] sm:$0xff]
  %v184 = vld [vmem:[%s1 + $0x320] sm:$0xff]
  %v185 = vld [vmem:[%s1 + $0x328] sm:$0xff]
  %v186 = vld [vmem:[%s1 + $0x330] sm:$0xff]
  %v187 = vld [vmem:[%s1 + $0x338] sm:$0xff]
  %v188 = vld [vmem:[%s1 + $0x340] sm:$0xff]
  %v189 = vld [vmem:[%s1 + $0x348] sm:$0xff]
  %v190 = vld [vmem:[%s1 + $0x350] sm:$0xff]
  %v191 = vld [vmem:[%s1 + $0x358] sm:$0xff]
  %v192 = vld [vmem:[%s1 + $0x360] sm:$0xff]
  %v193 = vld [vmem:[%s1 + $0x368] sm:$0xff]
  %v194 = vld [vmem:[%s1 + $0x370] sm:$0xff]
  %v195 = vld [vmem:[%s1 + $0x378] sm:$0xff]
  %v196 = vld [vmem:[%s1 + $0x380] sm:$0xff]
  %v197 = vld [vmem:[%s1 + $0x388] sm:$0xff]
  %v198 = vld [vmem:[%s1 + $0x390] sm:$0xff]
  %v199 = vld [vmem:[%s1 + $0x398] sm:$0xff]
  %v200 = vld [vmem:[%s1 + $0x3a0] sm:$0xff]
  %v201 = vld [vmem:[%s1 + $0x3a8] sm:$0xff]
  %v202 = vld [vmem:[%s1 + $0x3b0] sm:$0xff]
  %v203 = vld [vmem:[%s1 + $0x3b8] sm:$0xff]
  %v204 = vld [vmem:[%s1 + $0x3c0] sm:$0xff]
  %v205 = vld [vmem:[%s1 + $0x3c8] sm:$0xff]
  %v206 = vld [vmem:[%s1 + $0x3d0] sm:$0xff]
  %v207 = vld [vmem:[%s1 + $0x3d8] sm:$0xff]
  %v208 = vld [vmem:[%s1 + $0x3e0] sm:$0xff]
  %v209 = vld [vmem:[%s1 + $0x3e8] sm:$0xff]
  %v210 = vld [vmem:[%s1 + $0x3f0] sm:$0xff]
  %v211 = vld [vmem:[%s1 + $0x3f8] sm:$0xff]
  %v212 = vld [vmem:[%s1 + $0x400] sm:$0xff]
  %v213 = vld [vmem:[%s1 + $0x408] sm:$0xff]
  %v214 = vld [vmem:[%s1 + $0x410] sm:$0xff]
  %v215 = vld [vmem:[%s1 + $0x418] sm:$0xff]
  %v216 = vld [vmem:[%s1 + $0x420] sm:$0xff]
  %v217 = vld [vmem:[%s1 + $0x428] sm:$0xff]
  %v218 = vld [vmem:[%s1 + $0x430] sm:$0xff]
  %v219 = vld [vmem:[%s1 + $0x438] sm:$0xff]
  %v220 = vld [vmem:[%s1 + $0x440] sm:$0xff]
  %v221 = vld [vmem:[%s1 + $0x448] sm:$0xff]
  %v222 = vld [vmem:[%s1 + $0x450] sm:$0xff]
  %v223 = vld [vmem:[%s1 + $0x458] sm:$0xff]
  %v224 = vld [vmem:[%s1 + $0x460] sm:$0xff]
  %v225 = vld [vmem:[%s1 + $0x468] sm:$0xff]
  %v226 = vld [vmem:[%s1 + $0x470] sm:$0xff]
  %v227 = vld [vmem:[%s1 + $0x478] sm:$0xff]
  %v228 = vld [vmem:[%s1 + $0x480] sm:$0xff]
  %v229 = vld [vmem:[%s1 + $0x488] sm:$0xff]
  %v230 = vld [vmem:[%s1 + $0x490] sm:$0xff]
  %v231 = vld [vmem:[%s1 + $0x498] sm:$0xff]
  %v232 = vld [vmem:[%s1 + $0x4a0] sm:$0xff]
  %v233 = vld [vmem:[%s1 + $0x4a8] sm:$0xff]
  %v234 = vld [vmem:[%s1 + $0x4b0] sm:$0xff]
  %v235 = vld [vmem:[%s1 + $0x4b8] sm:$0xff]
  %v236 = vld [vmem:[%s1 + $0x4c0] sm:$0xff]
  %v237 = vld [vmem:[%s1 + $0x4c8] sm:$0xff]
  %v238 = vld [vmem:[%s1 + $0x4d0] sm:$0xff]
  %v239 = vld [vmem:[%s1 + $0x4d8] sm:$0xff]
  %v240 = vld [vmem:[%s1 + $0x4e0] sm:$0xff]
  %v241 = vld [vmem:[%s1 + $0x4e8] sm:$0xff]
  %v242 = vld [vmem:[%s1 + $0x4f0] sm:$0xff]
  %v243 = vld [vmem:[%s1 + $0x4f8] sm:$0xff]
  %v244 = vld [vmem:[%s1 + $0x500] sm:$0xff]
  %v245 = vld [vmem:[%s1 + $0x508] sm:$0xff]
  %v246 = vld [vmem:[%s1 + $0x510] sm:$0xff]
  %v247 = vld [vmem:[%s1 + $0x518] sm:$0xff]
  %v248 = vld [vmem:[%s1 + $0x520] sm:$0xff]
  %v249 = vld [vmem:[%s1 + $0x528] sm:$0xff]
  %v250 = vld [vmem:[%s1 + $0x530] sm:$0xff]
  %v251 = vld [vmem:[%s1 + $0x538] sm:$0xff]
  %v252 = vld [vmem:[%s1 + $0x540] sm:$0xff]
  %v253 = vld [vmem:[%s1 + $0x548] sm:$0xff]
  %v254 = vld [vmem:[%s1 + $0x550] sm:$0xff]
  %v255 = vld [vmem:[%s1 + $0x558] sm:$0xff]
  %v256 = vld [vmem:[%s1 + $0x560] sm:$0xff]
  %v257 = vld [vmem:[%s1 + $0x568] sm:$0xff]
  %v258 = vld [vmem:[%s1 + $0x570] sm:$0xff]
  %v259 = vld [vmem:[%s1 + $0x578] sm:$0xff]
  %v260 = vld [vmem:[%s1 + $0x580] sm:$0xff]
  %v261 = vld [vmem:[%s1 + $0x588] sm:$0xff]
  %v262 = vld [vmem:[%s1 + $0x590] sm:$0xff]
  %v263 = vld [vmem:[%s1 + $0x598] sm:$0xff]
  %v264 = vld [vmem:[%s1 + $0x5a0] sm:$0xff]
  %v265 = vld [vmem:[%s1 + $0x5a8] sm:$0xff]
  %v266 = vld [vmem:[%s1 + $0x5b0] sm:$0xff]
  %v267 = vld [vmem:[%s1 + $0x5b8] sm:$0xff]
  %v268 = vld [vmem:[%s1 + $0x5c0] sm:$0xff]
  %v269 = vld [vmem:[%s1 + $0x5c8] sm:$0xff]
  %v270 = vld [vmem:[%s1 + $0x5d0] sm:$0xff]
  %v271 = vld [vmem:[%s1 + $0x5d8] sm:$0xff]
  %v272 = vld [vmem:[%s1 + $0x5e0] sm:$0xff]
  %v273 = vld [vmem:[%s1 + $0x5e8] sm:$0xff]
  %v274 = vld [vmem:[%s1 + $0x5f0] sm:$0xff]
  %v275 = vld [vmem:[%s1 + $0x5f8] sm:$0xff]
  %v276 = vld [vmem:[%s1 + $0x600] sm:$0xff]
  %v277 = vld [vmem:[%s1 + $0x608] sm:$0xff]
  %v278 = vld [vmem:[%s1 + $0x610] sm:$0xff]
  %v279 = vld [vmem:[%s1 + $0x618] sm:$0xff]
  %v280 = vld [vmem:[%s1 + $0x620] sm:$0xff]
  %v281 = vld [vmem:[%s1 + $0x628] sm:$0xff]
  %v282 = vld [vmem:[%s1 + $0x630] sm:$0xff]
  %v283 = vld [vmem:[%s1 + $0x638] sm:$0xff]
  %v284 = vld [vmem:[%s1 + $0x640] sm:$0xff]
  %v285 = vld [vmem:[%s1 + $0x648] sm:$0xff]
  %v286 = vld [vmem:[%s1 + $0x650] sm:$0xff]
  %v287 = vld [vmem:[%s1 + $0x658] sm:$0xff]
  %v288 = vld [vmem:[%s1 + $0x660] sm:$0xff]
  %v289 = vld [vmem:[%s1 + $0x668] sm:$0xff]
  %v290 = vld [vmem:[%s1 + $0x670] sm:$0xff]
  %v291 = vld [vmem:[%s1 + $0x678] sm:$0xff]
  %v292 = vld [vmem:[%s1 + $0x680] sm:$0xff]
  %v293 = vld [vmem:[%s1 + $0x688] sm:$0xff]
  %v294 = vld [vmem:[%s1 + $0x690] sm:$0xff]
  %v295 = vld [vmem:[%s1 + $0x698] sm:$0xff]
  %v296 = vld [vmem:[%s1 + $0x6a0] sm:$0xff]
  %v297 = vld [vmem:[%s1 + $0x6a8] sm:$0xff]
  %v298 = vld [vmem:[%s1 + $0x6b0] sm:$0xff]
  %v299 = vld [vmem:[%s1 + $0x6b8] sm:$0xff]
  %v300 = vld [vmem:[%s1 + $0x6c0] sm:$0xff]
  %v301 = vld [vmem:[%s1 + $0x6c8] sm:$0xff]
  %v302 = vld [vmem:[%s1 + $0x6d0] sm:$0xff]
  %v303 = vld [vmem:[%s1 + $0x6d8] sm:$0xff]
  %v304 = vld [vmem:[%s1 + $0x6e0] sm:$0xff]
  %v305 = vld [vmem:[%s1 + $0x6e8] sm:$0xff]
  %v306 = vld [vmem:[%s1 + $0x6f0] sm:$0xff]
  %v307 = vld [vmem:[%s1 + $0x6f8] sm:$0xff]
  %v308 = vld [vmem:[%s1 + $0x700] sm:$0xff]
  %v309 = vld [vmem:[%s1 + $0x708] sm:$0xff]
  %v310 = vld [vmem:[%s1 + $0x710] sm:$0xff]
  %v311 = vld [vmem:[%s1 + $0x718] sm:$0xff]
  %v312 = vld [vmem:[%s1 + $0x720] sm:$0xff]
  %v313 = vld [vmem:[%s1 + $0x728] sm:$0xff]
  %v314 = vld [vmem:[%s1 + $0x730] sm:$0xff]
  %v315 = vld [vmem:[%s1 + $0x738] sm:$0xff]
  %v316 = vld [vmem:[%s1 + $0x740] sm:$0xff]
  %v317 = vld [vmem:[%s1 + $0x748] sm:$0xff]
  %v318 = vld [vmem:[%s1 + $0x750] sm:$0xff]
  %v319 = vld [vmem:[%s1 + $0x758] sm:$0xff]
  %v320 = vld [vmem:[%s1 + $0x760] sm:$0xff]
  %v321 = vld [vmem:[%s1 + $0x768] sm:$0xff]
  %v322 = vld [vmem:[%s1 + $0x770] sm:$0xff]
  %v323 = vld [vmem:[%s1 + $0x778] sm:$0xff]
  %v324 = vld [vmem:[%s1 + $0x780] sm:$0xff]
  %v325 = vld [vmem:[%s1 + $0x788] sm:$0xff]
  %v326 = vld [vmem:[%s1 + $0x790] sm:$0xff]
  %v327 = vld [vmem:[%s1 + $0x798] sm:$0xff]
  %v328 = vld [vmem:[%s1 + $0x7a0] sm:$0xff]
  %v329 = vld [vmem:[%s1 + $0x7a8] sm:$0xff]
  %v330 = vld [vmem:[%s1 + $0x7b0] sm:$0xff]
  %v331 = vld [vmem:[%s1 + $0x7b8] sm:$0xff]
  %v332 = vld [vmem:[%s1 + $0x7c0] sm:$0xff]
  %v333 = vld [vmem:[%s1 + $0x7c8] sm:$0xff]
  %v334 = vld [vmem:[%s1 + $0x7d0] sm:$0xff]
  %v335 = vld [vmem:[%s1 + $0x7d8] sm:$0xff]
  %v336 = vld [vmem:[%s1 + $0x7e0] sm:$0xff]
  %v337 = vld [vmem:[%s1 + $0x7e8] sm:$0xff]
  %v338 = vld [vmem:[%s1 + $0x7f0] sm:$0xff]
  %v339 = vld [vmem:[%s1 + $0x7f8] sm:$0xff]
  %v340 = vld [vmem:[%s1 + $0x800] sm:$0xff]
  %v341 = vld [vmem:[%s1 + $0x808] sm:$0xff]
  %v342 = vld [vmem:[%s1 + $0x810] sm:$0xff]
  %v343 = vld [vmem:[%s1 + $0x818] sm:$0xff]
  %v344 = vld [vmem:[%s1 + $0x820] sm:$0xff]
  %v345 = vld [vmem:[%s1 + $0x828] sm:$0xff]
  %v346 = vld [vmem:[%s1 + $0x830] sm:$0xff]
  %v347 = vld [vmem:[%s1 + $0x838] sm:$0xff]
  %v348 = vld [vmem:[%s1 + $0x840] sm:$0xff]
  %v349 = vld [vmem:[%s1 + $0x848] sm:$0xff]
  %v350 = vld [vmem:[%s1 + $0x850] sm:$0xff]
  %v351 = vld [vmem:[%s1 + $0x858] sm:$0xff]
  %v352 = vld [vmem:[%s1 + $0x860] sm:$0xff]
  %v353 = vld [vmem:[%s1 + $0x868] sm:$0xff]
  %v354 = vld [vmem:[%s1 + $0x870] sm:$0xff]
  %v355 = vld [vmem:[%s1 + $0x878] sm:$0xff]
  %v356 = vld [vmem:[%s1 + $0x880] sm:$0xff]
  %v357 = vld [vmem:[%s1 + $0x888] sm:$0xff]
  %v358 = vld [vmem:[%s1 + $0x890] sm:$0xff]
  %v359 = vld [vmem:[%s1 + $0x898] sm:$0xff]
  %v360 = vld [vmem:[%s1 + $0x8a0] sm:$0xff]
  %v361 = vld [vmem:[%s1 + $0x8a8] sm:$0xff]
  %v362 = vld [vmem:[%s1 + $0x8b0] sm:$0xff]
  %v363 = vld [vmem:[%s1 + $0x8b8] sm:$0xff]
  %v364 = vld [vmem:[%s1 + $0x8c0] sm:$0xff]
  %v365 = vld [vmem:[%s1 + $0x8c8] sm:$0xff]
  %v366 = vld [vmem:[%s1 + $0x8d0] sm:$0xff]
  %v367 = vld [vmem:[%s1 + $0x8d8] sm:$0xff]
  %v368 = vld [vmem:[%s1 + $0x8e0] sm:$0xff]
  %v369 = vld [vmem:[%s1 + $0x8e8] sm:$0xff]
  %v370 = vld [vmem:[%s1 + $0x8f0] sm:$0xff]
  %v371 = vld [vmem:[%s1 + $0x8f8] sm:$0xff]
  %v372 = vld [vmem:[%s1 + $0x900] sm:$0xff]
  %v373 = vld [vmem:[%s1 + $0x908] sm:$0xff]
  %v374 = vld [vmem:[%s1 + $0x910] sm:$0xff]
  %v375 = vld [vmem:[%s1 + $0x918] sm:$0xff]
  %v376 = vld [vmem:[%s1 + $0x920] sm:$0xff]
  %v377 = vld [vmem:[%s1 + $0x928] sm:$0xff]
  %v378 = vld [vmem:[%s1 + $0x930] sm:$0xff]
  %v379 = vld [vmem:[%s1 + $0x938] sm:$0xff]
  %v380 = vld [vmem:[%s1 + $0x940] sm:$0xff]
  %v381 = vld [vmem:[%s1 + $0x948] sm:$0xff]
  %v382 = vld [vmem:[%s1 + $0x950] sm:$0xff]
  %v383 = vld [vmem:[%s1 + $0x958] sm:$0xff]
  %v384 = vld [vmem:[%s1 + $0x960] sm:$0xff]
  %v385 = vld [vmem:[%s1 + $0x968] sm:$0xff]
  %v386 = vld [vmem:[%s1 + $0x970] sm:$0xff]
  %v387 = vld [vmem:[%s1 + $0x978] sm:$0xff]
  %v388 = vld [vmem:[%s1 + $0x980] sm:$0xff]
  %v389 = vld [vmem:[%s1 + $0x988] sm:$0xff]
  %v390 = vld [vmem:[%s1 + $0x990] sm:$0xff]
  %v391 = vld [vmem:[%s1 + $0x998] sm:$0xff]
  %v392 = vld [vmem:[%s1 + $0x9a0] sm:$0xff]
  %v393 = vld [vmem:[%s1 + $0x9a8] sm:$0xff]
  %v394 = vld [vmem:[%s1 + $0x9b0] sm:$0xff]
  %v395 = vld [vmem:[%s1 + $0x9b8] sm:$0xff]
  %v396 = vld [vmem:[%s1 + $0x9c0] sm:$0xff]
  %v397 = vld [vmem:[%s1 + $0x9c8] sm:$0xff]
  %v398 = vld [vmem:[%s1 + $0x9d0] sm:$0xff]
  %v399 = vld [vmem:[%s1 + $0x9d8] sm:$0xff]
  %v400 = vld [vmem:[%s1 + $0x9e0] sm:$0xff]
  %v401 = vld [vmem:[%s1 + $0x9e8] sm:$0xff]
  %v402 = vld [vmem:[%s1 + $0x9f0] sm:$0xff]
  %v403 = vld [vmem:[%s1 + $0x9f8] sm:$0xff]
  %v404 = vld [vmem:[%s1 + $0xa00] sm:$0xff]
  %v405 = vld [vmem:[%s1 + $0xa08] sm:$0xff]
  %v406 = vld [vmem:[%s1 + $0xa10] sm:$0xff]
  %v407 = vld [vmem:[%s1 + $0xa18] sm:$0xff]
  %v408 = vld [vmem:[%s1 + $0xa20] sm:$0xff]
  %v409 = vld [vmem:[%s1 + $0xa28] sm:$0xff]
  %v410 = vld [vmem:[%s1 + $0xa30] sm:$0xff]
  %v411 = vld [vmem:[%s1 + $0xa38] sm:$0xff]
  %v412 = vld [vmem:[%s1 + $0xa40] sm:$0xff]
  %v413 = vld [vmem:[%s1 + $0xa48] sm:$0xff]
  %v414 = vld [vmem:[%s1 + $0xa50] sm:$0xff]
  %v415 = vld [vmem:[%s1 + $0xa58] sm:$0xff]
  %v416 = vld [vmem:[%s1 + $0xa60] sm:$0xff]
  %v417 = vld [vmem:[%s1 + $0xa68] sm:$0xff]
  %v418 = vld [vmem:[%s1 + $0xa70] sm:$0xff]
  %v419 = vld [vmem:[%s1 + $0xa78] sm:$0xff]
  %v420 = vld [vmem:[%s1 + $0xa80] sm:$0xff]
  %v421 = vld [vmem:[%s1 + $0xa88] sm:$0xff]
  %v422 = vld [vmem:[%s1 + $0xa90] sm:$0xff]
  %v423 = vld [vmem:[%s1 + $0xa98] sm:$0xff]
  %v424 = vld [vmem:[%s1 + $0xaa0] sm:$0xff]
  %v425 = vld [vmem:[%s1 + $0xaa8] sm:$0xff]
  %v426 = vld [vmem:[%s1 + $0xab0] sm:$0xff]
  %v427 = vld [vmem:[%s1 + $0xab8] sm:$0xff]
  %v428 = vld [vmem:[%s1 + $0xac0] sm:$0xff]
  %v429 = vld [vmem:[%s1 + $0xac8] sm:$0xff]
  %v430 = vld [vmem:[%s1 + $0xad0] sm:$0xff]
  %v431 = vld [vmem:[%s1 + $0xad8] sm:$0xff]
  %v432 = vld [vmem:[%s1 + $0xae0] sm:$0xff]
  %v433 = vld [vmem:[%s1 + $0xae8] sm:$0xff]
  %v434 = vld [vmem:[%s1 + $0xaf0] sm:$0xff]
  %v435 = vld [vmem:[%s1 + $0xaf8] sm:$0xff]
  %v436 = vld [vmem:[%s1 + $0xb00] sm:$0xff]
  %v437 = vld [vmem:[%s1 + $0xb08] sm:$0xff]
  %v438 = vld [vmem:[%s1 + $0xb10] sm:$0xff]
  %v439 = vld [vmem:[%s1 + $0xb18] sm:$0xff]
  %v440 = vld [vmem:[%s1 + $0xb20] sm:$0xff]
  %v441 = vld [vmem:[%s1 + $0xb28] sm:$0xff]
  %v442 = vld [vmem:[%s1 + $0xb30] sm:$0xff]
  %v443 = vld [vmem:[%s1 + $0xb38] sm:$0xff]
  %v444 = vld [vmem:[%s1 + $0xb40] sm:$0xff]
  %v445 = vld [vmem:[%s1 + $0xb48] sm:$0xff]
  %v446 = vld [vmem:[%s1 + $0xb50] sm:$0xff]
  %v447 = vld [vmem:[%s1 + $0xb58] sm:$0xff]
  %v448 = vld [vmem:[%s1 + $0xb60] sm:$0xff]
  %v449 = vld [vmem:[%s1 + $0xb68] sm:$0xff]
  %v450 = vld [vmem:[%s1 + $0xb70] sm:$0xff]
  %v451 = vld [vmem:[%s1 + $0xb78] sm:$0xff]
  %v452 = vld [vmem:[%s1 + $0xb80] sm:$0xff]
  %v453 = vld [vmem:[%s1 + $0xb88] sm:$0xff]
  %v454 = vld [vmem:[%s1 + $0xb90] sm:$0xff]
  %v455 = vld [vmem:[%s1 + $0xb98] sm:$0xff]
  %v456 = vld [vmem:[%s1 + $0xba0] sm:$0xff]
  %v457 = vld [vmem:[%s1 + $0xba8] sm:$0xff]
  %v458 = vld [vmem:[%s1 + $0xbb0] sm:$0xff]
  %v459 = vld [vmem:[%s1 + $0xbb8] sm:$0xff]
  %v460 = vld [vmem:[%s1 + $0xbc0] sm:$0xff]
  %v461 = vld [vmem:[%s1 + $0xbc8] sm:$0xff]
  %v462 = vld [vmem:[%s1 + $0xbd0] sm:$0xff]
  %v463 = vld [vmem:[%s1 + $0xbd8] sm:$0xff]
  %v464 = vld [vmem:[%s1 + $0xbe0] sm:$0xff]
  %v465 = vld [vmem:[%s1 + $0xbe8] sm:$0xff]
  %v466 = vld [vmem:[%s1 + $0xbf0] sm:$0xff]
  %v467 = vld [vmem:[%s1 + $0xbf8] sm:$0xff]
  %v468 = vld [vmem:[%s1 + $0xc00] sm:$0xff]
  %v469 = vld [vmem:[%s1 + $0xc08] sm:$0xff]
  %v470 = vld [vmem:[%s1 + $0xc10] sm:$0xff]
  %v471 = vld [vmem:[%s1 + $0xc18] sm:$0xff]
  %v472 = vld [vmem:[%s1 + $0xc20] sm:$0xff]
  %v473 = vld [vmem:[%s1 + $0xc28] sm:$0xff]
  %v474 = vld [vmem:[%s1 + $0xc30] sm:$0xff]
  %v475 = vld [vmem:[%s1 + $0xc38] sm:$0xff]
  %v476 = vld [vmem:[%s1 + $0xc40] sm:$0xff]
  %v477 = vld [vmem:[%s1 + $0xc48] sm:$0xff]
  %v478 = vld [vmem:[%s1 + $0xc50] sm:$0xff]
  %v479 = vld [vmem:[%s1 + $0xc58] sm:$0xff]
  %v480 = vld [vmem:[%s1 + $0xc60] sm:$0xff]
  %v481 = vld [vmem:[%s1 + $0xc68] sm:$0xff]
  %v482 = vld [vmem:[%s1 + $0xc70] sm:$0xff]
  %v483 = vld [vmem:[%s1 + $0xc78] sm:$0xff]
  %v484 = vld [vmem:[%s1 + $0xc80] sm:$0xff]
  %v485 = vld [vmem:[%s1 + $0xc88] sm:$0xff]
  %v486 = vld [vmem:[%s1 + $0xc90] sm:$0xff]
  %v487 = vld [vmem:[%s1 + $0xc98] sm:$0xff]
  %v488 = vld [vmem:[%s1 + $0xca0] sm:$0xff]
  %v489 = vld [vmem:[%s1 + $0xca8] sm:$0xff]
  %v490 = vld [vmem:[%s1 + $0xcb0] sm:$0xff]
  %v491 = vld [vmem:[%s1 + $0xcb8] sm:$0xff]
  %v492 = vld [vmem:[%s1 + $0xcc0] sm:$0xff]
  %v493 = vld [vmem:[%s1 + $0xcc8] sm:$0xff]
  %v494 = vld [vmem:[%s1 + $0xcd0] sm:$0xff]
  %v495 = vld [vmem:[%s1 + $0xcd8] sm:$0xff]
  %v496 = vld [vmem:[%s1 + $0xce0] sm:$0xff]
  %v497 = vld [vmem:[%s1 + $0xce8] sm:$0xff]
  %v498 = vld [vmem:[%s1 + $0xcf0] sm:$0xff]
  %v499 = vld [vmem:[%s1 + $0xcf8] sm:$0xff]
  %v500 = vld [vmem:[%s1 + $0xd00] sm:$0xff]
  %v501 = vld [vmem:[%s1 + $0xd08] sm:$0xff]
  %v502 = vld [vmem:[%s1 + $0xd10] sm:$0xff]
  %v503 = vld [vmem:[%s1 + $0xd18] sm:$0xff]
  %v504 = vld [vmem:[%s1 + $0xd20] sm:$0xff]
  %v505 = vld [vmem:[%s1 + $0xd28] sm:$0xff]
  %v506 = vld [vmem:[%s1 + $0xd30] sm:$0xff]
  %v507 = vld [vmem:[%s1 + $0xd38] sm:$0xff]
  %v508 = vld [vmem:[%s1 + $0xd40] sm:$0xff]
  %v509 = vld [vmem:[%s1 + $0xd48] sm:$0xff]
  %v510 = vld [vmem:[%s1 + $0xd50] sm:$0xff]
  %v511 = vld [vmem:[%s1 + $0xd58] sm:$0xff]
  %v512 = vld [vmem:[%s1 + $0xd60] sm:$0xff]
  %v513 = vld [vmem:[%s1 + $0xd68] sm:$0xff]
  %v514 = vld [vmem:[%s1 + $0xd70] sm:$0xff]
  %v515 = vld [vmem:[%s1 + $0xd78] sm:$0xff]
  %v516 = vld [vmem:[%s1 + $0xd80] sm:$0xff]
  %v517 = vld [vmem:[%s1 + $0xd88] sm:$0xff]
  %v518 = vld [vmem:[%s1 + $0xd90] sm:$0xff]
  %v519 = vld [vmem:[%s1 + $0xd98] sm:$0xff]
  %v520 = vld [vmem:[%s1 + $0xda0] sm:$0xff]
  %v521 = vld [vmem:[%s1 + $0xda8] sm:$0xff]
  %v522 = vld [vmem:[%s1 + $0xdb0] sm:$0xff]
  %v523 = vld [vmem:[%s1 + $0xdb8] sm:$0xff]
  %v524 = vld [vmem:[%s1 + $0xdc0] sm:$0xff]
  %v525 = vld [vmem:[%s1 + $0xdc8] sm:$0xff]
  %v526 = vld [vmem:[%s1 + $0xdd0] sm:$0xff]
  %v527 = vld [vmem:[%s1 + $0xdd8] sm:$0xff]
  %v528 = vld [vmem:[%s1 + $0xde0] sm:$0xff]
  %v529 = vld [vmem:[%s1 + $0xde8] sm:$0xff]
  %v530 = vld [vmem:[%s1 + $0xdf0] sm:$0xff]
  %v531 = vld [vmem:[%s1 + $0xdf8] sm:$0xff]
  %v532 = vld [vmem:[%s1 + $0xe00] sm:$0xff]
  %v533 = vld [vmem:[%s1 + $0xe08] sm:$0xff]
  %v534 = vld [vmem:[%s1 + $0xe10] sm:$0xff]
  %v535 = vld [vmem:[%s1 + $0xe18] sm:$0xff]
  %v536 = vld [vmem:[%s1 + $0xe20] sm:$0xff]
  %v537 = vld [vmem:[%s1 + $0xe28] sm:$0xff]
  %v538 = vld [vmem:[%s1 + $0xe30] sm:$0xff]
  %v539 = vld [vmem:[%s1 + $0xe38] sm:$0xff]
  %v540 = vld [vmem:[%s1 + $0xe40] sm:$0xff]
  %v541 = vld [vmem:[%s1 + $0xe48] sm:$0xff]
  %v542 = vld [vmem:[%s1 + $0xe50] sm:$0xff]
  %v543 = vld [vmem:[%s1 + $0xe58] sm:$0xff]
  %v544 = vld [vmem:[%s1 + $0xe60] sm:$0xff]
  %v545 = vld [vmem:[%s1 + $0xe68] sm:$0xff]
  %v546 = vld [vmem:[%s1 + $0xe70] sm:$0xff]
  %v547 = vld [vmem:[%s1 + $0xe78] sm:$0xff]
  %v548 = vld [vmem:[%s1 + $0xe80] sm:$0xff]
  %v549 = vld [vmem:[%s1 + $0xe88] sm:$0xff]
  %v550 = vld [vmem:[%s1 + $0xe90] sm:$0xff]
  %v551 = vld [vmem:[%s1 + $0xe98] sm:$0xff]
  %v552 = vld [vmem:[%s1 + $0xea0] sm:$0xff]
  %v553 = vld [vmem:[%s1 + $0xea8] sm:$0xff]
  %v554 = vld [vmem:[%s1 + $0xeb0] sm:$0xff]
  %v555 = vld [vmem:[%s1 + $0xeb8] sm:$0xff]
  %v556 = vld [vmem:[%s1 + $0xec0] sm:$0xff]
  %v557 = vld [vmem:[%s1 + $0xec8] sm:$0xff]
  %v558 = vld [vmem:[%s1 + $0xed0] sm:$0xff]
  %v559 = vld [vmem:[%s1 + $0xed8] sm:$0xff]
  %v560 = vld [vmem:[%s1 + $0xee0] sm:$0xff]
  %v561 = vld [vmem:[%s1 + $0xee8] sm:$0xff]
  %v562 = vld [vmem:[%s1 + $0xef0] sm:$0xff]
  %v563 = vld [vmem:[%s1 + $0xef8] sm:$0xff]
  %v564 = vld [vmem:[%s1 + $0xf00] sm:$0xff]
  %v565 = vld [vmem:[%s1 + $0xf08] sm:$0xff]
  %v566 = vld [vmem:[%s1 + $0xf10] sm:$0xff]
  %v567 = vld [vmem:[%s1 + $0xf18] sm:$0xff]
  %v568 = vld [vmem:[%s1 + $0xf20] sm:$0xff]
  %v569 = vld [vmem:[%s1 + $0xf28] sm:$0xff]
  %v570 = vld [vmem:[%s1 + $0xf30] sm:$0xff]
  %v571 = vld [vmem:[%s1 + $0xf38] sm:$0xff]
  %v572 = vld [vmem:[%s1 + $0xf40] sm:$0xff]
  %v573 = vld [vmem:[%s1 + $0xf48] sm:$0xff]
  %v574 = vld [vmem:[%s1 + $0xf50] sm:$0xff]
  %v575 = vld [vmem:[%s1 + $0xf58] sm:$0xff]
  %v576 = vld [vmem:[%s1 + $0xf60] sm:$0xff]
  %v577 = vld [vmem:[%s1 + $0xf68] sm:$0xff]
  %v578 = vld [vmem:[%s1 + $0xf70] sm:$0xff]
  %v579 = vld [vmem:[%s1 + $0xf78] sm:$0xff]
  %v580 = vld [vmem:[%s1 + $0xf80] sm:$0xff]
  %v581 = vld [vmem:[%s1 + $0xf88] sm:$0xff]
  %v582 = vld [vmem:[%s1 + $0xf90] sm:$0xff]
  %v583 = vld [vmem:[%s1 + $0xf98] sm:$0xff]
  %v584 = vld [vmem:[%s1 + $0xfa0] sm:$0xff]
  %v585 = vld [vmem:[%s1 + $0xfa8] sm:$0xff]
  %v586 = vld [vmem:[%s1 + $0xfb0] sm:$0xff]
  %v587 = vld [vmem:[%s1 + $0xfb8] sm:$0xff]
  %v588 = vld [vmem:[%s1 + $0xfc0] sm:$0xff]
  %v589 = vld [vmem:[%s1 + $0xfc8] sm:$0xff]
  %v590 = vld [vmem:[%s1 + $0xfd0] sm:$0xff]
  %v591 = vld [vmem:[%s1 + $0xfd8] sm:$0xff]
  %v592 = vld [vmem:[%s1 + $0xfe0] sm:$0xff]
  %v593 = vld [vmem:[%s1 + $0xfe8] sm:$0xff]
  %v594 = vld [vmem:[%s1 + $0xff0] sm:$0xff]
  %v595 = vld [vmem:[%s1 + $0xff8] sm:$0xff]
  %v596 = vld [vmem:[%s1 + $0x1000] sm:$0xff]
  %v597 = vld [vmem:[%s1 + $0x1008] sm:$0xff]
  %v598 = vld [vmem:[%s1 + $0x1010] sm:$0xff]
  %v599 = vld [vmem:[%s1 + $0x1018] sm:$0xff]
  %v600 = vld [vmem:[%s1 + $0x1020] sm:$0xff]
  %v601 = vld [vmem:[%s1 + $0x1028] sm:$0xff]
  %v602 = vld [vmem:[%s1 + $0x1030] sm:$0xff]
  %v603 = vld [vmem:[%s1 + $0x1038] sm:$0xff]
  %v604 = vld [vmem:[%s1 + $0x1040] sm:$0xff]
  %v605 = vld [vmem:[%s1 + $0x1048] sm:$0xff]
  %v606 = vld [vmem:[%s1 + $0x1050] sm:$0xff]
  %v607 = vld [vmem:[%s1 + $0x1058] sm:$0xff]
  %v608 = vld [vmem:[%s1 + $0x1060] sm:$0xff]
  %v609 = vld [vmem:[%s1 + $0x1068] sm:$0xff]
  %v610 = vld [vmem:[%s1 + $0x1070] sm:$0xff]
  %v611 = vld [vmem:[%s1 + $0x1078] sm:$0xff]
  %v612 = vld [vmem:[%s1 + $0x1080] sm:$0xff]
  %v613 = vld [vmem:[%s1 + $0x1088] sm:$0xff]
  %v614 = vld [vmem:[%s1 + $0x1090] sm:$0xff]
  %v615 = vld [vmem:[%s1 + $0x1098] sm:$0xff]
  %v616 = vld [vmem:[%s1 + $0x10a0] sm:$0xff]
  %v617 = vld [vmem:[%s1 + $0x10a8] sm:$0xff]
  %v618 = vld [vmem:[%s1 + $0x10b0] sm:$0xff]
  %v619 = vld [vmem:[%s1 + $0x10b8] sm:$0xff]
  %v620 = vld [vmem:[%s1 + $0x10c0] sm:$0xff]
  %v621 = vld [vmem:[%s1 + $0x10c8] sm:$0xff]
  %v622 = vld [vmem:[%s1 + $0x10d0] sm:$0xff]
  %v623 = vld [vmem:[%s1 + $0x10d8] sm:$0xff]
  %v624 = vld [vmem:[%s1 + $0x10e0] sm:$0xff]
  %v625 = vld [vmem:[%s1 + $0x10e8] sm:$0xff]
  %v626 = vld [vmem:[%s1 + $0x10f0] sm:$0xff]
  %v627 = vld [vmem:[%s1 + $0x10f8] sm:$0xff]
  %v628 = vld [vmem:[%s1 + $0x1100] sm:$0xff]
  %v629 = vld [vmem:[%s1 + $0x1108] sm:$0xff]
  %v630 = vld [vmem:[%s1 + $0x1110] sm:$0xff]
  %v631 = vld [vmem:[%s1 + $0x1118] sm:$0xff]
  %v632 = vld [vmem:[%s1 + $0x1120] sm:$0xff]
  %v633 = vld [vmem:[%s1 + $0x1128] sm:$0xff]
  %v634 = vld [vmem:[%s1 + $0x1130] sm:$0xff]
  %v635 = vld [vmem:[%s1 + $0x1138] sm:$0xff]
  %v636 = vld [vmem:[%s1 + $0x1140] sm:$0xff]
  %v637 = vld [vmem:[%s1 + $0x1148] sm:$0xff]
  %v638 = vld [vmem:[%s1 + $0x1150] sm:$0xff]
  %v639 = vld [vmem:[%s1 + $0x1158] sm:$0xff]
  %v640 = vld [vmem:[%s1 + $0x1160] sm:$0xff]
  %v641 = vld [vmem:[%s1 + $0x1168] sm:$0xff]
  %v642 = vld [vmem:[%s1 + $0x1170] sm:$0xff]
  %v643 = vld [vmem:[%s1 + $0x1178] sm:$0xff]
  %v644 = vld [vmem:[%s1 + $0x1180] sm:$0xff]
  %v645 = vld [vmem:[%s1 + $0x1188] sm:$0xff]
  %v646 = vld [vmem:[%s1 + $0x1190] sm:$0xff]
  %v647 = vld [vmem:[%s1 + $0x1198] sm:$0xff]
  %v648 = vld [vmem:[%s1 + $0x11a0] sm:$0xff]
  %v649 = vld [vmem:[%s1 + $0x11a8] sm:$0xff]
  %v650 = vld [vmem:[%s1 + $0x11b0] sm:$0xff]
  %v651 = vld [vmem:[%s1 + $0x11b8] sm:$0xff]
  %v652 = vld [vmem:[%s1 + $0x11c0] sm:$0xff]
  %v653 = vld [vmem:[%s1 + $0x11c8] sm:$0xff]
  %v654 = vld [vmem:[%s1 + $0x11d0] sm:$0xff]
  %v655 = vld [vmem:[%s1 + $0x11d8] sm:$0xff]
  %v656 = vld [vmem:[%s1 + $0x11e0] sm:$0xff]
  %v657 = vld [vmem:[%s1 + $0x11e8] sm:$0xff]
  %v658 = vld [vmem:[%s1 + $0x11f0] sm:$0xff]
  %v659 = vld [vmem:[%s1 + $0x11f8] sm:$0xff]
  %v660 = vld [vmem:[%s1 + $0x1200] sm:$0xff]
  %v661 = vld [vmem:[%s1 + $0x1208] sm:$0xff]
  %v662 = vld [vmem:[%s1 + $0x1210] sm:$0xff]
  %v663 = vld [vmem:[%s1 + $0x1218] sm:$0xff]
  %v664 = vld [vmem:[%s1 + $0x1220] sm:$0xff]
  %v665 = vld [vmem:[%s1 + $0x1228] sm:$0xff]
  %v666 = vld [vmem:[%s1 + $0x1230] sm:$0xff]
  %v667 = vld [vmem:[%s1 + $0x1238] sm:$0xff]
  %v668 = vld [vmem:[%s1 + $0x1240] sm:$0xff]
  %v669 = vld [vmem:[%s1 + $0x1248] sm:$0xff]
  %v670 = vld [vmem:[%s1 + $0x1250] sm:$0xff]
  %v671 = vld [vmem:[%s1 + $0x1258] sm:$0xff]
  %v672 = vld [vmem:[%s1 + $0x1260] sm:$0xff]
  %v673 = vld [vmem:[%s1 + $0x1268] sm:$0xff]
  %v674 = vld [vmem:[%s1 + $0x1270] sm:$0xff]
  %v675 = vld [vmem:[%s1 + $0x1278] sm:$0xff]
  %v676 = vld [vmem:[%s1 + $0x1280] sm:$0xff]
  %v677 = vld [vmem:[%s1 + $0x1288] sm:$0xff]
  %v678 = vld [vmem:[%s1 + $0x1290] sm:$0xff]
  %v679 = vld [vmem:[%s1 + $0x1298] sm:$0xff]
  %v680 = vld [vmem:[%s1 + $0x12a0] sm:$0xff]
  %v681 = vld [vmem:[%s1 + $0x12a8] sm:$0xff]
  %v682 = vld [vmem:[%s1 + $0x12b0] sm:$0xff]
  %v683 = vld [vmem:[%s1 + $0x12b8] sm:$0xff]
  %v684 = vld [vmem:[%s1 + $0x12c0] sm:$0xff]
  %v685 = vld [vmem:[%s1 + $0x12c8] sm:$0xff]
  %v686 = vld [vmem:[%s1 + $0x12d0] sm:$0xff]
  %v687 = vld [vmem:[%s1 + $0x12d8] sm:$0xff]
  %v688 = vld [vmem:[%s1 + $0x12e0] sm:$0xff]
  %v689 = vld [vmem:[%s1 + $0x12e8] sm:$0xff]
  %v690 = vld [vmem:[%s1 + $0x12f0] sm:$0xff]
  %v691 = vld [vmem:[%s1 + $0x12f8] sm:$0xff]
  %v692 = vld [vmem:[%s1 + $0x1300] sm:$0xff]
  %v693 = vld [vmem:[%s1 + $0x1308] sm:$0xff]
  %v694 = vld [vmem:[%s1 + $0x1310] sm:$0xff]
  %v695 = vld [vmem:[%s1 + $0x1318] sm:$0xff]
  %v696 = vld [vmem:[%s1 + $0x1320] sm:$0xff]
  %v697 = vld [vmem:[%s1 + $0x1328] sm:$0xff]
  %v698 = vld [vmem:[%s1 + $0x1330] sm:$0xff]
  %v699 = vld [vmem:[%s1 + $0x1338] sm:$0xff]
  %v700 = vld [vmem:[%s1 + $0x1340] sm:$0xff]
  %v701 = vld [vmem:[%s1 + $0x1348] sm:$0xff]
  %v702 = vld [vmem:[%s1 + $0x1350] sm:$0xff]
  %v703 = vld [vmem:[%s1 + $0x1358] sm:$0xff]
  %v704 = vld [vmem:[%s1 + $0x1360] sm:$0xff]
  %v705 = vld [vmem:[%s1 + $0x1368] sm:$0xff]
  %v706 = vld [vmem:[%s1 + $0x1370] sm:$0xff]
  %v707 = vld [vmem:[%s1 + $0x1378] sm:$0xff]
  %v708 = vld [vmem:[%s1 + $0x1380] sm:$0xff]
  %v709 = vld [vmem:[%s1 + $0x1388] sm:$0xff]
  %v710 = vld [vmem:[%s1 + $0x1390] sm:$0xff]
  %v711 = vld [vmem:[%s1 + $0x1398] sm:$0xff]
  %v712 = vld [vmem:[%s1 + $0x13a0] sm:$0xff]
  %v713 = vld [vmem:[%s1 + $0x13a8] sm:$0xff]
  %v714 = vld [vmem:[%s1 + $0x13b0] sm:$0xff]
  %v715 = vld [vmem:[%s1 + $0x13b8] sm:$0xff]
  %v716 = vld [vmem:[%s1 + $0x13c0] sm:$0xff]
  %v717 = vld [vmem:[%s1 + $0x13c8] sm:$0xff]
  %v718 = vld [vmem:[%s1 + $0x13d0] sm:$0xff]
  %v719 = vld [vmem:[%s1 + $0x13d8] sm:$0xff]
  %v720 = vld [vmem:[%s1 + $0x13e0] sm:$0xff]
  %v721 = vld [vmem:[%s1 + $0x13e8] sm:$0xff]
  %v722 = vld [vmem:[%s1 + $0x13f0] sm:$0xff]
  %v723 = vld [vmem:[%s1 + $0x13f8] sm:$0xff]
  %v724 = vld [vmem:[%s1 + $0x1400] sm:$0xff]
  %v725 = vld [vmem:[%s1 + $0x1408] sm:$0xff]
  %v726 = vld [vmem:[%s1 + $0x1410] sm:$0xff]
  %v727 = vld [vmem:[%s1 + $0x1418] sm:$0xff]
  %v728 = vld [vmem:[%s1 + $0x1420] sm:$0xff]
  %v729 = vld [vmem:[%s1 + $0x1428] sm:$0xff]
  %v730 = vld [vmem:[%s1 + $0x1430] sm:$0xff]
  %v731 = vld [vmem:[%s1 + $0x1438] sm:$0xff]
  %v732 = vld [vmem:[%s1 + $0x1440] sm:$0xff]
  %v733 = vld [vmem:[%s1 + $0x1448] sm:$0xff]
  %v734 = vld [vmem:[%s1 + $0x1450] sm:$0xff]
  %v735 = vld [vmem:[%s1 + $0x1458] sm:$0xff]
  %v736 = vld [vmem:[%s1 + $0x1460] sm:$0xff]
  %v737 = vld [vmem:[%s1 + $0x1468] sm:$0xff]
  %v738 = vld [vmem:[%s1 + $0x1470] sm:$0xff]
  %v739 = vld [vmem:[%s1 + $0x1478] sm:$0xff]
  %v740 = vld [vmem:[%s1 + $0x1480] sm:$0xff]
  %v741 = vld [vmem:[%s1 + $0x1488] sm:$0xff]
  %v742 = vld [vmem:[%s1 + $0x1490] sm:$0xff]
  %v743 = vld [vmem:[%s1 + $0x1498] sm:$0xff]
  %v744 = vld [vmem:[%s1 + $0x14a0] sm:$0xff]
  %v745 = vld [vmem:[%s1 + $0x14a8] sm:$0xff]
  %v746 = vld [vmem:[%s1 + $0x14b0] sm:$0xff]
  %v747 = vld [vmem:[%s1 + $0x14b8] sm:$0xff]
  %v748 = vld [vmem:[%s1 + $0x14c0] sm:$0xff]
  %v749 = vld [vmem:[%s1 + $0x14c8] sm:$0xff]
  %v750 = vld [vmem:[%s1 + $0x14d0] sm:$0xff]
  %v751 = vld [vmem:[%s1 + $0x14d8] sm:$0xff]
  %v752 = vld [vmem:[%s1 + $0x14e0] sm:$0xff]
  %v753 = vld [vmem:[%s1 + $0x14e8] sm:$0xff]
  %v754 = vld [vmem:[%s1 + $0x14f0] sm:$0xff]
  %v755 = vld [vmem:[%s1 + $0x14f8] sm:$0xff]
  %v756 = vld [vmem:[%s1 + $0x1500] sm:$0xff]
  %v757 = vld [vmem:[%s1 + $0x1508] sm:$0xff]
  %v758 = vld [vmem:[%s1 + $0x1510] sm:$0xff]
  %v759 = vld [vmem:[%s1 + $0x1518] sm:$0xff]
  %v760 = vld [vmem:[%s1 + $0x1520] sm:$0xff]
  %v761 = vld [vmem:[%s1 + $0x1528] sm:$0xff]
  %v762 = vld [vmem:[%s1 + $0x1530] sm:$0xff]
  %v763 = vld [vmem:[%s1 + $0x1538] sm:$0xff]
  %v764 = vld [vmem:[%s1 + $0x1540] sm:$0xff]
  %v765 = vld [vmem:[%s1 + $0x1548] sm:$0xff]
  %v766 = vld [vmem:[%s1 + $0x1550] sm:$0xff]
  %v767 = vld [vmem:[%s1 + $0x1558] sm:$0xff]
  %v768 = vld [vmem:[%s1 + $0x1560] sm:$0xff]
  %v769 = vld [vmem:[%s1 + $0x1568] sm:$0xff]
  %v770 = vld [vmem:[%s1 + $0x1570] sm:$0xff]
  %v771 = vld [vmem:[%s1 + $0x1578] sm:$0xff]
  %v772 = vld [vmem:[%s1 + $0x1580] sm:$0xff]
  %v773 = vld [vmem:[%s1 + $0x1588] sm:$0xff]
  %v774 = vld [vmem:[%s1 + $0x1590] sm:$0xff]
  %v775 = vld [vmem:[%s1 + $0x1598] sm:$0xff]
  %v776 = vld [vmem:[%s1 + $0x15a0] sm:$0xff]
  %v777 = vld [vmem:[%s1 + $0x15a8] sm:$0xff]
  %v778 = vld [vmem:[%s1 + $0x15b0] sm:$0xff]
  %v779 = vld [vmem:[%s1 + $0x15b8] sm:$0xff]
  %v780 = vld [vmem:[%s1 + $0x15c0] sm:$0xff]
  %v781 = vld [vmem:[%s1 + $0x15c8] sm:$0xff]
  %v782 = vld [vmem:[%s1 + $0x15d0] sm:$0xff]
  %v783 = vld [vmem:[%s1 + $0x15d8] sm:$0xff]
  %v784 = vld [vmem:[%s1 + $0x15e0] sm:$0xff]
  %v785 = vld [vmem:[%s1 + $0x15e8] sm:$0xff]
  %v786 = vld [vmem:[%s1 + $0x15f0] sm:$0xff]
  %v787 = vld [vmem:[%s1 + $0x15f8] sm:$0xff]
  %v788 = vld [vmem:[%s1 + $0x1600] sm:$0xff]
  %v789 = vld [vmem:[%s1 + $0x1608] sm:$0xff]
  %v790 = vld [vmem:[%s1 + $0x1610] sm:$0xff]
  %v791 = vld [vmem:[%s1 + $0x1618] sm:$0xff]
  %v792 = vld [vmem:[%s1 + $0x1620] sm:$0xff]
  %v793 = vld [vmem:[%s1 + $0x1628] sm:$0xff]
  %v794 = vld [vmem:[%s1 + $0x1630] sm:$0xff]
  %v795 = vld [vmem:[%s1 + $0x1638] sm:$0xff]
  %v796 = vld [vmem:[%s1 + $0x1640] sm:$0xff]
  %v797 = vld [vmem:[%s1 + $0x1648] sm:$0xff]
  %v798 = vld [vmem:[%s1 + $0x1650] sm:$0xff]
  %v799 = vld [vmem:[%s1 + $0x1658] sm:$0xff]
  %v800 = vld [vmem:[%s1 + $0x1660] sm:$0xff]
  %v801 = vld [vmem:[%s1 + $0x1668] sm:$0xff]
  %v802 = vld [vmem:[%s1 + $0x1670] sm:$0xff]
  %v803 = vld [vmem:[%s1 + $0x1678] sm:$0xff]
  %v804 = vld [vmem:[%s1 + $0x1680] sm:$0xff]
  %v805 = vld [vmem:[%s1 + $0x1688] sm:$0xff]
  %v806 = vld [vmem:[%s1 + $0x1690] sm:$0xff]
  %v807 = vld [vmem:[%s1 + $0x1698] sm:$0xff]
  %v808 = vld [vmem:[%s1 + $0x16a0] sm:$0xff]
  %v809 = vld [vmem:[%s1 + $0x16a8] sm:$0xff]
  %v810 = vld [vmem:[%s1 + $0x16b0] sm:$0xff]
  %v811 = vld [vmem:[%s1 + $0x16b8] sm:$0xff]
  %v812 = vld [vmem:[%s1 + $0x16c0] sm:$0xff]
  %v813 = vld [vmem:[%s1 + $0x16c8] sm:$0xff]
  %v814 = vld [vmem:[%s1 + $0x16d0] sm:$0xff]
  %v815 = vld [vmem:[%s1 + $0x16d8] sm:$0xff]
  %v816 = vld [vmem:[%s1 + $0x16e0] sm:$0xff]
  %v817 = vld [vmem:[%s1 + $0x16e8] sm:$0xff]
  %v818 = vld [vmem:[%s1 + $0x16f0] sm:$0xff]
  %v819 = vld [vmem:[%s1 + $0x16f8] sm:$0xff]
  %v820 = vld [vmem:[%s1 + $0x1700] sm:$0xff]
  %v821 = vld [vmem:[%s1 + $0x1708] sm:$0xff]
  %v822 = vld [vmem:[%s1 + $0x1710] sm:$0xff]
  %v823 = vld [vmem:[%s1 + $0x1718] sm:$0xff]
  %v824 = vld [vmem:[%s1 + $0x1720] sm:$0xff]
  %v825 = vld [vmem:[%s1 + $0x1728] sm:$0xff]
  %v826 = vld [vmem:[%s1 + $0x1730] sm:$0xff]
  %v827 = vld [vmem:[%s1 + $0x1738] sm:$0xff]
  %v828 = vld [vmem:[%s1 + $0x1740] sm:$0xff]
  %v829 = vld [vmem:[%s1 + $0x1748] sm:$0xff]
  %v830 = vld [vmem:[%s1 + $0x1750] sm:$0xff]
  %v831 = vld [vmem:[%s1 + $0x1758] sm:$0xff]
  %v832 = vld [vmem:[%s1 + $0x1760] sm:$0xff]
  %v833 = vld [vmem:[%s1 + $0x1768] sm:$0xff]
  %v834 = vld [vmem:[%s1 + $0x1770] sm:$0xff]
  %v835 = vld [vmem:[%s1 + $0x1778] sm:$0xff]
  %v836 = vld [vmem:[%s1 + $0x1780] sm:$0xff]
  %v837 = vld [vmem:[%s1 + $0x1788] sm:$0xff]
  %v838 = vld [vmem:[%s1 + $0x1790] sm:$0xff]
  %v839 = vld [vmem:[%s1 + $0x1798] sm:$0xff]
  %v840 = vld [vmem:[%s1 + $0x17a0] sm:$0xff]
  %v841 = vld [vmem:[%s1 + $0x17a8] sm:$0xff]
  %v842 = vld [vmem:[%s1 + $0x17b0] sm:$0xff]
  %v843 = vld [vmem:[%s1 + $0x17b8] sm:$0xff]
  %v844 = vld [vmem:[%s1 + $0x17c0] sm:$0xff]
  %v845 = vld [vmem:[%s1 + $0x17c8] sm:$0xff]
  %v846 = vld [vmem:[%s1 + $0x17d0] sm:$0xff]
  %v847 = vld [vmem:[%s1 + $0x17d8] sm:$0xff]
  %v848 = vld [vmem:[%s1 + $0x17e0] sm:$0xff]
  %v849 = vld [vmem:[%s1 + $0x17e8] sm:$0xff]
  %v850 = vld [vmem:[%s1 + $0x17f0] sm:$0xff]
  %v851 = vld [vmem:[%s1 + $0x17f8] sm:$0xff]
  %v852 = vld [vmem:[%s1 + $0x1800] sm:$0xff]
  %v853 = vld [vmem:[%s1 + $0x1808] sm:$0xff]
  %v854 = vld [vmem:[%s1 + $0x1810] sm:$0xff]
  %v855 = vld [vmem:[%s1 + $0x1818] sm:$0xff]
  %v856 = vld [vmem:[%s1 + $0x1820] sm:$0xff]
  %v857 = vld [vmem:[%s1 + $0x1828] sm:$0xff]
  %v858 = vld [vmem:[%s1 + $0x1830] sm:$0xff]
  %v859 = vld [vmem:[%s1 + $0x1838] sm:$0xff]
  %v860 = vld [vmem:[%s1 + $0x1840] sm:$0xff]
  %v861 = vld [vmem:[%s1 + $0x1848] sm:$0xff]
  %v862 = vld [vmem:[%s1 + $0x1850] sm:$0xff]
  %v863 = vld [vmem:[%s1 + $0x1858] sm:$0xff]
  %v864 = vld [vmem:[%s1 + $0x1860] sm:$0xff]
  %v865 = vld [vmem:[%s1 + $0x1868] sm:$0xff]
  %v866 = vld [vmem:[%s1 + $0x1870] sm:$0xff]
  %v867 = vld [vmem:[%s1 + $0x1878] sm:$0xff]
  %v868 = vld [vmem:[%s1 + $0x1880] sm:$0xff]
  %v869 = vld [vmem:[%s1 + $0x1888] sm:$0xff]
  %v870 = vld [vmem:[%s1 + $0x1890] sm:$0xff]
  %v871 = vld [vmem:[%s1 + $0x1898] sm:$0xff]
  %v872 = vld [vmem:[%s1 + $0x18a0] sm:$0xff]
  %v873 = vld [vmem:[%s1 + $0x18a8] sm:$0xff]
  %v874 = vld [vmem:[%s1 + $0x18b0] sm:$0xff]
  %v875 = vld [vmem:[%s1 + $0x18b8] sm:$0xff]
  %v876 = vld [vmem:[%s1 + $0x18c0] sm:$0xff]
  %v877 = vld [vmem:[%s1 + $0x18c8] sm:$0xff]
  %v878 = vld [vmem:[%s1 + $0x18d0] sm:$0xff]
  %v879 = vld [vmem:[%s1 + $0x18d8] sm:$0xff]
  %v880 = vld [vmem:[%s1 + $0x18e0] sm:$0xff]
  %v881 = vld [vmem:[%s1 + $0x18e8] sm:$0xff]
  %v882 = vld [vmem:[%s1 + $0x18f0] sm:$0xff]
  %v883 = vld [vmem:[%s1 + $0x18f8] sm:$0xff]
  %v884 = vld [vmem:[%s1 + $0x1900] sm:$0xff]
  %v885 = vld [vmem:[%s1 + $0x1908] sm:$0xff]
  %v886 = vld [vmem:[%s1 + $0x1910] sm:$0xff]
  %v887 = vld [vmem:[%s1 + $0x1918] sm:$0xff]
  %v888 = vld [vmem:[%s1 + $0x1920] sm:$0xff]
  %v889 = vld [vmem:[%s1 + $0x1928] sm:$0xff]
  %v890 = vld [vmem:[%s1 + $0x1930] sm:$0xff]
  %v891 = vld [vmem:[%s1 + $0x1938] sm:$0xff]
  %v892 = vld [vmem:[%s1 + $0x1940] sm:$0xff]
  %v893 = vld [vmem:[%s1 + $0x1948] sm:$0xff]
  %v894 = vld [vmem:[%s1 + $0x1950] sm:$0xff]
  %v895 = vld [vmem:[%s1 + $0x1958] sm:$0xff]
  %v896 = vld [vmem:[%s1 + $0x1960] sm:$0xff]
  %v897 = vld [vmem:[%s1 + $0x1968] sm:$0xff]
  %v898 = vld [vmem:[%s1 + $0x1970] sm:$0xff]
  %v899 = vld [vmem:[%s1 + $0x1978] sm:$0xff]
  %v900 = vld [vmem:[%s1 + $0x1980] sm:$0xff]
  %v901 = vld [vmem:[%s1 + $0x1988] sm:$0xff]
  %v902 = vld [vmem:[%s1 + $0x1990] sm:$0xff]
  %v903 = vld [vmem:[%s1 + $0x1998] sm:$0xff]
  %v904 = vld [vmem:[%s1 + $0x19a0] sm:$0xff]
  %v905 = vld [vmem:[%s1 + $0x19a8] sm:$0xff]
  %v906 = vld [vmem:[%s1 + $0x19b0] sm:$0xff]
  %v907 = vld [vmem:[%s1 + $0x19b8] sm:$0xff]
  %v908 = vld [vmem:[%s1 + $0x19c0] sm:$0xff]
  %v909 = vld [vmem:[%s1 + $0x19c8] sm:$0xff]
  %v910 = vld [vmem:[%s1 + $0x19d0] sm:$0xff]
  %v911 = vld [vmem:[%s1 + $0x19d8] sm:$0xff]
  %v912 = vld [vmem:[%s1 + $0x19e0] sm:$0xff]
  %v913 = vld [vmem:[%s1 + $0x19e8] sm:$0xff]
  %v914 = vld [vmem:[%s1 + $0x19f0] sm:$0xff]
  %v915 = vld [vmem:[%s1 + $0x19f8] sm:$0xff]
  %v916 = vld [vmem:[%s1 + $0x1a00] sm:$0xff]
  %v917 = vld [vmem:[%s1 + $0x1a08] sm:$0xff]
  %v918 = vld [vmem:[%s1 + $0x1a10] sm:$0xff]
  %v919 = vld [vmem:[%s1 + $0x1a18] sm:$0xff]
  %v920 = vld [vmem:[%s1 + $0x1a20] sm:$0xff]
  %v921 = vld [vmem:[%s1 + $0x1a28] sm:$0xff]
  %v922 = vld [vmem:[%s1 + $0x1a30] sm:$0xff]
  %v923 = vld [vmem:[%s1 + $0x1a38] sm:$0xff]
  %v924 = vld [vmem:[%s1 + $0x1a40] sm:$0xff]
  %v925 = vld [vmem:[%s1 + $0x1a48] sm:$0xff]
  %v926 = vld [vmem:[%s1 + $0x1a50] sm:$0xff]
  %v927 = vld [vmem:[%s1 + $0x1a58] sm:$0xff]
  %v928 = vld [vmem:[%s1 + $0x1a60] sm:$0xff]
  %v929 = vld [vmem:[%s1 + $0x1a68] sm:$0xff]
  %v930 = vld [vmem:[%s1 + $0x1a70] sm:$0xff]
  %v931 = vld [vmem:[%s1 + $0x1a78] sm:$0xff]
  %v932 = vld [vmem:[%s1 + $0x1a80] sm:$0xff]
  %v933 = vld [vmem:[%s1 + $0x1a88] sm:$0xff]
  %v934 = vld [vmem:[%s1 + $0x1a90] sm:$0xff]
  %v935 = vld [vmem:[%s1 + $0x1a98] sm:$0xff]
  %v936 = vld [vmem:[%s1 + $0x1aa0] sm:$0xff]
  %v937 = vld [vmem:[%s1 + $0x1aa8] sm:$0xff]
  %v938 = vld [vmem:[%s1 + $0x1ab0] sm:$0xff]
  %v939 = vld [vmem:[%s1 + $0x1ab8] sm:$0xff]
  %v940 = vld [vmem:[%s1 + $0x1ac0] sm:$0xff]
  %v941 = vld [vmem:[%s1 + $0x1ac8] sm:$0xff]
  %v942 = vld [vmem:[%s1 + $0x1ad0] sm:$0xff]
  %v943 = vld [vmem:[%s1 + $0x1ad8] sm:$0xff]
  %v944 = vld [vmem:[%s1 + $0x1ae0] sm:$0xff]
  %v945 = vld [vmem:[%s1 + $0x1ae8] sm:$0xff]
  %v946 = vld [vmem:[%s1 + $0x1af0] sm:$0xff]
  %v947 = vld [vmem:[%s1 + $0x1af8] sm:$0xff]
  %v948 = vld [vmem:[%s1 + $0x1b00] sm:$0xff]
  %v949 = vld [vmem:[%s1 + $0x1b08] sm:$0xff]
  %v950 = vld [vmem:[%s1 + $0x1b10] sm:$0xff]
  %v951 = vld [vmem:[%s1 + $0x1b18] sm:$0xff]
  %v952 = vld [vmem:[%s1 + $0x1b20] sm:$0xff]
  %v953 = vld [vmem:[%s1 + $0x1b28] sm:$0xff]
  %v954 = vld [vmem:[%s1 + $0x1b30] sm:$0xff]
  %v955 = vld [vmem:[%s1 + $0x1b38] sm:$0xff]
  %v956 = vld [vmem:[%s1 + $0x1b40] sm:$0xff]
  %v957 = vld [vmem:[%s1 + $0x1b48] sm:$0xff]
  %v958 = vld [vmem:[%s1 + $0x1b50] sm:$0xff]
  %v959 = vld [vmem:[%s1 + $0x1b58] sm:$0xff]
  %v960 = vld [vmem:[%s1 + $0x1b60] sm:$0xff]
  %v961 = vld [vmem:[%s1 + $0x1b68] sm:$0xff]
  %v962 = vld [vmem:[%s1 + $0x1b70] sm:$0xff]
  %v963 = vld [vmem:[%s1 + $0x1b78] sm:$0xff]
  %v964 = vld [vmem:[%s1 + $0x1b80] sm:$0xff]
  %v965 = vld [vmem:[%s1 + $0x1b88] sm:$0xff]
  %v966 = vld [vmem:[%s1 + $0x1b90] sm:$0xff]
  %v967 = vld [vmem:[%s1 + $0x1b98] sm:$0xff]
  %v968 = vld [vmem:[%s1 + $0x1ba0] sm:$0xff]
  %v969 = vld [vmem:[%s1 + $0x1ba8] sm:$0xff]
  %v970 = vld [vmem:[%s1 + $0x1bb0] sm:$0xff]
  %v971 = vld [vmem:[%s1 + $0x1bb8] sm:$0xff]
  %v972 = vld [vmem:[%s1 + $0x1bc0] sm:$0xff]
  %v973 = vld [vmem:[%s1 + $0x1bc8] sm:$0xff]
  %v974 = vld [vmem:[%s1 + $0x1bd0] sm:$0xff]
  %v975 = vld [vmem:[%s1 + $0x1bd8] sm:$0xff]
  %v976 = vld [vmem:[%s1 + $0x1be0] sm:$0xff]
  %v977 = vld [vmem:[%s1 + $0x1be8] sm:$0xff]
  %v978 = vld [vmem:[%s1 + $0x1bf0] sm:$0xff]
  %v979 = vld [vmem:[%s1 + $0x1bf8] sm:$0xff]
  %v980 = vld [vmem:[%s1 + $0x1c00] sm:$0xff]
  %v981 = vld [vmem:[%s1 + $0x1c08] sm:$0xff]
  %v982 = vld [vmem:[%s1 + $0x1c10] sm:$0xff]
  %v983 = vld [vmem:[%s1 + $0x1c18] sm:$0xff]
  %v984 = vld [vmem:[%s1 + $0x1c20] sm:$0xff]
  %v985 = vld [vmem:[%s1 + $0x1c28] sm:$0xff]
  %v986 = vld [vmem:[%s1 + $0x1c30] sm:$0xff]
  %v987 = vld [vmem:[%s1 + $0x1c38] sm:$0xff]
  %v988 = vld [vmem:[%s1 + $0x1c40] sm:$0xff]
  %v989 = vld [vmem:[%s1 + $0x1c48] sm:$0xff]
  %v990 = vld [vmem:[%s1 + $0x1c50] sm:$0xff]
  %v991 = vld [vmem:[%s1 + $0x1c58] sm:$0xff]
  %v992 = vld [vmem:[%s1 + $0x1c60] sm:$0xff]
  %v993 = vld [vmem:[%s1 + $0x1c68] sm:$0xff]
  %v994 = vld [vmem:[%s1 + $0x1c70] sm:$0xff]
  %v995 = vld [vmem:[%s1 + $0x1c78] sm:$0xff]
  %v996 = vld [vmem:[%s1 + $0x1c80] sm:$0xff]
  %v997 = vld [vmem:[%s1 + $0x1c88] sm:$0xff]
  %v998 = vld [vmem:[%s1 + $0x1c90] sm:$0xff]
  %v999 = vld [vmem:[%s1 + $0x1c98] sm:$0xff]
  %v1000 = vld [vmem:[%s1 + $0x1ca0] sm:$0xff]
  %v1001 = vld [vmem:[%s1 + $0x1ca8] sm:$0xff]
  %v1002 = vld [vmem:[%s1 + $0x1cb0] sm:$0xff]
  %v1003 = vld [vmem:[%s1 + $0x1cb8] sm:$0xff]
  %v1004 = vld [vmem:[%s1 + $0x1cc0] sm:$0xff]
  %v1005 = vld [vmem:[%s1 + $0x1cc8] sm:$0xff]
  %v1006 = vld [vmem:[%s1 + $0x1cd0] sm:$0xff]
  %v1007 = vld [vmem:[%s1 + $0x1cd8] sm:$0xff]
  %v1008 = vld [vmem:[%s1 + $0x1ce0] sm:$0xff]
  %v1009 = vld [vmem:[%s1 + $0x1ce8] sm:$0xff]
  %v1010 = vld [vmem:[%s1 + $0x1cf0] sm:$0xff]
  %v1011 = vld [vmem:[%s1 + $0x1cf8] sm:$0xff]
  %v1012 = vld [vmem:[%s1 + $0x1d00] sm:$0xff]
  %v1013 = vld [vmem:[%s1 + $0x1d08] sm:$0xff]
  %v1014 = vld [vmem:[%s1 + $0x1d10] sm:$0xff]
  %v1015 = vld [vmem:[%s1 + $0x1d18] sm:$0xff]
  %v1016 = vld [vmem:[%s1 + $0x1d20] sm:$0xff]
  %v1017 = vld [vmem:[%s1 + $0x1d28] sm:$0xff]
  %v1018 = vld [vmem:[%s1 + $0x1d30] sm:$0xff]
  %v1019 = vld [vmem:[%s1 + $0x1d38] sm:$0xff]
  %v1020 = vld [vmem:[%s1 + $0x1d40] sm:$0xff]
  %v1021 = vld [vmem:[%s1 + $0x1d48] sm:$0xff]
  %v1022 = vld [vmem:[%s1 + $0x1d50] sm:$0xff]
  %v1023 = vld [vmem:[%s1 + $0x1d58] sm:$0xff]
  %v1024 = vld [vmem:[%s1 + $0x1d60] sm:$0xff]
  %v1025 = vld [vmem:[%s1 + $0x1d68] sm:$0xff]
  %v1026 = vld [vmem:[%s1 + $0x1d70] sm:$0xff]
  %v1027 = vld [vmem:[%s1 + $0x1d78] sm:$0xff]
  %v1028 = vld [vmem:[%s1 + $0x1d80] sm:$0xff]
  %v1029 = vld [vmem:[%s1 + $0x1d88] sm:$0xff]
  %v1030 = vld [vmem:[%s1 + $0x1d90] sm:$0xff]
  %v1031 = vld [vmem:[%s1 + $0x1d98] sm:$0xff]
  %v1032 = vld [vmem:[%s1 + $0x1da0] sm:$0xff]
  %v1033 = vld [vmem:[%s1 + $0x1da8] sm:$0xff]
  %v1034 = vld [vmem:[%s1 + $0x1db0] sm:$0xff]
  %v1035 = vld [vmem:[%s1 + $0x1db8] sm:$0xff]
  %v1036 = vld [vmem:[%s1 + $0x1dc0] sm:$0xff]
  %v1037 = vld [vmem:[%s1 + $0x1dc8] sm:$0xff]
  %v1038 = vld [vmem:[%s1 + $0x1dd0] sm:$0xff]
  %v1039 = vld [vmem:[%s1 + $0x1dd8] sm:$0xff]
  %v1040 = vld [vmem:[%s1 + $0x1de0] sm:$0xff]
  %v1041 = vld [vmem:[%s1 + $0x1de8] sm:$0xff]
  %v1042 = vld [vmem:[%s1 + $0x1df0] sm:$0xff]
  %v1043 = vld [vmem:[%s1 + $0x1df8] sm:$0xff]
  %v1044 = vld [vmem:[%s1 + $0x1e00] sm:$0xff]
  %v1045 = vld [vmem:[%s1 + $0x1e08] sm:$0xff]
  %v1046 = vld [vmem:[%s1 + $0x1e10] sm:$0xff]
  %v1047 = vld [vmem:[%s1 + $0x1e18] sm:$0xff]
  %v1048 = vld [vmem:[%s1 + $0x1e20] sm:$0xff]
  %v1049 = vld [vmem:[%s1 + $0x1e28] sm:$0xff]
  %v1050 = vld [vmem:[%s1 + $0x1e30] sm:$0xff]
  %v1051 = vld [vmem:[%s1 + $0x1e38] sm:$0xff]
  %v1052 = vld [vmem:[%s1 + $0x1e40] sm:$0xff]
  %v1053 = vld [vmem:[%s1 + $0x1e48] sm:$0xff]
  %v1054 = vld [vmem:[%s1 + $0x1e50] sm:$0xff]
  %v1055 = vld [vmem:[%s1 + $0x1e58] sm:$0xff]
  %v1056 = vld [vmem:[%s1 + $0x1e60] sm:$0xff]
  %v1057 = vld [vmem:[%s1 + $0x1e68] sm:$0xff]
  %v1058 = vld [vmem:[%s1 + $0x1e70] sm:$0xff]
  %v1059 = vld [vmem:[%s1 + $0x1e78] sm:$0xff]
  %v1060 = vld [vmem:[%s1 + $0x1e80] sm:$0xff]
  %v1061 = vld [vmem:[%s1 + $0x1e88] sm:$0xff]
  %v1062 = vld [vmem:[%s1 + $0x1e90] sm:$0xff]
  %v1063 = vld [vmem:[%s1 + $0x1e98] sm:$0xff]
  %v1064 = vld [vmem:[%s1 + $0x1ea0] sm:$0xff]
  %v1065 = vld [vmem:[%s1 + $0x1ea8] sm:$0xff]
  %v1066 = vld [vmem:[%s1 + $0x1eb0] sm:$0xff]
  %v1067 = vld [vmem:[%s1 + $0x1eb8] sm:$0xff]
  %v1068 = vld [vmem:[%s1 + $0x1ec0] sm:$0xff]
  %v1069 = vld [vmem:[%s1 + $0x1ec8] sm:$0xff]
  %v1070 = vld [vmem:[%s1 + $0x1ed0] sm:$0xff]
  %v1071 = vld [vmem:[%s1 + $0x1ed8] sm:$0xff]
  %v1072 = vld [vmem:[%s1 + $0x1ee0] sm:$0xff]
  %v1073 = vld [vmem:[%s1 + $0x1ee8] sm:$0xff]
  %v1074 = vld [vmem:[%s1 + $0x1ef0] sm:$0xff]
  %v1075 = vld [vmem:[%s1 + $0x1ef8] sm:$0xff]
  %v1076 = vld [vmem:[%s1 + $0x1f00] sm:$0xff]
  %v1077 = vld [vmem:[%s1 + $0x1f08] sm:$0xff]
  %v1078 = vld [vmem:[%s1 + $0x1f10] sm:$0xff]
  %v1079 = vld [vmem:[%s1 + $0x1f18] sm:$0xff]
  %v1080 = vld [vmem:[%s1 + $0x1f20] sm:$0xff]
  %v1081 = vld [vmem:[%s1 + $0x1f28] sm:$0xff]
  %v1082 = vld [vmem:[%s1 + $0x1f30] sm:$0xff]
  %v1083 = vld [vmem:[%s1 + $0x1f38] sm:$0xff]
  %v1084 = vld [vmem:[%s1 + $0x1f40] sm:$0xff]
  %v1085 = vld [vmem:[%s1 + $0x1f48] sm:$0xff]
  %v1086 = vld [vmem:[%s1 + $0x1f50] sm:$0xff]
  %v1087 = vld [vmem:[%s1 + $0x1f58] sm:$0xff]
  %v1088 = vld [vmem:[%s1 + $0x1f60] sm:$0xff]
  %v1089 = vld [vmem:[%s1 + $0x1f68] sm:$0xff]
  %v1090 = vld [vmem:[%s1 + $0x1f70] sm:$0xff]
  %v1091 = vld [vmem:[%s1 + $0x1f78] sm:$0xff]
  %v1092 = vld [vmem:[%s1 + $0x1f80] sm:$0xff]
  %v1093 = vld [vmem:[%s1 + $0x1f88] sm:$0xff]
  %v1094 = vld [vmem:[%s1 + $0x1f90] sm:$0xff]
  %v1095 = vld [vmem:[%s1 + $0x1f98] sm:$0xff]
  %v1096 = vld [vmem:[%s1 + $0x1fa0] sm:$0xff]
  %v1097 = vld [vmem:[%s1 + $0x1fa8] sm:$0xff]
  %v1098 = vld [vmem:[%s1 + $0x1fb0] sm:$0xff]
  %v1099 = vld [vmem:[%s1 + $0x1fb8] sm:$0xff]
  %v1100 = vld [vmem:[%s1 + $0x1fc0] sm:$0xff]
  %v1101 = vld [vmem:[%s1 + $0x1fc8] sm:$0xff]
  %v1102 = vld [vmem:[%s1 + $0x1fd0] sm:$0xff]
  %v1103 = vld [vmem:[%s1 + $0x1fd8] sm:$0xff]
  %v1104 = vld [vmem:[%s1 + $0x1fe0] sm:$0xff]
  %v1105 = vld [vmem:[%s1 + $0x1fe8] sm:$0xff]
  %v1106 = vld [vmem:[%s1 + $0x1ff0] sm:$0xff]
  %v1107 = vld [vmem:[%s1 + $0x1ff8] sm:$0xff]
  %v1172 = vunpack.c.l.b16 %v20
  %v1173 = vunpack.c.h.b16 %v20
  %v1174 = vunpack.c.l.b16 %v21
  %v1175 = vunpack.c.h.b16 %v21
  %v1176 = vunpack.c.l.b16 %v22
  %v1177 = vunpack.c.h.b16 %v22
  %v1178 = vunpack.c.l.b16 %v23
  %v1179 = vunpack.c.h.b16 %v23
  %v1180 = vunpack.c.l.b16 %v24
  %v1181 = vunpack.c.h.b16 %v24
  %v1182 = vunpack.c.l.b16 %v25
  %v1183 = vunpack.c.h.b16 %v25
  %v1184 = vunpack.c.l.b16 %v26
  %v1185 = vunpack.c.h.b16 %v26
  %v1186 = vunpack.c.l.b16 %v27
  %v1187 = vunpack.c.h.b16 %v27
  %v1188 = vunpack.c.l.b16 %v28
  %v1189 = vunpack.c.h.b16 %v28
  %v1190 = vunpack.c.l.b16 %v29
  %v1191 = vunpack.c.h.b16 %v29
  %v1192 = vunpack.c.l.b16 %v30
  %v1193 = vunpack.c.h.b16 %v30
  %v1194 = vunpack.c.l.b16 %v31
  %v1195 = vunpack.c.h.b16 %v31
  %v1196 = vunpack.c.l.b16 %v32
  %v1197 = vunpack.c.h.b16 %v32
  %v1198 = vunpack.c.l.b16 %v33
  %v1199 = vunpack.c.h.b16 %v33
  %v1200 = vunpack.c.l.b16 %v34
  %v1201 = vunpack.c.h.b16 %v34
  %v1202 = vunpack.c.l.b16 %v35
  %v1203 = vunpack.c.h.b16 %v35
  %v1204 = vunpack.c.l.b16 %v36
  %v1205 = vunpack.c.h.b16 %v36
  %v1206 = vunpack.c.l.b16 %v37
  %v1207 = vunpack.c.h.b16 %v37
  %v1208 = vunpack.c.l.b16 %v38
  %v1209 = vunpack.c.h.b16 %v38
  %v1210 = vunpack.c.l.b16 %v39
  %v1211 = vunpack.c.h.b16 %v39
  %v1212 = vunpack.c.l.b16 %v40
  %v1213 = vunpack.c.h.b16 %v40
  %v1214 = vunpack.c.l.b16 %v41
  %v1215 = vunpack.c.h.b16 %v41
  %v1216 = vunpack.c.l.b16 %v42
  %v1217 = vunpack.c.h.b16 %v42
  %v1218 = vunpack.c.l.b16 %v43
  %v1219 = vunpack.c.h.b16 %v43
  %v1220 = vunpack.c.l.b16 %v44
  %v1221 = vunpack.c.h.b16 %v44
  %v1222 = vunpack.c.l.b16 %v45
  %v1223 = vunpack.c.h.b16 %v45
  %v1224 = vunpack.c.l.b16 %v46
  %v1225 = vunpack.c.h.b16 %v46
  %v1226 = vunpack.c.l.b16 %v47
  %v1227 = vunpack.c.h.b16 %v47
  %v1228 = vunpack.c.l.b16 %v48
  %v1229 = vunpack.c.h.b16 %v48
  %v1230 = vunpack.c.l.b16 %v49
  %v1231 = vunpack.c.h.b16 %v49
  %v1232 = vunpack.c.l.b16 %v50
  %v1233 = vunpack.c.h.b16 %v50
  %v1234 = vunpack.c.l.b16 %v51
  %v1235 = vunpack.c.h.b16 %v51
  %v1236 = vunpack.c.l.b16 %v52
  %v1237 = vunpack.c.h.b16 %v52
  %v1238 = vunpack.c.l.b16 %v53
  %v1239 = vunpack.c.h.b16 %v53
  %v1240 = vunpack.c.l.b16 %v54
  %v1241 = vunpack.c.h.b16 %v54
  %v1242 = vunpack.c.l.b16 %v55
  %v1243 = vunpack.c.h.b16 %v55
  %v1244 = vunpack.c.l.b16 %v56
  %v1245 = vunpack.c.h.b16 %v56
  %v1246 = vunpack.c.l.b16 %v57
  %v1247 = vunpack.c.h.b16 %v57
  %v1248 = vunpack.c.l.b16 %v58
  %v1249 = vunpack.c.h.b16 %v58
  %v1250 = vunpack.c.l.b16 %v59
  %v1251 = vunpack.c.h.b16 %v59
  %v1252 = vunpack.c.l.b16 %v60
  %v1253 = vunpack.c.h.b16 %v60
  %v1254 = vunpack.c.l.b16 %v61
  %v1255 = vunpack.c.h.b16 %v61
  %v1256 = vunpack.c.l.b16 %v62
  %v1257 = vunpack.c.h.b16 %v62
  %v1258 = vunpack.c.l.b16 %v63
  %v1259 = vunpack.c.h.b16 %v63
  %v1260 = vunpack.c.l.b16 %v64
  %v1261 = vunpack.c.h.b16 %v64
  %v1262 = vunpack.c.l.b16 %v65
  %v1263 = vunpack.c.h.b16 %v65
  %v1264 = vunpack.c.l.b16 %v66
  %v1265 = vunpack.c.h.b16 %v66
  %v1266 = vunpack.c.l.b16 %v67
  %v1267 = vunpack.c.h.b16 %v67
  %v1268 = vunpack.c.l.b16 %v68
  %v1269 = vunpack.c.h.b16 %v68
  %v1270 = vunpack.c.l.b16 %v69
  %v1271 = vunpack.c.h.b16 %v69
  %v1272 = vunpack.c.l.b16 %v70
  %v1273 = vunpack.c.h.b16 %v70
  %v1274 = vunpack.c.l.b16 %v71
  %v1275 = vunpack.c.h.b16 %v71
  %v1276 = vunpack.c.l.b16 %v72
  %v1277 = vunpack.c.h.b16 %v72
  %v1278 = vunpack.c.l.b16 %v73
  %v1279 = vunpack.c.h.b16 %v73
  %v1280 = vunpack.c.l.b16 %v74
  %v1281 = vunpack.c.h.b16 %v74
  %v1282 = vunpack.c.l.b16 %v75
  %v1283 = vunpack.c.h.b16 %v75
  %v1284 = vunpack.c.l.b16 %v76
  %v1285 = vunpack.c.h.b16 %v76
  %v1286 = vunpack.c.l.b16 %v77
  %v1287 = vunpack.c.h.b16 %v77
  %v1288 = vunpack.c.l.b16 %v78
  %v1289 = vunpack.c.h.b16 %v78
  %v1290 = vunpack.c.l.b16 %v79
  %v1291 = vunpack.c.h.b16 %v79
  %v1292 = vunpack.c.l.b16 %v80
  %v1293 = vunpack.c.h.b16 %v80
  %v1294 = vunpack.c.l.b16 %v81
  %v1295 = vunpack.c.h.b16 %v81
  %v1296 = vunpack.c.l.b16 %v82
  %v1297 = vunpack.c.h.b16 %v82
  %v1298 = vunpack.c.l.b16 %v83
  %v1299 = vunpack.c.h.b16 %v83
  %v1300 = vpack.c.b16 %v1204, %v1172
  %v1301 = vpack.c.b16 %v1205, %v1173
  %v1302 = vpack.c.b16 %v1206, %v1174
  %v1303 = vpack.c.b16 %v1207, %v1175
  %v1304 = vpack.c.b16 %v1208, %v1176
  %v1305 = vpack.c.b16 %v1209, %v1177
  %v1306 = vpack.c.b16 %v1210, %v1178
  %v1307 = vpack.c.b16 %v1211, %v1179
  %v1308 = vpack.c.b16 %v1212, %v1180
  %v1309 = vpack.c.b16 %v1213, %v1181
  %v1310 = vpack.c.b16 %v1214, %v1182
  %v1311 = vpack.c.b16 %v1215, %v1183
  %v1312 = vpack.c.b16 %v1216, %v1184
  %v1313 = vpack.c.b16 %v1217, %v1185
  %v1314 = vpack.c.b16 %v1218, %v1186
  %v1315 = vpack.c.b16 %v1219, %v1187
  %v1316 = vpack.c.b16 %v1220, %v1188
  %v1317 = vpack.c.b16 %v1221, %v1189
  %v1318 = vpack.c.b16 %v1222, %v1190
  %v1319 = vpack.c.b16 %v1223, %v1191
  %v1320 = vpack.c.b16 %v1224, %v1192
  %v1321 = vpack.c.b16 %v1225, %v1193
  %v1322 = vpack.c.b16 %v1226, %v1194
  %v1323 = vpack.c.b16 %v1227, %v1195
  %v1324 = vpack.c.b16 %v1228, %v1196
  %v1325 = vpack.c.b16 %v1229, %v1197
  %v1326 = vpack.c.b16 %v1230, %v1198
  %v1327 = vpack.c.b16 %v1231, %v1199
  %v1328 = vpack.c.b16 %v1232, %v1200
  %v1329 = vpack.c.b16 %v1233, %v1201
  %v1330 = vpack.c.b16 %v1234, %v1202
  %v1331 = vpack.c.b16 %v1235, %v1203
  %v1332 = vpack.c.b16 %v1268, %v1236
  %v1333 = vpack.c.b16 %v1269, %v1237
  %v1334 = vpack.c.b16 %v1270, %v1238
  %v1335 = vpack.c.b16 %v1271, %v1239
  %v1336 = vpack.c.b16 %v1272, %v1240
  %v1337 = vpack.c.b16 %v1273, %v1241
  %v1338 = vpack.c.b16 %v1274, %v1242
  %v1339 = vpack.c.b16 %v1275, %v1243
  %v1340 = vpack.c.b16 %v1276, %v1244
  %v1341 = vpack.c.b16 %v1277, %v1245
  %v1342 = vpack.c.b16 %v1278, %v1246
  %v1343 = vpack.c.b16 %v1279, %v1247
  %v1344 = vpack.c.b16 %v1280, %v1248
  %v1345 = vpack.c.b16 %v1281, %v1249
  %v1346 = vpack.c.b16 %v1282, %v1250
  %v1347 = vpack.c.b16 %v1283, %v1251
  %v1348 = vpack.c.b16 %v1284, %v1252
  %v1349 = vpack.c.b16 %v1285, %v1253
  %v1350 = vpack.c.b16 %v1286, %v1254
  %v1351 = vpack.c.b16 %v1287, %v1255
  %v1352 = vpack.c.b16 %v1288, %v1256
  %v1353 = vpack.c.b16 %v1289, %v1257
  %v1354 = vpack.c.b16 %v1290, %v1258
  %v1355 = vpack.c.b16 %v1291, %v1259
  %v1356 = vpack.c.b16 %v1292, %v1260
  %v1357 = vpack.c.b16 %v1293, %v1261
  %v1358 = vpack.c.b16 %v1294, %v1262
  %v1359 = vpack.c.b16 %v1295, %v1263
  %v1360 = vpack.c.b16 %v1296, %v1264
  %v1361 = vpack.c.b16 %v1297, %v1265
  %v1362 = vpack.c.b16 %v1298, %v1266
  %v1363 = vpack.c.b16 %v1299, %v1267
  %v2452 = vunpack.c.l.b16 %v84
  %v2453 = vunpack.c.h.b16 %v84
  %v2454 = vunpack.c.l.b16 %v85
  %v2455 = vunpack.c.h.b16 %v85
  %v2456 = vunpack.c.l.b16 %v86
  %v2457 = vunpack.c.h.b16 %v86
  %v2458 = vunpack.c.l.b16 %v87
  %v2459 = vunpack.c.h.b16 %v87
  %v2460 = vunpack.c.l.b16 %v88
  %v2461 = vunpack.c.h.b16 %v88
  %v2462 = vunpack.c.l.b16 %v89
  %v2463 = vunpack.c.h.b16 %v89
  %v2464 = vunpack.c.l.b16 %v90
  %v2465 = vunpack.c.h.b16 %v90
  %v2466 = vunpack.c.l.b16 %v91
  %v2467 = vunpack.c.h.b16 %v91
  %v2468 = vunpack.c.l.b16 %v92
  %v2469 = vunpack.c.h.b16 %v92
  %v2470 = vunpack.c.l.b16 %v93
  %v2471 = vunpack.c.h.b16 %v93
  %v2472 = vunpack.c.l.b16 %v94
  %v2473 = vunpack.c.h.b16 %v94
  %v2474 = vunpack.c.l.b16 %v95
  %v2475 = vunpack.c.h.b16 %v95
  %v2476 = vunpack.c.l.b16 %v96
  %v2477 = vunpack.c.h.b16 %v96
  %v2478 = vunpack.c.l.b16 %v97
  %v2479 = vunpack.c.h.b16 %v97
  %v2480 = vunpack.c.l.b16 %v98
  %v2481 = vunpack.c.h.b16 %v98
  %v2482 = vunpack.c.l.b16 %v99
  %v2483 = vunpack.c.h.b16 %v99
  %v2484 = vunpack.c.l.b16 %v100
  %v2485 = vunpack.c.h.b16 %v100
  %v2486 = vunpack.c.l.b16 %v101
  %v2487 = vunpack.c.h.b16 %v101
  %v2488 = vunpack.c.l.b16 %v102
  %v2489 = vunpack.c.h.b16 %v102
  %v2490 = vunpack.c.l.b16 %v103
  %v2491 = vunpack.c.h.b16 %v103
  %v2492 = vunpack.c.l.b16 %v104
  %v2493 = vunpack.c.h.b16 %v104
  %v2494 = vunpack.c.l.b16 %v105
  %v2495 = vunpack.c.h.b16 %v105
  %v2496 = vunpack.c.l.b16 %v106
  %v2497 = vunpack.c.h.b16 %v106
  %v2498 = vunpack.c.l.b16 %v107
  %v2499 = vunpack.c.h.b16 %v107
  %v2500 = vunpack.c.l.b16 %v108
  %v2501 = vunpack.c.h.b16 %v108
  %v2502 = vunpack.c.l.b16 %v109
  %v2503 = vunpack.c.h.b16 %v109
  %v2504 = vunpack.c.l.b16 %v110
  %v2505 = vunpack.c.h.b16 %v110
  %v2506 = vunpack.c.l.b16 %v111
  %v2507 = vunpack.c.h.b16 %v111
  %v2508 = vunpack.c.l.b16 %v112
  %v2509 = vunpack.c.h.b16 %v112
  %v2510 = vunpack.c.l.b16 %v113
  %v2511 = vunpack.c.h.b16 %v113
  %v2512 = vunpack.c.l.b16 %v114
  %v2513 = vunpack.c.h.b16 %v114
  %v2514 = vunpack.c.l.b16 %v115
  %v2515 = vunpack.c.h.b16 %v115
  %v2516 = vunpack.c.l.b16 %v116
  %v2517 = vunpack.c.h.b16 %v116
  %v2518 = vunpack.c.l.b16 %v117
  %v2519 = vunpack.c.h.b16 %v117
  %v2520 = vunpack.c.l.b16 %v118
  %v2521 = vunpack.c.h.b16 %v118
  %v2522 = vunpack.c.l.b16 %v119
  %v2523 = vunpack.c.h.b16 %v119
  %v2524 = vunpack.c.l.b16 %v120
  %v2525 = vunpack.c.h.b16 %v120
  %v2526 = vunpack.c.l.b16 %v121
  %v2527 = vunpack.c.h.b16 %v121
  %v2528 = vunpack.c.l.b16 %v122
  %v2529 = vunpack.c.h.b16 %v122
  %v2530 = vunpack.c.l.b16 %v123
  %v2531 = vunpack.c.h.b16 %v123
  %v2532 = vunpack.c.l.b16 %v124
  %v2533 = vunpack.c.h.b16 %v124
  %v2534 = vunpack.c.l.b16 %v125
  %v2535 = vunpack.c.h.b16 %v125
  %v2536 = vunpack.c.l.b16 %v126
  %v2537 = vunpack.c.h.b16 %v126
  %v2538 = vunpack.c.l.b16 %v127
  %v2539 = vunpack.c.h.b16 %v127
  %v2540 = vunpack.c.l.b16 %v128
  %v2541 = vunpack.c.h.b16 %v128
  %v2542 = vunpack.c.l.b16 %v129
  %v2543 = vunpack.c.h.b16 %v129
  %v2544 = vunpack.c.l.b16 %v130
  %v2545 = vunpack.c.h.b16 %v130
  %v2546 = vunpack.c.l.b16 %v131
  %v2547 = vunpack.c.h.b16 %v131
  %v2548 = vunpack.c.l.b16 %v132
  %v2549 = vunpack.c.h.b16 %v132
  %v2550 = vunpack.c.l.b16 %v133
  %v2551 = vunpack.c.h.b16 %v133
  %v2552 = vunpack.c.l.b16 %v134
  %v2553 = vunpack.c.h.b16 %v134
  %v2554 = vunpack.c.l.b16 %v135
  %v2555 = vunpack.c.h.b16 %v135
  %v2556 = vunpack.c.l.b16 %v136
  %v2557 = vunpack.c.h.b16 %v136
  %v2558 = vunpack.c.l.b16 %v137
  %v2559 = vunpack.c.h.b16 %v137
  %v2560 = vunpack.c.l.b16 %v138
  %v2561 = vunpack.c.h.b16 %v138
  %v2562 = vunpack.c.l.b16 %v139
  %v2563 = vunpack.c.h.b16 %v139
  %v2564 = vunpack.c.l.b16 %v140
  %v2565 = vunpack.c.h.b16 %v140
  %v2566 = vunpack.c.l.b16 %v141
  %v2567 = vunpack.c.h.b16 %v141
  %v2568 = vunpack.c.l.b16 %v142
  %v2569 = vunpack.c.h.b16 %v142
  %v2570 = vunpack.c.l.b16 %v143
  %v2571 = vunpack.c.h.b16 %v143
  %v2572 = vunpack.c.l.b16 %v144
  %v2573 = vunpack.c.h.b16 %v144
  %v2574 = vunpack.c.l.b16 %v145
  %v2575 = vunpack.c.h.b16 %v145
  %v2576 = vunpack.c.l.b16 %v146
  %v2577 = vunpack.c.h.b16 %v146
  %v2578 = vunpack.c.l.b16 %v147
  %v2579 = vunpack.c.h.b16 %v147
  %v2580 = vunpack.c.l.b16 %v148
  %v2581 = vunpack.c.h.b16 %v148
  %v2582 = vunpack.c.l.b16 %v149
  %v2583 = vunpack.c.h.b16 %v149
  %v2584 = vunpack.c.l.b16 %v150
  %v2585 = vunpack.c.h.b16 %v150
  %v2586 = vunpack.c.l.b16 %v151
  %v2587 = vunpack.c.h.b16 %v151
  %v2588 = vunpack.c.l.b16 %v152
  %v2589 = vunpack.c.h.b16 %v152
  %v2590 = vunpack.c.l.b16 %v153
  %v2591 = vunpack.c.h.b16 %v153
  %v2592 = vunpack.c.l.b16 %v154
  %v2593 = vunpack.c.h.b16 %v154
  %v2594 = vunpack.c.l.b16 %v155
  %v2595 = vunpack.c.h.b16 %v155
  %v2596 = vunpack.c.l.b16 %v156
  %v2597 = vunpack.c.h.b16 %v156
  %v2598 = vunpack.c.l.b16 %v157
  %v2599 = vunpack.c.h.b16 %v157
  %v2600 = vunpack.c.l.b16 %v158
  %v2601 = vunpack.c.h.b16 %v158
  %v2602 = vunpack.c.l.b16 %v159
  %v2603 = vunpack.c.h.b16 %v159
  %v2604 = vunpack.c.l.b16 %v160
  %v2605 = vunpack.c.h.b16 %v160
  %v2606 = vunpack.c.l.b16 %v161
  %v2607 = vunpack.c.h.b16 %v161
  %v2608 = vunpack.c.l.b16 %v162
  %v2609 = vunpack.c.h.b16 %v162
  %v2610 = vunpack.c.l.b16 %v163
  %v2611 = vunpack.c.h.b16 %v163
  %v2612 = vunpack.c.l.b16 %v164
  %v2613 = vunpack.c.h.b16 %v164
  %v2614 = vunpack.c.l.b16 %v165
  %v2615 = vunpack.c.h.b16 %v165
  %v2616 = vunpack.c.l.b16 %v166
  %v2617 = vunpack.c.h.b16 %v166
  %v2618 = vunpack.c.l.b16 %v167
  %v2619 = vunpack.c.h.b16 %v167
  %v2620 = vunpack.c.l.b16 %v168
  %v2621 = vunpack.c.h.b16 %v168
  %v2622 = vunpack.c.l.b16 %v169
  %v2623 = vunpack.c.h.b16 %v169
  %v2624 = vunpack.c.l.b16 %v170
  %v2625 = vunpack.c.h.b16 %v170
  %v2626 = vunpack.c.l.b16 %v171
  %v2627 = vunpack.c.h.b16 %v171
  %v2628 = vunpack.c.l.b16 %v172
  %v2629 = vunpack.c.h.b16 %v172
  %v2630 = vunpack.c.l.b16 %v173
  %v2631 = vunpack.c.h.b16 %v173
  %v2632 = vunpack.c.l.b16 %v174
  %v2633 = vunpack.c.h.b16 %v174
  %v2634 = vunpack.c.l.b16 %v175
  %v2635 = vunpack.c.h.b16 %v175
  %v2636 = vunpack.c.l.b16 %v176
  %v2637 = vunpack.c.h.b16 %v176
  %v2638 = vunpack.c.l.b16 %v177
  %v2639 = vunpack.c.h.b16 %v177
  %v2640 = vunpack.c.l.b16 %v178
  %v2641 = vunpack.c.h.b16 %v178
  %v2642 = vunpack.c.l.b16 %v179
  %v2643 = vunpack.c.h.b16 %v179
  %v2644 = vunpack.c.l.b16 %v180
  %v2645 = vunpack.c.h.b16 %v180
  %v2646 = vunpack.c.l.b16 %v181
  %v2647 = vunpack.c.h.b16 %v181
  %v2648 = vunpack.c.l.b16 %v182
  %v2649 = vunpack.c.h.b16 %v182
  %v2650 = vunpack.c.l.b16 %v183
  %v2651 = vunpack.c.h.b16 %v183
  %v2652 = vunpack.c.l.b16 %v184
  %v2653 = vunpack.c.h.b16 %v184
  %v2654 = vunpack.c.l.b16 %v185
  %v2655 = vunpack.c.h.b16 %v185
  %v2656 = vunpack.c.l.b16 %v186
  %v2657 = vunpack.c.h.b16 %v186
  %v2658 = vunpack.c.l.b16 %v187
  %v2659 = vunpack.c.h.b16 %v187
  %v2660 = vunpack.c.l.b16 %v188
  %v2661 = vunpack.c.h.b16 %v188
  %v2662 = vunpack.c.l.b16 %v189
  %v2663 = vunpack.c.h.b16 %v189
  %v2664 = vunpack.c.l.b16 %v190
  %v2665 = vunpack.c.h.b16 %v190
  %v2666 = vunpack.c.l.b16 %v191
  %v2667 = vunpack.c.h.b16 %v191
  %v2668 = vunpack.c.l.b16 %v192
  %v2669 = vunpack.c.h.b16 %v192
  %v2670 = vunpack.c.l.b16 %v193
  %v2671 = vunpack.c.h.b16 %v193
  %v2672 = vunpack.c.l.b16 %v194
  %v2673 = vunpack.c.h.b16 %v194
  %v2674 = vunpack.c.l.b16 %v195
  %v2675 = vunpack.c.h.b16 %v195
  %v2676 = vunpack.c.l.b16 %v196
  %v2677 = vunpack.c.h.b16 %v196
  %v2678 = vunpack.c.l.b16 %v197
  %v2679 = vunpack.c.h.b16 %v197
  %v2680 = vunpack.c.l.b16 %v198
  %v2681 = vunpack.c.h.b16 %v198
  %v2682 = vunpack.c.l.b16 %v199
  %v2683 = vunpack.c.h.b16 %v199
  %v2684 = vunpack.c.l.b16 %v200
  %v2685 = vunpack.c.h.b16 %v200
  %v2686 = vunpack.c.l.b16 %v201
  %v2687 = vunpack.c.h.b16 %v201
  %v2688 = vunpack.c.l.b16 %v202
  %v2689 = vunpack.c.h.b16 %v202
  %v2690 = vunpack.c.l.b16 %v203
  %v2691 = vunpack.c.h.b16 %v203
  %v2692 = vunpack.c.l.b16 %v204
  %v2693 = vunpack.c.h.b16 %v204
  %v2694 = vunpack.c.l.b16 %v205
  %v2695 = vunpack.c.h.b16 %v205
  %v2696 = vunpack.c.l.b16 %v206
  %v2697 = vunpack.c.h.b16 %v206
  %v2698 = vunpack.c.l.b16 %v207
  %v2699 = vunpack.c.h.b16 %v207
  %v2700 = vunpack.c.l.b16 %v208
  %v2701 = vunpack.c.h.b16 %v208
  %v2702 = vunpack.c.l.b16 %v209
  %v2703 = vunpack.c.h.b16 %v209
  %v2704 = vunpack.c.l.b16 %v210
  %v2705 = vunpack.c.h.b16 %v210
  %v2706 = vunpack.c.l.b16 %v211
  %v2707 = vunpack.c.h.b16 %v211
  %v2708 = vunpack.c.l.b16 %v212
  %v2709 = vunpack.c.h.b16 %v212
  %v2710 = vunpack.c.l.b16 %v213
  %v2711 = vunpack.c.h.b16 %v213
  %v2712 = vunpack.c.l.b16 %v214
  %v2713 = vunpack.c.h.b16 %v214
  %v2714 = vunpack.c.l.b16 %v215
  %v2715 = vunpack.c.h.b16 %v215
  %v2716 = vunpack.c.l.b16 %v216
  %v2717 = vunpack.c.h.b16 %v216
  %v2718 = vunpack.c.l.b16 %v217
  %v2719 = vunpack.c.h.b16 %v217
  %v2720 = vunpack.c.l.b16 %v218
  %v2721 = vunpack.c.h.b16 %v218
  %v2722 = vunpack.c.l.b16 %v219
  %v2723 = vunpack.c.h.b16 %v219
  %v2724 = vunpack.c.l.b16 %v220
  %v2725 = vunpack.c.h.b16 %v220
  %v2726 = vunpack.c.l.b16 %v221
  %v2727 = vunpack.c.h.b16 %v221
  %v2728 = vunpack.c.l.b16 %v222
  %v2729 = vunpack.c.h.b16 %v222
  %v2730 = vunpack.c.l.b16 %v223
  %v2731 = vunpack.c.h.b16 %v223
  %v2732 = vunpack.c.l.b16 %v224
  %v2733 = vunpack.c.h.b16 %v224
  %v2734 = vunpack.c.l.b16 %v225
  %v2735 = vunpack.c.h.b16 %v225
  %v2736 = vunpack.c.l.b16 %v226
  %v2737 = vunpack.c.h.b16 %v226
  %v2738 = vunpack.c.l.b16 %v227
  %v2739 = vunpack.c.h.b16 %v227
  %v2740 = vunpack.c.l.b16 %v228
  %v2741 = vunpack.c.h.b16 %v228
  %v2742 = vunpack.c.l.b16 %v229
  %v2743 = vunpack.c.h.b16 %v229
  %v2744 = vunpack.c.l.b16 %v230
  %v2745 = vunpack.c.h.b16 %v230
  %v2746 = vunpack.c.l.b16 %v231
  %v2747 = vunpack.c.h.b16 %v231
  %v2748 = vunpack.c.l.b16 %v232
  %v2749 = vunpack.c.h.b16 %v232
  %v2750 = vunpack.c.l.b16 %v233
  %v2751 = vunpack.c.h.b16 %v233
  %v2752 = vunpack.c.l.b16 %v234
  %v2753 = vunpack.c.h.b16 %v234
  %v2754 = vunpack.c.l.b16 %v235
  %v2755 = vunpack.c.h.b16 %v235
  %v2756 = vunpack.c.l.b16 %v236
  %v2757 = vunpack.c.h.b16 %v236
  %v2758 = vunpack.c.l.b16 %v237
  %v2759 = vunpack.c.h.b16 %v237
  %v2760 = vunpack.c.l.b16 %v238
  %v2761 = vunpack.c.h.b16 %v238
  %v2762 = vunpack.c.l.b16 %v239
  %v2763 = vunpack.c.h.b16 %v239
  %v2764 = vunpack.c.l.b16 %v240
  %v2765 = vunpack.c.h.b16 %v240
  %v2766 = vunpack.c.l.b16 %v241
  %v2767 = vunpack.c.h.b16 %v241
  %v2768 = vunpack.c.l.b16 %v242
  %v2769 = vunpack.c.h.b16 %v242
  %v2770 = vunpack.c.l.b16 %v243
  %v2771 = vunpack.c.h.b16 %v243
  %v2772 = vunpack.c.l.b16 %v244
  %v2773 = vunpack.c.h.b16 %v244
  %v2774 = vunpack.c.l.b16 %v245
  %v2775 = vunpack.c.h.b16 %v245
  %v2776 = vunpack.c.l.b16 %v246
  %v2777 = vunpack.c.h.b16 %v246
  %v2778 = vunpack.c.l.b16 %v247
  %v2779 = vunpack.c.h.b16 %v247
  %v2780 = vunpack.c.l.b16 %v248
  %v2781 = vunpack.c.h.b16 %v248
  %v2782 = vunpack.c.l.b16 %v249
  %v2783 = vunpack.c.h.b16 %v249
  %v2784 = vunpack.c.l.b16 %v250
  %v2785 = vunpack.c.h.b16 %v250
  %v2786 = vunpack.c.l.b16 %v251
  %v2787 = vunpack.c.h.b16 %v251
  %v2788 = vunpack.c.l.b16 %v252
  %v2789 = vunpack.c.h.b16 %v252
  %v2790 = vunpack.c.l.b16 %v253
  %v2791 = vunpack.c.h.b16 %v253
  %v2792 = vunpack.c.l.b16 %v254
  %v2793 = vunpack.c.h.b16 %v254
  %v2794 = vunpack.c.l.b16 %v255
  %v2795 = vunpack.c.h.b16 %v255
  %v2796 = vunpack.c.l.b16 %v256
  %v2797 = vunpack.c.h.b16 %v256
  %v2798 = vunpack.c.l.b16 %v257
  %v2799 = vunpack.c.h.b16 %v257
  %v2800 = vunpack.c.l.b16 %v258
  %v2801 = vunpack.c.h.b16 %v258
  %v2802 = vunpack.c.l.b16 %v259
  %v2803 = vunpack.c.h.b16 %v259
  %v2804 = vunpack.c.l.b16 %v260
  %v2805 = vunpack.c.h.b16 %v260
  %v2806 = vunpack.c.l.b16 %v261
  %v2807 = vunpack.c.h.b16 %v261
  %v2808 = vunpack.c.l.b16 %v262
  %v2809 = vunpack.c.h.b16 %v262
  %v2810 = vunpack.c.l.b16 %v263
  %v2811 = vunpack.c.h.b16 %v263
  %v2812 = vunpack.c.l.b16 %v264
  %v2813 = vunpack.c.h.b16 %v264
  %v2814 = vunpack.c.l.b16 %v265
  %v2815 = vunpack.c.h.b16 %v265
  %v2816 = vunpack.c.l.b16 %v266
  %v2817 = vunpack.c.h.b16 %v266
  %v2818 = vunpack.c.l.b16 %v267
  %v2819 = vunpack.c.h.b16 %v267
  %v2820 = vunpack.c.l.b16 %v268
  %v2821 = vunpack.c.h.b16 %v268
  %v2822 = vunpack.c.l.b16 %v269
  %v2823 = vunpack.c.h.b16 %v269
  %v2824 = vunpack.c.l.b16 %v270
  %v2825 = vunpack.c.h.b16 %v270
  %v2826 = vunpack.c.l.b16 %v271
  %v2827 = vunpack.c.h.b16 %v271
  %v2828 = vunpack.c.l.b16 %v272
  %v2829 = vunpack.c.h.b16 %v272
  %v2830 = vunpack.c.l.b16 %v273
  %v2831 = vunpack.c.h.b16 %v273
  %v2832 = vunpack.c.l.b16 %v274
  %v2833 = vunpack.c.h.b16 %v274
  %v2834 = vunpack.c.l.b16 %v275
  %v2835 = vunpack.c.h.b16 %v275
  %v2836 = vunpack.c.l.b16 %v276
  %v2837 = vunpack.c.h.b16 %v276
  %v2838 = vunpack.c.l.b16 %v277
  %v2839 = vunpack.c.h.b16 %v277
  %v2840 = vunpack.c.l.b16 %v278
  %v2841 = vunpack.c.h.b16 %v278
  %v2842 = vunpack.c.l.b16 %v279
  %v2843 = vunpack.c.h.b16 %v279
  %v2844 = vunpack.c.l.b16 %v280
  %v2845 = vunpack.c.h.b16 %v280
  %v2846 = vunpack.c.l.b16 %v281
  %v2847 = vunpack.c.h.b16 %v281
  %v2848 = vunpack.c.l.b16 %v282
  %v2849 = vunpack.c.h.b16 %v282
  %v2850 = vunpack.c.l.b16 %v283
  %v2851 = vunpack.c.h.b16 %v283
  %v2852 = vunpack.c.l.b16 %v284
  %v2853 = vunpack.c.h.b16 %v284
  %v2854 = vunpack.c.l.b16 %v285
  %v2855 = vunpack.c.h.b16 %v285
  %v2856 = vunpack.c.l.b16 %v286
  %v2857 = vunpack.c.h.b16 %v286
  %v2858 = vunpack.c.l.b16 %v287
  %v2859 = vunpack.c.h.b16 %v287
  %v2860 = vunpack.c.l.b16 %v288
  %v2861 = vunpack.c.h.b16 %v288
  %v2862 = vunpack.c.l.b16 %v289
  %v2863 = vunpack.c.h.b16 %v289
  %v2864 = vunpack.c.l.b16 %v290
  %v2865 = vunpack.c.h.b16 %v290
  %v2866 = vunpack.c.l.b16 %v291
  %v2867 = vunpack.c.h.b16 %v291
  %v2868 = vunpack.c.l.b16 %v292
  %v2869 = vunpack.c.h.b16 %v292
  %v2870 = vunpack.c.l.b16 %v293
  %v2871 = vunpack.c.h.b16 %v293
  %v2872 = vunpack.c.l.b16 %v294
  %v2873 = vunpack.c.h.b16 %v294
  %v2874 = vunpack.c.l.b16 %v295
  %v2875 = vunpack.c.h.b16 %v295
  %v2876 = vunpack.c.l.b16 %v296
  %v2877 = vunpack.c.h.b16 %v296
  %v2878 = vunpack.c.l.b16 %v297
  %v2879 = vunpack.c.h.b16 %v297
  %v2880 = vunpack.c.l.b16 %v298
  %v2881 = vunpack.c.h.b16 %v298
  %v2882 = vunpack.c.l.b16 %v299
  %v2883 = vunpack.c.h.b16 %v299
  %v2884 = vunpack.c.l.b16 %v300
  %v2885 = vunpack.c.h.b16 %v300
  %v2886 = vunpack.c.l.b16 %v301
  %v2887 = vunpack.c.h.b16 %v301
  %v2888 = vunpack.c.l.b16 %v302
  %v2889 = vunpack.c.h.b16 %v302
  %v2890 = vunpack.c.l.b16 %v303
  %v2891 = vunpack.c.h.b16 %v303
  %v2892 = vunpack.c.l.b16 %v304
  %v2893 = vunpack.c.h.b16 %v304
  %v2894 = vunpack.c.l.b16 %v305
  %v2895 = vunpack.c.h.b16 %v305
  %v2896 = vunpack.c.l.b16 %v306
  %v2897 = vunpack.c.h.b16 %v306
  %v2898 = vunpack.c.l.b16 %v307
  %v2899 = vunpack.c.h.b16 %v307
  %v2900 = vunpack.c.l.b16 %v308
  %v2901 = vunpack.c.h.b16 %v308
  %v2902 = vunpack.c.l.b16 %v309
  %v2903 = vunpack.c.h.b16 %v309
  %v2904 = vunpack.c.l.b16 %v310
  %v2905 = vunpack.c.h.b16 %v310
  %v2906 = vunpack.c.l.b16 %v311
  %v2907 = vunpack.c.h.b16 %v311
  %v2908 = vunpack.c.l.b16 %v312
  %v2909 = vunpack.c.h.b16 %v312
  %v2910 = vunpack.c.l.b16 %v313
  %v2911 = vunpack.c.h.b16 %v313
  %v2912 = vunpack.c.l.b16 %v314
  %v2913 = vunpack.c.h.b16 %v314
  %v2914 = vunpack.c.l.b16 %v315
  %v2915 = vunpack.c.h.b16 %v315
  %v2916 = vunpack.c.l.b16 %v316
  %v2917 = vunpack.c.h.b16 %v316
  %v2918 = vunpack.c.l.b16 %v317
  %v2919 = vunpack.c.h.b16 %v317
  %v2920 = vunpack.c.l.b16 %v318
  %v2921 = vunpack.c.h.b16 %v318
  %v2922 = vunpack.c.l.b16 %v319
  %v2923 = vunpack.c.h.b16 %v319
  %v2924 = vunpack.c.l.b16 %v320
  %v2925 = vunpack.c.h.b16 %v320
  %v2926 = vunpack.c.l.b16 %v321
  %v2927 = vunpack.c.h.b16 %v321
  %v2928 = vunpack.c.l.b16 %v322
  %v2929 = vunpack.c.h.b16 %v322
  %v2930 = vunpack.c.l.b16 %v323
  %v2931 = vunpack.c.h.b16 %v323
  %v2932 = vunpack.c.l.b16 %v324
  %v2933 = vunpack.c.h.b16 %v324
  %v2934 = vunpack.c.l.b16 %v325
  %v2935 = vunpack.c.h.b16 %v325
  %v2936 = vunpack.c.l.b16 %v326
  %v2937 = vunpack.c.h.b16 %v326
  %v2938 = vunpack.c.l.b16 %v327
  %v2939 = vunpack.c.h.b16 %v327
  %v2940 = vunpack.c.l.b16 %v328
  %v2941 = vunpack.c.h.b16 %v328
  %v2942 = vunpack.c.l.b16 %v329
  %v2943 = vunpack.c.h.b16 %v329
  %v2944 = vunpack.c.l.b16 %v330
  %v2945 = vunpack.c.h.b16 %v330
  %v2946 = vunpack.c.l.b16 %v331
  %v2947 = vunpack.c.h.b16 %v331
  %v2948 = vunpack.c.l.b16 %v332
  %v2949 = vunpack.c.h.b16 %v332
  %v2950 = vunpack.c.l.b16 %v333
  %v2951 = vunpack.c.h.b16 %v333
  %v2952 = vunpack.c.l.b16 %v334
  %v2953 = vunpack.c.h.b16 %v334
  %v2954 = vunpack.c.l.b16 %v335
  %v2955 = vunpack.c.h.b16 %v335
  %v2956 = vunpack.c.l.b16 %v336
  %v2957 = vunpack.c.h.b16 %v336
  %v2958 = vunpack.c.l.b16 %v337
  %v2959 = vunpack.c.h.b16 %v337
  %v2960 = vunpack.c.l.b16 %v338
  %v2961 = vunpack.c.h.b16 %v338
  %v2962 = vunpack.c.l.b16 %v339
  %v2963 = vunpack.c.h.b16 %v339
  %v2964 = vunpack.c.l.b16 %v340
  %v2965 = vunpack.c.h.b16 %v340
  %v2966 = vunpack.c.l.b16 %v341
  %v2967 = vunpack.c.h.b16 %v341
  %v2968 = vunpack.c.l.b16 %v342
  %v2969 = vunpack.c.h.b16 %v342
  %v2970 = vunpack.c.l.b16 %v343
  %v2971 = vunpack.c.h.b16 %v343
  %v2972 = vunpack.c.l.b16 %v344
  %v2973 = vunpack.c.h.b16 %v344
  %v2974 = vunpack.c.l.b16 %v345
  %v2975 = vunpack.c.h.b16 %v345
  %v2976 = vunpack.c.l.b16 %v346
  %v2977 = vunpack.c.h.b16 %v346
  %v2978 = vunpack.c.l.b16 %v347
  %v2979 = vunpack.c.h.b16 %v347
  %v2980 = vunpack.c.l.b16 %v348
  %v2981 = vunpack.c.h.b16 %v348
  %v2982 = vunpack.c.l.b16 %v349
  %v2983 = vunpack.c.h.b16 %v349
  %v2984 = vunpack.c.l.b16 %v350
  %v2985 = vunpack.c.h.b16 %v350
  %v2986 = vunpack.c.l.b16 %v351
  %v2987 = vunpack.c.h.b16 %v351
  %v2988 = vunpack.c.l.b16 %v352
  %v2989 = vunpack.c.h.b16 %v352
  %v2990 = vunpack.c.l.b16 %v353
  %v2991 = vunpack.c.h.b16 %v353
  %v2992 = vunpack.c.l.b16 %v354
  %v2993 = vunpack.c.h.b16 %v354
  %v2994 = vunpack.c.l.b16 %v355
  %v2995 = vunpack.c.h.b16 %v355
  %v2996 = vunpack.c.l.b16 %v356
  %v2997 = vunpack.c.h.b16 %v356
  %v2998 = vunpack.c.l.b16 %v357
  %v2999 = vunpack.c.h.b16 %v357
  %v3000 = vunpack.c.l.b16 %v358
  %v3001 = vunpack.c.h.b16 %v358
  %v3002 = vunpack.c.l.b16 %v359
  %v3003 = vunpack.c.h.b16 %v359
  %v3004 = vunpack.c.l.b16 %v360
  %v3005 = vunpack.c.h.b16 %v360
  %v3006 = vunpack.c.l.b16 %v361
  %v3007 = vunpack.c.h.b16 %v361
  %v3008 = vunpack.c.l.b16 %v362
  %v3009 = vunpack.c.h.b16 %v362
  %v3010 = vunpack.c.l.b16 %v363
  %v3011 = vunpack.c.h.b16 %v363
  %v3012 = vunpack.c.l.b16 %v364
  %v3013 = vunpack.c.h.b16 %v364
  %v3014 = vunpack.c.l.b16 %v365
  %v3015 = vunpack.c.h.b16 %v365
  %v3016 = vunpack.c.l.b16 %v366
  %v3017 = vunpack.c.h.b16 %v366
  %v3018 = vunpack.c.l.b16 %v367
  %v3019 = vunpack.c.h.b16 %v367
  %v3020 = vunpack.c.l.b16 %v368
  %v3021 = vunpack.c.h.b16 %v368
  %v3022 = vunpack.c.l.b16 %v369
  %v3023 = vunpack.c.h.b16 %v369
  %v3024 = vunpack.c.l.b16 %v370
  %v3025 = vunpack.c.h.b16 %v370
  %v3026 = vunpack.c.l.b16 %v371
  %v3027 = vunpack.c.h.b16 %v371
  %v3028 = vunpack.c.l.b16 %v372
  %v3029 = vunpack.c.h.b16 %v372
  %v3030 = vunpack.c.l.b16 %v373
  %v3031 = vunpack.c.h.b16 %v373
  %v3032 = vunpack.c.l.b16 %v374
  %v3033 = vunpack.c.h.b16 %v374
  %v3034 = vunpack.c.l.b16 %v375
  %v3035 = vunpack.c.h.b16 %v375
  %v3036 = vunpack.c.l.b16 %v376
  %v3037 = vunpack.c.h.b16 %v376
  %v3038 = vunpack.c.l.b16 %v377
  %v3039 = vunpack.c.h.b16 %v377
  %v3040 = vunpack.c.l.b16 %v378
  %v3041 = vunpack.c.h.b16 %v378
  %v3042 = vunpack.c.l.b16 %v379
  %v3043 = vunpack.c.h.b16 %v379
  %v3044 = vunpack.c.l.b16 %v380
  %v3045 = vunpack.c.h.b16 %v380
  %v3046 = vunpack.c.l.b16 %v381
  %v3047 = vunpack.c.h.b16 %v381
  %v3048 = vunpack.c.l.b16 %v382
  %v3049 = vunpack.c.h.b16 %v382
  %v3050 = vunpack.c.l.b16 %v383
  %v3051 = vunpack.c.h.b16 %v383
  %v3052 = vunpack.c.l.b16 %v384
  %v3053 = vunpack.c.h.b16 %v384
  %v3054 = vunpack.c.l.b16 %v385
  %v3055 = vunpack.c.h.b16 %v385
  %v3056 = vunpack.c.l.b16 %v386
  %v3057 = vunpack.c.h.b16 %v386
  %v3058 = vunpack.c.l.b16 %v387
  %v3059 = vunpack.c.h.b16 %v387
  %v3060 = vunpack.c.l.b16 %v388
  %v3061 = vunpack.c.h.b16 %v388
  %v3062 = vunpack.c.l.b16 %v389
  %v3063 = vunpack.c.h.b16 %v389
  %v3064 = vunpack.c.l.b16 %v390
  %v3065 = vunpack.c.h.b16 %v390
  %v3066 = vunpack.c.l.b16 %v391
  %v3067 = vunpack.c.h.b16 %v391
  %v3068 = vunpack.c.l.b16 %v392
  %v3069 = vunpack.c.h.b16 %v392
  %v3070 = vunpack.c.l.b16 %v393
  %v3071 = vunpack.c.h.b16 %v393
  %v3072 = vunpack.c.l.b16 %v394
  %v3073 = vunpack.c.h.b16 %v394
  %v3074 = vunpack.c.l.b16 %v395
  %v3075 = vunpack.c.h.b16 %v395
  %v3076 = vunpack.c.l.b16 %v396
  %v3077 = vunpack.c.h.b16 %v396
  %v3078 = vunpack.c.l.b16 %v397
  %v3079 = vunpack.c.h.b16 %v397
  %v3080 = vunpack.c.l.b16 %v398
  %v3081 = vunpack.c.h.b16 %v398
  %v3082 = vunpack.c.l.b16 %v399
  %v3083 = vunpack.c.h.b16 %v399
  %v3084 = vunpack.c.l.b16 %v400
  %v3085 = vunpack.c.h.b16 %v400
  %v3086 = vunpack.c.l.b16 %v401
  %v3087 = vunpack.c.h.b16 %v401
  %v3088 = vunpack.c.l.b16 %v402
  %v3089 = vunpack.c.h.b16 %v402
  %v3090 = vunpack.c.l.b16 %v403
  %v3091 = vunpack.c.h.b16 %v403
  %v3092 = vunpack.c.l.b16 %v404
  %v3093 = vunpack.c.h.b16 %v404
  %v3094 = vunpack.c.l.b16 %v405
  %v3095 = vunpack.c.h.b16 %v405
  %v3096 = vunpack.c.l.b16 %v406
  %v3097 = vunpack.c.h.b16 %v406
  %v3098 = vunpack.c.l.b16 %v407
  %v3099 = vunpack.c.h.b16 %v407
  %v3100 = vunpack.c.l.b16 %v408
  %v3101 = vunpack.c.h.b16 %v408
  %v3102 = vunpack.c.l.b16 %v409
  %v3103 = vunpack.c.h.b16 %v409
  %v3104 = vunpack.c.l.b16 %v410
  %v3105 = vunpack.c.h.b16 %v410
  %v3106 = vunpack.c.l.b16 %v411
  %v3107 = vunpack.c.h.b16 %v411
  %v3108 = vunpack.c.l.b16 %v412
  %v3109 = vunpack.c.h.b16 %v412
  %v3110 = vunpack.c.l.b16 %v413
  %v3111 = vunpack.c.h.b16 %v413
  %v3112 = vunpack.c.l.b16 %v414
  %v3113 = vunpack.c.h.b16 %v414
  %v3114 = vunpack.c.l.b16 %v415
  %v3115 = vunpack.c.h.b16 %v415
  %v3116 = vunpack.c.l.b16 %v416
  %v3117 = vunpack.c.h.b16 %v416
  %v3118 = vunpack.c.l.b16 %v417
  %v3119 = vunpack.c.h.b16 %v417
  %v3120 = vunpack.c.l.b16 %v418
  %v3121 = vunpack.c.h.b16 %v418
  %v3122 = vunpack.c.l.b16 %v419
  %v3123 = vunpack.c.h.b16 %v419
  %v3124 = vunpack.c.l.b16 %v420
  %v3125 = vunpack.c.h.b16 %v420
  %v3126 = vunpack.c.l.b16 %v421
  %v3127 = vunpack.c.h.b16 %v421
  %v3128 = vunpack.c.l.b16 %v422
  %v3129 = vunpack.c.h.b16 %v422
  %v3130 = vunpack.c.l.b16 %v423
  %v3131 = vunpack.c.h.b16 %v423
  %v3132 = vunpack.c.l.b16 %v424
  %v3133 = vunpack.c.h.b16 %v424
  %v3134 = vunpack.c.l.b16 %v425
  %v3135 = vunpack.c.h.b16 %v425
  %v3136 = vunpack.c.l.b16 %v426
  %v3137 = vunpack.c.h.b16 %v426
  %v3138 = vunpack.c.l.b16 %v427
  %v3139 = vunpack.c.h.b16 %v427
  %v3140 = vunpack.c.l.b16 %v428
  %v3141 = vunpack.c.h.b16 %v428
  %v3142 = vunpack.c.l.b16 %v429
  %v3143 = vunpack.c.h.b16 %v429
  %v3144 = vunpack.c.l.b16 %v430
  %v3145 = vunpack.c.h.b16 %v430
  %v3146 = vunpack.c.l.b16 %v431
  %v3147 = vunpack.c.h.b16 %v431
  %v3148 = vunpack.c.l.b16 %v432
  %v3149 = vunpack.c.h.b16 %v432
  %v3150 = vunpack.c.l.b16 %v433
  %v3151 = vunpack.c.h.b16 %v433
  %v3152 = vunpack.c.l.b16 %v434
  %v3153 = vunpack.c.h.b16 %v434
  %v3154 = vunpack.c.l.b16 %v435
  %v3155 = vunpack.c.h.b16 %v435
  %v3156 = vunpack.c.l.b16 %v436
  %v3157 = vunpack.c.h.b16 %v436
  %v3158 = vunpack.c.l.b16 %v437
  %v3159 = vunpack.c.h.b16 %v437
  %v3160 = vunpack.c.l.b16 %v438
  %v3161 = vunpack.c.h.b16 %v438
  %v3162 = vunpack.c.l.b16 %v439
  %v3163 = vunpack.c.h.b16 %v439
  %v3164 = vunpack.c.l.b16 %v440
  %v3165 = vunpack.c.h.b16 %v440
  %v3166 = vunpack.c.l.b16 %v441
  %v3167 = vunpack.c.h.b16 %v441
  %v3168 = vunpack.c.l.b16 %v442
  %v3169 = vunpack.c.h.b16 %v442
  %v3170 = vunpack.c.l.b16 %v443
  %v3171 = vunpack.c.h.b16 %v443
  %v3172 = vunpack.c.l.b16 %v444
  %v3173 = vunpack.c.h.b16 %v444
  %v3174 = vunpack.c.l.b16 %v445
  %v3175 = vunpack.c.h.b16 %v445
  %v3176 = vunpack.c.l.b16 %v446
  %v3177 = vunpack.c.h.b16 %v446
  %v3178 = vunpack.c.l.b16 %v447
  %v3179 = vunpack.c.h.b16 %v447
  %v3180 = vunpack.c.l.b16 %v448
  %v3181 = vunpack.c.h.b16 %v448
  %v3182 = vunpack.c.l.b16 %v449
  %v3183 = vunpack.c.h.b16 %v449
  %v3184 = vunpack.c.l.b16 %v450
  %v3185 = vunpack.c.h.b16 %v450
  %v3186 = vunpack.c.l.b16 %v451
  %v3187 = vunpack.c.h.b16 %v451
  %v3188 = vunpack.c.l.b16 %v452
  %v3189 = vunpack.c.h.b16 %v452
  %v3190 = vunpack.c.l.b16 %v453
  %v3191 = vunpack.c.h.b16 %v453
  %v3192 = vunpack.c.l.b16 %v454
  %v3193 = vunpack.c.h.b16 %v454
  %v3194 = vunpack.c.l.b16 %v455
  %v3195 = vunpack.c.h.b16 %v455
  %v3196 = vunpack.c.l.b16 %v456
  %v3197 = vunpack.c.h.b16 %v456
  %v3198 = vunpack.c.l.b16 %v457
  %v3199 = vunpack.c.h.b16 %v457
  %v3200 = vunpack.c.l.b16 %v458
  %v3201 = vunpack.c.h.b16 %v458
  %v3202 = vunpack.c.l.b16 %v459
  %v3203 = vunpack.c.h.b16 %v459
  %v3204 = vunpack.c.l.b16 %v460
  %v3205 = vunpack.c.h.b16 %v460
  %v3206 = vunpack.c.l.b16 %v461
  %v3207 = vunpack.c.h.b16 %v461
  %v3208 = vunpack.c.l.b16 %v462
  %v3209 = vunpack.c.h.b16 %v462
  %v3210 = vunpack.c.l.b16 %v463
  %v3211 = vunpack.c.h.b16 %v463
  %v3212 = vunpack.c.l.b16 %v464
  %v3213 = vunpack.c.h.b16 %v464
  %v3214 = vunpack.c.l.b16 %v465
  %v3215 = vunpack.c.h.b16 %v465
  %v3216 = vunpack.c.l.b16 %v466
  %v3217 = vunpack.c.h.b16 %v466
  %v3218 = vunpack.c.l.b16 %v467
  %v3219 = vunpack.c.h.b16 %v467
  %v3220 = vunpack.c.l.b16 %v468
  %v3221 = vunpack.c.h.b16 %v468
  %v3222 = vunpack.c.l.b16 %v469
  %v3223 = vunpack.c.h.b16 %v469
  %v3224 = vunpack.c.l.b16 %v470
  %v3225 = vunpack.c.h.b16 %v470
  %v3226 = vunpack.c.l.b16 %v471
  %v3227 = vunpack.c.h.b16 %v471
  %v3228 = vunpack.c.l.b16 %v472
  %v3229 = vunpack.c.h.b16 %v472
  %v3230 = vunpack.c.l.b16 %v473
  %v3231 = vunpack.c.h.b16 %v473
  %v3232 = vunpack.c.l.b16 %v474
  %v3233 = vunpack.c.h.b16 %v474
  %v3234 = vunpack.c.l.b16 %v475
  %v3235 = vunpack.c.h.b16 %v475
  %v3236 = vunpack.c.l.b16 %v476
  %v3237 = vunpack.c.h.b16 %v476
  %v3238 = vunpack.c.l.b16 %v477
  %v3239 = vunpack.c.h.b16 %v477
  %v3240 = vunpack.c.l.b16 %v478
  %v3241 = vunpack.c.h.b16 %v478
  %v3242 = vunpack.c.l.b16 %v479
  %v3243 = vunpack.c.h.b16 %v479
  %v3244 = vunpack.c.l.b16 %v480
  %v3245 = vunpack.c.h.b16 %v480
  %v3246 = vunpack.c.l.b16 %v481
  %v3247 = vunpack.c.h.b16 %v481
  %v3248 = vunpack.c.l.b16 %v482
  %v3249 = vunpack.c.h.b16 %v482
  %v3250 = vunpack.c.l.b16 %v483
  %v3251 = vunpack.c.h.b16 %v483
  %v3252 = vunpack.c.l.b16 %v484
  %v3253 = vunpack.c.h.b16 %v484
  %v3254 = vunpack.c.l.b16 %v485
  %v3255 = vunpack.c.h.b16 %v485
  %v3256 = vunpack.c.l.b16 %v486
  %v3257 = vunpack.c.h.b16 %v486
  %v3258 = vunpack.c.l.b16 %v487
  %v3259 = vunpack.c.h.b16 %v487
  %v3260 = vunpack.c.l.b16 %v488
  %v3261 = vunpack.c.h.b16 %v488
  %v3262 = vunpack.c.l.b16 %v489
  %v3263 = vunpack.c.h.b16 %v489
  %v3264 = vunpack.c.l.b16 %v490
  %v3265 = vunpack.c.h.b16 %v490
  %v3266 = vunpack.c.l.b16 %v491
  %v3267 = vunpack.c.h.b16 %v491
  %v3268 = vunpack.c.l.b16 %v492
  %v3269 = vunpack.c.h.b16 %v492
  %v3270 = vunpack.c.l.b16 %v493
  %v3271 = vunpack.c.h.b16 %v493
  %v3272 = vunpack.c.l.b16 %v494
  %v3273 = vunpack.c.h.b16 %v494
  %v3274 = vunpack.c.l.b16 %v495
  %v3275 = vunpack.c.h.b16 %v495
  %v3276 = vunpack.c.l.b16 %v496
  %v3277 = vunpack.c.h.b16 %v496
  %v3278 = vunpack.c.l.b16 %v497
  %v3279 = vunpack.c.h.b16 %v497
  %v3280 = vunpack.c.l.b16 %v498
  %v3281 = vunpack.c.h.b16 %v498
  %v3282 = vunpack.c.l.b16 %v499
  %v3283 = vunpack.c.h.b16 %v499
  %v3284 = vunpack.c.l.b16 %v500
  %v3285 = vunpack.c.h.b16 %v500
  %v3286 = vunpack.c.l.b16 %v501
  %v3287 = vunpack.c.h.b16 %v501
  %v3288 = vunpack.c.l.b16 %v502
  %v3289 = vunpack.c.h.b16 %v502
  %v3290 = vunpack.c.l.b16 %v503
  %v3291 = vunpack.c.h.b16 %v503
  %v3292 = vunpack.c.l.b16 %v504
  %v3293 = vunpack.c.h.b16 %v504
  %v3294 = vunpack.c.l.b16 %v505
  %v3295 = vunpack.c.h.b16 %v505
  %v3296 = vunpack.c.l.b16 %v506
  %v3297 = vunpack.c.h.b16 %v506
  %v3298 = vunpack.c.l.b16 %v507
  %v3299 = vunpack.c.h.b16 %v507
  %v3300 = vunpack.c.l.b16 %v508
  %v3301 = vunpack.c.h.b16 %v508
  %v3302 = vunpack.c.l.b16 %v509
  %v3303 = vunpack.c.h.b16 %v509
  %v3304 = vunpack.c.l.b16 %v510
  %v3305 = vunpack.c.h.b16 %v510
  %v3306 = vunpack.c.l.b16 %v511
  %v3307 = vunpack.c.h.b16 %v511
  %v3308 = vunpack.c.l.b16 %v512
  %v3309 = vunpack.c.h.b16 %v512
  %v3310 = vunpack.c.l.b16 %v513
  %v3311 = vunpack.c.h.b16 %v513
  %v3312 = vunpack.c.l.b16 %v514
  %v3313 = vunpack.c.h.b16 %v514
  %v3314 = vunpack.c.l.b16 %v515
  %v3315 = vunpack.c.h.b16 %v515
  %v3316 = vunpack.c.l.b16 %v516
  %v3317 = vunpack.c.h.b16 %v516
  %v3318 = vunpack.c.l.b16 %v517
  %v3319 = vunpack.c.h.b16 %v517
  %v3320 = vunpack.c.l.b16 %v518
  %v3321 = vunpack.c.h.b16 %v518
  %v3322 = vunpack.c.l.b16 %v519
  %v3323 = vunpack.c.h.b16 %v519
  %v3324 = vunpack.c.l.b16 %v520
  %v3325 = vunpack.c.h.b16 %v520
  %v3326 = vunpack.c.l.b16 %v521
  %v3327 = vunpack.c.h.b16 %v521
  %v3328 = vunpack.c.l.b16 %v522
  %v3329 = vunpack.c.h.b16 %v522
  %v3330 = vunpack.c.l.b16 %v523
  %v3331 = vunpack.c.h.b16 %v523
  %v3332 = vunpack.c.l.b16 %v524
  %v3333 = vunpack.c.h.b16 %v524
  %v3334 = vunpack.c.l.b16 %v525
  %v3335 = vunpack.c.h.b16 %v525
  %v3336 = vunpack.c.l.b16 %v526
  %v3337 = vunpack.c.h.b16 %v526
  %v3338 = vunpack.c.l.b16 %v527
  %v3339 = vunpack.c.h.b16 %v527
  %v3340 = vunpack.c.l.b16 %v528
  %v3341 = vunpack.c.h.b16 %v528
  %v3342 = vunpack.c.l.b16 %v529
  %v3343 = vunpack.c.h.b16 %v529
  %v3344 = vunpack.c.l.b16 %v530
  %v3345 = vunpack.c.h.b16 %v530
  %v3346 = vunpack.c.l.b16 %v531
  %v3347 = vunpack.c.h.b16 %v531
  %v3348 = vunpack.c.l.b16 %v532
  %v3349 = vunpack.c.h.b16 %v532
  %v3350 = vunpack.c.l.b16 %v533
  %v3351 = vunpack.c.h.b16 %v533
  %v3352 = vunpack.c.l.b16 %v534
  %v3353 = vunpack.c.h.b16 %v534
  %v3354 = vunpack.c.l.b16 %v535
  %v3355 = vunpack.c.h.b16 %v535
  %v3356 = vunpack.c.l.b16 %v536
  %v3357 = vunpack.c.h.b16 %v536
  %v3358 = vunpack.c.l.b16 %v537
  %v3359 = vunpack.c.h.b16 %v537
  %v3360 = vunpack.c.l.b16 %v538
  %v3361 = vunpack.c.h.b16 %v538
  %v3362 = vunpack.c.l.b16 %v539
  %v3363 = vunpack.c.h.b16 %v539
  %v3364 = vunpack.c.l.b16 %v540
  %v3365 = vunpack.c.h.b16 %v540
  %v3366 = vunpack.c.l.b16 %v541
  %v3367 = vunpack.c.h.b16 %v541
  %v3368 = vunpack.c.l.b16 %v542
  %v3369 = vunpack.c.h.b16 %v542
  %v3370 = vunpack.c.l.b16 %v543
  %v3371 = vunpack.c.h.b16 %v543
  %v3372 = vunpack.c.l.b16 %v544
  %v3373 = vunpack.c.h.b16 %v544
  %v3374 = vunpack.c.l.b16 %v545
  %v3375 = vunpack.c.h.b16 %v545
  %v3376 = vunpack.c.l.b16 %v546
  %v3377 = vunpack.c.h.b16 %v546
  %v3378 = vunpack.c.l.b16 %v547
  %v3379 = vunpack.c.h.b16 %v547
  %v3380 = vunpack.c.l.b16 %v548
  %v3381 = vunpack.c.h.b16 %v548
  %v3382 = vunpack.c.l.b16 %v549
  %v3383 = vunpack.c.h.b16 %v549
  %v3384 = vunpack.c.l.b16 %v550
  %v3385 = vunpack.c.h.b16 %v550
  %v3386 = vunpack.c.l.b16 %v551
  %v3387 = vunpack.c.h.b16 %v551
  %v3388 = vunpack.c.l.b16 %v552
  %v3389 = vunpack.c.h.b16 %v552
  %v3390 = vunpack.c.l.b16 %v553
  %v3391 = vunpack.c.h.b16 %v553
  %v3392 = vunpack.c.l.b16 %v554
  %v3393 = vunpack.c.h.b16 %v554
  %v3394 = vunpack.c.l.b16 %v555
  %v3395 = vunpack.c.h.b16 %v555
  %v3396 = vunpack.c.l.b16 %v556
  %v3397 = vunpack.c.h.b16 %v556
  %v3398 = vunpack.c.l.b16 %v557
  %v3399 = vunpack.c.h.b16 %v557
  %v3400 = vunpack.c.l.b16 %v558
  %v3401 = vunpack.c.h.b16 %v558
  %v3402 = vunpack.c.l.b16 %v559
  %v3403 = vunpack.c.h.b16 %v559
  %v3404 = vunpack.c.l.b16 %v560
  %v3405 = vunpack.c.h.b16 %v560
  %v3406 = vunpack.c.l.b16 %v561
  %v3407 = vunpack.c.h.b16 %v561
  %v3408 = vunpack.c.l.b16 %v562
  %v3409 = vunpack.c.h.b16 %v562
  %v3410 = vunpack.c.l.b16 %v563
  %v3411 = vunpack.c.h.b16 %v563
  %v3412 = vunpack.c.l.b16 %v564
  %v3413 = vunpack.c.h.b16 %v564
  %v3414 = vunpack.c.l.b16 %v565
  %v3415 = vunpack.c.h.b16 %v565
  %v3416 = vunpack.c.l.b16 %v566
  %v3417 = vunpack.c.h.b16 %v566
  %v3418 = vunpack.c.l.b16 %v567
  %v3419 = vunpack.c.h.b16 %v567
  %v3420 = vunpack.c.l.b16 %v568
  %v3421 = vunpack.c.h.b16 %v568
  %v3422 = vunpack.c.l.b16 %v569
  %v3423 = vunpack.c.h.b16 %v569
  %v3424 = vunpack.c.l.b16 %v570
  %v3425 = vunpack.c.h.b16 %v570
  %v3426 = vunpack.c.l.b16 %v571
  %v3427 = vunpack.c.h.b16 %v571
  %v3428 = vunpack.c.l.b16 %v572
  %v3429 = vunpack.c.h.b16 %v572
  %v3430 = vunpack.c.l.b16 %v573
  %v3431 = vunpack.c.h.b16 %v573
  %v3432 = vunpack.c.l.b16 %v574
  %v3433 = vunpack.c.h.b16 %v574
  %v3434 = vunpack.c.l.b16 %v575
  %v3435 = vunpack.c.h.b16 %v575
  %v3436 = vunpack.c.l.b16 %v576
  %v3437 = vunpack.c.h.b16 %v576
  %v3438 = vunpack.c.l.b16 %v577
  %v3439 = vunpack.c.h.b16 %v577
  %v3440 = vunpack.c.l.b16 %v578
  %v3441 = vunpack.c.h.b16 %v578
  %v3442 = vunpack.c.l.b16 %v579
  %v3443 = vunpack.c.h.b16 %v579
  %v3444 = vunpack.c.l.b16 %v580
  %v3445 = vunpack.c.h.b16 %v580
  %v3446 = vunpack.c.l.b16 %v581
  %v3447 = vunpack.c.h.b16 %v581
  %v3448 = vunpack.c.l.b16 %v582
  %v3449 = vunpack.c.h.b16 %v582
  %v3450 = vunpack.c.l.b16 %v583
  %v3451 = vunpack.c.h.b16 %v583
  %v3452 = vunpack.c.l.b16 %v584
  %v3453 = vunpack.c.h.b16 %v584
  %v3454 = vunpack.c.l.b16 %v585
  %v3455 = vunpack.c.h.b16 %v585
  %v3456 = vunpack.c.l.b16 %v586
  %v3457 = vunpack.c.h.b16 %v586
  %v3458 = vunpack.c.l.b16 %v587
  %v3459 = vunpack.c.h.b16 %v587
  %v3460 = vunpack.c.l.b16 %v588
  %v3461 = vunpack.c.h.b16 %v588
  %v3462 = vunpack.c.l.b16 %v589
  %v3463 = vunpack.c.h.b16 %v589
  %v3464 = vunpack.c.l.b16 %v590
  %v3465 = vunpack.c.h.b16 %v590
  %v3466 = vunpack.c.l.b16 %v591
  %v3467 = vunpack.c.h.b16 %v591
  %v3468 = vunpack.c.l.b16 %v592
  %v3469 = vunpack.c.h.b16 %v592
  %v3470 = vunpack.c.l.b16 %v593
  %v3471 = vunpack.c.h.b16 %v593
  %v3472 = vunpack.c.l.b16 %v594
  %v3473 = vunpack.c.h.b16 %v594
  %v3474 = vunpack.c.l.b16 %v595
  %v3475 = vunpack.c.h.b16 %v595
  %v3476 = vunpack.c.l.b16 %v596
  %v3477 = vunpack.c.h.b16 %v596
  %v3478 = vunpack.c.l.b16 %v597
  %v3479 = vunpack.c.h.b16 %v597
  %v3480 = vunpack.c.l.b16 %v598
  %v3481 = vunpack.c.h.b16 %v598
  %v3482 = vunpack.c.l.b16 %v599
  %v3483 = vunpack.c.h.b16 %v599
  %v3484 = vunpack.c.l.b16 %v600
  %v3485 = vunpack.c.h.b16 %v600
  %v3486 = vunpack.c.l.b16 %v601
  %v3487 = vunpack.c.h.b16 %v601
  %v3488 = vunpack.c.l.b16 %v602
  %v3489 = vunpack.c.h.b16 %v602
  %v3490 = vunpack.c.l.b16 %v603
  %v3491 = vunpack.c.h.b16 %v603
  %v3492 = vunpack.c.l.b16 %v604
  %v3493 = vunpack.c.h.b16 %v604
  %v3494 = vunpack.c.l.b16 %v605
  %v3495 = vunpack.c.h.b16 %v605
  %v3496 = vunpack.c.l.b16 %v606
  %v3497 = vunpack.c.h.b16 %v606
  %v3498 = vunpack.c.l.b16 %v607
  %v3499 = vunpack.c.h.b16 %v607
  %v3500 = vunpack.c.l.b16 %v608
  %v3501 = vunpack.c.h.b16 %v608
  %v3502 = vunpack.c.l.b16 %v609
  %v3503 = vunpack.c.h.b16 %v609
  %v3504 = vunpack.c.l.b16 %v610
  %v3505 = vunpack.c.h.b16 %v610
  %v3506 = vunpack.c.l.b16 %v611
  %v3507 = vunpack.c.h.b16 %v611
  %v3508 = vunpack.c.l.b16 %v612
  %v3509 = vunpack.c.h.b16 %v612
  %v3510 = vunpack.c.l.b16 %v613
  %v3511 = vunpack.c.h.b16 %v613
  %v3512 = vunpack.c.l.b16 %v614
  %v3513 = vunpack.c.h.b16 %v614
  %v3514 = vunpack.c.l.b16 %v615
  %v3515 = vunpack.c.h.b16 %v615
  %v3516 = vunpack.c.l.b16 %v616
  %v3517 = vunpack.c.h.b16 %v616
  %v3518 = vunpack.c.l.b16 %v617
  %v3519 = vunpack.c.h.b16 %v617
  %v3520 = vunpack.c.l.b16 %v618
  %v3521 = vunpack.c.h.b16 %v618
  %v3522 = vunpack.c.l.b16 %v619
  %v3523 = vunpack.c.h.b16 %v619
  %v3524 = vunpack.c.l.b16 %v620
  %v3525 = vunpack.c.h.b16 %v620
  %v3526 = vunpack.c.l.b16 %v621
  %v3527 = vunpack.c.h.b16 %v621
  %v3528 = vunpack.c.l.b16 %v622
  %v3529 = vunpack.c.h.b16 %v622
  %v3530 = vunpack.c.l.b16 %v623
  %v3531 = vunpack.c.h.b16 %v623
  %v3532 = vunpack.c.l.b16 %v624
  %v3533 = vunpack.c.h.b16 %v624
  %v3534 = vunpack.c.l.b16 %v625
  %v3535 = vunpack.c.h.b16 %v625
  %v3536 = vunpack.c.l.b16 %v626
  %v3537 = vunpack.c.h.b16 %v626
  %v3538 = vunpack.c.l.b16 %v627
  %v3539 = vunpack.c.h.b16 %v627
  %v3540 = vunpack.c.l.b16 %v628
  %v3541 = vunpack.c.h.b16 %v628
  %v3542 = vunpack.c.l.b16 %v629
  %v3543 = vunpack.c.h.b16 %v629
  %v3544 = vunpack.c.l.b16 %v630
  %v3545 = vunpack.c.h.b16 %v630
  %v3546 = vunpack.c.l.b16 %v631
  %v3547 = vunpack.c.h.b16 %v631
  %v3548 = vunpack.c.l.b16 %v632
  %v3549 = vunpack.c.h.b16 %v632
  %v3550 = vunpack.c.l.b16 %v633
  %v3551 = vunpack.c.h.b16 %v633
  %v3552 = vunpack.c.l.b16 %v634
  %v3553 = vunpack.c.h.b16 %v634
  %v3554 = vunpack.c.l.b16 %v635
  %v3555 = vunpack.c.h.b16 %v635
  %v3556 = vunpack.c.l.b16 %v636
  %v3557 = vunpack.c.h.b16 %v636
  %v3558 = vunpack.c.l.b16 %v637
  %v3559 = vunpack.c.h.b16 %v637
  %v3560 = vunpack.c.l.b16 %v638
  %v3561 = vunpack.c.h.b16 %v638
  %v3562 = vunpack.c.l.b16 %v639
  %v3563 = vunpack.c.h.b16 %v639
  %v3564 = vunpack.c.l.b16 %v640
  %v3565 = vunpack.c.h.b16 %v640
  %v3566 = vunpack.c.l.b16 %v641
  %v3567 = vunpack.c.h.b16 %v641
  %v3568 = vunpack.c.l.b16 %v642
  %v3569 = vunpack.c.h.b16 %v642
  %v3570 = vunpack.c.l.b16 %v643
  %v3571 = vunpack.c.h.b16 %v643
  %v3572 = vunpack.c.l.b16 %v644
  %v3573 = vunpack.c.h.b16 %v644
  %v3574 = vunpack.c.l.b16 %v645
  %v3575 = vunpack.c.h.b16 %v645
  %v3576 = vunpack.c.l.b16 %v646
  %v3577 = vunpack.c.h.b16 %v646
  %v3578 = vunpack.c.l.b16 %v647
  %v3579 = vunpack.c.h.b16 %v647
  %v3580 = vunpack.c.l.b16 %v648
  %v3581 = vunpack.c.h.b16 %v648
  %v3582 = vunpack.c.l.b16 %v649
  %v3583 = vunpack.c.h.b16 %v649
  %v3584 = vunpack.c.l.b16 %v650
  %v3585 = vunpack.c.h.b16 %v650
  %v3586 = vunpack.c.l.b16 %v651
  %v3587 = vunpack.c.h.b16 %v651
  %v3588 = vunpack.c.l.b16 %v652
  %v3589 = vunpack.c.h.b16 %v652
  %v3590 = vunpack.c.l.b16 %v653
  %v3591 = vunpack.c.h.b16 %v653
  %v3592 = vunpack.c.l.b16 %v654
  %v3593 = vunpack.c.h.b16 %v654
  %v3594 = vunpack.c.l.b16 %v655
  %v3595 = vunpack.c.h.b16 %v655
  %v3596 = vunpack.c.l.b16 %v656
  %v3597 = vunpack.c.h.b16 %v656
  %v3598 = vunpack.c.l.b16 %v657
  %v3599 = vunpack.c.h.b16 %v657
  %v3600 = vunpack.c.l.b16 %v658
  %v3601 = vunpack.c.h.b16 %v658
  %v3602 = vunpack.c.l.b16 %v659
  %v3603 = vunpack.c.h.b16 %v659
  %v3604 = vunpack.c.l.b16 %v660
  %v3605 = vunpack.c.h.b16 %v660
  %v3606 = vunpack.c.l.b16 %v661
  %v3607 = vunpack.c.h.b16 %v661
  %v3608 = vunpack.c.l.b16 %v662
  %v3609 = vunpack.c.h.b16 %v662
  %v3610 = vunpack.c.l.b16 %v663
  %v3611 = vunpack.c.h.b16 %v663
  %v3612 = vunpack.c.l.b16 %v664
  %v3613 = vunpack.c.h.b16 %v664
  %v3614 = vunpack.c.l.b16 %v665
  %v3615 = vunpack.c.h.b16 %v665
  %v3616 = vunpack.c.l.b16 %v666
  %v3617 = vunpack.c.h.b16 %v666
  %v3618 = vunpack.c.l.b16 %v667
  %v3619 = vunpack.c.h.b16 %v667
  %v3620 = vunpack.c.l.b16 %v668
  %v3621 = vunpack.c.h.b16 %v668
  %v3622 = vunpack.c.l.b16 %v669
  %v3623 = vunpack.c.h.b16 %v669
  %v3624 = vunpack.c.l.b16 %v670
  %v3625 = vunpack.c.h.b16 %v670
  %v3626 = vunpack.c.l.b16 %v671
  %v3627 = vunpack.c.h.b16 %v671
  %v3628 = vunpack.c.l.b16 %v672
  %v3629 = vunpack.c.h.b16 %v672
  %v3630 = vunpack.c.l.b16 %v673
  %v3631 = vunpack.c.h.b16 %v673
  %v3632 = vunpack.c.l.b16 %v674
  %v3633 = vunpack.c.h.b16 %v674
  %v3634 = vunpack.c.l.b16 %v675
  %v3635 = vunpack.c.h.b16 %v675
  %v3636 = vunpack.c.l.b16 %v676
  %v3637 = vunpack.c.h.b16 %v676
  %v3638 = vunpack.c.l.b16 %v677
  %v3639 = vunpack.c.h.b16 %v677
  %v3640 = vunpack.c.l.b16 %v678
  %v3641 = vunpack.c.h.b16 %v678
  %v3642 = vunpack.c.l.b16 %v679
  %v3643 = vunpack.c.h.b16 %v679
  %v3644 = vunpack.c.l.b16 %v680
  %v3645 = vunpack.c.h.b16 %v680
  %v3646 = vunpack.c.l.b16 %v681
  %v3647 = vunpack.c.h.b16 %v681
  %v3648 = vunpack.c.l.b16 %v682
  %v3649 = vunpack.c.h.b16 %v682
  %v3650 = vunpack.c.l.b16 %v683
  %v3651 = vunpack.c.h.b16 %v683
  %v3652 = vunpack.c.l.b16 %v684
  %v3653 = vunpack.c.h.b16 %v684
  %v3654 = vunpack.c.l.b16 %v685
  %v3655 = vunpack.c.h.b16 %v685
  %v3656 = vunpack.c.l.b16 %v686
  %v3657 = vunpack.c.h.b16 %v686
  %v3658 = vunpack.c.l.b16 %v687
  %v3659 = vunpack.c.h.b16 %v687
  %v3660 = vunpack.c.l.b16 %v688
  %v3661 = vunpack.c.h.b16 %v688
  %v3662 = vunpack.c.l.b16 %v689
  %v3663 = vunpack.c.h.b16 %v689
  %v3664 = vunpack.c.l.b16 %v690
  %v3665 = vunpack.c.h.b16 %v690
  %v3666 = vunpack.c.l.b16 %v691
  %v3667 = vunpack.c.h.b16 %v691
  %v3668 = vunpack.c.l.b16 %v692
  %v3669 = vunpack.c.h.b16 %v692
  %v3670 = vunpack.c.l.b16 %v693
  %v3671 = vunpack.c.h.b16 %v693
  %v3672 = vunpack.c.l.b16 %v694
  %v3673 = vunpack.c.h.b16 %v694
  %v3674 = vunpack.c.l.b16 %v695
  %v3675 = vunpack.c.h.b16 %v695
  %v3676 = vunpack.c.l.b16 %v696
  %v3677 = vunpack.c.h.b16 %v696
  %v3678 = vunpack.c.l.b16 %v697
  %v3679 = vunpack.c.h.b16 %v697
  %v3680 = vunpack.c.l.b16 %v698
  %v3681 = vunpack.c.h.b16 %v698
  %v3682 = vunpack.c.l.b16 %v699
  %v3683 = vunpack.c.h.b16 %v699
  %v3684 = vunpack.c.l.b16 %v700
  %v3685 = vunpack.c.h.b16 %v700
  %v3686 = vunpack.c.l.b16 %v701
  %v3687 = vunpack.c.h.b16 %v701
  %v3688 = vunpack.c.l.b16 %v702
  %v3689 = vunpack.c.h.b16 %v702
  %v3690 = vunpack.c.l.b16 %v703
  %v3691 = vunpack.c.h.b16 %v703
  %v3692 = vunpack.c.l.b16 %v704
  %v3693 = vunpack.c.h.b16 %v704
  %v3694 = vunpack.c.l.b16 %v705
  %v3695 = vunpack.c.h.b16 %v705
  %v3696 = vunpack.c.l.b16 %v706
  %v3697 = vunpack.c.h.b16 %v706
  %v3698 = vunpack.c.l.b16 %v707
  %v3699 = vunpack.c.h.b16 %v707
  %v3700 = vunpack.c.l.b16 %v708
  %v3701 = vunpack.c.h.b16 %v708
  %v3702 = vunpack.c.l.b16 %v709
  %v3703 = vunpack.c.h.b16 %v709
  %v3704 = vunpack.c.l.b16 %v710
  %v3705 = vunpack.c.h.b16 %v710
  %v3706 = vunpack.c.l.b16 %v711
  %v3707 = vunpack.c.h.b16 %v711
  %v3708 = vunpack.c.l.b16 %v712
  %v3709 = vunpack.c.h.b16 %v712
  %v3710 = vunpack.c.l.b16 %v713
  %v3711 = vunpack.c.h.b16 %v713
  %v3712 = vunpack.c.l.b16 %v714
  %v3713 = vunpack.c.h.b16 %v714
  %v3714 = vunpack.c.l.b16 %v715
  %v3715 = vunpack.c.h.b16 %v715
  %v3716 = vunpack.c.l.b16 %v716
  %v3717 = vunpack.c.h.b16 %v716
  %v3718 = vunpack.c.l.b16 %v717
  %v3719 = vunpack.c.h.b16 %v717
  %v3720 = vunpack.c.l.b16 %v718
  %v3721 = vunpack.c.h.b16 %v718
  %v3722 = vunpack.c.l.b16 %v719
  %v3723 = vunpack.c.h.b16 %v719
  %v3724 = vunpack.c.l.b16 %v720
  %v3725 = vunpack.c.h.b16 %v720
  %v3726 = vunpack.c.l.b16 %v721
  %v3727 = vunpack.c.h.b16 %v721
  %v3728 = vunpack.c.l.b16 %v722
  %v3729 = vunpack.c.h.b16 %v722
  %v3730 = vunpack.c.l.b16 %v723
  %v3731 = vunpack.c.h.b16 %v723
  %v3732 = vunpack.c.l.b16 %v724
  %v3733 = vunpack.c.h.b16 %v724
  %v3734 = vunpack.c.l.b16 %v725
  %v3735 = vunpack.c.h.b16 %v725
  %v3736 = vunpack.c.l.b16 %v726
  %v3737 = vunpack.c.h.b16 %v726
  %v3738 = vunpack.c.l.b16 %v727
  %v3739 = vunpack.c.h.b16 %v727
  %v3740 = vunpack.c.l.b16 %v728
  %v3741 = vunpack.c.h.b16 %v728
  %v3742 = vunpack.c.l.b16 %v729
  %v3743 = vunpack.c.h.b16 %v729
  %v3744 = vunpack.c.l.b16 %v730
  %v3745 = vunpack.c.h.b16 %v730
  %v3746 = vunpack.c.l.b16 %v731
  %v3747 = vunpack.c.h.b16 %v731
  %v3748 = vunpack.c.l.b16 %v732
  %v3749 = vunpack.c.h.b16 %v732
  %v3750 = vunpack.c.l.b16 %v733
  %v3751 = vunpack.c.h.b16 %v733
  %v3752 = vunpack.c.l.b16 %v734
  %v3753 = vunpack.c.h.b16 %v734
  %v3754 = vunpack.c.l.b16 %v735
  %v3755 = vunpack.c.h.b16 %v735
  %v3756 = vunpack.c.l.b16 %v736
  %v3757 = vunpack.c.h.b16 %v736
  %v3758 = vunpack.c.l.b16 %v737
  %v3759 = vunpack.c.h.b16 %v737
  %v3760 = vunpack.c.l.b16 %v738
  %v3761 = vunpack.c.h.b16 %v738
  %v3762 = vunpack.c.l.b16 %v739
  %v3763 = vunpack.c.h.b16 %v739
  %v3764 = vunpack.c.l.b16 %v740
  %v3765 = vunpack.c.h.b16 %v740
  %v3766 = vunpack.c.l.b16 %v741
  %v3767 = vunpack.c.h.b16 %v741
  %v3768 = vunpack.c.l.b16 %v742
  %v3769 = vunpack.c.h.b16 %v742
  %v3770 = vunpack.c.l.b16 %v743
  %v3771 = vunpack.c.h.b16 %v743
  %v3772 = vunpack.c.l.b16 %v744
  %v3773 = vunpack.c.h.b16 %v744
  %v3774 = vunpack.c.l.b16 %v745
  %v3775 = vunpack.c.h.b16 %v745
  %v3776 = vunpack.c.l.b16 %v746
  %v3777 = vunpack.c.h.b16 %v746
  %v3778 = vunpack.c.l.b16 %v747
  %v3779 = vunpack.c.h.b16 %v747
  %v3780 = vunpack.c.l.b16 %v748
  %v3781 = vunpack.c.h.b16 %v748
  %v3782 = vunpack.c.l.b16 %v749
  %v3783 = vunpack.c.h.b16 %v749
  %v3784 = vunpack.c.l.b16 %v750
  %v3785 = vunpack.c.h.b16 %v750
  %v3786 = vunpack.c.l.b16 %v751
  %v3787 = vunpack.c.h.b16 %v751
  %v3788 = vunpack.c.l.b16 %v752
  %v3789 = vunpack.c.h.b16 %v752
  %v3790 = vunpack.c.l.b16 %v753
  %v3791 = vunpack.c.h.b16 %v753
  %v3792 = vunpack.c.l.b16 %v754
  %v3793 = vunpack.c.h.b16 %v754
  %v3794 = vunpack.c.l.b16 %v755
  %v3795 = vunpack.c.h.b16 %v755
  %v3796 = vunpack.c.l.b16 %v756
  %v3797 = vunpack.c.h.b16 %v756
  %v3798 = vunpack.c.l.b16 %v757
  %v3799 = vunpack.c.h.b16 %v757
  %v3800 = vunpack.c.l.b16 %v758
  %v3801 = vunpack.c.h.b16 %v758
  %v3802 = vunpack.c.l.b16 %v759
  %v3803 = vunpack.c.h.b16 %v759
  %v3804 = vunpack.c.l.b16 %v760
  %v3805 = vunpack.c.h.b16 %v760
  %v3806 = vunpack.c.l.b16 %v761
  %v3807 = vunpack.c.h.b16 %v761
  %v3808 = vunpack.c.l.b16 %v762
  %v3809 = vunpack.c.h.b16 %v762
  %v3810 = vunpack.c.l.b16 %v763
  %v3811 = vunpack.c.h.b16 %v763
  %v3812 = vunpack.c.l.b16 %v764
  %v3813 = vunpack.c.h.b16 %v764
  %v3814 = vunpack.c.l.b16 %v765
  %v3815 = vunpack.c.h.b16 %v765
  %v3816 = vunpack.c.l.b16 %v766
  %v3817 = vunpack.c.h.b16 %v766
  %v3818 = vunpack.c.l.b16 %v767
  %v3819 = vunpack.c.h.b16 %v767
  %v3820 = vunpack.c.l.b16 %v768
  %v3821 = vunpack.c.h.b16 %v768
  %v3822 = vunpack.c.l.b16 %v769
  %v3823 = vunpack.c.h.b16 %v769
  %v3824 = vunpack.c.l.b16 %v770
  %v3825 = vunpack.c.h.b16 %v770
  %v3826 = vunpack.c.l.b16 %v771
  %v3827 = vunpack.c.h.b16 %v771
  %v3828 = vunpack.c.l.b16 %v772
  %v3829 = vunpack.c.h.b16 %v772
  %v3830 = vunpack.c.l.b16 %v773
  %v3831 = vunpack.c.h.b16 %v773
  %v3832 = vunpack.c.l.b16 %v774
  %v3833 = vunpack.c.h.b16 %v774
  %v3834 = vunpack.c.l.b16 %v775
  %v3835 = vunpack.c.h.b16 %v775
  %v3836 = vunpack.c.l.b16 %v776
  %v3837 = vunpack.c.h.b16 %v776
  %v3838 = vunpack.c.l.b16 %v777
  %v3839 = vunpack.c.h.b16 %v777
  %v3840 = vunpack.c.l.b16 %v778
  %v3841 = vunpack.c.h.b16 %v778
  %v3842 = vunpack.c.l.b16 %v779
  %v3843 = vunpack.c.h.b16 %v779
  %v3844 = vunpack.c.l.b16 %v780
  %v3845 = vunpack.c.h.b16 %v780
  %v3846 = vunpack.c.l.b16 %v781
  %v3847 = vunpack.c.h.b16 %v781
  %v3848 = vunpack.c.l.b16 %v782
  %v3849 = vunpack.c.h.b16 %v782
  %v3850 = vunpack.c.l.b16 %v783
  %v3851 = vunpack.c.h.b16 %v783
  %v3852 = vunpack.c.l.b16 %v784
  %v3853 = vunpack.c.h.b16 %v784
  %v3854 = vunpack.c.l.b16 %v785
  %v3855 = vunpack.c.h.b16 %v785
  %v3856 = vunpack.c.l.b16 %v786
  %v3857 = vunpack.c.h.b16 %v786
  %v3858 = vunpack.c.l.b16 %v787
  %v3859 = vunpack.c.h.b16 %v787
  %v3860 = vunpack.c.l.b16 %v788
  %v3861 = vunpack.c.h.b16 %v788
  %v3862 = vunpack.c.l.b16 %v789
  %v3863 = vunpack.c.h.b16 %v789
  %v3864 = vunpack.c.l.b16 %v790
  %v3865 = vunpack.c.h.b16 %v790
  %v3866 = vunpack.c.l.b16 %v791
  %v3867 = vunpack.c.h.b16 %v791
  %v3868 = vunpack.c.l.b16 %v792
  %v3869 = vunpack.c.h.b16 %v792
  %v3870 = vunpack.c.l.b16 %v793
  %v3871 = vunpack.c.h.b16 %v793
  %v3872 = vunpack.c.l.b16 %v794
  %v3873 = vunpack.c.h.b16 %v794
  %v3874 = vunpack.c.l.b16 %v795
  %v3875 = vunpack.c.h.b16 %v795
  %v3876 = vunpack.c.l.b16 %v796
  %v3877 = vunpack.c.h.b16 %v796
  %v3878 = vunpack.c.l.b16 %v797
  %v3879 = vunpack.c.h.b16 %v797
  %v3880 = vunpack.c.l.b16 %v798
  %v3881 = vunpack.c.h.b16 %v798
  %v3882 = vunpack.c.l.b16 %v799
  %v3883 = vunpack.c.h.b16 %v799
  %v3884 = vunpack.c.l.b16 %v800
  %v3885 = vunpack.c.h.b16 %v800
  %v3886 = vunpack.c.l.b16 %v801
  %v3887 = vunpack.c.h.b16 %v801
  %v3888 = vunpack.c.l.b16 %v802
  %v3889 = vunpack.c.h.b16 %v802
  %v3890 = vunpack.c.l.b16 %v803
  %v3891 = vunpack.c.h.b16 %v803
  %v3892 = vunpack.c.l.b16 %v804
  %v3893 = vunpack.c.h.b16 %v804
  %v3894 = vunpack.c.l.b16 %v805
  %v3895 = vunpack.c.h.b16 %v805
  %v3896 = vunpack.c.l.b16 %v806
  %v3897 = vunpack.c.h.b16 %v806
  %v3898 = vunpack.c.l.b16 %v807
  %v3899 = vunpack.c.h.b16 %v807
  %v3900 = vunpack.c.l.b16 %v808
  %v3901 = vunpack.c.h.b16 %v808
  %v3902 = vunpack.c.l.b16 %v809
  %v3903 = vunpack.c.h.b16 %v809
  %v3904 = vunpack.c.l.b16 %v810
  %v3905 = vunpack.c.h.b16 %v810
  %v3906 = vunpack.c.l.b16 %v811
  %v3907 = vunpack.c.h.b16 %v811
  %v3908 = vunpack.c.l.b16 %v812
  %v3909 = vunpack.c.h.b16 %v812
  %v3910 = vunpack.c.l.b16 %v813
  %v3911 = vunpack.c.h.b16 %v813
  %v3912 = vunpack.c.l.b16 %v814
  %v3913 = vunpack.c.h.b16 %v814
  %v3914 = vunpack.c.l.b16 %v815
  %v3915 = vunpack.c.h.b16 %v815
  %v3916 = vunpack.c.l.b16 %v816
  %v3917 = vunpack.c.h.b16 %v816
  %v3918 = vunpack.c.l.b16 %v817
  %v3919 = vunpack.c.h.b16 %v817
  %v3920 = vunpack.c.l.b16 %v818
  %v3921 = vunpack.c.h.b16 %v818
  %v3922 = vunpack.c.l.b16 %v819
  %v3923 = vunpack.c.h.b16 %v819
  %v3924 = vunpack.c.l.b16 %v820
  %v3925 = vunpack.c.h.b16 %v820
  %v3926 = vunpack.c.l.b16 %v821
  %v3927 = vunpack.c.h.b16 %v821
  %v3928 = vunpack.c.l.b16 %v822
  %v3929 = vunpack.c.h.b16 %v822
  %v3930 = vunpack.c.l.b16 %v823
  %v3931 = vunpack.c.h.b16 %v823
  %v3932 = vunpack.c.l.b16 %v824
  %v3933 = vunpack.c.h.b16 %v824
  %v3934 = vunpack.c.l.b16 %v825
  %v3935 = vunpack.c.h.b16 %v825
  %v3936 = vunpack.c.l.b16 %v826
  %v3937 = vunpack.c.h.b16 %v826
  %v3938 = vunpack.c.l.b16 %v827
  %v3939 = vunpack.c.h.b16 %v827
  %v3940 = vunpack.c.l.b16 %v828
  %v3941 = vunpack.c.h.b16 %v828
  %v3942 = vunpack.c.l.b16 %v829
  %v3943 = vunpack.c.h.b16 %v829
  %v3944 = vunpack.c.l.b16 %v830
  %v3945 = vunpack.c.h.b16 %v830
  %v3946 = vunpack.c.l.b16 %v831
  %v3947 = vunpack.c.h.b16 %v831
  %v3948 = vunpack.c.l.b16 %v832
  %v3949 = vunpack.c.h.b16 %v832
  %v3950 = vunpack.c.l.b16 %v833
  %v3951 = vunpack.c.h.b16 %v833
  %v3952 = vunpack.c.l.b16 %v834
  %v3953 = vunpack.c.h.b16 %v834
  %v3954 = vunpack.c.l.b16 %v835
  %v3955 = vunpack.c.h.b16 %v835
  %v3956 = vunpack.c.l.b16 %v836
  %v3957 = vunpack.c.h.b16 %v836
  %v3958 = vunpack.c.l.b16 %v837
  %v3959 = vunpack.c.h.b16 %v837
  %v3960 = vunpack.c.l.b16 %v838
  %v3961 = vunpack.c.h.b16 %v838
  %v3962 = vunpack.c.l.b16 %v839
  %v3963 = vunpack.c.h.b16 %v839
  %v3964 = vunpack.c.l.b16 %v840
  %v3965 = vunpack.c.h.b16 %v840
  %v3966 = vunpack.c.l.b16 %v841
  %v3967 = vunpack.c.h.b16 %v841
  %v3968 = vunpack.c.l.b16 %v842
  %v3969 = vunpack.c.h.b16 %v842
  %v3970 = vunpack.c.l.b16 %v843
  %v3971 = vunpack.c.h.b16 %v843
  %v3972 = vunpack.c.l.b16 %v844
  %v3973 = vunpack.c.h.b16 %v844
  %v3974 = vunpack.c.l.b16 %v845
  %v3975 = vunpack.c.h.b16 %v845
  %v3976 = vunpack.c.l.b16 %v846
  %v3977 = vunpack.c.h.b16 %v846
  %v3978 = vunpack.c.l.b16 %v847
  %v3979 = vunpack.c.h.b16 %v847
  %v3980 = vunpack.c.l.b16 %v848
  %v3981 = vunpack.c.h.b16 %v848
  %v3982 = vunpack.c.l.b16 %v849
  %v3983 = vunpack.c.h.b16 %v849
  %v3984 = vunpack.c.l.b16 %v850
  %v3985 = vunpack.c.h.b16 %v850
  %v3986 = vunpack.c.l.b16 %v851
  %v3987 = vunpack.c.h.b16 %v851
  %v3988 = vunpack.c.l.b16 %v852
  %v3989 = vunpack.c.h.b16 %v852
  %v3990 = vunpack.c.l.b16 %v853
  %v3991 = vunpack.c.h.b16 %v853
  %v3992 = vunpack.c.l.b16 %v854
  %v3993 = vunpack.c.h.b16 %v854
  %v3994 = vunpack.c.l.b16 %v855
  %v3995 = vunpack.c.h.b16 %v855
  %v3996 = vunpack.c.l.b16 %v856
  %v3997 = vunpack.c.h.b16 %v856
  %v3998 = vunpack.c.l.b16 %v857
  %v3999 = vunpack.c.h.b16 %v857
  %v4000 = vunpack.c.l.b16 %v858
  %v4001 = vunpack.c.h.b16 %v858
  %v4002 = vunpack.c.l.b16 %v859
  %v4003 = vunpack.c.h.b16 %v859
  %v4004 = vunpack.c.l.b16 %v860
  %v4005 = vunpack.c.h.b16 %v860
  %v4006 = vunpack.c.l.b16 %v861
  %v4007 = vunpack.c.h.b16 %v861
  %v4008 = vunpack.c.l.b16 %v862
  %v4009 = vunpack.c.h.b16 %v862
  %v4010 = vunpack.c.l.b16 %v863
  %v4011 = vunpack.c.h.b16 %v863
  %v4012 = vunpack.c.l.b16 %v864
  %v4013 = vunpack.c.h.b16 %v864
  %v4014 = vunpack.c.l.b16 %v865
  %v4015 = vunpack.c.h.b16 %v865
  %v4016 = vunpack.c.l.b16 %v866
  %v4017 = vunpack.c.h.b16 %v866
  %v4018 = vunpack.c.l.b16 %v867
  %v4019 = vunpack.c.h.b16 %v867
  %v4020 = vunpack.c.l.b16 %v868
  %v4021 = vunpack.c.h.b16 %v868
  %v4022 = vunpack.c.l.b16 %v869
  %v4023 = vunpack.c.h.b16 %v869
  %v4024 = vunpack.c.l.b16 %v870
  %v4025 = vunpack.c.h.b16 %v870
  %v4026 = vunpack.c.l.b16 %v871
  %v4027 = vunpack.c.h.b16 %v871
  %v4028 = vunpack.c.l.b16 %v872
  %v4029 = vunpack.c.h.b16 %v872
  %v4030 = vunpack.c.l.b16 %v873
  %v4031 = vunpack.c.h.b16 %v873
  %v4032 = vunpack.c.l.b16 %v874
  %v4033 = vunpack.c.h.b16 %v874
  %v4034 = vunpack.c.l.b16 %v875
  %v4035 = vunpack.c.h.b16 %v875
  %v4036 = vunpack.c.l.b16 %v876
  %v4037 = vunpack.c.h.b16 %v876
  %v4038 = vunpack.c.l.b16 %v877
  %v4039 = vunpack.c.h.b16 %v877
  %v4040 = vunpack.c.l.b16 %v878
  %v4041 = vunpack.c.h.b16 %v878
  %v4042 = vunpack.c.l.b16 %v879
  %v4043 = vunpack.c.h.b16 %v879
  %v4044 = vunpack.c.l.b16 %v880
  %v4045 = vunpack.c.h.b16 %v880
  %v4046 = vunpack.c.l.b16 %v881
  %v4047 = vunpack.c.h.b16 %v881
  %v4048 = vunpack.c.l.b16 %v882
  %v4049 = vunpack.c.h.b16 %v882
  %v4050 = vunpack.c.l.b16 %v883
  %v4051 = vunpack.c.h.b16 %v883
  %v4052 = vunpack.c.l.b16 %v884
  %v4053 = vunpack.c.h.b16 %v884
  %v4054 = vunpack.c.l.b16 %v885
  %v4055 = vunpack.c.h.b16 %v885
  %v4056 = vunpack.c.l.b16 %v886
  %v4057 = vunpack.c.h.b16 %v886
  %v4058 = vunpack.c.l.b16 %v887
  %v4059 = vunpack.c.h.b16 %v887
  %v4060 = vunpack.c.l.b16 %v888
  %v4061 = vunpack.c.h.b16 %v888
  %v4062 = vunpack.c.l.b16 %v889
  %v4063 = vunpack.c.h.b16 %v889
  %v4064 = vunpack.c.l.b16 %v890
  %v4065 = vunpack.c.h.b16 %v890
  %v4066 = vunpack.c.l.b16 %v891
  %v4067 = vunpack.c.h.b16 %v891
  %v4068 = vunpack.c.l.b16 %v892
  %v4069 = vunpack.c.h.b16 %v892
  %v4070 = vunpack.c.l.b16 %v893
  %v4071 = vunpack.c.h.b16 %v893
  %v4072 = vunpack.c.l.b16 %v894
  %v4073 = vunpack.c.h.b16 %v894
  %v4074 = vunpack.c.l.b16 %v895
  %v4075 = vunpack.c.h.b16 %v895
  %v4076 = vunpack.c.l.b16 %v896
  %v4077 = vunpack.c.h.b16 %v896
  %v4078 = vunpack.c.l.b16 %v897
  %v4079 = vunpack.c.h.b16 %v897
  %v4080 = vunpack.c.l.b16 %v898
  %v4081 = vunpack.c.h.b16 %v898
  %v4082 = vunpack.c.l.b16 %v899
  %v4083 = vunpack.c.h.b16 %v899
  %v4084 = vunpack.c.l.b16 %v900
  %v4085 = vunpack.c.h.b16 %v900
  %v4086 = vunpack.c.l.b16 %v901
  %v4087 = vunpack.c.h.b16 %v901
  %v4088 = vunpack.c.l.b16 %v902
  %v4089 = vunpack.c.h.b16 %v902
  %v4090 = vunpack.c.l.b16 %v903
  %v4091 = vunpack.c.h.b16 %v903
  %v4092 = vunpack.c.l.b16 %v904
  %v4093 = vunpack.c.h.b16 %v904
  %v4094 = vunpack.c.l.b16 %v905
  %v4095 = vunpack.c.h.b16 %v905
  %v4096 = vunpack.c.l.b16 %v906
  %v4097 = vunpack.c.h.b16 %v906
  %v4098 = vunpack.c.l.b16 %v907
  %v4099 = vunpack.c.h.b16 %v907
  %v4100 = vunpack.c.l.b16 %v908
  %v4101 = vunpack.c.h.b16 %v908
  %v4102 = vunpack.c.l.b16 %v909
  %v4103 = vunpack.c.h.b16 %v909
  %v4104 = vunpack.c.l.b16 %v910
  %v4105 = vunpack.c.h.b16 %v910
  %v4106 = vunpack.c.l.b16 %v911
  %v4107 = vunpack.c.h.b16 %v911
  %v4108 = vunpack.c.l.b16 %v912
  %v4109 = vunpack.c.h.b16 %v912
  %v4110 = vunpack.c.l.b16 %v913
  %v4111 = vunpack.c.h.b16 %v913
  %v4112 = vunpack.c.l.b16 %v914
  %v4113 = vunpack.c.h.b16 %v914
  %v4114 = vunpack.c.l.b16 %v915
  %v4115 = vunpack.c.h.b16 %v915
  %v4116 = vunpack.c.l.b16 %v916
  %v4117 = vunpack.c.h.b16 %v916
  %v4118 = vunpack.c.l.b16 %v917
  %v4119 = vunpack.c.h.b16 %v917
  %v4120 = vunpack.c.l.b16 %v918
  %v4121 = vunpack.c.h.b16 %v918
  %v4122 = vunpack.c.l.b16 %v919
  %v4123 = vunpack.c.h.b16 %v919
  %v4124 = vunpack.c.l.b16 %v920
  %v4125 = vunpack.c.h.b16 %v920
  %v4126 = vunpack.c.l.b16 %v921
  %v4127 = vunpack.c.h.b16 %v921
  %v4128 = vunpack.c.l.b16 %v922
  %v4129 = vunpack.c.h.b16 %v922
  %v4130 = vunpack.c.l.b16 %v923
  %v4131 = vunpack.c.h.b16 %v923
  %v4132 = vunpack.c.l.b16 %v924
  %v4133 = vunpack.c.h.b16 %v924
  %v4134 = vunpack.c.l.b16 %v925
  %v4135 = vunpack.c.h.b16 %v925
  %v4136 = vunpack.c.l.b16 %v926
  %v4137 = vunpack.c.h.b16 %v926
  %v4138 = vunpack.c.l.b16 %v927
  %v4139 = vunpack.c.h.b16 %v927
  %v4140 = vunpack.c.l.b16 %v928
  %v4141 = vunpack.c.h.b16 %v928
  %v4142 = vunpack.c.l.b16 %v929
  %v4143 = vunpack.c.h.b16 %v929
  %v4144 = vunpack.c.l.b16 %v930
  %v4145 = vunpack.c.h.b16 %v930
  %v4146 = vunpack.c.l.b16 %v931
  %v4147 = vunpack.c.h.b16 %v931
  %v4148 = vunpack.c.l.b16 %v932
  %v4149 = vunpack.c.h.b16 %v932
  %v4150 = vunpack.c.l.b16 %v933
  %v4151 = vunpack.c.h.b16 %v933
  %v4152 = vunpack.c.l.b16 %v934
  %v4153 = vunpack.c.h.b16 %v934
  %v4154 = vunpack.c.l.b16 %v935
  %v4155 = vunpack.c.h.b16 %v935
  %v4156 = vunpack.c.l.b16 %v936
  %v4157 = vunpack.c.h.b16 %v936
  %v4158 = vunpack.c.l.b16 %v937
  %v4159 = vunpack.c.h.b16 %v937
  %v4160 = vunpack.c.l.b16 %v938
  %v4161 = vunpack.c.h.b16 %v938
  %v4162 = vunpack.c.l.b16 %v939
  %v4163 = vunpack.c.h.b16 %v939
  %v4164 = vunpack.c.l.b16 %v940
  %v4165 = vunpack.c.h.b16 %v940
  %v4166 = vunpack.c.l.b16 %v941
  %v4167 = vunpack.c.h.b16 %v941
  %v4168 = vunpack.c.l.b16 %v942
  %v4169 = vunpack.c.h.b16 %v942
  %v4170 = vunpack.c.l.b16 %v943
  %v4171 = vunpack.c.h.b16 %v943
  %v4172 = vunpack.c.l.b16 %v944
  %v4173 = vunpack.c.h.b16 %v944
  %v4174 = vunpack.c.l.b16 %v945
  %v4175 = vunpack.c.h.b16 %v945
  %v4176 = vunpack.c.l.b16 %v946
  %v4177 = vunpack.c.h.b16 %v946
  %v4178 = vunpack.c.l.b16 %v947
  %v4179 = vunpack.c.h.b16 %v947
  %v4180 = vunpack.c.l.b16 %v948
  %v4181 = vunpack.c.h.b16 %v948
  %v4182 = vunpack.c.l.b16 %v949
  %v4183 = vunpack.c.h.b16 %v949
  %v4184 = vunpack.c.l.b16 %v950
  %v4185 = vunpack.c.h.b16 %v950
  %v4186 = vunpack.c.l.b16 %v951
  %v4187 = vunpack.c.h.b16 %v951
  %v4188 = vunpack.c.l.b16 %v952
  %v4189 = vunpack.c.h.b16 %v952
  %v4190 = vunpack.c.l.b16 %v953
  %v4191 = vunpack.c.h.b16 %v953
  %v4192 = vunpack.c.l.b16 %v954
  %v4193 = vunpack.c.h.b16 %v954
  %v4194 = vunpack.c.l.b16 %v955
  %v4195 = vunpack.c.h.b16 %v955
  %v4196 = vunpack.c.l.b16 %v956
  %v4197 = vunpack.c.h.b16 %v956
  %v4198 = vunpack.c.l.b16 %v957
  %v4199 = vunpack.c.h.b16 %v957
  %v4200 = vunpack.c.l.b16 %v958
  %v4201 = vunpack.c.h.b16 %v958
  %v4202 = vunpack.c.l.b16 %v959
  %v4203 = vunpack.c.h.b16 %v959
  %v4204 = vunpack.c.l.b16 %v960
  %v4205 = vunpack.c.h.b16 %v960
  %v4206 = vunpack.c.l.b16 %v961
  %v4207 = vunpack.c.h.b16 %v961
  %v4208 = vunpack.c.l.b16 %v962
  %v4209 = vunpack.c.h.b16 %v962
  %v4210 = vunpack.c.l.b16 %v963
  %v4211 = vunpack.c.h.b16 %v963
  %v4212 = vunpack.c.l.b16 %v964
  %v4213 = vunpack.c.h.b16 %v964
  %v4214 = vunpack.c.l.b16 %v965
  %v4215 = vunpack.c.h.b16 %v965
  %v4216 = vunpack.c.l.b16 %v966
  %v4217 = vunpack.c.h.b16 %v966
  %v4218 = vunpack.c.l.b16 %v967
  %v4219 = vunpack.c.h.b16 %v967
  %v4220 = vunpack.c.l.b16 %v968
  %v4221 = vunpack.c.h.b16 %v968
  %v4222 = vunpack.c.l.b16 %v969
  %v4223 = vunpack.c.h.b16 %v969
  %v4224 = vunpack.c.l.b16 %v970
  %v4225 = vunpack.c.h.b16 %v970
  %v4226 = vunpack.c.l.b16 %v971
  %v4227 = vunpack.c.h.b16 %v971
  %v4228 = vunpack.c.l.b16 %v972
  %v4229 = vunpack.c.h.b16 %v972
  %v4230 = vunpack.c.l.b16 %v973
  %v4231 = vunpack.c.h.b16 %v973
  %v4232 = vunpack.c.l.b16 %v974
  %v4233 = vunpack.c.h.b16 %v974
  %v4234 = vunpack.c.l.b16 %v975
  %v4235 = vunpack.c.h.b16 %v975
  %v4236 = vunpack.c.l.b16 %v976
  %v4237 = vunpack.c.h.b16 %v976
  %v4238 = vunpack.c.l.b16 %v977
  %v4239 = vunpack.c.h.b16 %v977
  %v4240 = vunpack.c.l.b16 %v978
  %v4241 = vunpack.c.h.b16 %v978
  %v4242 = vunpack.c.l.b16 %v979
  %v4243 = vunpack.c.h.b16 %v979
  %v4244 = vunpack.c.l.b16 %v980
  %v4245 = vunpack.c.h.b16 %v980
  %v4246 = vunpack.c.l.b16 %v981
  %v4247 = vunpack.c.h.b16 %v981
  %v4248 = vunpack.c.l.b16 %v982
  %v4249 = vunpack.c.h.b16 %v982
  %v4250 = vunpack.c.l.b16 %v983
  %v4251 = vunpack.c.h.b16 %v983
  %v4252 = vunpack.c.l.b16 %v984
  %v4253 = vunpack.c.h.b16 %v984
  %v4254 = vunpack.c.l.b16 %v985
  %v4255 = vunpack.c.h.b16 %v985
  %v4256 = vunpack.c.l.b16 %v986
  %v4257 = vunpack.c.h.b16 %v986
  %v4258 = vunpack.c.l.b16 %v987
  %v4259 = vunpack.c.h.b16 %v987
  %v4260 = vunpack.c.l.b16 %v988
  %v4261 = vunpack.c.h.b16 %v988
  %v4262 = vunpack.c.l.b16 %v989
  %v4263 = vunpack.c.h.b16 %v989
  %v4264 = vunpack.c.l.b16 %v990
  %v4265 = vunpack.c.h.b16 %v990
  %v4266 = vunpack.c.l.b16 %v991
  %v4267 = vunpack.c.h.b16 %v991
  %v4268 = vunpack.c.l.b16 %v992
  %v4269 = vunpack.c.h.b16 %v992
  %v4270 = vunpack.c.l.b16 %v993
  %v4271 = vunpack.c.h.b16 %v993
  %v4272 = vunpack.c.l.b16 %v994
  %v4273 = vunpack.c.h.b16 %v994
  %v4274 = vunpack.c.l.b16 %v995
  %v4275 = vunpack.c.h.b16 %v995
  %v4276 = vunpack.c.l.b16 %v996
  %v4277 = vunpack.c.h.b16 %v996
  %v4278 = vunpack.c.l.b16 %v997
  %v4279 = vunpack.c.h.b16 %v997
  %v4280 = vunpack.c.l.b16 %v998
  %v4281 = vunpack.c.h.b16 %v998
  %v4282 = vunpack.c.l.b16 %v999
  %v4283 = vunpack.c.h.b16 %v999
  %v4284 = vunpack.c.l.b16 %v1000
  %v4285 = vunpack.c.h.b16 %v1000
  %v4286 = vunpack.c.l.b16 %v1001
  %v4287 = vunpack.c.h.b16 %v1001
  %v4288 = vunpack.c.l.b16 %v1002
  %v4289 = vunpack.c.h.b16 %v1002
  %v4290 = vunpack.c.l.b16 %v1003
  %v4291 = vunpack.c.h.b16 %v1003
  %v4292 = vunpack.c.l.b16 %v1004
  %v4293 = vunpack.c.h.b16 %v1004
  %v4294 = vunpack.c.l.b16 %v1005
  %v4295 = vunpack.c.h.b16 %v1005
  %v4296 = vunpack.c.l.b16 %v1006
  %v4297 = vunpack.c.h.b16 %v1006
  %v4298 = vunpack.c.l.b16 %v1007
  %v4299 = vunpack.c.h.b16 %v1007
  %v4300 = vunpack.c.l.b16 %v1008
  %v4301 = vunpack.c.h.b16 %v1008
  %v4302 = vunpack.c.l.b16 %v1009
  %v4303 = vunpack.c.h.b16 %v1009
  %v4304 = vunpack.c.l.b16 %v1010
  %v4305 = vunpack.c.h.b16 %v1010
  %v4306 = vunpack.c.l.b16 %v1011
  %v4307 = vunpack.c.h.b16 %v1011
  %v4308 = vunpack.c.l.b16 %v1012
  %v4309 = vunpack.c.h.b16 %v1012
  %v4310 = vunpack.c.l.b16 %v1013
  %v4311 = vunpack.c.h.b16 %v1013
  %v4312 = vunpack.c.l.b16 %v1014
  %v4313 = vunpack.c.h.b16 %v1014
  %v4314 = vunpack.c.l.b16 %v1015
  %v4315 = vunpack.c.h.b16 %v1015
  %v4316 = vunpack.c.l.b16 %v1016
  %v4317 = vunpack.c.h.b16 %v1016
  %v4318 = vunpack.c.l.b16 %v1017
  %v4319 = vunpack.c.h.b16 %v1017
  %v4320 = vunpack.c.l.b16 %v1018
  %v4321 = vunpack.c.h.b16 %v1018
  %v4322 = vunpack.c.l.b16 %v1019
  %v4323 = vunpack.c.h.b16 %v1019
  %v4324 = vunpack.c.l.b16 %v1020
  %v4325 = vunpack.c.h.b16 %v1020
  %v4326 = vunpack.c.l.b16 %v1021
  %v4327 = vunpack.c.h.b16 %v1021
  %v4328 = vunpack.c.l.b16 %v1022
  %v4329 = vunpack.c.h.b16 %v1022
  %v4330 = vunpack.c.l.b16 %v1023
  %v4331 = vunpack.c.h.b16 %v1023
  %v4332 = vunpack.c.l.b16 %v1024
  %v4333 = vunpack.c.h.b16 %v1024
  %v4334 = vunpack.c.l.b16 %v1025
  %v4335 = vunpack.c.h.b16 %v1025
  %v4336 = vunpack.c.l.b16 %v1026
  %v4337 = vunpack.c.h.b16 %v1026
  %v4338 = vunpack.c.l.b16 %v1027
  %v4339 = vunpack.c.h.b16 %v1027
  %v4340 = vunpack.c.l.b16 %v1028
  %v4341 = vunpack.c.h.b16 %v1028
  %v4342 = vunpack.c.l.b16 %v1029
  %v4343 = vunpack.c.h.b16 %v1029
  %v4344 = vunpack.c.l.b16 %v1030
  %v4345 = vunpack.c.h.b16 %v1030
  %v4346 = vunpack.c.l.b16 %v1031
  %v4347 = vunpack.c.h.b16 %v1031
  %v4348 = vunpack.c.l.b16 %v1032
  %v4349 = vunpack.c.h.b16 %v1032
  %v4350 = vunpack.c.l.b16 %v1033
  %v4351 = vunpack.c.h.b16 %v1033
  %v4352 = vunpack.c.l.b16 %v1034
  %v4353 = vunpack.c.h.b16 %v1034
  %v4354 = vunpack.c.l.b16 %v1035
  %v4355 = vunpack.c.h.b16 %v1035
  %v4356 = vunpack.c.l.b16 %v1036
  %v4357 = vunpack.c.h.b16 %v1036
  %v4358 = vunpack.c.l.b16 %v1037
  %v4359 = vunpack.c.h.b16 %v1037
  %v4360 = vunpack.c.l.b16 %v1038
  %v4361 = vunpack.c.h.b16 %v1038
  %v4362 = vunpack.c.l.b16 %v1039
  %v4363 = vunpack.c.h.b16 %v1039
  %v4364 = vunpack.c.l.b16 %v1040
  %v4365 = vunpack.c.h.b16 %v1040
  %v4366 = vunpack.c.l.b16 %v1041
  %v4367 = vunpack.c.h.b16 %v1041
  %v4368 = vunpack.c.l.b16 %v1042
  %v4369 = vunpack.c.h.b16 %v1042
  %v4370 = vunpack.c.l.b16 %v1043
  %v4371 = vunpack.c.h.b16 %v1043
  %v4372 = vunpack.c.l.b16 %v1044
  %v4373 = vunpack.c.h.b16 %v1044
  %v4374 = vunpack.c.l.b16 %v1045
  %v4375 = vunpack.c.h.b16 %v1045
  %v4376 = vunpack.c.l.b16 %v1046
  %v4377 = vunpack.c.h.b16 %v1046
  %v4378 = vunpack.c.l.b16 %v1047
  %v4379 = vunpack.c.h.b16 %v1047
  %v4380 = vunpack.c.l.b16 %v1048
  %v4381 = vunpack.c.h.b16 %v1048
  %v4382 = vunpack.c.l.b16 %v1049
  %v4383 = vunpack.c.h.b16 %v1049
  %v4384 = vunpack.c.l.b16 %v1050
  %v4385 = vunpack.c.h.b16 %v1050
  %v4386 = vunpack.c.l.b16 %v1051
  %v4387 = vunpack.c.h.b16 %v1051
  %v4388 = vunpack.c.l.b16 %v1052
  %v4389 = vunpack.c.h.b16 %v1052
  %v4390 = vunpack.c.l.b16 %v1053
  %v4391 = vunpack.c.h.b16 %v1053
  %v4392 = vunpack.c.l.b16 %v1054
  %v4393 = vunpack.c.h.b16 %v1054
  %v4394 = vunpack.c.l.b16 %v1055
  %v4395 = vunpack.c.h.b16 %v1055
  %v4396 = vunpack.c.l.b16 %v1056
  %v4397 = vunpack.c.h.b16 %v1056
  %v4398 = vunpack.c.l.b16 %v1057
  %v4399 = vunpack.c.h.b16 %v1057
  %v4400 = vunpack.c.l.b16 %v1058
  %v4401 = vunpack.c.h.b16 %v1058
  %v4402 = vunpack.c.l.b16 %v1059
  %v4403 = vunpack.c.h.b16 %v1059
  %v4404 = vunpack.c.l.b16 %v1060
  %v4405 = vunpack.c.h.b16 %v1060
  %v4406 = vunpack.c.l.b16 %v1061
  %v4407 = vunpack.c.h.b16 %v1061
  %v4408 = vunpack.c.l.b16 %v1062
  %v4409 = vunpack.c.h.b16 %v1062
  %v4410 = vunpack.c.l.b16 %v1063
  %v4411 = vunpack.c.h.b16 %v1063
  %v4412 = vunpack.c.l.b16 %v1064
  %v4413 = vunpack.c.h.b16 %v1064
  %v4414 = vunpack.c.l.b16 %v1065
  %v4415 = vunpack.c.h.b16 %v1065
  %v4416 = vunpack.c.l.b16 %v1066
  %v4417 = vunpack.c.h.b16 %v1066
  %v4418 = vunpack.c.l.b16 %v1067
  %v4419 = vunpack.c.h.b16 %v1067
  %v4420 = vunpack.c.l.b16 %v1068
  %v4421 = vunpack.c.h.b16 %v1068
  %v4422 = vunpack.c.l.b16 %v1069
  %v4423 = vunpack.c.h.b16 %v1069
  %v4424 = vunpack.c.l.b16 %v1070
  %v4425 = vunpack.c.h.b16 %v1070
  %v4426 = vunpack.c.l.b16 %v1071
  %v4427 = vunpack.c.h.b16 %v1071
  %v4428 = vunpack.c.l.b16 %v1072
  %v4429 = vunpack.c.h.b16 %v1072
  %v4430 = vunpack.c.l.b16 %v1073
  %v4431 = vunpack.c.h.b16 %v1073
  %v4432 = vunpack.c.l.b16 %v1074
  %v4433 = vunpack.c.h.b16 %v1074
  %v4434 = vunpack.c.l.b16 %v1075
  %v4435 = vunpack.c.h.b16 %v1075
  %v4436 = vunpack.c.l.b16 %v1076
  %v4437 = vunpack.c.h.b16 %v1076
  %v4438 = vunpack.c.l.b16 %v1077
  %v4439 = vunpack.c.h.b16 %v1077
  %v4440 = vunpack.c.l.b16 %v1078
  %v4441 = vunpack.c.h.b16 %v1078
  %v4442 = vunpack.c.l.b16 %v1079
  %v4443 = vunpack.c.h.b16 %v1079
  %v4444 = vunpack.c.l.b16 %v1080
  %v4445 = vunpack.c.h.b16 %v1080
  %v4446 = vunpack.c.l.b16 %v1081
  %v4447 = vunpack.c.h.b16 %v1081
  %v4448 = vunpack.c.l.b16 %v1082
  %v4449 = vunpack.c.h.b16 %v1082
  %v4450 = vunpack.c.l.b16 %v1083
  %v4451 = vunpack.c.h.b16 %v1083
  %v4452 = vunpack.c.l.b16 %v1084
  %v4453 = vunpack.c.h.b16 %v1084
  %v4454 = vunpack.c.l.b16 %v1085
  %v4455 = vunpack.c.h.b16 %v1085
  %v4456 = vunpack.c.l.b16 %v1086
  %v4457 = vunpack.c.h.b16 %v1086
  %v4458 = vunpack.c.l.b16 %v1087
  %v4459 = vunpack.c.h.b16 %v1087
  %v4460 = vunpack.c.l.b16 %v1088
  %v4461 = vunpack.c.h.b16 %v1088
  %v4462 = vunpack.c.l.b16 %v1089
  %v4463 = vunpack.c.h.b16 %v1089
  %v4464 = vunpack.c.l.b16 %v1090
  %v4465 = vunpack.c.h.b16 %v1090
  %v4466 = vunpack.c.l.b16 %v1091
  %v4467 = vunpack.c.h.b16 %v1091
  %v4468 = vunpack.c.l.b16 %v1092
  %v4469 = vunpack.c.h.b16 %v1092
  %v4470 = vunpack.c.l.b16 %v1093
  %v4471 = vunpack.c.h.b16 %v1093
  %v4472 = vunpack.c.l.b16 %v1094
  %v4473 = vunpack.c.h.b16 %v1094
  %v4474 = vunpack.c.l.b16 %v1095
  %v4475 = vunpack.c.h.b16 %v1095
  %v4476 = vunpack.c.l.b16 %v1096
  %v4477 = vunpack.c.h.b16 %v1096
  %v4478 = vunpack.c.l.b16 %v1097
  %v4479 = vunpack.c.h.b16 %v1097
  %v4480 = vunpack.c.l.b16 %v1098
  %v4481 = vunpack.c.h.b16 %v1098
  %v4482 = vunpack.c.l.b16 %v1099
  %v4483 = vunpack.c.h.b16 %v1099
  %v4484 = vunpack.c.l.b16 %v1100
  %v4485 = vunpack.c.h.b16 %v1100
  %v4486 = vunpack.c.l.b16 %v1101
  %v4487 = vunpack.c.h.b16 %v1101
  %v4488 = vunpack.c.l.b16 %v1102
  %v4489 = vunpack.c.h.b16 %v1102
  %v4490 = vunpack.c.l.b16 %v1103
  %v4491 = vunpack.c.h.b16 %v1103
  %v4492 = vunpack.c.l.b16 %v1104
  %v4493 = vunpack.c.h.b16 %v1104
  %v4494 = vunpack.c.l.b16 %v1105
  %v4495 = vunpack.c.h.b16 %v1105
  %v4496 = vunpack.c.l.b16 %v1106
  %v4497 = vunpack.c.h.b16 %v1106
  %v4498 = vunpack.c.l.b16 %v1107
  %v4499 = vunpack.c.h.b16 %v1107
  %v4500 = vpack.c.b16 %v2456, %v2452
  %v4501 = vpack.c.b16 %v2457, %v2453
  %v4502 = vpack.c.b16 %v2458, %v2454
  %v4503 = vpack.c.b16 %v2459, %v2455
  %v4504 = vpack.c.b16 %v2464, %v2460
  %v4505 = vpack.c.b16 %v2465, %v2461
  %v4506 = vpack.c.b16 %v2466, %v2462
  %v4507 = vpack.c.b16 %v2467, %v2463
  %v4508 = vpack.c.b16 %v2472, %v2468
  %v4509 = vpack.c.b16 %v2473, %v2469
  %v4510 = vpack.c.b16 %v2474, %v2470
  %v4511 = vpack.c.b16 %v2475, %v2471
  %v4512 = vpack.c.b16 %v2480, %v2476
  %v4513 = vpack.c.b16 %v2481, %v2477
  %v4514 = vpack.c.b16 %v2482, %v2478
  %v4515 = vpack.c.b16 %v2483, %v2479
  %v4516 = vpack.c.b16 %v2488, %v2484
  %v4517 = vpack.c.b16 %v2489, %v2485
  %v4518 = vpack.c.b16 %v2490, %v2486
  %v4519 = vpack.c.b16 %v2491, %v2487
  %v4520 = vpack.c.b16 %v2496, %v2492
  %v4521 = vpack.c.b16 %v2497, %v2493
  %v4522 = vpack.c.b16 %v2498, %v2494
  %v4523 = vpack.c.b16 %v2499, %v2495
  %v4524 = vpack.c.b16 %v2504, %v2500
  %v4525 = vpack.c.b16 %v2505, %v2501
  %v4526 = vpack.c.b16 %v2506, %v2502
  %v4527 = vpack.c.b16 %v2507, %v2503
  %v4528 = vpack.c.b16 %v2512, %v2508
  %v4529 = vpack.c.b16 %v2513, %v2509
  %v4530 = vpack.c.b16 %v2514, %v2510
  %v4531 = vpack.c.b16 %v2515, %v2511
  %v4532 = vpack.c.b16 %v2520, %v2516
  %v4533 = vpack.c.b16 %v2521, %v2517
  %v4534 = vpack.c.b16 %v2522, %v2518
  %v4535 = vpack.c.b16 %v2523, %v2519
  %v4536 = vpack.c.b16 %v2528, %v2524
  %v4537 = vpack.c.b16 %v2529, %v2525
  %v4538 = vpack.c.b16 %v2530, %v2526
  %v4539 = vpack.c.b16 %v2531, %v2527
  %v4540 = vpack.c.b16 %v2536, %v2532
  %v4541 = vpack.c.b16 %v2537, %v2533
  %v4542 = vpack.c.b16 %v2538, %v2534
  %v4543 = vpack.c.b16 %v2539, %v2535
  %v4544 = vpack.c.b16 %v2544, %v2540
  %v4545 = vpack.c.b16 %v2545, %v2541
  %v4546 = vpack.c.b16 %v2546, %v2542
  %v4547 = vpack.c.b16 %v2547, %v2543
  %v4548 = vpack.c.b16 %v2552, %v2548
  %v4549 = vpack.c.b16 %v2553, %v2549
  %v4550 = vpack.c.b16 %v2554, %v2550
  %v4551 = vpack.c.b16 %v2555, %v2551
  %v4552 = vpack.c.b16 %v2560, %v2556
  %v4553 = vpack.c.b16 %v2561, %v2557
  %v4554 = vpack.c.b16 %v2562, %v2558
  %v4555 = vpack.c.b16 %v2563, %v2559
  %v4556 = vpack.c.b16 %v2568, %v2564
  %v4557 = vpack.c.b16 %v2569, %v2565
  %v4558 = vpack.c.b16 %v2570, %v2566
  %v4559 = vpack.c.b16 %v2571, %v2567
  %v4560 = vpack.c.b16 %v2576, %v2572
  %v4561 = vpack.c.b16 %v2577, %v2573
  %v4562 = vpack.c.b16 %v2578, %v2574
  %v4563 = vpack.c.b16 %v2579, %v2575
  %v4564 = vpack.c.b16 %v2584, %v2580
  %v4565 = vpack.c.b16 %v2585, %v2581
  %v4566 = vpack.c.b16 %v2586, %v2582
  %v4567 = vpack.c.b16 %v2587, %v2583
  %v4568 = vpack.c.b16 %v2592, %v2588
  %v4569 = vpack.c.b16 %v2593, %v2589
  %v4570 = vpack.c.b16 %v2594, %v2590
  %v4571 = vpack.c.b16 %v2595, %v2591
  %v4572 = vpack.c.b16 %v2600, %v2596
  %v4573 = vpack.c.b16 %v2601, %v2597
  %v4574 = vpack.c.b16 %v2602, %v2598
  %v4575 = vpack.c.b16 %v2603, %v2599
  %v4576 = vpack.c.b16 %v2608, %v2604
  %v4577 = vpack.c.b16 %v2609, %v2605
  %v4578 = vpack.c.b16 %v2610, %v2606
  %v4579 = vpack.c.b16 %v2611, %v2607
  %v4580 = vpack.c.b16 %v2616, %v2612
  %v4581 = vpack.c.b16 %v2617, %v2613
  %v4582 = vpack.c.b16 %v2618, %v2614
  %v4583 = vpack.c.b16 %v2619, %v2615
  %v4584 = vpack.c.b16 %v2624, %v2620
  %v4585 = vpack.c.b16 %v2625, %v2621
  %v4586 = vpack.c.b16 %v2626, %v2622
  %v4587 = vpack.c.b16 %v2627, %v2623
  %v4588 = vpack.c.b16 %v2632, %v2628
  %v4589 = vpack.c.b16 %v2633, %v2629
  %v4590 = vpack.c.b16 %v2634, %v2630
  %v4591 = vpack.c.b16 %v2635, %v2631
  %v4592 = vpack.c.b16 %v2640, %v2636
  %v4593 = vpack.c.b16 %v2641, %v2637
  %v4594 = vpack.c.b16 %v2642, %v2638
  %v4595 = vpack.c.b16 %v2643, %v2639
  %v4596 = vpack.c.b16 %v2648, %v2644
  %v4597 = vpack.c.b16 %v2649, %v2645
  %v4598 = vpack.c.b16 %v2650, %v2646
  %v4599 = vpack.c.b16 %v2651, %v2647
  %v4600 = vpack.c.b16 %v2656, %v2652
  %v4601 = vpack.c.b16 %v2657, %v2653
  %v4602 = vpack.c.b16 %v2658, %v2654
  %v4603 = vpack.c.b16 %v2659, %v2655
  %v4604 = vpack.c.b16 %v2664, %v2660
  %v4605 = vpack.c.b16 %v2665, %v2661
  %v4606 = vpack.c.b16 %v2666, %v2662
  %v4607 = vpack.c.b16 %v2667, %v2663
  %v4608 = vpack.c.b16 %v2672, %v2668
  %v4609 = vpack.c.b16 %v2673, %v2669
  %v4610 = vpack.c.b16 %v2674, %v2670
  %v4611 = vpack.c.b16 %v2675, %v2671
  %v4612 = vpack.c.b16 %v2680, %v2676
  %v4613 = vpack.c.b16 %v2681, %v2677
  %v4614 = vpack.c.b16 %v2682, %v2678
  %v4615 = vpack.c.b16 %v2683, %v2679
  %v4616 = vpack.c.b16 %v2688, %v2684
  %v4617 = vpack.c.b16 %v2689, %v2685
  %v4618 = vpack.c.b16 %v2690, %v2686
  %v4619 = vpack.c.b16 %v2691, %v2687
  %v4620 = vpack.c.b16 %v2696, %v2692
  %v4621 = vpack.c.b16 %v2697, %v2693
  %v4622 = vpack.c.b16 %v2698, %v2694
  %v4623 = vpack.c.b16 %v2699, %v2695
  %v4624 = vpack.c.b16 %v2704, %v2700
  %v4625 = vpack.c.b16 %v2705, %v2701
  %v4626 = vpack.c.b16 %v2706, %v2702
  %v4627 = vpack.c.b16 %v2707, %v2703
  %v4628 = vpack.c.b16 %v2712, %v2708
  %v4629 = vpack.c.b16 %v2713, %v2709
  %v4630 = vpack.c.b16 %v2714, %v2710
  %v4631 = vpack.c.b16 %v2715, %v2711
  %v4632 = vpack.c.b16 %v2720, %v2716
  %v4633 = vpack.c.b16 %v2721, %v2717
  %v4634 = vpack.c.b16 %v2722, %v2718
  %v4635 = vpack.c.b16 %v2723, %v2719
  %v4636 = vpack.c.b16 %v2728, %v2724
  %v4637 = vpack.c.b16 %v2729, %v2725
  %v4638 = vpack.c.b16 %v2730, %v2726
  %v4639 = vpack.c.b16 %v2731, %v2727
  %v4640 = vpack.c.b16 %v2736, %v2732
  %v4641 = vpack.c.b16 %v2737, %v2733
  %v4642 = vpack.c.b16 %v2738, %v2734
  %v4643 = vpack.c.b16 %v2739, %v2735
  %v4644 = vpack.c.b16 %v2744, %v2740
  %v4645 = vpack.c.b16 %v2745, %v2741
  %v4646 = vpack.c.b16 %v2746, %v2742
  %v4647 = vpack.c.b16 %v2747, %v2743
  %v4648 = vpack.c.b16 %v2752, %v2748
  %v4649 = vpack.c.b16 %v2753, %v2749
  %v4650 = vpack.c.b16 %v2754, %v2750
  %v4651 = vpack.c.b16 %v2755, %v2751
  %v4652 = vpack.c.b16 %v2760, %v2756
  %v4653 = vpack.c.b16 %v2761, %v2757
  %v4654 = vpack.c.b16 %v2762, %v2758
  %v4655 = vpack.c.b16 %v2763, %v2759
  %v4656 = vpack.c.b16 %v2768, %v2764
  %v4657 = vpack.c.b16 %v2769, %v2765
  %v4658 = vpack.c.b16 %v2770, %v2766
  %v4659 = vpack.c.b16 %v2771, %v2767
  %v4660 = vpack.c.b16 %v2776, %v2772
  %v4661 = vpack.c.b16 %v2777, %v2773
  %v4662 = vpack.c.b16 %v2778, %v2774
  %v4663 = vpack.c.b16 %v2779, %v2775
  %v4664 = vpack.c.b16 %v2784, %v2780
  %v4665 = vpack.c.b16 %v2785, %v2781
  %v4666 = vpack.c.b16 %v2786, %v2782
  %v4667 = vpack.c.b16 %v2787, %v2783
  %v4668 = vpack.c.b16 %v2792, %v2788
  %v4669 = vpack.c.b16 %v2793, %v2789
  %v4670 = vpack.c.b16 %v2794, %v2790
  %v4671 = vpack.c.b16 %v2795, %v2791
  %v4672 = vpack.c.b16 %v2800, %v2796
  %v4673 = vpack.c.b16 %v2801, %v2797
  %v4674 = vpack.c.b16 %v2802, %v2798
  %v4675 = vpack.c.b16 %v2803, %v2799
  %v4676 = vpack.c.b16 %v2808, %v2804
  %v4677 = vpack.c.b16 %v2809, %v2805
  %v4678 = vpack.c.b16 %v2810, %v2806
  %v4679 = vpack.c.b16 %v2811, %v2807
  %v4680 = vpack.c.b16 %v2816, %v2812
  %v4681 = vpack.c.b16 %v2817, %v2813
  %v4682 = vpack.c.b16 %v2818, %v2814
  %v4683 = vpack.c.b16 %v2819, %v2815
  %v4684 = vpack.c.b16 %v2824, %v2820
  %v4685 = vpack.c.b16 %v2825, %v2821
  %v4686 = vpack.c.b16 %v2826, %v2822
  %v4687 = vpack.c.b16 %v2827, %v2823
  %v4688 = vpack.c.b16 %v2832, %v2828
  %v4689 = vpack.c.b16 %v2833, %v2829
  %v4690 = vpack.c.b16 %v2834, %v2830
  %v4691 = vpack.c.b16 %v2835, %v2831
  %v4692 = vpack.c.b16 %v2840, %v2836
  %v4693 = vpack.c.b16 %v2841, %v2837
  %v4694 = vpack.c.b16 %v2842, %v2838
  %v4695 = vpack.c.b16 %v2843, %v2839
  %v4696 = vpack.c.b16 %v2848, %v2844
  %v4697 = vpack.c.b16 %v2849, %v2845
  %v4698 = vpack.c.b16 %v2850, %v2846
  %v4699 = vpack.c.b16 %v2851, %v2847
  %v4700 = vpack.c.b16 %v2856, %v2852
  %v4701 = vpack.c.b16 %v2857, %v2853
  %v4702 = vpack.c.b16 %v2858, %v2854
  %v4703 = vpack.c.b16 %v2859, %v2855
  %v4704 = vpack.c.b16 %v2864, %v2860
  %v4705 = vpack.c.b16 %v2865, %v2861
  %v4706 = vpack.c.b16 %v2866, %v2862
  %v4707 = vpack.c.b16 %v2867, %v2863
  %v4708 = vpack.c.b16 %v2872, %v2868
  %v4709 = vpack.c.b16 %v2873, %v2869
  %v4710 = vpack.c.b16 %v2874, %v2870
  %v4711 = vpack.c.b16 %v2875, %v2871
  %v4712 = vpack.c.b16 %v2880, %v2876
  %v4713 = vpack.c.b16 %v2881, %v2877
  %v4714 = vpack.c.b16 %v2882, %v2878
  %v4715 = vpack.c.b16 %v2883, %v2879
  %v4716 = vpack.c.b16 %v2888, %v2884
  %v4717 = vpack.c.b16 %v2889, %v2885
  %v4718 = vpack.c.b16 %v2890, %v2886
  %v4719 = vpack.c.b16 %v2891, %v2887
  %v4720 = vpack.c.b16 %v2896, %v2892
  %v4721 = vpack.c.b16 %v2897, %v2893
  %v4722 = vpack.c.b16 %v2898, %v2894
  %v4723 = vpack.c.b16 %v2899, %v2895
  %v4724 = vpack.c.b16 %v2904, %v2900
  %v4725 = vpack.c.b16 %v2905, %v2901
  %v4726 = vpack.c.b16 %v2906, %v2902
  %v4727 = vpack.c.b16 %v2907, %v2903
  %v4728 = vpack.c.b16 %v2912, %v2908
  %v4729 = vpack.c.b16 %v2913, %v2909
  %v4730 = vpack.c.b16 %v2914, %v2910
  %v4731 = vpack.c.b16 %v2915, %v2911
  %v4732 = vpack.c.b16 %v2920, %v2916
  %v4733 = vpack.c.b16 %v2921, %v2917
  %v4734 = vpack.c.b16 %v2922, %v2918
  %v4735 = vpack.c.b16 %v2923, %v2919
  %v4736 = vpack.c.b16 %v2928, %v2924
  %v4737 = vpack.c.b16 %v2929, %v2925
  %v4738 = vpack.c.b16 %v2930, %v2926
  %v4739 = vpack.c.b16 %v2931, %v2927
  %v4740 = vpack.c.b16 %v2936, %v2932
  %v4741 = vpack.c.b16 %v2937, %v2933
  %v4742 = vpack.c.b16 %v2938, %v2934
  %v4743 = vpack.c.b16 %v2939, %v2935
  %v4744 = vpack.c.b16 %v2944, %v2940
  %v4745 = vpack.c.b16 %v2945, %v2941
  %v4746 = vpack.c.b16 %v2946, %v2942
  %v4747 = vpack.c.b16 %v2947, %v2943
  %v4748 = vpack.c.b16 %v2952, %v2948
  %v4749 = vpack.c.b16 %v2953, %v2949
  %v4750 = vpack.c.b16 %v2954, %v2950
  %v4751 = vpack.c.b16 %v2955, %v2951
  %v4752 = vpack.c.b16 %v2960, %v2956
  %v4753 = vpack.c.b16 %v2961, %v2957
  %v4754 = vpack.c.b16 %v2962, %v2958
  %v4755 = vpack.c.b16 %v2963, %v2959
  %v4756 = vpack.c.b16 %v2968, %v2964
  %v4757 = vpack.c.b16 %v2969, %v2965
  %v4758 = vpack.c.b16 %v2970, %v2966
  %v4759 = vpack.c.b16 %v2971, %v2967
  %v4760 = vpack.c.b16 %v2976, %v2972
  %v4761 = vpack.c.b16 %v2977, %v2973
  %v4762 = vpack.c.b16 %v2978, %v2974
  %v4763 = vpack.c.b16 %v2979, %v2975
  %v4764 = vpack.c.b16 %v2984, %v2980
  %v4765 = vpack.c.b16 %v2985, %v2981
  %v4766 = vpack.c.b16 %v2986, %v2982
  %v4767 = vpack.c.b16 %v2987, %v2983
  %v4768 = vpack.c.b16 %v2992, %v2988
  %v4769 = vpack.c.b16 %v2993, %v2989
  %v4770 = vpack.c.b16 %v2994, %v2990
  %v4771 = vpack.c.b16 %v2995, %v2991
  %v4772 = vpack.c.b16 %v3000, %v2996
  %v4773 = vpack.c.b16 %v3001, %v2997
  %v4774 = vpack.c.b16 %v3002, %v2998
  %v4775 = vpack.c.b16 %v3003, %v2999
  %v4776 = vpack.c.b16 %v3008, %v3004
  %v4777 = vpack.c.b16 %v3009, %v3005
  %v4778 = vpack.c.b16 %v3010, %v3006
  %v4779 = vpack.c.b16 %v3011, %v3007
  %v4780 = vpack.c.b16 %v3016, %v3012
  %v4781 = vpack.c.b16 %v3017, %v3013
  %v4782 = vpack.c.b16 %v3018, %v3014
  %v4783 = vpack.c.b16 %v3019, %v3015
  %v4784 = vpack.c.b16 %v3024, %v3020
  %v4785 = vpack.c.b16 %v3025, %v3021
  %v4786 = vpack.c.b16 %v3026, %v3022
  %v4787 = vpack.c.b16 %v3027, %v3023
  %v4788 = vpack.c.b16 %v3032, %v3028
  %v4789 = vpack.c.b16 %v3033, %v3029
  %v4790 = vpack.c.b16 %v3034, %v3030
  %v4791 = vpack.c.b16 %v3035, %v3031
  %v4792 = vpack.c.b16 %v3040, %v3036
  %v4793 = vpack.c.b16 %v3041, %v3037
  %v4794 = vpack.c.b16 %v3042, %v3038
  %v4795 = vpack.c.b16 %v3043, %v3039
  %v4796 = vpack.c.b16 %v3048, %v3044
  %v4797 = vpack.c.b16 %v3049, %v3045
  %v4798 = vpack.c.b16 %v3050, %v3046
  %v4799 = vpack.c.b16 %v3051, %v3047
  %v4800 = vpack.c.b16 %v3056, %v3052
  %v4801 = vpack.c.b16 %v3057, %v3053
  %v4802 = vpack.c.b16 %v3058, %v3054
  %v4803 = vpack.c.b16 %v3059, %v3055
  %v4804 = vpack.c.b16 %v3064, %v3060
  %v4805 = vpack.c.b16 %v3065, %v3061
  %v4806 = vpack.c.b16 %v3066, %v3062
  %v4807 = vpack.c.b16 %v3067, %v3063
  %v4808 = vpack.c.b16 %v3072, %v3068
  %v4809 = vpack.c.b16 %v3073, %v3069
  %v4810 = vpack.c.b16 %v3074, %v3070
  %v4811 = vpack.c.b16 %v3075, %v3071
  %v4812 = vpack.c.b16 %v3080, %v3076
  %v4813 = vpack.c.b16 %v3081, %v3077
  %v4814 = vpack.c.b16 %v3082, %v3078
  %v4815 = vpack.c.b16 %v3083, %v3079
  %v4816 = vpack.c.b16 %v3088, %v3084
  %v4817 = vpack.c.b16 %v3089, %v3085
  %v4818 = vpack.c.b16 %v3090, %v3086
  %v4819 = vpack.c.b16 %v3091, %v3087
  %v4820 = vpack.c.b16 %v3096, %v3092
  %v4821 = vpack.c.b16 %v3097, %v3093
  %v4822 = vpack.c.b16 %v3098, %v3094
  %v4823 = vpack.c.b16 %v3099, %v3095
  %v4824 = vpack.c.b16 %v3104, %v3100
  %v4825 = vpack.c.b16 %v3105, %v3101
  %v4826 = vpack.c.b16 %v3106, %v3102
  %v4827 = vpack.c.b16 %v3107, %v3103
  %v4828 = vpack.c.b16 %v3112, %v3108
  %v4829 = vpack.c.b16 %v3113, %v3109
  %v4830 = vpack.c.b16 %v3114, %v3110
  %v4831 = vpack.c.b16 %v3115, %v3111
  %v4832 = vpack.c.b16 %v3120, %v3116
  %v4833 = vpack.c.b16 %v3121, %v3117
  %v4834 = vpack.c.b16 %v3122, %v3118
  %v4835 = vpack.c.b16 %v3123, %v3119
  %v4836 = vpack.c.b16 %v3128, %v3124
  %v4837 = vpack.c.b16 %v3129, %v3125
  %v4838 = vpack.c.b16 %v3130, %v3126
  %v4839 = vpack.c.b16 %v3131, %v3127
  %v4840 = vpack.c.b16 %v3136, %v3132
  %v4841 = vpack.c.b16 %v3137, %v3133
  %v4842 = vpack.c.b16 %v3138, %v3134
  %v4843 = vpack.c.b16 %v3139, %v3135
  %v4844 = vpack.c.b16 %v3144, %v3140
  %v4845 = vpack.c.b16 %v3145, %v3141
  %v4846 = vpack.c.b16 %v3146, %v3142
  %v4847 = vpack.c.b16 %v3147, %v3143
  %v4848 = vpack.c.b16 %v3152, %v3148
  %v4849 = vpack.c.b16 %v3153, %v3149
  %v4850 = vpack.c.b16 %v3154, %v3150
  %v4851 = vpack.c.b16 %v3155, %v3151
  %v4852 = vpack.c.b16 %v3160, %v3156
  %v4853 = vpack.c.b16 %v3161, %v3157
  %v4854 = vpack.c.b16 %v3162, %v3158
  %v4855 = vpack.c.b16 %v3163, %v3159
  %v4856 = vpack.c.b16 %v3168, %v3164
  %v4857 = vpack.c.b16 %v3169, %v3165
  %v4858 = vpack.c.b16 %v3170, %v3166
  %v4859 = vpack.c.b16 %v3171, %v3167
  %v4860 = vpack.c.b16 %v3176, %v3172
  %v4861 = vpack.c.b16 %v3177, %v3173
  %v4862 = vpack.c.b16 %v3178, %v3174
  %v4863 = vpack.c.b16 %v3179, %v3175
  %v4864 = vpack.c.b16 %v3184, %v3180
  %v4865 = vpack.c.b16 %v3185, %v3181
  %v4866 = vpack.c.b16 %v3186, %v3182
  %v4867 = vpack.c.b16 %v3187, %v3183
  %v4868 = vpack.c.b16 %v3192, %v3188
  %v4869 = vpack.c.b16 %v3193, %v3189
  %v4870 = vpack.c.b16 %v3194, %v3190
  %v4871 = vpack.c.b16 %v3195, %v3191
  %v4872 = vpack.c.b16 %v3200, %v3196
  %v4873 = vpack.c.b16 %v3201, %v3197
  %v4874 = vpack.c.b16 %v3202, %v3198
  %v4875 = vpack.c.b16 %v3203, %v3199
  %v4876 = vpack.c.b16 %v3208, %v3204
  %v4877 = vpack.c.b16 %v3209, %v3205
  %v4878 = vpack.c.b16 %v3210, %v3206
  %v4879 = vpack.c.b16 %v3211, %v3207
  %v4880 = vpack.c.b16 %v3216, %v3212
  %v4881 = vpack.c.b16 %v3217, %v3213
  %v4882 = vpack.c.b16 %v3218, %v3214
  %v4883 = vpack.c.b16 %v3219, %v3215
  %v4884 = vpack.c.b16 %v3224, %v3220
  %v4885 = vpack.c.b16 %v3225, %v3221
  %v4886 = vpack.c.b16 %v3226, %v3222
  %v4887 = vpack.c.b16 %v3227, %v3223
  %v4888 = vpack.c.b16 %v3232, %v3228
  %v4889 = vpack.c.b16 %v3233, %v3229
  %v4890 = vpack.c.b16 %v3234, %v3230
  %v4891 = vpack.c.b16 %v3235, %v3231
  %v4892 = vpack.c.b16 %v3240, %v3236
  %v4893 = vpack.c.b16 %v3241, %v3237
  %v4894 = vpack.c.b16 %v3242, %v3238
  %v4895 = vpack.c.b16 %v3243, %v3239
  %v4896 = vpack.c.b16 %v3248, %v3244
  %v4897 = vpack.c.b16 %v3249, %v3245
  %v4898 = vpack.c.b16 %v3250, %v3246
  %v4899 = vpack.c.b16 %v3251, %v3247
  %v4900 = vpack.c.b16 %v3256, %v3252
  %v4901 = vpack.c.b16 %v3257, %v3253
  %v4902 = vpack.c.b16 %v3258, %v3254
  %v4903 = vpack.c.b16 %v3259, %v3255
  %v4904 = vpack.c.b16 %v3264, %v3260
  %v4905 = vpack.c.b16 %v3265, %v3261
  %v4906 = vpack.c.b16 %v3266, %v3262
  %v4907 = vpack.c.b16 %v3267, %v3263
  %v4908 = vpack.c.b16 %v3272, %v3268
  %v4909 = vpack.c.b16 %v3273, %v3269
  %v4910 = vpack.c.b16 %v3274, %v3270
  %v4911 = vpack.c.b16 %v3275, %v3271
  %v4912 = vpack.c.b16 %v3280, %v3276
  %v4913 = vpack.c.b16 %v3281, %v3277
  %v4914 = vpack.c.b16 %v3282, %v3278
  %v4915 = vpack.c.b16 %v3283, %v3279
  %v4916 = vpack.c.b16 %v3288, %v3284
  %v4917 = vpack.c.b16 %v3289, %v3285
  %v4918 = vpack.c.b16 %v3290, %v3286
  %v4919 = vpack.c.b16 %v3291, %v3287
  %v4920 = vpack.c.b16 %v3296, %v3292
  %v4921 = vpack.c.b16 %v3297, %v3293
  %v4922 = vpack.c.b16 %v3298, %v3294
  %v4923 = vpack.c.b16 %v3299, %v3295
  %v4924 = vpack.c.b16 %v3304, %v3300
  %v4925 = vpack.c.b16 %v3305, %v3301
  %v4926 = vpack.c.b16 %v3306, %v3302
  %v4927 = vpack.c.b16 %v3307, %v3303
  %v4928 = vpack.c.b16 %v3312, %v3308
  %v4929 = vpack.c.b16 %v3313, %v3309
  %v4930 = vpack.c.b16 %v3314, %v3310
  %v4931 = vpack.c.b16 %v3315, %v3311
  %v4932 = vpack.c.b16 %v3320, %v3316
  %v4933 = vpack.c.b16 %v3321, %v3317
  %v4934 = vpack.c.b16 %v3322, %v3318
  %v4935 = vpack.c.b16 %v3323, %v3319
  %v4936 = vpack.c.b16 %v3328, %v3324
  %v4937 = vpack.c.b16 %v3329, %v3325
  %v4938 = vpack.c.b16 %v3330, %v3326
  %v4939 = vpack.c.b16 %v3331, %v3327
  %v4940 = vpack.c.b16 %v3336, %v3332
  %v4941 = vpack.c.b16 %v3337, %v3333
  %v4942 = vpack.c.b16 %v3338, %v3334
  %v4943 = vpack.c.b16 %v3339, %v3335
  %v4944 = vpack.c.b16 %v3344, %v3340
  %v4945 = vpack.c.b16 %v3345, %v3341
  %v4946 = vpack.c.b16 %v3346, %v3342
  %v4947 = vpack.c.b16 %v3347, %v3343
  %v4948 = vpack.c.b16 %v3352, %v3348
  %v4949 = vpack.c.b16 %v3353, %v3349
  %v4950 = vpack.c.b16 %v3354, %v3350
  %v4951 = vpack.c.b16 %v3355, %v3351
  %v4952 = vpack.c.b16 %v3360, %v3356
  %v4953 = vpack.c.b16 %v3361, %v3357
  %v4954 = vpack.c.b16 %v3362, %v3358
  %v4955 = vpack.c.b16 %v3363, %v3359
  %v4956 = vpack.c.b16 %v3368, %v3364
  %v4957 = vpack.c.b16 %v3369, %v3365
  %v4958 = vpack.c.b16 %v3370, %v3366
  %v4959 = vpack.c.b16 %v3371, %v3367
  %v4960 = vpack.c.b16 %v3376, %v3372
  %v4961 = vpack.c.b16 %v3377, %v3373
  %v4962 = vpack.c.b16 %v3378, %v3374
  %v4963 = vpack.c.b16 %v3379, %v3375
  %v4964 = vpack.c.b16 %v3384, %v3380
  %v4965 = vpack.c.b16 %v3385, %v3381
  %v4966 = vpack.c.b16 %v3386, %v3382
  %v4967 = vpack.c.b16 %v3387, %v3383
  %v4968 = vpack.c.b16 %v3392, %v3388
  %v4969 = vpack.c.b16 %v3393, %v3389
  %v4970 = vpack.c.b16 %v3394, %v3390
  %v4971 = vpack.c.b16 %v3395, %v3391
  %v4972 = vpack.c.b16 %v3400, %v3396
  %v4973 = vpack.c.b16 %v3401, %v3397
  %v4974 = vpack.c.b16 %v3402, %v3398
  %v4975 = vpack.c.b16 %v3403, %v3399
  %v4976 = vpack.c.b16 %v3408, %v3404
  %v4977 = vpack.c.b16 %v3409, %v3405
  %v4978 = vpack.c.b16 %v3410, %v3406
  %v4979 = vpack.c.b16 %v3411, %v3407
  %v4980 = vpack.c.b16 %v3416, %v3412
  %v4981 = vpack.c.b16 %v3417, %v3413
  %v4982 = vpack.c.b16 %v3418, %v3414
  %v4983 = vpack.c.b16 %v3419, %v3415
  %v4984 = vpack.c.b16 %v3424, %v3420
  %v4985 = vpack.c.b16 %v3425, %v3421
  %v4986 = vpack.c.b16 %v3426, %v3422
  %v4987 = vpack.c.b16 %v3427, %v3423
  %v4988 = vpack.c.b16 %v3432, %v3428
  %v4989 = vpack.c.b16 %v3433, %v3429
  %v4990 = vpack.c.b16 %v3434, %v3430
  %v4991 = vpack.c.b16 %v3435, %v3431
  %v4992 = vpack.c.b16 %v3440, %v3436
  %v4993 = vpack.c.b16 %v3441, %v3437
  %v4994 = vpack.c.b16 %v3442, %v3438
  %v4995 = vpack.c.b16 %v3443, %v3439
  %v4996 = vpack.c.b16 %v3448, %v3444
  %v4997 = vpack.c.b16 %v3449, %v3445
  %v4998 = vpack.c.b16 %v3450, %v3446
  %v4999 = vpack.c.b16 %v3451, %v3447
  %v5000 = vpack.c.b16 %v3456, %v3452
  %v5001 = vpack.c.b16 %v3457, %v3453
  %v5002 = vpack.c.b16 %v3458, %v3454
  %v5003 = vpack.c.b16 %v3459, %v3455
  %v5004 = vpack.c.b16 %v3464, %v3460
  %v5005 = vpack.c.b16 %v3465, %v3461
  %v5006 = vpack.c.b16 %v3466, %v3462
  %v5007 = vpack.c.b16 %v3467, %v3463
  %v5008 = vpack.c.b16 %v3472, %v3468
  %v5009 = vpack.c.b16 %v3473, %v3469
  %v5010 = vpack.c.b16 %v3474, %v3470
  %v5011 = vpack.c.b16 %v3475, %v3471
  %v5012 = vpack.c.b16 %v3480, %v3476
  %v5013 = vpack.c.b16 %v3481, %v3477
  %v5014 = vpack.c.b16 %v3482, %v3478
  %v5015 = vpack.c.b16 %v3483, %v3479
  %v5016 = vpack.c.b16 %v3488, %v3484
  %v5017 = vpack.c.b16 %v3489, %v3485
  %v5018 = vpack.c.b16 %v3490, %v3486
  %v5019 = vpack.c.b16 %v3491, %v3487
  %v5020 = vpack.c.b16 %v3496, %v3492
  %v5021 = vpack.c.b16 %v3497, %v3493
  %v5022 = vpack.c.b16 %v3498, %v3494
  %v5023 = vpack.c.b16 %v3499, %v3495
  %v5024 = vpack.c.b16 %v3504, %v3500
  %v5025 = vpack.c.b16 %v3505, %v3501
  %v5026 = vpack.c.b16 %v3506, %v3502
  %v5027 = vpack.c.b16 %v3507, %v3503
  %v5028 = vpack.c.b16 %v3512, %v3508
  %v5029 = vpack.c.b16 %v3513, %v3509
  %v5030 = vpack.c.b16 %v3514, %v3510
  %v5031 = vpack.c.b16 %v3515, %v3511
  %v5032 = vpack.c.b16 %v3520, %v3516
  %v5033 = vpack.c.b16 %v3521, %v3517
  %v5034 = vpack.c.b16 %v3522, %v3518
  %v5035 = vpack.c.b16 %v3523, %v3519
  %v5036 = vpack.c.b16 %v3528, %v3524
  %v5037 = vpack.c.b16 %v3529, %v3525
  %v5038 = vpack.c.b16 %v3530, %v3526
  %v5039 = vpack.c.b16 %v3531, %v3527
  %v5040 = vpack.c.b16 %v3536, %v3532
  %v5041 = vpack.c.b16 %v3537, %v3533
  %v5042 = vpack.c.b16 %v3538, %v3534
  %v5043 = vpack.c.b16 %v3539, %v3535
  %v5044 = vpack.c.b16 %v3544, %v3540
  %v5045 = vpack.c.b16 %v3545, %v3541
  %v5046 = vpack.c.b16 %v3546, %v3542
  %v5047 = vpack.c.b16 %v3547, %v3543
  %v5048 = vpack.c.b16 %v3552, %v3548
  %v5049 = vpack.c.b16 %v3553, %v3549
  %v5050 = vpack.c.b16 %v3554, %v3550
  %v5051 = vpack.c.b16 %v3555, %v3551
  %v5052 = vpack.c.b16 %v3560, %v3556
  %v5053 = vpack.c.b16 %v3561, %v3557
  %v5054 = vpack.c.b16 %v3562, %v3558
  %v5055 = vpack.c.b16 %v3563, %v3559
  %v5056 = vpack.c.b16 %v3568, %v3564
  %v5057 = vpack.c.b16 %v3569, %v3565
  %v5058 = vpack.c.b16 %v3570, %v3566
  %v5059 = vpack.c.b16 %v3571, %v3567
  %v5060 = vpack.c.b16 %v3576, %v3572
  %v5061 = vpack.c.b16 %v3577, %v3573
  %v5062 = vpack.c.b16 %v3578, %v3574
  %v5063 = vpack.c.b16 %v3579, %v3575
  %v5064 = vpack.c.b16 %v3584, %v3580
  %v5065 = vpack.c.b16 %v3585, %v3581
  %v5066 = vpack.c.b16 %v3586, %v3582
  %v5067 = vpack.c.b16 %v3587, %v3583
  %v5068 = vpack.c.b16 %v3592, %v3588
  %v5069 = vpack.c.b16 %v3593, %v3589
  %v5070 = vpack.c.b16 %v3594, %v3590
  %v5071 = vpack.c.b16 %v3595, %v3591
  %v5072 = vpack.c.b16 %v3600, %v3596
  %v5073 = vpack.c.b16 %v3601, %v3597
  %v5074 = vpack.c.b16 %v3602, %v3598
  %v5075 = vpack.c.b16 %v3603, %v3599
  %v5076 = vpack.c.b16 %v3608, %v3604
  %v5077 = vpack.c.b16 %v3609, %v3605
  %v5078 = vpack.c.b16 %v3610, %v3606
  %v5079 = vpack.c.b16 %v3611, %v3607
  %v5080 = vpack.c.b16 %v3616, %v3612
  %v5081 = vpack.c.b16 %v3617, %v3613
  %v5082 = vpack.c.b16 %v3618, %v3614
  %v5083 = vpack.c.b16 %v3619, %v3615
  %v5084 = vpack.c.b16 %v3624, %v3620
  %v5085 = vpack.c.b16 %v3625, %v3621
  %v5086 = vpack.c.b16 %v3626, %v3622
  %v5087 = vpack.c.b16 %v3627, %v3623
  %v5088 = vpack.c.b16 %v3632, %v3628
  %v5089 = vpack.c.b16 %v3633, %v3629
  %v5090 = vpack.c.b16 %v3634, %v3630
  %v5091 = vpack.c.b16 %v3635, %v3631
  %v5092 = vpack.c.b16 %v3640, %v3636
  %v5093 = vpack.c.b16 %v3641, %v3637
  %v5094 = vpack.c.b16 %v3642, %v3638
  %v5095 = vpack.c.b16 %v3643, %v3639
  %v5096 = vpack.c.b16 %v3648, %v3644
  %v5097 = vpack.c.b16 %v3649, %v3645
  %v5098 = vpack.c.b16 %v3650, %v3646
  %v5099 = vpack.c.b16 %v3651, %v3647
  %v5100 = vpack.c.b16 %v3656, %v3652
  %v5101 = vpack.c.b16 %v3657, %v3653
  %v5102 = vpack.c.b16 %v3658, %v3654
  %v5103 = vpack.c.b16 %v3659, %v3655
  %v5104 = vpack.c.b16 %v3664, %v3660
  %v5105 = vpack.c.b16 %v3665, %v3661
  %v5106 = vpack.c.b16 %v3666, %v3662
  %v5107 = vpack.c.b16 %v3667, %v3663
  %v5108 = vpack.c.b16 %v3672, %v3668
  %v5109 = vpack.c.b16 %v3673, %v3669
  %v5110 = vpack.c.b16 %v3674, %v3670
  %v5111 = vpack.c.b16 %v3675, %v3671
  %v5112 = vpack.c.b16 %v3680, %v3676
  %v5113 = vpack.c.b16 %v3681, %v3677
  %v5114 = vpack.c.b16 %v3682, %v3678
  %v5115 = vpack.c.b16 %v3683, %v3679
  %v5116 = vpack.c.b16 %v3688, %v3684
  %v5117 = vpack.c.b16 %v3689, %v3685
  %v5118 = vpack.c.b16 %v3690, %v3686
  %v5119 = vpack.c.b16 %v3691, %v3687
  %v5120 = vpack.c.b16 %v3696, %v3692
  %v5121 = vpack.c.b16 %v3697, %v3693
  %v5122 = vpack.c.b16 %v3698, %v3694
  %v5123 = vpack.c.b16 %v3699, %v3695
  %v5124 = vpack.c.b16 %v3704, %v3700
  %v5125 = vpack.c.b16 %v3705, %v3701
  %v5126 = vpack.c.b16 %v3706, %v3702
  %v5127 = vpack.c.b16 %v3707, %v3703
  %v5128 = vpack.c.b16 %v3712, %v3708
  %v5129 = vpack.c.b16 %v3713, %v3709
  %v5130 = vpack.c.b16 %v3714, %v3710
  %v5131 = vpack.c.b16 %v3715, %v3711
  %v5132 = vpack.c.b16 %v3720, %v3716
  %v5133 = vpack.c.b16 %v3721, %v3717
  %v5134 = vpack.c.b16 %v3722, %v3718
  %v5135 = vpack.c.b16 %v3723, %v3719
  %v5136 = vpack.c.b16 %v3728, %v3724
  %v5137 = vpack.c.b16 %v3729, %v3725
  %v5138 = vpack.c.b16 %v3730, %v3726
  %v5139 = vpack.c.b16 %v3731, %v3727
  %v5140 = vpack.c.b16 %v3736, %v3732
  %v5141 = vpack.c.b16 %v3737, %v3733
  %v5142 = vpack.c.b16 %v3738, %v3734
  %v5143 = vpack.c.b16 %v3739, %v3735
  %v5144 = vpack.c.b16 %v3744, %v3740
  %v5145 = vpack.c.b16 %v3745, %v3741
  %v5146 = vpack.c.b16 %v3746, %v3742
  %v5147 = vpack.c.b16 %v3747, %v3743
  %v5148 = vpack.c.b16 %v3752, %v3748
  %v5149 = vpack.c.b16 %v3753, %v3749
  %v5150 = vpack.c.b16 %v3754, %v3750
  %v5151 = vpack.c.b16 %v3755, %v3751
  %v5152 = vpack.c.b16 %v3760, %v3756
  %v5153 = vpack.c.b16 %v3761, %v3757
  %v5154 = vpack.c.b16 %v3762, %v3758
  %v5155 = vpack.c.b16 %v3763, %v3759
  %v5156 = vpack.c.b16 %v3768, %v3764
  %v5157 = vpack.c.b16 %v3769, %v3765
  %v5158 = vpack.c.b16 %v3770, %v3766
  %v5159 = vpack.c.b16 %v3771, %v3767
  %v5160 = vpack.c.b16 %v3776, %v3772
  %v5161 = vpack.c.b16 %v3777, %v3773
  %v5162 = vpack.c.b16 %v3778, %v3774
  %v5163 = vpack.c.b16 %v3779, %v3775
  %v5164 = vpack.c.b16 %v3784, %v3780
  %v5165 = vpack.c.b16 %v3785, %v3781
  %v5166 = vpack.c.b16 %v3786, %v3782
  %v5167 = vpack.c.b16 %v3787, %v3783
  %v5168 = vpack.c.b16 %v3792, %v3788
  %v5169 = vpack.c.b16 %v3793, %v3789
  %v5170 = vpack.c.b16 %v3794, %v3790
  %v5171 = vpack.c.b16 %v3795, %v3791
  %v5172 = vpack.c.b16 %v3800, %v3796
  %v5173 = vpack.c.b16 %v3801, %v3797
  %v5174 = vpack.c.b16 %v3802, %v3798
  %v5175 = vpack.c.b16 %v3803, %v3799
  %v5176 = vpack.c.b16 %v3808, %v3804
  %v5177 = vpack.c.b16 %v3809, %v3805
  %v5178 = vpack.c.b16 %v3810, %v3806
  %v5179 = vpack.c.b16 %v3811, %v3807
  %v5180 = vpack.c.b16 %v3816, %v3812
  %v5181 = vpack.c.b16 %v3817, %v3813
  %v5182 = vpack.c.b16 %v3818, %v3814
  %v5183 = vpack.c.b16 %v3819, %v3815
  %v5184 = vpack.c.b16 %v3824, %v3820
  %v5185 = vpack.c.b16 %v3825, %v3821
  %v5186 = vpack.c.b16 %v3826, %v3822
  %v5187 = vpack.c.b16 %v3827, %v3823
  %v5188 = vpack.c.b16 %v3832, %v3828
  %v5189 = vpack.c.b16 %v3833, %v3829
  %v5190 = vpack.c.b16 %v3834, %v3830
  %v5191 = vpack.c.b16 %v3835, %v3831
  %v5192 = vpack.c.b16 %v3840, %v3836
  %v5193 = vpack.c.b16 %v3841, %v3837
  %v5194 = vpack.c.b16 %v3842, %v3838
  %v5195 = vpack.c.b16 %v3843, %v3839
  %v5196 = vpack.c.b16 %v3848, %v3844
  %v5197 = vpack.c.b16 %v3849, %v3845
  %v5198 = vpack.c.b16 %v3850, %v3846
  %v5199 = vpack.c.b16 %v3851, %v3847
  %v5200 = vpack.c.b16 %v3856, %v3852
  %v5201 = vpack.c.b16 %v3857, %v3853
  %v5202 = vpack.c.b16 %v3858, %v3854
  %v5203 = vpack.c.b16 %v3859, %v3855
  %v5204 = vpack.c.b16 %v3864, %v3860
  %v5205 = vpack.c.b16 %v3865, %v3861
  %v5206 = vpack.c.b16 %v3866, %v3862
  %v5207 = vpack.c.b16 %v3867, %v3863
  %v5208 = vpack.c.b16 %v3872, %v3868
  %v5209 = vpack.c.b16 %v3873, %v3869
  %v5210 = vpack.c.b16 %v3874, %v3870
  %v5211 = vpack.c.b16 %v3875, %v3871
  %v5212 = vpack.c.b16 %v3880, %v3876
  %v5213 = vpack.c.b16 %v3881, %v3877
  %v5214 = vpack.c.b16 %v3882, %v3878
  %v5215 = vpack.c.b16 %v3883, %v3879
  %v5216 = vpack.c.b16 %v3888, %v3884
  %v5217 = vpack.c.b16 %v3889, %v3885
  %v5218 = vpack.c.b16 %v3890, %v3886
  %v5219 = vpack.c.b16 %v3891, %v3887
  %v5220 = vpack.c.b16 %v3896, %v3892
  %v5221 = vpack.c.b16 %v3897, %v3893
  %v5222 = vpack.c.b16 %v3898, %v3894
  %v5223 = vpack.c.b16 %v3899, %v3895
  %v5224 = vpack.c.b16 %v3904, %v3900
  %v5225 = vpack.c.b16 %v3905, %v3901
  %v5226 = vpack.c.b16 %v3906, %v3902
  %v5227 = vpack.c.b16 %v3907, %v3903
  %v5228 = vpack.c.b16 %v3912, %v3908
  %v5229 = vpack.c.b16 %v3913, %v3909
  %v5230 = vpack.c.b16 %v3914, %v3910
  %v5231 = vpack.c.b16 %v3915, %v3911
  %v5232 = vpack.c.b16 %v3920, %v3916
  %v5233 = vpack.c.b16 %v3921, %v3917
  %v5234 = vpack.c.b16 %v3922, %v3918
  %v5235 = vpack.c.b16 %v3923, %v3919
  %v5236 = vpack.c.b16 %v3928, %v3924
  %v5237 = vpack.c.b16 %v3929, %v3925
  %v5238 = vpack.c.b16 %v3930, %v3926
  %v5239 = vpack.c.b16 %v3931, %v3927
  %v5240 = vpack.c.b16 %v3936, %v3932
  %v5241 = vpack.c.b16 %v3937, %v3933
  %v5242 = vpack.c.b16 %v3938, %v3934
  %v5243 = vpack.c.b16 %v3939, %v3935
  %v5244 = vpack.c.b16 %v3944, %v3940
  %v5245 = vpack.c.b16 %v3945, %v3941
  %v5246 = vpack.c.b16 %v3946, %v3942
  %v5247 = vpack.c.b16 %v3947, %v3943
  %v5248 = vpack.c.b16 %v3952, %v3948
  %v5249 = vpack.c.b16 %v3953, %v3949
  %v5250 = vpack.c.b16 %v3954, %v3950
  %v5251 = vpack.c.b16 %v3955, %v3951
  %v5252 = vpack.c.b16 %v3960, %v3956
  %v5253 = vpack.c.b16 %v3961, %v3957
  %v5254 = vpack.c.b16 %v3962, %v3958
  %v5255 = vpack.c.b16 %v3963, %v3959
  %v5256 = vpack.c.b16 %v3968, %v3964
  %v5257 = vpack.c.b16 %v3969, %v3965
  %v5258 = vpack.c.b16 %v3970, %v3966
  %v5259 = vpack.c.b16 %v3971, %v3967
  %v5260 = vpack.c.b16 %v3976, %v3972
  %v5261 = vpack.c.b16 %v3977, %v3973
  %v5262 = vpack.c.b16 %v3978, %v3974
  %v5263 = vpack.c.b16 %v3979, %v3975
  %v5264 = vpack.c.b16 %v3984, %v3980
  %v5265 = vpack.c.b16 %v3985, %v3981
  %v5266 = vpack.c.b16 %v3986, %v3982
  %v5267 = vpack.c.b16 %v3987, %v3983
  %v5268 = vpack.c.b16 %v3992, %v3988
  %v5269 = vpack.c.b16 %v3993, %v3989
  %v5270 = vpack.c.b16 %v3994, %v3990
  %v5271 = vpack.c.b16 %v3995, %v3991
  %v5272 = vpack.c.b16 %v4000, %v3996
  %v5273 = vpack.c.b16 %v4001, %v3997
  %v5274 = vpack.c.b16 %v4002, %v3998
  %v5275 = vpack.c.b16 %v4003, %v3999
  %v5276 = vpack.c.b16 %v4008, %v4004
  %v5277 = vpack.c.b16 %v4009, %v4005
  %v5278 = vpack.c.b16 %v4010, %v4006
  %v5279 = vpack.c.b16 %v4011, %v4007
  %v5280 = vpack.c.b16 %v4016, %v4012
  %v5281 = vpack.c.b16 %v4017, %v4013
  %v5282 = vpack.c.b16 %v4018, %v4014
  %v5283 = vpack.c.b16 %v4019, %v4015
  %v5284 = vpack.c.b16 %v4024, %v4020
  %v5285 = vpack.c.b16 %v4025, %v4021
  %v5286 = vpack.c.b16 %v4026, %v4022
  %v5287 = vpack.c.b16 %v4027, %v4023
  %v5288 = vpack.c.b16 %v4032, %v4028
  %v5289 = vpack.c.b16 %v4033, %v4029
  %v5290 = vpack.c.b16 %v4034, %v4030
  %v5291 = vpack.c.b16 %v4035, %v4031
  %v5292 = vpack.c.b16 %v4040, %v4036
  %v5293 = vpack.c.b16 %v4041, %v4037
  %v5294 = vpack.c.b16 %v4042, %v4038
  %v5295 = vpack.c.b16 %v4043, %v4039
  %v5296 = vpack.c.b16 %v4048, %v4044
  %v5297 = vpack.c.b16 %v4049, %v4045
  %v5298 = vpack.c.b16 %v4050, %v4046
  %v5299 = vpack.c.b16 %v4051, %v4047
  %v5300 = vpack.c.b16 %v4056, %v4052
  %v5301 = vpack.c.b16 %v4057, %v4053
  %v5302 = vpack.c.b16 %v4058, %v4054
  %v5303 = vpack.c.b16 %v4059, %v4055
  %v5304 = vpack.c.b16 %v4064, %v4060
  %v5305 = vpack.c.b16 %v4065, %v4061
  %v5306 = vpack.c.b16 %v4066, %v4062
  %v5307 = vpack.c.b16 %v4067, %v4063
  %v5308 = vpack.c.b16 %v4072, %v4068
  %v5309 = vpack.c.b16 %v4073, %v4069
  %v5310 = vpack.c.b16 %v4074, %v4070
  %v5311 = vpack.c.b16 %v4075, %v4071
  %v5312 = vpack.c.b16 %v4080, %v4076
  %v5313 = vpack.c.b16 %v4081, %v4077
  %v5314 = vpack.c.b16 %v4082, %v4078
  %v5315 = vpack.c.b16 %v4083, %v4079
  %v5316 = vpack.c.b16 %v4088, %v4084
  %v5317 = vpack.c.b16 %v4089, %v4085
  %v5318 = vpack.c.b16 %v4090, %v4086
  %v5319 = vpack.c.b16 %v4091, %v4087
  %v5320 = vpack.c.b16 %v4096, %v4092
  %v5321 = vpack.c.b16 %v4097, %v4093
  %v5322 = vpack.c.b16 %v4098, %v4094
  %v5323 = vpack.c.b16 %v4099, %v4095
  %v5324 = vpack.c.b16 %v4104, %v4100
  %v5325 = vpack.c.b16 %v4105, %v4101
  %v5326 = vpack.c.b16 %v4106, %v4102
  %v5327 = vpack.c.b16 %v4107, %v4103
  %v5328 = vpack.c.b16 %v4112, %v4108
  %v5329 = vpack.c.b16 %v4113, %v4109
  %v5330 = vpack.c.b16 %v4114, %v4110
  %v5331 = vpack.c.b16 %v4115, %v4111
  %v5332 = vpack.c.b16 %v4120, %v4116
  %v5333 = vpack.c.b16 %v4121, %v4117
  %v5334 = vpack.c.b16 %v4122, %v4118
  %v5335 = vpack.c.b16 %v4123, %v4119
  %v5336 = vpack.c.b16 %v4128, %v4124
  %v5337 = vpack.c.b16 %v4129, %v4125
  %v5338 = vpack.c.b16 %v4130, %v4126
  %v5339 = vpack.c.b16 %v4131, %v4127
  %v5340 = vpack.c.b16 %v4136, %v4132
  %v5341 = vpack.c.b16 %v4137, %v4133
  %v5342 = vpack.c.b16 %v4138, %v4134
  %v5343 = vpack.c.b16 %v4139, %v4135
  %v5344 = vpack.c.b16 %v4144, %v4140
  %v5345 = vpack.c.b16 %v4145, %v4141
  %v5346 = vpack.c.b16 %v4146, %v4142
  %v5347 = vpack.c.b16 %v4147, %v4143
  %v5348 = vpack.c.b16 %v4152, %v4148
  %v5349 = vpack.c.b16 %v4153, %v4149
  %v5350 = vpack.c.b16 %v4154, %v4150
  %v5351 = vpack.c.b16 %v4155, %v4151
  %v5352 = vpack.c.b16 %v4160, %v4156
  %v5353 = vpack.c.b16 %v4161, %v4157
  %v5354 = vpack.c.b16 %v4162, %v4158
  %v5355 = vpack.c.b16 %v4163, %v4159
  %v5356 = vpack.c.b16 %v4168, %v4164
  %v5357 = vpack.c.b16 %v4169, %v4165
  %v5358 = vpack.c.b16 %v4170, %v4166
  %v5359 = vpack.c.b16 %v4171, %v4167
  %v5360 = vpack.c.b16 %v4176, %v4172
  %v5361 = vpack.c.b16 %v4177, %v4173
  %v5362 = vpack.c.b16 %v4178, %v4174
  %v5363 = vpack.c.b16 %v4179, %v4175
  %v5364 = vpack.c.b16 %v4184, %v4180
  %v5365 = vpack.c.b16 %v4185, %v4181
  %v5366 = vpack.c.b16 %v4186, %v4182
  %v5367 = vpack.c.b16 %v4187, %v4183
  %v5368 = vpack.c.b16 %v4192, %v4188
  %v5369 = vpack.c.b16 %v4193, %v4189
  %v5370 = vpack.c.b16 %v4194, %v4190
  %v5371 = vpack.c.b16 %v4195, %v4191
  %v5372 = vpack.c.b16 %v4200, %v4196
  %v5373 = vpack.c.b16 %v4201, %v4197
  %v5374 = vpack.c.b16 %v4202, %v4198
  %v5375 = vpack.c.b16 %v4203, %v4199
  %v5376 = vpack.c.b16 %v4208, %v4204
  %v5377 = vpack.c.b16 %v4209, %v4205
  %v5378 = vpack.c.b16 %v4210, %v4206
  %v5379 = vpack.c.b16 %v4211, %v4207
  %v5380 = vpack.c.b16 %v4216, %v4212
  %v5381 = vpack.c.b16 %v4217, %v4213
  %v5382 = vpack.c.b16 %v4218, %v4214
  %v5383 = vpack.c.b16 %v4219, %v4215
  %v5384 = vpack.c.b16 %v4224, %v4220
  %v5385 = vpack.c.b16 %v4225, %v4221
  %v5386 = vpack.c.b16 %v4226, %v4222
  %v5387 = vpack.c.b16 %v4227, %v4223
  %v5388 = vpack.c.b16 %v4232, %v4228
  %v5389 = vpack.c.b16 %v4233, %v4229
  %v5390 = vpack.c.b16 %v4234, %v4230
  %v5391 = vpack.c.b16 %v4235, %v4231
  %v5392 = vpack.c.b16 %v4240, %v4236
  %v5393 = vpack.c.b16 %v4241, %v4237
  %v5394 = vpack.c.b16 %v4242, %v4238
  %v5395 = vpack.c.b16 %v4243, %v4239
  %v5396 = vpack.c.b16 %v4248, %v4244
  %v5397 = vpack.c.b16 %v4249, %v4245
  %v5398 = vpack.c.b16 %v4250, %v4246
  %v5399 = vpack.c.b16 %v4251, %v4247
  %v5400 = vpack.c.b16 %v4256, %v4252
  %v5401 = vpack.c.b16 %v4257, %v4253
  %v5402 = vpack.c.b16 %v4258, %v4254
  %v5403 = vpack.c.b16 %v4259, %v4255
  %v5404 = vpack.c.b16 %v4264, %v4260
  %v5405 = vpack.c.b16 %v4265, %v4261
  %v5406 = vpack.c.b16 %v4266, %v4262
  %v5407 = vpack.c.b16 %v4267, %v4263
  %v5408 = vpack.c.b16 %v4272, %v4268
  %v5409 = vpack.c.b16 %v4273, %v4269
  %v5410 = vpack.c.b16 %v4274, %v4270
  %v5411 = vpack.c.b16 %v4275, %v4271
  %v5412 = vpack.c.b16 %v4280, %v4276
  %v5413 = vpack.c.b16 %v4281, %v4277
  %v5414 = vpack.c.b16 %v4282, %v4278
  %v5415 = vpack.c.b16 %v4283, %v4279
  %v5416 = vpack.c.b16 %v4288, %v4284
  %v5417 = vpack.c.b16 %v4289, %v4285
  %v5418 = vpack.c.b16 %v4290, %v4286
  %v5419 = vpack.c.b16 %v4291, %v4287
  %v5420 = vpack.c.b16 %v4296, %v4292
  %v5421 = vpack.c.b16 %v4297, %v4293
  %v5422 = vpack.c.b16 %v4298, %v4294
  %v5423 = vpack.c.b16 %v4299, %v4295
  %v5424 = vpack.c.b16 %v4304, %v4300
  %v5425 = vpack.c.b16 %v4305, %v4301
  %v5426 = vpack.c.b16 %v4306, %v4302
  %v5427 = vpack.c.b16 %v4307, %v4303
  %v5428 = vpack.c.b16 %v4312, %v4308
  %v5429 = vpack.c.b16 %v4313, %v4309
  %v5430 = vpack.c.b16 %v4314, %v4310
  %v5431 = vpack.c.b16 %v4315, %v4311
  %v5432 = vpack.c.b16 %v4320, %v4316
  %v5433 = vpack.c.b16 %v4321, %v4317
  %v5434 = vpack.c.b16 %v4322, %v4318
  %v5435 = vpack.c.b16 %v4323, %v4319
  %v5436 = vpack.c.b16 %v4328, %v4324
  %v5437 = vpack.c.b16 %v4329, %v4325
  %v5438 = vpack.c.b16 %v4330, %v4326
  %v5439 = vpack.c.b16 %v4331, %v4327
  %v5440 = vpack.c.b16 %v4336, %v4332
  %v5441 = vpack.c.b16 %v4337, %v4333
  %v5442 = vpack.c.b16 %v4338, %v4334
  %v5443 = vpack.c.b16 %v4339, %v4335
  %v5444 = vpack.c.b16 %v4344, %v4340
  %v5445 = vpack.c.b16 %v4345, %v4341
  %v5446 = vpack.c.b16 %v4346, %v4342
  %v5447 = vpack.c.b16 %v4347, %v4343
  %v5448 = vpack.c.b16 %v4352, %v4348
  %v5449 = vpack.c.b16 %v4353, %v4349
  %v5450 = vpack.c.b16 %v4354, %v4350
  %v5451 = vpack.c.b16 %v4355, %v4351
  %v5452 = vpack.c.b16 %v4360, %v4356
  %v5453 = vpack.c.b16 %v4361, %v4357
  %v5454 = vpack.c.b16 %v4362, %v4358
  %v5455 = vpack.c.b16 %v4363, %v4359
  %v5456 = vpack.c.b16 %v4368, %v4364
  %v5457 = vpack.c.b16 %v4369, %v4365
  %v5458 = vpack.c.b16 %v4370, %v4366
  %v5459 = vpack.c.b16 %v4371, %v4367
  %v5460 = vpack.c.b16 %v4376, %v4372
  %v5461 = vpack.c.b16 %v4377, %v4373
  %v5462 = vpack.c.b16 %v4378, %v4374
  %v5463 = vpack.c.b16 %v4379, %v4375
  %v5464 = vpack.c.b16 %v4384, %v4380
  %v5465 = vpack.c.b16 %v4385, %v4381
  %v5466 = vpack.c.b16 %v4386, %v4382
  %v5467 = vpack.c.b16 %v4387, %v4383
  %v5468 = vpack.c.b16 %v4392, %v4388
  %v5469 = vpack.c.b16 %v4393, %v4389
  %v5470 = vpack.c.b16 %v4394, %v4390
  %v5471 = vpack.c.b16 %v4395, %v4391
  %v5472 = vpack.c.b16 %v4400, %v4396
  %v5473 = vpack.c.b16 %v4401, %v4397
  %v5474 = vpack.c.b16 %v4402, %v4398
  %v5475 = vpack.c.b16 %v4403, %v4399
  %v5476 = vpack.c.b16 %v4408, %v4404
  %v5477 = vpack.c.b16 %v4409, %v4405
  %v5478 = vpack.c.b16 %v4410, %v4406
  %v5479 = vpack.c.b16 %v4411, %v4407
  %v5480 = vpack.c.b16 %v4416, %v4412
  %v5481 = vpack.c.b16 %v4417, %v4413
  %v5482 = vpack.c.b16 %v4418, %v4414
  %v5483 = vpack.c.b16 %v4419, %v4415
  %v5484 = vpack.c.b16 %v4424, %v4420
  %v5485 = vpack.c.b16 %v4425, %v4421
  %v5486 = vpack.c.b16 %v4426, %v4422
  %v5487 = vpack.c.b16 %v4427, %v4423
  %v5488 = vpack.c.b16 %v4432, %v4428
  %v5489 = vpack.c.b16 %v4433, %v4429
  %v5490 = vpack.c.b16 %v4434, %v4430
  %v5491 = vpack.c.b16 %v4435, %v4431
  %v5492 = vpack.c.b16 %v4440, %v4436
  %v5493 = vpack.c.b16 %v4441, %v4437
  %v5494 = vpack.c.b16 %v4442, %v4438
  %v5495 = vpack.c.b16 %v4443, %v4439
  %v5496 = vpack.c.b16 %v4448, %v4444
  %v5497 = vpack.c.b16 %v4449, %v4445
  %v5498 = vpack.c.b16 %v4450, %v4446
  %v5499 = vpack.c.b16 %v4451, %v4447
  %v5500 = vpack.c.b16 %v4456, %v4452
  %v5501 = vpack.c.b16 %v4457, %v4453
  %v5502 = vpack.c.b16 %v4458, %v4454
  %v5503 = vpack.c.b16 %v4459, %v4455
  %v5504 = vpack.c.b16 %v4464, %v4460
  %v5505 = vpack.c.b16 %v4465, %v4461
  %v5506 = vpack.c.b16 %v4466, %v4462
  %v5507 = vpack.c.b16 %v4467, %v4463
  %v5508 = vpack.c.b16 %v4472, %v4468
  %v5509 = vpack.c.b16 %v4473, %v4469
  %v5510 = vpack.c.b16 %v4474, %v4470
  %v5511 = vpack.c.b16 %v4475, %v4471
  %v5512 = vpack.c.b16 %v4480, %v4476
  %v5513 = vpack.c.b16 %v4481, %v4477
  %v5514 = vpack.c.b16 %v4482, %v4478
  %v5515 = vpack.c.b16 %v4483, %v4479
  %v5516 = vpack.c.b16 %v4488, %v4484
  %v5517 = vpack.c.b16 %v4489, %v4485
  %v5518 = vpack.c.b16 %v4490, %v4486
  %v5519 = vpack.c.b16 %v4491, %v4487
  %v5520 = vpack.c.b16 %v4496, %v4492
  %v5521 = vpack.c.b16 %v4497, %v4493
  %v5522 = vpack.c.b16 %v4498, %v4494
  %v5523 = vpack.c.b16 %v4499, %v4495
  %6548 = vmatpush.bf16.msra.mxu0 %v4528
  %6549 = vmatpush.bf16.msra.mxu0 %v4524
  %6550 = vmatpush.bf16.msra.mxu0 %v4520
  %6551 = vmatpush.bf16.msra.mxu0 %v4516
  %6552 = vmatpush.bf16.msra.mxu0 %v4512
  %6553 = vmatpush.bf16.msra.mxu0 %v4508
  %6554 = vmatpush.bf16.msra.mxu0 %v4504
  %6555 = vmatpush.bf16.msra.mxu0 %v4500
  %6556 = vmatmul.bf16.gmra.mxu0 %v1300
  %v6557 = vpop.f32.mrf.mxu0
  %v6558 = vadd.f32 0.0, %v6557
  %v6559 = vpop.f32.mrf.mxu0
  %v6560 = vadd.f32 0.0, %v6559
  %6561 = vmatmul.bf16.gmra.mxu0 %v1332
  %v6562 = vpop.f32.mrf.mxu0
  %v6563 = vadd.f32 0.0, %v6562
  %v6564 = vpop.f32.mrf.mxu0
  %v6565 = vadd.f32 0.0, %v6564
  %6566 = vdwg.mxu0
  %6567 = vmatpush.bf16.msra.mxu0 %v4560
  %6568 = vmatpush.bf16.msra.mxu0 %v4556
  %6569 = vmatpush.bf16.msra.mxu0 %v4552
  %6570 = vmatpush.bf16.msra.mxu0 %v4548
  %6571 = vmatpush.bf16.msra.mxu0 %v4544
  %6572 = vmatpush.bf16.msra.mxu0 %v4540
  %6573 = vmatpush.bf16.msra.mxu0 %v4536
  %6574 = vmatpush.bf16.msra.mxu0 %v4532
  %6575 = vmatmul.bf16.gmra.mxu0 %v1301
  %v6576 = vpop.f32.mrf.mxu0
  %v6577 = vadd.f32 %v6558, %v6576
  %v6578 = vpop.f32.mrf.mxu0
  %v6579 = vadd.f32 %v6560, %v6578
  %6580 = vmatmul.bf16.gmra.mxu0 %v1333
  %v6581 = vpop.f32.mrf.mxu0
  %v6582 = vadd.f32 %v6563, %v6581
  %v6583 = vpop.f32.mrf.mxu0
  %v6584 = vadd.f32 %v6565, %v6583
  %6585 = vdwg.mxu0
  %6586 = vmatpush.bf16.msra.mxu0 %v4592
  %6587 = vmatpush.bf16.msra.mxu0 %v4588
  %6588 = vmatpush.bf16.msra.mxu0 %v4584
  %6589 = vmatpush.bf16.msra.mxu0 %v4580
  %6590 = vmatpush.bf16.msra.mxu0 %v4576
  %6591 = vmatpush.bf16.msra.mxu0 %v4572
  %6592 = vmatpush.bf16.msra.mxu0 %v4568
  %6593 = vmatpush.bf16.msra.mxu0 %v4564
  %6594 = vmatmul.bf16.gmra.mxu0 %v1302
  %v6595 = vpop.f32.mrf.mxu0
  %v6596 = vadd.f32 %v6577, %v6595
  %v6597 = vpop.f32.mrf.mxu0
  %v6598 = vadd.f32 %v6579, %v6597
  %6599 = vmatmul.bf16.gmra.mxu0 %v1334
  %v6600 = vpop.f32.mrf.mxu0
  %v6601 = vadd.f32 %v6582, %v6600
  %v6602 = vpop.f32.mrf.mxu0
  %v6603 = vadd.f32 %v6584, %v6602
  %6604 = vdwg.mxu0
  %6605 = vmatpush.bf16.msra.mxu0 %v4624
  %6606 = vmatpush.bf16.msra.mxu0 %v4620
  %6607 = vmatpush.bf16.msra.mxu0 %v4616
  %6608 = vmatpush.bf16.msra.mxu0 %v4612
  %6609 = vmatpush.bf16.msra.mxu0 %v4608
  %6610 = vmatpush.bf16.msra.mxu0 %v4604
  %6611 = vmatpush.bf16.msra.mxu0 %v4600
  %6612 = vmatpush.bf16.msra.mxu0 %v4596
  %6613 = vmatmul.bf16.gmra.mxu0 %v1303
  %v6614 = vpop.f32.mrf.mxu0
  %v6615 = vadd.f32 %v6596, %v6614
  %v6616 = vpop.f32.mrf.mxu0
  %v6617 = vadd.f32 %v6598, %v6616
  %6618 = vmatmul.bf16.gmra.mxu0 %v1335
  %v6619 = vpop.f32.mrf.mxu0
  %v6620 = vadd.f32 %v6601, %v6619
  %v6621 = vpop.f32.mrf.mxu0
  %v6622 = vadd.f32 %v6603, %v6621
  %6623 = vdwg.mxu0
  %6624 = vmatpush.bf16.msra.mxu0 %v4656
  %6625 = vmatpush.bf16.msra.mxu0 %v4652
  %6626 = vmatpush.bf16.msra.mxu0 %v4648
  %6627 = vmatpush.bf16.msra.mxu0 %v4644
  %6628 = vmatpush.bf16.msra.mxu0 %v4640
  %6629 = vmatpush.bf16.msra.mxu0 %v4636
  %6630 = vmatpush.bf16.msra.mxu0 %v4632
  %6631 = vmatpush.bf16.msra.mxu0 %v4628
  %6632 = vmatmul.bf16.gmra.mxu0 %v1304
  %v6633 = vpop.f32.mrf.mxu0
  %v6634 = vadd.f32 %v6615, %v6633
  %v6635 = vpop.f32.mrf.mxu0
  %v6636 = vadd.f32 %v6617, %v6635
  %6637 = vmatmul.bf16.gmra.mxu0 %v1336
  %v6638 = vpop.f32.mrf.mxu0
  %v6639 = vadd.f32 %v6620, %v6638
  %v6640 = vpop.f32.mrf.mxu0
  %v6641 = vadd.f32 %v6622, %v6640
  %6642 = vdwg.mxu0
  %6643 = vmatpush.bf16.msra.mxu0 %v4688
  %6644 = vmatpush.bf16.msra.mxu0 %v4684
  %6645 = vmatpush.bf16.msra.mxu0 %v4680
  %6646 = vmatpush.bf16.msra.mxu0 %v4676
  %6647 = vmatpush.bf16.msra.mxu0 %v4672
  %6648 = vmatpush.bf16.msra.mxu0 %v4668
  %6649 = vmatpush.bf16.msra.mxu0 %v4664
  %6650 = vmatpush.bf16.msra.mxu0 %v4660
  %6651 = vmatmul.bf16.gmra.mxu0 %v1305
  %v6652 = vpop.f32.mrf.mxu0
  %v6653 = vadd.f32 %v6634, %v6652
  %v6654 = vpop.f32.mrf.mxu0
  %v6655 = vadd.f32 %v6636, %v6654
  %6656 = vmatmul.bf16.gmra.mxu0 %v1337
  %v6657 = vpop.f32.mrf.mxu0
  %v6658 = vadd.f32 %v6639, %v6657
  %v6659 = vpop.f32.mrf.mxu0
  %v6660 = vadd.f32 %v6641, %v6659
  %6661 = vdwg.mxu0
  %6662 = vmatpush.bf16.msra.mxu0 %v4720
  %6663 = vmatpush.bf16.msra.mxu0 %v4716
  %6664 = vmatpush.bf16.msra.mxu0 %v4712
  %6665 = vmatpush.bf16.msra.mxu0 %v4708
  %6666 = vmatpush.bf16.msra.mxu0 %v4704
  %6667 = vmatpush.bf16.msra.mxu0 %v4700
  %6668 = vmatpush.bf16.msra.mxu0 %v4696
  %6669 = vmatpush.bf16.msra.mxu0 %v4692
  %6670 = vmatmul.bf16.gmra.mxu0 %v1306
  %v6671 = vpop.f32.mrf.mxu0
  %v6672 = vadd.f32 %v6653, %v6671
  %v6673 = vpop.f32.mrf.mxu0
  %v6674 = vadd.f32 %v6655, %v6673
  %6675 = vmatmul.bf16.gmra.mxu0 %v1338
  %v6676 = vpop.f32.mrf.mxu0
  %v6677 = vadd.f32 %v6658, %v6676
  %v6678 = vpop.f32.mrf.mxu0
  %v6679 = vadd.f32 %v6660, %v6678
  %6680 = vdwg.mxu0
  %6681 = vmatpush.bf16.msra.mxu0 %v4752
  %6682 = vmatpush.bf16.msra.mxu0 %v4748
  %6683 = vmatpush.bf16.msra.mxu0 %v4744
  %6684 = vmatpush.bf16.msra.mxu0 %v4740
  %6685 = vmatpush.bf16.msra.mxu0 %v4736
  %6686 = vmatpush.bf16.msra.mxu0 %v4732
  %6687 = vmatpush.bf16.msra.mxu0 %v4728
  %6688 = vmatpush.bf16.msra.mxu0 %v4724
  %6689 = vmatmul.bf16.gmra.mxu0 %v1307
  %v6690 = vpop.f32.mrf.mxu0
  %v6691 = vadd.f32 %v6672, %v6690
  %v6692 = vpop.f32.mrf.mxu0
  %v6693 = vadd.f32 %v6674, %v6692
  %6694 = vmatmul.bf16.gmra.mxu0 %v1339
  %v6695 = vpop.f32.mrf.mxu0
  %v6696 = vadd.f32 %v6677, %v6695
  %v6697 = vpop.f32.mrf.mxu0
  %v6698 = vadd.f32 %v6679, %v6697
  %6699 = vdwg.mxu0
  %6700 = vmatpush.bf16.msra.mxu0 %v4784
  %6701 = vmatpush.bf16.msra.mxu0 %v4780
  %6702 = vmatpush.bf16.msra.mxu0 %v4776
  %6703 = vmatpush.bf16.msra.mxu0 %v4772
  %6704 = vmatpush.bf16.msra.mxu0 %v4768
  %6705 = vmatpush.bf16.msra.mxu0 %v4764
  %6706 = vmatpush.bf16.msra.mxu0 %v4760
  %6707 = vmatpush.bf16.msra.mxu0 %v4756
  %6708 = vmatmul.bf16.gmra.mxu0 %v1308
  %v6709 = vpop.f32.mrf.mxu0
  %v6710 = vadd.f32 %v6691, %v6709
  %v6711 = vpop.f32.mrf.mxu0
  %v6712 = vadd.f32 %v6693, %v6711
  %6713 = vmatmul.bf16.gmra.mxu0 %v1340
  %v6714 = vpop.f32.mrf.mxu0
  %v6715 = vadd.f32 %v6696, %v6714
  %v6716 = vpop.f32.mrf.mxu0
  %v6717 = vadd.f32 %v6698, %v6716
  %6718 = vdwg.mxu0
  %6719 = vmatpush.bf16.msra.mxu0 %v4816
  %6720 = vmatpush.bf16.msra.mxu0 %v4812
  %6721 = vmatpush.bf16.msra.mxu0 %v4808
  %6722 = vmatpush.bf16.msra.mxu0 %v4804
  %6723 = vmatpush.bf16.msra.mxu0 %v4800
  %6724 = vmatpush.bf16.msra.mxu0 %v4796
  %6725 = vmatpush.bf16.msra.mxu0 %v4792
  %6726 = vmatpush.bf16.msra.mxu0 %v4788
  %6727 = vmatmul.bf16.gmra.mxu0 %v1309
  %v6728 = vpop.f32.mrf.mxu0
  %v6729 = vadd.f32 %v6710, %v6728
  %v6730 = vpop.f32.mrf.mxu0
  %v6731 = vadd.f32 %v6712, %v6730
  %6732 = vmatmul.bf16.gmra.mxu0 %v1341
  %v6733 = vpop.f32.mrf.mxu0
  %v6734 = vadd.f32 %v6715, %v6733
  %v6735 = vpop.f32.mrf.mxu0
  %v6736 = vadd.f32 %v6717, %v6735
  %6737 = vdwg.mxu0
  %6738 = vmatpush.bf16.msra.mxu0 %v4848
  %6739 = vmatpush.bf16.msra.mxu0 %v4844
  %6740 = vmatpush.bf16.msra.mxu0 %v4840
  %6741 = vmatpush.bf16.msra.mxu0 %v4836
  %6742 = vmatpush.bf16.msra.mxu0 %v4832
  %6743 = vmatpush.bf16.msra.mxu0 %v4828
  %6744 = vmatpush.bf16.msra.mxu0 %v4824
  %6745 = vmatpush.bf16.msra.mxu0 %v4820
  %6746 = vmatmul.bf16.gmra.mxu0 %v1310
  %v6747 = vpop.f32.mrf.mxu0
  %v6748 = vadd.f32 %v6729, %v6747
  %v6749 = vpop.f32.mrf.mxu0
  %v6750 = vadd.f32 %v6731, %v6749
  %6751 = vmatmul.bf16.gmra.mxu0 %v1342
  %v6752 = vpop.f32.mrf.mxu0
  %v6753 = vadd.f32 %v6734, %v6752
  %v6754 = vpop.f32.mrf.mxu0
  %v6755 = vadd.f32 %v6736, %v6754
  %6756 = vdwg.mxu0
  %6757 = vmatpush.bf16.msra.mxu0 %v4880
  %6758 = vmatpush.bf16.msra.mxu0 %v4876
  %6759 = vmatpush.bf16.msra.mxu0 %v4872
  %6760 = vmatpush.bf16.msra.mxu0 %v4868
  %6761 = vmatpush.bf16.msra.mxu0 %v4864
  %6762 = vmatpush.bf16.msra.mxu0 %v4860
  %6763 = vmatpush.bf16.msra.mxu0 %v4856
  %6764 = vmatpush.bf16.msra.mxu0 %v4852
  %6765 = vmatmul.bf16.gmra.mxu0 %v1311
  %v6766 = vpop.f32.mrf.mxu0
  %v6767 = vadd.f32 %v6748, %v6766
  %v6768 = vpop.f32.mrf.mxu0
  %v6769 = vadd.f32 %v6750, %v6768
  %6770 = vmatmul.bf16.gmra.mxu0 %v1343
  %v6771 = vpop.f32.mrf.mxu0
  %v6772 = vadd.f32 %v6753, %v6771
  %v6773 = vpop.f32.mrf.mxu0
  %v6774 = vadd.f32 %v6755, %v6773
  %6775 = vdwg.mxu0
  %6776 = vmatpush.bf16.msra.mxu0 %v4912
  %6777 = vmatpush.bf16.msra.mxu0 %v4908
  %6778 = vmatpush.bf16.msra.mxu0 %v4904
  %6779 = vmatpush.bf16.msra.mxu0 %v4900
  %6780 = vmatpush.bf16.msra.mxu0 %v4896
  %6781 = vmatpush.bf16.msra.mxu0 %v4892
  %6782 = vmatpush.bf16.msra.mxu0 %v4888
  %6783 = vmatpush.bf16.msra.mxu0 %v4884
  %6784 = vmatmul.bf16.gmra.mxu0 %v1312
  %v6785 = vpop.f32.mrf.mxu0
  %v6786 = vadd.f32 %v6767, %v6785
  %v6787 = vpop.f32.mrf.mxu0
  %v6788 = vadd.f32 %v6769, %v6787
  %6789 = vmatmul.bf16.gmra.mxu0 %v1344
  %v6790 = vpop.f32.mrf.mxu0
  %v6791 = vadd.f32 %v6772, %v6790
  %v6792 = vpop.f32.mrf.mxu0
  %v6793 = vadd.f32 %v6774, %v6792
  %6794 = vdwg.mxu0
  %6795 = vmatpush.bf16.msra.mxu0 %v4944
  %6796 = vmatpush.bf16.msra.mxu0 %v4940
  %6797 = vmatpush.bf16.msra.mxu0 %v4936
  %6798 = vmatpush.bf16.msra.mxu0 %v4932
  %6799 = vmatpush.bf16.msra.mxu0 %v4928
  %6800 = vmatpush.bf16.msra.mxu0 %v4924
  %6801 = vmatpush.bf16.msra.mxu0 %v4920
  %6802 = vmatpush.bf16.msra.mxu0 %v4916
  %6803 = vmatmul.bf16.gmra.mxu0 %v1313
  %v6804 = vpop.f32.mrf.mxu0
  %v6805 = vadd.f32 %v6786, %v6804
  %v6806 = vpop.f32.mrf.mxu0
  %v6807 = vadd.f32 %v6788, %v6806
  %6808 = vmatmul.bf16.gmra.mxu0 %v1345
  %v6809 = vpop.f32.mrf.mxu0
  %v6810 = vadd.f32 %v6791, %v6809
  %v6811 = vpop.f32.mrf.mxu0
  %v6812 = vadd.f32 %v6793, %v6811
  %6813 = vdwg.mxu0
  %6814 = vmatpush.bf16.msra.mxu0 %v4976
  %6815 = vmatpush.bf16.msra.mxu0 %v4972
  %6816 = vmatpush.bf16.msra.mxu0 %v4968
  %6817 = vmatpush.bf16.msra.mxu0 %v4964
  %6818 = vmatpush.bf16.msra.mxu0 %v4960
  %6819 = vmatpush.bf16.msra.mxu0 %v4956
  %6820 = vmatpush.bf16.msra.mxu0 %v4952
  %6821 = vmatpush.bf16.msra.mxu0 %v4948
  %6822 = vmatmul.bf16.gmra.mxu0 %v1314
  %v6823 = vpop.f32.mrf.mxu0
  %v6824 = vadd.f32 %v6805, %v6823
  %v6825 = vpop.f32.mrf.mxu0
  %v6826 = vadd.f32 %v6807, %v6825
  %6827 = vmatmul.bf16.gmra.mxu0 %v1346
  %v6828 = vpop.f32.mrf.mxu0
  %v6829 = vadd.f32 %v6810, %v6828
  %v6830 = vpop.f32.mrf.mxu0
  %v6831 = vadd.f32 %v6812, %v6830
  %6832 = vdwg.mxu0
  %6833 = vmatpush.bf16.msra.mxu0 %v5008
  %6834 = vmatpush.bf16.msra.mxu0 %v5004
  %6835 = vmatpush.bf16.msra.mxu0 %v5000
  %6836 = vmatpush.bf16.msra.mxu0 %v4996
  %6837 = vmatpush.bf16.msra.mxu0 %v4992
  %6838 = vmatpush.bf16.msra.mxu0 %v4988
  %6839 = vmatpush.bf16.msra.mxu0 %v4984
  %6840 = vmatpush.bf16.msra.mxu0 %v4980
  %6841 = vmatmul.bf16.gmra.mxu0 %v1315
  %v6842 = vpop.f32.mrf.mxu0
  %v6843 = vadd.f32 %v6824, %v6842
  %v6844 = vpop.f32.mrf.mxu0
  %v6845 = vadd.f32 %v6826, %v6844
  %6846 = vmatmul.bf16.gmra.mxu0 %v1347
  %v6847 = vpop.f32.mrf.mxu0
  %v6848 = vadd.f32 %v6829, %v6847
  %v6849 = vpop.f32.mrf.mxu0
  %v6850 = vadd.f32 %v6831, %v6849
  %6851 = vdwg.mxu0
  %6852 = vmatpush.bf16.msra.mxu0 %v5040
  %6853 = vmatpush.bf16.msra.mxu0 %v5036
  %6854 = vmatpush.bf16.msra.mxu0 %v5032
  %6855 = vmatpush.bf16.msra.mxu0 %v5028
  %6856 = vmatpush.bf16.msra.mxu0 %v5024
  %6857 = vmatpush.bf16.msra.mxu0 %v5020
  %6858 = vmatpush.bf16.msra.mxu0 %v5016
  %6859 = vmatpush.bf16.msra.mxu0 %v5012
  %6860 = vmatmul.bf16.gmra.mxu0 %v1316
  %v6861 = vpop.f32.mrf.mxu0
  %v6862 = vadd.f32 %v6843, %v6861
  %v6863 = vpop.f32.mrf.mxu0
  %v6864 = vadd.f32 %v6845, %v6863
  %6865 = vmatmul.bf16.gmra.mxu0 %v1348
  %v6866 = vpop.f32.mrf.mxu0
  %v6867 = vadd.f32 %v6848, %v6866
  %v6868 = vpop.f32.mrf.mxu0
  %v6869 = vadd.f32 %v6850, %v6868
  %6870 = vdwg.mxu0
  %6871 = vmatpush.bf16.msra.mxu0 %v5072
  %6872 = vmatpush.bf16.msra.mxu0 %v5068
  %6873 = vmatpush.bf16.msra.mxu0 %v5064
  %6874 = vmatpush.bf16.msra.mxu0 %v5060
  %6875 = vmatpush.bf16.msra.mxu0 %v5056
  %6876 = vmatpush.bf16.msra.mxu0 %v5052
  %6877 = vmatpush.bf16.msra.mxu0 %v5048
  %6878 = vmatpush.bf16.msra.mxu0 %v5044
  %6879 = vmatmul.bf16.gmra.mxu0 %v1317
  %v6880 = vpop.f32.mrf.mxu0
  %v6881 = vadd.f32 %v6862, %v6880
  %v6882 = vpop.f32.mrf.mxu0
  %v6883 = vadd.f32 %v6864, %v6882
  %6884 = vmatmul.bf16.gmra.mxu0 %v1349
  %v6885 = vpop.f32.mrf.mxu0
  %v6886 = vadd.f32 %v6867, %v6885
  %v6887 = vpop.f32.mrf.mxu0
  %v6888 = vadd.f32 %v6869, %v6887
  %6889 = vdwg.mxu0
  %6890 = vmatpush.bf16.msra.mxu0 %v5104
  %6891 = vmatpush.bf16.msra.mxu0 %v5100
  %6892 = vmatpush.bf16.msra.mxu0 %v5096
  %6893 = vmatpush.bf16.msra.mxu0 %v5092
  %6894 = vmatpush.bf16.msra.mxu0 %v5088
  %6895 = vmatpush.bf16.msra.mxu0 %v5084
  %6896 = vmatpush.bf16.msra.mxu0 %v5080
  %6897 = vmatpush.bf16.msra.mxu0 %v5076
  %6898 = vmatmul.bf16.gmra.mxu0 %v1318
  %v6899 = vpop.f32.mrf.mxu0
  %v6900 = vadd.f32 %v6881, %v6899
  %v6901 = vpop.f32.mrf.mxu0
  %v6902 = vadd.f32 %v6883, %v6901
  %6903 = vmatmul.bf16.gmra.mxu0 %v1350
  %v6904 = vpop.f32.mrf.mxu0
  %v6905 = vadd.f32 %v6886, %v6904
  %v6906 = vpop.f32.mrf.mxu0
  %v6907 = vadd.f32 %v6888, %v6906
  %6908 = vdwg.mxu0
  %6909 = vmatpush.bf16.msra.mxu0 %v5136
  %6910 = vmatpush.bf16.msra.mxu0 %v5132
  %6911 = vmatpush.bf16.msra.mxu0 %v5128
  %6912 = vmatpush.bf16.msra.mxu0 %v5124
  %6913 = vmatpush.bf16.msra.mxu0 %v5120
  %6914 = vmatpush.bf16.msra.mxu0 %v5116
  %6915 = vmatpush.bf16.msra.mxu0 %v5112
  %6916 = vmatpush.bf16.msra.mxu0 %v5108
  %6917 = vmatmul.bf16.gmra.mxu0 %v1319
  %v6918 = vpop.f32.mrf.mxu0
  %v6919 = vadd.f32 %v6900, %v6918
  %v6920 = vpop.f32.mrf.mxu0
  %v6921 = vadd.f32 %v6902, %v6920
  %6922 = vmatmul.bf16.gmra.mxu0 %v1351
  %v6923 = vpop.f32.mrf.mxu0
  %v6924 = vadd.f32 %v6905, %v6923
  %v6925 = vpop.f32.mrf.mxu0
  %v6926 = vadd.f32 %v6907, %v6925
  %6927 = vdwg.mxu0
  %6928 = vmatpush.bf16.msra.mxu0 %v5168
  %6929 = vmatpush.bf16.msra.mxu0 %v5164
  %6930 = vmatpush.bf16.msra.mxu0 %v5160
  %6931 = vmatpush.bf16.msra.mxu0 %v5156
  %6932 = vmatpush.bf16.msra.mxu0 %v5152
  %6933 = vmatpush.bf16.msra.mxu0 %v5148
  %6934 = vmatpush.bf16.msra.mxu0 %v5144
  %6935 = vmatpush.bf16.msra.mxu0 %v5140
  %6936 = vmatmul.bf16.gmra.mxu0 %v1320
  %v6937 = vpop.f32.mrf.mxu0
  %v6938 = vadd.f32 %v6919, %v6937
  %v6939 = vpop.f32.mrf.mxu0
  %v6940 = vadd.f32 %v6921, %v6939
  %6941 = vmatmul.bf16.gmra.mxu0 %v1352
  %v6942 = vpop.f32.mrf.mxu0
  %v6943 = vadd.f32 %v6924, %v6942
  %v6944 = vpop.f32.mrf.mxu0
  %v6945 = vadd.f32 %v6926, %v6944
  %6946 = vdwg.mxu0
  %6947 = vmatpush.bf16.msra.mxu0 %v5200
  %6948 = vmatpush.bf16.msra.mxu0 %v5196
  %6949 = vmatpush.bf16.msra.mxu0 %v5192
  %6950 = vmatpush.bf16.msra.mxu0 %v5188
  %6951 = vmatpush.bf16.msra.mxu0 %v5184
  %6952 = vmatpush.bf16.msra.mxu0 %v5180
  %6953 = vmatpush.bf16.msra.mxu0 %v5176
  %6954 = vmatpush.bf16.msra.mxu0 %v5172
  %6955 = vmatmul.bf16.gmra.mxu0 %v1321
  %v6956 = vpop.f32.mrf.mxu0
  %v6957 = vadd.f32 %v6938, %v6956
  %v6958 = vpop.f32.mrf.mxu0
  %v6959 = vadd.f32 %v6940, %v6958
  %6960 = vmatmul.bf16.gmra.mxu0 %v1353
  %v6961 = vpop.f32.mrf.mxu0
  %v6962 = vadd.f32 %v6943, %v6961
  %v6963 = vpop.f32.mrf.mxu0
  %v6964 = vadd.f32 %v6945, %v6963
  %6965 = vdwg.mxu0
  %6966 = vmatpush.bf16.msra.mxu0 %v5232
  %6967 = vmatpush.bf16.msra.mxu0 %v5228
  %6968 = vmatpush.bf16.msra.mxu0 %v5224
  %6969 = vmatpush.bf16.msra.mxu0 %v5220
  %6970 = vmatpush.bf16.msra.mxu0 %v5216
  %6971 = vmatpush.bf16.msra.mxu0 %v5212
  %6972 = vmatpush.bf16.msra.mxu0 %v5208
  %6973 = vmatpush.bf16.msra.mxu0 %v5204
  %6974 = vmatmul.bf16.gmra.mxu0 %v1322
  %v6975 = vpop.f32.mrf.mxu0
  %v6976 = vadd.f32 %v6957, %v6975
  %v6977 = vpop.f32.mrf.mxu0
  %v6978 = vadd.f32 %v6959, %v6977
  %6979 = vmatmul.bf16.gmra.mxu0 %v1354
  %v6980 = vpop.f32.mrf.mxu0
  %v6981 = vadd.f32 %v6962, %v6980
  %v6982 = vpop.f32.mrf.mxu0
  %v6983 = vadd.f32 %v6964, %v6982
  %6984 = vdwg.mxu0
  %6985 = vmatpush.bf16.msra.mxu0 %v5264
  %6986 = vmatpush.bf16.msra.mxu0 %v5260
  %6987 = vmatpush.bf16.msra.mxu0 %v5256
  %6988 = vmatpush.bf16.msra.mxu0 %v5252
  %6989 = vmatpush.bf16.msra.mxu0 %v5248
  %6990 = vmatpush.bf16.msra.mxu0 %v5244
  %6991 = vmatpush.bf16.msra.mxu0 %v5240
  %6992 = vmatpush.bf16.msra.mxu0 %v5236
  %6993 = vmatmul.bf16.gmra.mxu0 %v1323
  %v6994 = vpop.f32.mrf.mxu0
  %v6995 = vadd.f32 %v6976, %v6994
  %v6996 = vpop.f32.mrf.mxu0
  %v6997 = vadd.f32 %v6978, %v6996
  %6998 = vmatmul.bf16.gmra.mxu0 %v1355
  %v6999 = vpop.f32.mrf.mxu0
  %v7000 = vadd.f32 %v6981, %v6999
  %v7001 = vpop.f32.mrf.mxu0
  %v7002 = vadd.f32 %v6983, %v7001
  %7003 = vdwg.mxu0
  %7004 = vmatpush.bf16.msra.mxu0 %v5296
  %7005 = vmatpush.bf16.msra.mxu0 %v5292
  %7006 = vmatpush.bf16.msra.mxu0 %v5288
  %7007 = vmatpush.bf16.msra.mxu0 %v5284
  %7008 = vmatpush.bf16.msra.mxu0 %v5280
  %7009 = vmatpush.bf16.msra.mxu0 %v5276
  %7010 = vmatpush.bf16.msra.mxu0 %v5272
  %7011 = vmatpush.bf16.msra.mxu0 %v5268
  %7012 = vmatmul.bf16.gmra.mxu0 %v1324
  %v7013 = vpop.f32.mrf.mxu0
  %v7014 = vadd.f32 %v6995, %v7013
  %v7015 = vpop.f32.mrf.mxu0
  %v7016 = vadd.f32 %v6997, %v7015
  %7017 = vmatmul.bf16.gmra.mxu0 %v1356
  %v7018 = vpop.f32.mrf.mxu0
  %v7019 = vadd.f32 %v7000, %v7018
  %v7020 = vpop.f32.mrf.mxu0
  %v7021 = vadd.f32 %v7002, %v7020
  %7022 = vdwg.mxu0
  %7023 = vmatpush.bf16.msra.mxu0 %v5328
  %7024 = vmatpush.bf16.msra.mxu0 %v5324
  %7025 = vmatpush.bf16.msra.mxu0 %v5320
  %7026 = vmatpush.bf16.msra.mxu0 %v5316
  %7027 = vmatpush.bf16.msra.mxu0 %v5312
  %7028 = vmatpush.bf16.msra.mxu0 %v5308
  %7029 = vmatpush.bf16.msra.mxu0 %v5304
  %7030 = vmatpush.bf16.msra.mxu0 %v5300
  %7031 = vmatmul.bf16.gmra.mxu0 %v1325
  %v7032 = vpop.f32.mrf.mxu0
  %v7033 = vadd.f32 %v7014, %v7032
  %v7034 = vpop.f32.mrf.mxu0
  %v7035 = vadd.f32 %v7016, %v7034
  %7036 = vmatmul.bf16.gmra.mxu0 %v1357
  %v7037 = vpop.f32.mrf.mxu0
  %v7038 = vadd.f32 %v7019, %v7037
  %v7039 = vpop.f32.mrf.mxu0
  %v7040 = vadd.f32 %v7021, %v7039
  %7041 = vdwg.mxu0
  %7042 = vmatpush.bf16.msra.mxu0 %v5360
  %7043 = vmatpush.bf16.msra.mxu0 %v5356
  %7044 = vmatpush.bf16.msra.mxu0 %v5352
  %7045 = vmatpush.bf16.msra.mxu0 %v5348
  %7046 = vmatpush.bf16.msra.mxu0 %v5344
  %7047 = vmatpush.bf16.msra.mxu0 %v5340
  %7048 = vmatpush.bf16.msra.mxu0 %v5336
  %7049 = vmatpush.bf16.msra.mxu0 %v5332
  %7050 = vmatmul.bf16.gmra.mxu0 %v1326
  %v7051 = vpop.f32.mrf.mxu0
  %v7052 = vadd.f32 %v7033, %v7051
  %v7053 = vpop.f32.mrf.mxu0
  %v7054 = vadd.f32 %v7035, %v7053
  %7055 = vmatmul.bf16.gmra.mxu0 %v1358
  %v7056 = vpop.f32.mrf.mxu0
  %v7057 = vadd.f32 %v7038, %v7056
  %v7058 = vpop.f32.mrf.mxu0
  %v7059 = vadd.f32 %v7040, %v7058
  %7060 = vdwg.mxu0
  %7061 = vmatpush.bf16.msra.mxu0 %v5392
  %7062 = vmatpush.bf16.msra.mxu0 %v5388
  %7063 = vmatpush.bf16.msra.mxu0 %v5384
  %7064 = vmatpush.bf16.msra.mxu0 %v5380
  %7065 = vmatpush.bf16.msra.mxu0 %v5376
  %7066 = vmatpush.bf16.msra.mxu0 %v5372
  %7067 = vmatpush.bf16.msra.mxu0 %v5368
  %7068 = vmatpush.bf16.msra.mxu0 %v5364
  %7069 = vmatmul.bf16.gmra.mxu0 %v1327
  %v7070 = vpop.f32.mrf.mxu0
  %v7071 = vadd.f32 %v7052, %v7070
  %v7072 = vpop.f32.mrf.mxu0
  %v7073 = vadd.f32 %v7054, %v7072
  %7074 = vmatmul.bf16.gmra.mxu0 %v1359
  %v7075 = vpop.f32.mrf.mxu0
  %v7076 = vadd.f32 %v7057, %v7075
  %v7077 = vpop.f32.mrf.mxu0
  %v7078 = vadd.f32 %v7059, %v7077
  %7079 = vdwg.mxu0
  %7080 = vmatpush.bf16.msra.mxu0 %v5424
  %7081 = vmatpush.bf16.msra.mxu0 %v5420
  %7082 = vmatpush.bf16.msra.mxu0 %v5416
  %7083 = vmatpush.bf16.msra.mxu0 %v5412
  %7084 = vmatpush.bf16.msra.mxu0 %v5408
  %7085 = vmatpush.bf16.msra.mxu0 %v5404
  %7086 = vmatpush.bf16.msra.mxu0 %v5400
  %7087 = vmatpush.bf16.msra.mxu0 %v5396
  %7088 = vmatmul.bf16.gmra.mxu0 %v1328
  %v7089 = vpop.f32.mrf.mxu0
  %v7090 = vadd.f32 %v7071, %v7089
  %v7091 = vpop.f32.mrf.mxu0
  %v7092 = vadd.f32 %v7073, %v7091
  %7093 = vmatmul.bf16.gmra.mxu0 %v1360
  %v7094 = vpop.f32.mrf.mxu0
  %v7095 = vadd.f32 %v7076, %v7094
  %v7096 = vpop.f32.mrf.mxu0
  %v7097 = vadd.f32 %v7078, %v7096
  %7098 = vdwg.mxu0
  %7099 = vmatpush.bf16.msra.mxu0 %v5456
  %7100 = vmatpush.bf16.msra.mxu0 %v5452
  %7101 = vmatpush.bf16.msra.mxu0 %v5448
  %7102 = vmatpush.bf16.msra.mxu0 %v5444
  %7103 = vmatpush.bf16.msra.mxu0 %v5440
  %7104 = vmatpush.bf16.msra.mxu0 %v5436
  %7105 = vmatpush.bf16.msra.mxu0 %v5432
  %7106 = vmatpush.bf16.msra.mxu0 %v5428
  %7107 = vmatmul.bf16.gmra.mxu0 %v1329
  %v7108 = vpop.f32.mrf.mxu0
  %v7109 = vadd.f32 %v7090, %v7108
  %v7110 = vpop.f32.mrf.mxu0
  %v7111 = vadd.f32 %v7092, %v7110
  %7112 = vmatmul.bf16.gmra.mxu0 %v1361
  %v7113 = vpop.f32.mrf.mxu0
  %v7114 = vadd.f32 %v7095, %v7113
  %v7115 = vpop.f32.mrf.mxu0
  %v7116 = vadd.f32 %v7097, %v7115
  %7117 = vdwg.mxu0
  %7118 = vmatpush.bf16.msra.mxu0 %v5488
  %7119 = vmatpush.bf16.msra.mxu0 %v5484
  %7120 = vmatpush.bf16.msra.mxu0 %v5480
  %7121 = vmatpush.bf16.msra.mxu0 %v5476
  %7122 = vmatpush.bf16.msra.mxu0 %v5472
  %7123 = vmatpush.bf16.msra.mxu0 %v5468
  %7124 = vmatpush.bf16.msra.mxu0 %v5464
  %7125 = vmatpush.bf16.msra.mxu0 %v5460
  %7126 = vmatmul.bf16.gmra.mxu0 %v1330
  %v7127 = vpop.f32.mrf.mxu0
  %v7128 = vadd.f32 %v7109, %v7127
  %v7129 = vpop.f32.mrf.mxu0
  %v7130 = vadd.f32 %v7111, %v7129
  %7131 = vmatmul.bf16.gmra.mxu0 %v1362
  %v7132 = vpop.f32.mrf.mxu0
  %v7133 = vadd.f32 %v7114, %v7132
  %v7134 = vpop.f32.mrf.mxu0
  %v7135 = vadd.f32 %v7116, %v7134
  %7136 = vdwg.mxu0
  %7137 = vmatpush.bf16.msra.mxu0 %v5520
  %7138 = vmatpush.bf16.msra.mxu0 %v5516
  %7139 = vmatpush.bf16.msra.mxu0 %v5512
  %7140 = vmatpush.bf16.msra.mxu0 %v5508
  %7141 = vmatpush.bf16.msra.mxu0 %v5504
  %7142 = vmatpush.bf16.msra.mxu0 %v5500
  %7143 = vmatpush.bf16.msra.mxu0 %v5496
  %7144 = vmatpush.bf16.msra.mxu0 %v5492
  %7145 = vmatmul.bf16.gmra.mxu0 %v1331
  %v7146 = vpop.f32.mrf.mxu0
  %v7147 = vadd.f32 %v7128, %v7146
  %v7148 = vpop.f32.mrf.mxu0
  %v7149 = vadd.f32 %v7130, %v7148
  %7150 = vmatmul.bf16.gmra.mxu0 %v1363
  %v7151 = vpop.f32.mrf.mxu0
  %v7152 = vadd.f32 %v7133, %v7151
  %v7153 = vpop.f32.mrf.mxu0
  %v7154 = vadd.f32 %v7135, %v7153
  %7155 = vdwg.mxu0
  %7156 = vmatpush.bf16.msra.mxu0 %v4529
  %7157 = vmatpush.bf16.msra.mxu0 %v4525
  %7158 = vmatpush.bf16.msra.mxu0 %v4521
  %7159 = vmatpush.bf16.msra.mxu0 %v4517
  %7160 = vmatpush.bf16.msra.mxu0 %v4513
  %7161 = vmatpush.bf16.msra.mxu0 %v4509
  %7162 = vmatpush.bf16.msra.mxu0 %v4505
  %7163 = vmatpush.bf16.msra.mxu0 %v4501
  %7164 = vmatmul.bf16.gmra.mxu0 %v1300
  %v7165 = vpop.f32.mrf.mxu0
  %v7166 = vadd.f32 0.0, %v7165
  %v7167 = vpop.f32.mrf.mxu0
  %v7168 = vadd.f32 0.0, %v7167
  %7169 = vmatmul.bf16.gmra.mxu0 %v1332
  %v7170 = vpop.f32.mrf.mxu0
  %v7171 = vadd.f32 0.0, %v7170
  %v7172 = vpop.f32.mrf.mxu0
  %v7173 = vadd.f32 0.0, %v7172
  %7174 = vdwg.mxu0
  %7175 = vmatpush.bf16.msra.mxu0 %v4561
  %7176 = vmatpush.bf16.msra.mxu0 %v4557
  %7177 = vmatpush.bf16.msra.mxu0 %v4553
  %7178 = vmatpush.bf16.msra.mxu0 %v4549
  %7179 = vmatpush.bf16.msra.mxu0 %v4545
  %7180 = vmatpush.bf16.msra.mxu0 %v4541
  %7181 = vmatpush.bf16.msra.mxu0 %v4537
  %7182 = vmatpush.bf16.msra.mxu0 %v4533
  %7183 = vmatmul.bf16.gmra.mxu0 %v1301
  %v7184 = vpop.f32.mrf.mxu0
  %v7185 = vadd.f32 %v7166, %v7184
  %v7186 = vpop.f32.mrf.mxu0
  %v7187 = vadd.f32 %v7168, %v7186
  %7188 = vmatmul.bf16.gmra.mxu0 %v1333
  %v7189 = vpop.f32.mrf.mxu0
  %v7190 = vadd.f32 %v7171, %v7189
  %v7191 = vpop.f32.mrf.mxu0
  %v7192 = vadd.f32 %v7173, %v7191
  %7193 = vdwg.mxu0
  %7194 = vmatpush.bf16.msra.mxu0 %v4593
  %7195 = vmatpush.bf16.msra.mxu0 %v4589
  %7196 = vmatpush.bf16.msra.mxu0 %v4585
  %7197 = vmatpush.bf16.msra.mxu0 %v4581
  %7198 = vmatpush.bf16.msra.mxu0 %v4577
  %7199 = vmatpush.bf16.msra.mxu0 %v4573
  %7200 = vmatpush.bf16.msra.mxu0 %v4569
  %7201 = vmatpush.bf16.msra.mxu0 %v4565
  %7202 = vmatmul.bf16.gmra.mxu0 %v1302
  %v7203 = vpop.f32.mrf.mxu0
  %v7204 = vadd.f32 %v7185, %v7203
  %v7205 = vpop.f32.mrf.mxu0
  %v7206 = vadd.f32 %v7187, %v7205
  %7207 = vmatmul.bf16.gmra.mxu0 %v1334
  %v7208 = vpop.f32.mrf.mxu0
  %v7209 = vadd.f32 %v7190, %v7208
  %v7210 = vpop.f32.mrf.mxu0
  %v7211 = vadd.f32 %v7192, %v7210
  %7212 = vdwg.mxu0
  %7213 = vmatpush.bf16.msra.mxu0 %v4625
  %7214 = vmatpush.bf16.msra.mxu0 %v4621
  %7215 = vmatpush.bf16.msra.mxu0 %v4617
  %7216 = vmatpush.bf16.msra.mxu0 %v4613
  %7217 = vmatpush.bf16.msra.mxu0 %v4609
  %7218 = vmatpush.bf16.msra.mxu0 %v4605
  %7219 = vmatpush.bf16.msra.mxu0 %v4601
  %7220 = vmatpush.bf16.msra.mxu0 %v4597
  %7221 = vmatmul.bf16.gmra.mxu0 %v1303
  %v7222 = vpop.f32.mrf.mxu0
  %v7223 = vadd.f32 %v7204, %v7222
  %v7224 = vpop.f32.mrf.mxu0
  %v7225 = vadd.f32 %v7206, %v7224
  %7226 = vmatmul.bf16.gmra.mxu0 %v1335
  %v7227 = vpop.f32.mrf.mxu0
  %v7228 = vadd.f32 %v7209, %v7227
  %v7229 = vpop.f32.mrf.mxu0
  %v7230 = vadd.f32 %v7211, %v7229
  %7231 = vdwg.mxu0
  %7232 = vmatpush.bf16.msra.mxu0 %v4657
  %7233 = vmatpush.bf16.msra.mxu0 %v4653
  %7234 = vmatpush.bf16.msra.mxu0 %v4649
  %7235 = vmatpush.bf16.msra.mxu0 %v4645
  %7236 = vmatpush.bf16.msra.mxu0 %v4641
  %7237 = vmatpush.bf16.msra.mxu0 %v4637
  %7238 = vmatpush.bf16.msra.mxu0 %v4633
  %7239 = vmatpush.bf16.msra.mxu0 %v4629
  %7240 = vmatmul.bf16.gmra.mxu0 %v1304
  %v7241 = vpop.f32.mrf.mxu0
  %v7242 = vadd.f32 %v7223, %v7241
  %v7243 = vpop.f32.mrf.mxu0
  %v7244 = vadd.f32 %v7225, %v7243
  %7245 = vmatmul.bf16.gmra.mxu0 %v1336
  %v7246 = vpop.f32.mrf.mxu0
  %v7247 = vadd.f32 %v7228, %v7246
  %v7248 = vpop.f32.mrf.mxu0
  %v7249 = vadd.f32 %v7230, %v7248
  %7250 = vdwg.mxu0
  %7251 = vmatpush.bf16.msra.mxu0 %v4689
  %7252 = vmatpush.bf16.msra.mxu0 %v4685
  %7253 = vmatpush.bf16.msra.mxu0 %v4681
  %7254 = vmatpush.bf16.msra.mxu0 %v4677
  %7255 = vmatpush.bf16.msra.mxu0 %v4673
  %7256 = vmatpush.bf16.msra.mxu0 %v4669
  %7257 = vmatpush.bf16.msra.mxu0 %v4665
  %7258 = vmatpush.bf16.msra.mxu0 %v4661
  %7259 = vmatmul.bf16.gmra.mxu0 %v1305
  %v7260 = vpop.f32.mrf.mxu0
  %v7261 = vadd.f32 %v7242, %v7260
  %v7262 = vpop.f32.mrf.mxu0
  %v7263 = vadd.f32 %v7244, %v7262
  %7264 = vmatmul.bf16.gmra.mxu0 %v1337
  %v7265 = vpop.f32.mrf.mxu0
  %v7266 = vadd.f32 %v7247, %v7265
  %v7267 = vpop.f32.mrf.mxu0
  %v7268 = vadd.f32 %v7249, %v7267
  %7269 = vdwg.mxu0
  %7270 = vmatpush.bf16.msra.mxu0 %v4721
  %7271 = vmatpush.bf16.msra.mxu0 %v4717
  %7272 = vmatpush.bf16.msra.mxu0 %v4713
  %7273 = vmatpush.bf16.msra.mxu0 %v4709
  %7274 = vmatpush.bf16.msra.mxu0 %v4705
  %7275 = vmatpush.bf16.msra.mxu0 %v4701
  %7276 = vmatpush.bf16.msra.mxu0 %v4697
  %7277 = vmatpush.bf16.msra.mxu0 %v4693
  %7278 = vmatmul.bf16.gmra.mxu0 %v1306
  %v7279 = vpop.f32.mrf.mxu0
  %v7280 = vadd.f32 %v7261, %v7279
  %v7281 = vpop.f32.mrf.mxu0
  %v7282 = vadd.f32 %v7263, %v7281
  %7283 = vmatmul.bf16.gmra.mxu0 %v1338
  %v7284 = vpop.f32.mrf.mxu0
  %v7285 = vadd.f32 %v7266, %v7284
  %v7286 = vpop.f32.mrf.mxu0
  %v7287 = vadd.f32 %v7268, %v7286
  %7288 = vdwg.mxu0
  %7289 = vmatpush.bf16.msra.mxu0 %v4753
  %7290 = vmatpush.bf16.msra.mxu0 %v4749
  %7291 = vmatpush.bf16.msra.mxu0 %v4745
  %7292 = vmatpush.bf16.msra.mxu0 %v4741
  %7293 = vmatpush.bf16.msra.mxu0 %v4737
  %7294 = vmatpush.bf16.msra.mxu0 %v4733
  %7295 = vmatpush.bf16.msra.mxu0 %v4729
  %7296 = vmatpush.bf16.msra.mxu0 %v4725
  %7297 = vmatmul.bf16.gmra.mxu0 %v1307
  %v7298 = vpop.f32.mrf.mxu0
  %v7299 = vadd.f32 %v7280, %v7298
  %v7300 = vpop.f32.mrf.mxu0
  %v7301 = vadd.f32 %v7282, %v7300
  %7302 = vmatmul.bf16.gmra.mxu0 %v1339
  %v7303 = vpop.f32.mrf.mxu0
  %v7304 = vadd.f32 %v7285, %v7303
  %v7305 = vpop.f32.mrf.mxu0
  %v7306 = vadd.f32 %v7287, %v7305
  %7307 = vdwg.mxu0
  %7308 = vmatpush.bf16.msra.mxu0 %v4785
  %7309 = vmatpush.bf16.msra.mxu0 %v4781
  %7310 = vmatpush.bf16.msra.mxu0 %v4777
  %7311 = vmatpush.bf16.msra.mxu0 %v4773
  %7312 = vmatpush.bf16.msra.mxu0 %v4769
  %7313 = vmatpush.bf16.msra.mxu0 %v4765
  %7314 = vmatpush.bf16.msra.mxu0 %v4761
  %7315 = vmatpush.bf16.msra.mxu0 %v4757
  %7316 = vmatmul.bf16.gmra.mxu0 %v1308
  %v7317 = vpop.f32.mrf.mxu0
  %v7318 = vadd.f32 %v7299, %v7317
  %v7319 = vpop.f32.mrf.mxu0
  %v7320 = vadd.f32 %v7301, %v7319
  %7321 = vmatmul.bf16.gmra.mxu0 %v1340
  %v7322 = vpop.f32.mrf.mxu0
  %v7323 = vadd.f32 %v7304, %v7322
  %v7324 = vpop.f32.mrf.mxu0
  %v7325 = vadd.f32 %v7306, %v7324
  %7326 = vdwg.mxu0
  %7327 = vmatpush.bf16.msra.mxu0 %v4817
  %7328 = vmatpush.bf16.msra.mxu0 %v4813
  %7329 = vmatpush.bf16.msra.mxu0 %v4809
  %7330 = vmatpush.bf16.msra.mxu0 %v4805
  %7331 = vmatpush.bf16.msra.mxu0 %v4801
  %7332 = vmatpush.bf16.msra.mxu0 %v4797
  %7333 = vmatpush.bf16.msra.mxu0 %v4793
  %7334 = vmatpush.bf16.msra.mxu0 %v4789
  %7335 = vmatmul.bf16.gmra.mxu0 %v1309
  %v7336 = vpop.f32.mrf.mxu0
  %v7337 = vadd.f32 %v7318, %v7336
  %v7338 = vpop.f32.mrf.mxu0
  %v7339 = vadd.f32 %v7320, %v7338
  %7340 = vmatmul.bf16.gmra.mxu0 %v1341
  %v7341 = vpop.f32.mrf.mxu0
  %v7342 = vadd.f32 %v7323, %v7341
  %v7343 = vpop.f32.mrf.mxu0
  %v7344 = vadd.f32 %v7325, %v7343
  %7345 = vdwg.mxu0
  %7346 = vmatpush.bf16.msra.mxu0 %v4849
  %7347 = vmatpush.bf16.msra.mxu0 %v4845
  %7348 = vmatpush.bf16.msra.mxu0 %v4841
  %7349 = vmatpush.bf16.msra.mxu0 %v4837
  %7350 = vmatpush.bf16.msra.mxu0 %v4833
  %7351 = vmatpush.bf16.msra.mxu0 %v4829
  %7352 = vmatpush.bf16.msra.mxu0 %v4825
  %7353 = vmatpush.bf16.msra.mxu0 %v4821
  %7354 = vmatmul.bf16.gmra.mxu0 %v1310
  %v7355 = vpop.f32.mrf.mxu0
  %v7356 = vadd.f32 %v7337, %v7355
  %v7357 = vpop.f32.mrf.mxu0
  %v7358 = vadd.f32 %v7339, %v7357
  %7359 = vmatmul.bf16.gmra.mxu0 %v1342
  %v7360 = vpop.f32.mrf.mxu0
  %v7361 = vadd.f32 %v7342, %v7360
  %v7362 = vpop.f32.mrf.mxu0
  %v7363 = vadd.f32 %v7344, %v7362
  %7364 = vdwg.mxu0
  %7365 = vmatpush.bf16.msra.mxu0 %v4881
  %7366 = vmatpush.bf16.msra.mxu0 %v4877
  %7367 = vmatpush.bf16.msra.mxu0 %v4873
  %7368 = vmatpush.bf16.msra.mxu0 %v4869
  %7369 = vmatpush.bf16.msra.mxu0 %v4865
  %7370 = vmatpush.bf16.msra.mxu0 %v4861
  %7371 = vmatpush.bf16.msra.mxu0 %v4857
  %7372 = vmatpush.bf16.msra.mxu0 %v4853
  %7373 = vmatmul.bf16.gmra.mxu0 %v1311
  %v7374 = vpop.f32.mrf.mxu0
  %v7375 = vadd.f32 %v7356, %v7374
  %v7376 = vpop.f32.mrf.mxu0
  %v7377 = vadd.f32 %v7358, %v7376
  %7378 = vmatmul.bf16.gmra.mxu0 %v1343
  %v7379 = vpop.f32.mrf.mxu0
  %v7380 = vadd.f32 %v7361, %v7379
  %v7381 = vpop.f32.mrf.mxu0
  %v7382 = vadd.f32 %v7363, %v7381
  %7383 = vdwg.mxu0
  %7384 = vmatpush.bf16.msra.mxu0 %v4913
  %7385 = vmatpush.bf16.msra.mxu0 %v4909
  %7386 = vmatpush.bf16.msra.mxu0 %v4905
  %7387 = vmatpush.bf16.msra.mxu0 %v4901
  %7388 = vmatpush.bf16.msra.mxu0 %v4897
  %7389 = vmatpush.bf16.msra.mxu0 %v4893
  %7390 = vmatpush.bf16.msra.mxu0 %v4889
  %7391 = vmatpush.bf16.msra.mxu0 %v4885
  %7392 = vmatmul.bf16.gmra.mxu0 %v1312
  %v7393 = vpop.f32.mrf.mxu0
  %v7394 = vadd.f32 %v7375, %v7393
  %v7395 = vpop.f32.mrf.mxu0
  %v7396 = vadd.f32 %v7377, %v7395
  %7397 = vmatmul.bf16.gmra.mxu0 %v1344
  %v7398 = vpop.f32.mrf.mxu0
  %v7399 = vadd.f32 %v7380, %v7398
  %v7400 = vpop.f32.mrf.mxu0
  %v7401 = vadd.f32 %v7382, %v7400
  %7402 = vdwg.mxu0
  %7403 = vmatpush.bf16.msra.mxu0 %v4945
  %7404 = vmatpush.bf16.msra.mxu0 %v4941
  %7405 = vmatpush.bf16.msra.mxu0 %v4937
  %7406 = vmatpush.bf16.msra.mxu0 %v4933
  %7407 = vmatpush.bf16.msra.mxu0 %v4929
  %7408 = vmatpush.bf16.msra.mxu0 %v4925
  %7409 = vmatpush.bf16.msra.mxu0 %v4921
  %7410 = vmatpush.bf16.msra.mxu0 %v4917
  %7411 = vmatmul.bf16.gmra.mxu0 %v1313
  %v7412 = vpop.f32.mrf.mxu0
  %v7413 = vadd.f32 %v7394, %v7412
  %v7414 = vpop.f32.mrf.mxu0
  %v7415 = vadd.f32 %v7396, %v7414
  %7416 = vmatmul.bf16.gmra.mxu0 %v1345
  %v7417 = vpop.f32.mrf.mxu0
  %v7418 = vadd.f32 %v7399, %v7417
  %v7419 = vpop.f32.mrf.mxu0
  %v7420 = vadd.f32 %v7401, %v7419
  %7421 = vdwg.mxu0
  %7422 = vmatpush.bf16.msra.mxu0 %v4977
  %7423 = vmatpush.bf16.msra.mxu0 %v4973
  %7424 = vmatpush.bf16.msra.mxu0 %v4969
  %7425 = vmatpush.bf16.msra.mxu0 %v4965
  %7426 = vmatpush.bf16.msra.mxu0 %v4961
  %7427 = vmatpush.bf16.msra.mxu0 %v4957
  %7428 = vmatpush.bf16.msra.mxu0 %v4953
  %7429 = vmatpush.bf16.msra.mxu0 %v4949
  %7430 = vmatmul.bf16.gmra.mxu0 %v1314
  %v7431 = vpop.f32.mrf.mxu0
  %v7432 = vadd.f32 %v7413, %v7431
  %v7433 = vpop.f32.mrf.mxu0
  %v7434 = vadd.f32 %v7415, %v7433
  %7435 = vmatmul.bf16.gmra.mxu0 %v1346
  %v7436 = vpop.f32.mrf.mxu0
  %v7437 = vadd.f32 %v7418, %v7436
  %v7438 = vpop.f32.mrf.mxu0
  %v7439 = vadd.f32 %v7420, %v7438
  %7440 = vdwg.mxu0
  %7441 = vmatpush.bf16.msra.mxu0 %v5009
  %7442 = vmatpush.bf16.msra.mxu0 %v5005
  %7443 = vmatpush.bf16.msra.mxu0 %v5001
  %7444 = vmatpush.bf16.msra.mxu0 %v4997
  %7445 = vmatpush.bf16.msra.mxu0 %v4993
  %7446 = vmatpush.bf16.msra.mxu0 %v4989
  %7447 = vmatpush.bf16.msra.mxu0 %v4985
  %7448 = vmatpush.bf16.msra.mxu0 %v4981
  %7449 = vmatmul.bf16.gmra.mxu0 %v1315
  %v7450 = vpop.f32.mrf.mxu0
  %v7451 = vadd.f32 %v7432, %v7450
  %v7452 = vpop.f32.mrf.mxu0
  %v7453 = vadd.f32 %v7434, %v7452
  %7454 = vmatmul.bf16.gmra.mxu0 %v1347
  %v7455 = vpop.f32.mrf.mxu0
  %v7456 = vadd.f32 %v7437, %v7455
  %v7457 = vpop.f32.mrf.mxu0
  %v7458 = vadd.f32 %v7439, %v7457
  %7459 = vdwg.mxu0
  %7460 = vmatpush.bf16.msra.mxu0 %v5041
  %7461 = vmatpush.bf16.msra.mxu0 %v5037
  %7462 = vmatpush.bf16.msra.mxu0 %v5033
  %7463 = vmatpush.bf16.msra.mxu0 %v5029
  %7464 = vmatpush.bf16.msra.mxu0 %v5025
  %7465 = vmatpush.bf16.msra.mxu0 %v5021
  %7466 = vmatpush.bf16.msra.mxu0 %v5017
  %7467 = vmatpush.bf16.msra.mxu0 %v5013
  %7468 = vmatmul.bf16.gmra.mxu0 %v1316
  %v7469 = vpop.f32.mrf.mxu0
  %v7470 = vadd.f32 %v7451, %v7469
  %v7471 = vpop.f32.mrf.mxu0
  %v7472 = vadd.f32 %v7453, %v7471
  %7473 = vmatmul.bf16.gmra.mxu0 %v1348
  %v7474 = vpop.f32.mrf.mxu0
  %v7475 = vadd.f32 %v7456, %v7474
  %v7476 = vpop.f32.mrf.mxu0
  %v7477 = vadd.f32 %v7458, %v7476
  %7478 = vdwg.mxu0
  %7479 = vmatpush.bf16.msra.mxu0 %v5073
  %7480 = vmatpush.bf16.msra.mxu0 %v5069
  %7481 = vmatpush.bf16.msra.mxu0 %v5065
  %7482 = vmatpush.bf16.msra.mxu0 %v5061
  %7483 = vmatpush.bf16.msra.mxu0 %v5057
  %7484 = vmatpush.bf16.msra.mxu0 %v5053
  %7485 = vmatpush.bf16.msra.mxu0 %v5049
  %7486 = vmatpush.bf16.msra.mxu0 %v5045
  %7487 = vmatmul.bf16.gmra.mxu0 %v1317
  %v7488 = vpop.f32.mrf.mxu0
  %v7489 = vadd.f32 %v7470, %v7488
  %v7490 = vpop.f32.mrf.mxu0
  %v7491 = vadd.f32 %v7472, %v7490
  %7492 = vmatmul.bf16.gmra.mxu0 %v1349
  %v7493 = vpop.f32.mrf.mxu0
  %v7494 = vadd.f32 %v7475, %v7493
  %v7495 = vpop.f32.mrf.mxu0
  %v7496 = vadd.f32 %v7477, %v7495
  %7497 = vdwg.mxu0
  %7498 = vmatpush.bf16.msra.mxu0 %v5105
  %7499 = vmatpush.bf16.msra.mxu0 %v5101
  %7500 = vmatpush.bf16.msra.mxu0 %v5097
  %7501 = vmatpush.bf16.msra.mxu0 %v5093
  %7502 = vmatpush.bf16.msra.mxu0 %v5089
  %7503 = vmatpush.bf16.msra.mxu0 %v5085
  %7504 = vmatpush.bf16.msra.mxu0 %v5081
  %7505 = vmatpush.bf16.msra.mxu0 %v5077
  %7506 = vmatmul.bf16.gmra.mxu0 %v1318
  %v7507 = vpop.f32.mrf.mxu0
  %v7508 = vadd.f32 %v7489, %v7507
  %v7509 = vpop.f32.mrf.mxu0
  %v7510 = vadd.f32 %v7491, %v7509
  %7511 = vmatmul.bf16.gmra.mxu0 %v1350
  %v7512 = vpop.f32.mrf.mxu0
  %v7513 = vadd.f32 %v7494, %v7512
  %v7514 = vpop.f32.mrf.mxu0
  %v7515 = vadd.f32 %v7496, %v7514
  %7516 = vdwg.mxu0
  %7517 = vmatpush.bf16.msra.mxu0 %v5137
  %7518 = vmatpush.bf16.msra.mxu0 %v5133
  %7519 = vmatpush.bf16.msra.mxu0 %v5129
  %7520 = vmatpush.bf16.msra.mxu0 %v5125
  %7521 = vmatpush.bf16.msra.mxu0 %v5121
  %7522 = vmatpush.bf16.msra.mxu0 %v5117
  %7523 = vmatpush.bf16.msra.mxu0 %v5113
  %7524 = vmatpush.bf16.msra.mxu0 %v5109
  %7525 = vmatmul.bf16.gmra.mxu0 %v1319
  %v7526 = vpop.f32.mrf.mxu0
  %v7527 = vadd.f32 %v7508, %v7526
  %v7528 = vpop.f32.mrf.mxu0
  %v7529 = vadd.f32 %v7510, %v7528
  %7530 = vmatmul.bf16.gmra.mxu0 %v1351
  %v7531 = vpop.f32.mrf.mxu0
  %v7532 = vadd.f32 %v7513, %v7531
  %v7533 = vpop.f32.mrf.mxu0
  %v7534 = vadd.f32 %v7515, %v7533
  %7535 = vdwg.mxu0
  %7536 = vmatpush.bf16.msra.mxu0 %v5169
  %7537 = vmatpush.bf16.msra.mxu0 %v5165
  %7538 = vmatpush.bf16.msra.mxu0 %v5161
  %7539 = vmatpush.bf16.msra.mxu0 %v5157
  %7540 = vmatpush.bf16.msra.mxu0 %v5153
  %7541 = vmatpush.bf16.msra.mxu0 %v5149
  %7542 = vmatpush.bf16.msra.mxu0 %v5145
  %7543 = vmatpush.bf16.msra.mxu0 %v5141
  %7544 = vmatmul.bf16.gmra.mxu0 %v1320
  %v7545 = vpop.f32.mrf.mxu0
  %v7546 = vadd.f32 %v7527, %v7545
  %v7547 = vpop.f32.mrf.mxu0
  %v7548 = vadd.f32 %v7529, %v7547
  %7549 = vmatmul.bf16.gmra.mxu0 %v1352
  %v7550 = vpop.f32.mrf.mxu0
  %v7551 = vadd.f32 %v7532, %v7550
  %v7552 = vpop.f32.mrf.mxu0
  %v7553 = vadd.f32 %v7534, %v7552
  %7554 = vdwg.mxu0
  %7555 = vmatpush.bf16.msra.mxu0 %v5201
  %7556 = vmatpush.bf16.msra.mxu0 %v5197
  %7557 = vmatpush.bf16.msra.mxu0 %v5193
  %7558 = vmatpush.bf16.msra.mxu0 %v5189
  %7559 = vmatpush.bf16.msra.mxu0 %v5185
  %7560 = vmatpush.bf16.msra.mxu0 %v5181
  %7561 = vmatpush.bf16.msra.mxu0 %v5177
  %7562 = vmatpush.bf16.msra.mxu0 %v5173
  %7563 = vmatmul.bf16.gmra.mxu0 %v1321
  %v7564 = vpop.f32.mrf.mxu0
  %v7565 = vadd.f32 %v7546, %v7564
  %v7566 = vpop.f32.mrf.mxu0
  %v7567 = vadd.f32 %v7548, %v7566
  %7568 = vmatmul.bf16.gmra.mxu0 %v1353
  %v7569 = vpop.f32.mrf.mxu0
  %v7570 = vadd.f32 %v7551, %v7569
  %v7571 = vpop.f32.mrf.mxu0
  %v7572 = vadd.f32 %v7553, %v7571
  %7573 = vdwg.mxu0
  %7574 = vmatpush.bf16.msra.mxu0 %v5233
  %7575 = vmatpush.bf16.msra.mxu0 %v5229
  %7576 = vmatpush.bf16.msra.mxu0 %v5225
  %7577 = vmatpush.bf16.msra.mxu0 %v5221
  %7578 = vmatpush.bf16.msra.mxu0 %v5217
  %7579 = vmatpush.bf16.msra.mxu0 %v5213
  %7580 = vmatpush.bf16.msra.mxu0 %v5209
  %7581 = vmatpush.bf16.msra.mxu0 %v5205
  %7582 = vmatmul.bf16.gmra.mxu0 %v1322
  %v7583 = vpop.f32.mrf.mxu0
  %v7584 = vadd.f32 %v7565, %v7583
  %v7585 = vpop.f32.mrf.mxu0
  %v7586 = vadd.f32 %v7567, %v7585
  %7587 = vmatmul.bf16.gmra.mxu0 %v1354
  %v7588 = vpop.f32.mrf.mxu0
  %v7589 = vadd.f32 %v7570, %v7588
  %v7590 = vpop.f32.mrf.mxu0
  %v7591 = vadd.f32 %v7572, %v7590
  %7592 = vdwg.mxu0
  %7593 = vmatpush.bf16.msra.mxu0 %v5265
  %7594 = vmatpush.bf16.msra.mxu0 %v5261
  %7595 = vmatpush.bf16.msra.mxu0 %v5257
  %7596 = vmatpush.bf16.msra.mxu0 %v5253
  %7597 = vmatpush.bf16.msra.mxu0 %v5249
  %7598 = vmatpush.bf16.msra.mxu0 %v5245
  %7599 = vmatpush.bf16.msra.mxu0 %v5241
  %7600 = vmatpush.bf16.msra.mxu0 %v5237
  %7601 = vmatmul.bf16.gmra.mxu0 %v1323
  %v7602 = vpop.f32.mrf.mxu0
  %v7603 = vadd.f32 %v7584, %v7602
  %v7604 = vpop.f32.mrf.mxu0
  %v7605 = vadd.f32 %v7586, %v7604
  %7606 = vmatmul.bf16.gmra.mxu0 %v1355
  %v7607 = vpop.f32.mrf.mxu0
  %v7608 = vadd.f32 %v7589, %v7607
  %v7609 = vpop.f32.mrf.mxu0
  %v7610 = vadd.f32 %v7591, %v7609
  %7611 = vdwg.mxu0
  %7612 = vmatpush.bf16.msra.mxu0 %v5297
  %7613 = vmatpush.bf16.msra.mxu0 %v5293
  %7614 = vmatpush.bf16.msra.mxu0 %v5289
  %7615 = vmatpush.bf16.msra.mxu0 %v5285
  %7616 = vmatpush.bf16.msra.mxu0 %v5281
  %7617 = vmatpush.bf16.msra.mxu0 %v5277
  %7618 = vmatpush.bf16.msra.mxu0 %v5273
  %7619 = vmatpush.bf16.msra.mxu0 %v5269
  %7620 = vmatmul.bf16.gmra.mxu0 %v1324
  %v7621 = vpop.f32.mrf.mxu0
  %v7622 = vadd.f32 %v7603, %v7621
  %v7623 = vpop.f32.mrf.mxu0
  %v7624 = vadd.f32 %v7605, %v7623
  %7625 = vmatmul.bf16.gmra.mxu0 %v1356
  %v7626 = vpop.f32.mrf.mxu0
  %v7627 = vadd.f32 %v7608, %v7626
  %v7628 = vpop.f32.mrf.mxu0
  %v7629 = vadd.f32 %v7610, %v7628
  %7630 = vdwg.mxu0
  %7631 = vmatpush.bf16.msra.mxu0 %v5329
  %7632 = vmatpush.bf16.msra.mxu0 %v5325
  %7633 = vmatpush.bf16.msra.mxu0 %v5321
  %7634 = vmatpush.bf16.msra.mxu0 %v5317
  %7635 = vmatpush.bf16.msra.mxu0 %v5313
  %7636 = vmatpush.bf16.msra.mxu0 %v5309
  %7637 = vmatpush.bf16.msra.mxu0 %v5305
  %7638 = vmatpush.bf16.msra.mxu0 %v5301
  %7639 = vmatmul.bf16.gmra.mxu0 %v1325
  %v7640 = vpop.f32.mrf.mxu0
  %v7641 = vadd.f32 %v7622, %v7640
  %v7642 = vpop.f32.mrf.mxu0
  %v7643 = vadd.f32 %v7624, %v7642
  %7644 = vmatmul.bf16.gmra.mxu0 %v1357
  %v7645 = vpop.f32.mrf.mxu0
  %v7646 = vadd.f32 %v7627, %v7645
  %v7647 = vpop.f32.mrf.mxu0
  %v7648 = vadd.f32 %v7629, %v7647
  %7649 = vdwg.mxu0
  %7650 = vmatpush.bf16.msra.mxu0 %v5361
  %7651 = vmatpush.bf16.msra.mxu0 %v5357
  %7652 = vmatpush.bf16.msra.mxu0 %v5353
  %7653 = vmatpush.bf16.msra.mxu0 %v5349
  %7654 = vmatpush.bf16.msra.mxu0 %v5345
  %7655 = vmatpush.bf16.msra.mxu0 %v5341
  %7656 = vmatpush.bf16.msra.mxu0 %v5337
  %7657 = vmatpush.bf16.msra.mxu0 %v5333
  %7658 = vmatmul.bf16.gmra.mxu0 %v1326
  %v7659 = vpop.f32.mrf.mxu0
  %v7660 = vadd.f32 %v7641, %v7659
  %v7661 = vpop.f32.mrf.mxu0
  %v7662 = vadd.f32 %v7643, %v7661
  %7663 = vmatmul.bf16.gmra.mxu0 %v1358
  %v7664 = vpop.f32.mrf.mxu0
  %v7665 = vadd.f32 %v7646, %v7664
  %v7666 = vpop.f32.mrf.mxu0
  %v7667 = vadd.f32 %v7648, %v7666
  %7668 = vdwg.mxu0
  %7669 = vmatpush.bf16.msra.mxu0 %v5393
  %7670 = vmatpush.bf16.msra.mxu0 %v5389
  %7671 = vmatpush.bf16.msra.mxu0 %v5385
  %7672 = vmatpush.bf16.msra.mxu0 %v5381
  %7673 = vmatpush.bf16.msra.mxu0 %v5377
  %7674 = vmatpush.bf16.msra.mxu0 %v5373
  %7675 = vmatpush.bf16.msra.mxu0 %v5369
  %7676 = vmatpush.bf16.msra.mxu0 %v5365
  %7677 = vmatmul.bf16.gmra.mxu0 %v1327
  %v7678 = vpop.f32.mrf.mxu0
  %v7679 = vadd.f32 %v7660, %v7678
  %v7680 = vpop.f32.mrf.mxu0
  %v7681 = vadd.f32 %v7662, %v7680
  %7682 = vmatmul.bf16.gmra.mxu0 %v1359
  %v7683 = vpop.f32.mrf.mxu0
  %v7684 = vadd.f32 %v7665, %v7683
  %v7685 = vpop.f32.mrf.mxu0
  %v7686 = vadd.f32 %v7667, %v7685
  %7687 = vdwg.mxu0
  %7688 = vmatpush.bf16.msra.mxu0 %v5425
  %7689 = vmatpush.bf16.msra.mxu0 %v5421
  %7690 = vmatpush.bf16.msra.mxu0 %v5417
  %7691 = vmatpush.bf16.msra.mxu0 %v5413
  %7692 = vmatpush.bf16.msra.mxu0 %v5409
  %7693 = vmatpush.bf16.msra.mxu0 %v5405
  %7694 = vmatpush.bf16.msra.mxu0 %v5401
  %7695 = vmatpush.bf16.msra.mxu0 %v5397
  %7696 = vmatmul.bf16.gmra.mxu0 %v1328
  %v7697 = vpop.f32.mrf.mxu0
  %v7698 = vadd.f32 %v7679, %v7697
  %v7699 = vpop.f32.mrf.mxu0
  %v7700 = vadd.f32 %v7681, %v7699
  %7701 = vmatmul.bf16.gmra.mxu0 %v1360
  %v7702 = vpop.f32.mrf.mxu0
  %v7703 = vadd.f32 %v7684, %v7702
  %v7704 = vpop.f32.mrf.mxu0
  %v7705 = vadd.f32 %v7686, %v7704
  %7706 = vdwg.mxu0
  %7707 = vmatpush.bf16.msra.mxu0 %v5457
  %7708 = vmatpush.bf16.msra.mxu0 %v5453
  %7709 = vmatpush.bf16.msra.mxu0 %v5449
  %7710 = vmatpush.bf16.msra.mxu0 %v5445
  %7711 = vmatpush.bf16.msra.mxu0 %v5441
  %7712 = vmatpush.bf16.msra.mxu0 %v5437
  %7713 = vmatpush.bf16.msra.mxu0 %v5433
  %7714 = vmatpush.bf16.msra.mxu0 %v5429
  %7715 = vmatmul.bf16.gmra.mxu0 %v1329
  %v7716 = vpop.f32.mrf.mxu0
  %v7717 = vadd.f32 %v7698, %v7716
  %v7718 = vpop.f32.mrf.mxu0
  %v7719 = vadd.f32 %v7700, %v7718
  %7720 = vmatmul.bf16.gmra.mxu0 %v1361
  %v7721 = vpop.f32.mrf.mxu0
  %v7722 = vadd.f32 %v7703, %v7721
  %v7723 = vpop.f32.mrf.mxu0
  %v7724 = vadd.f32 %v7705, %v7723
  %7725 = vdwg.mxu0
  %7726 = vmatpush.bf16.msra.mxu0 %v5489
  %7727 = vmatpush.bf16.msra.mxu0 %v5485
  %7728 = vmatpush.bf16.msra.mxu0 %v5481
  %7729 = vmatpush.bf16.msra.mxu0 %v5477
  %7730 = vmatpush.bf16.msra.mxu0 %v5473
  %7731 = vmatpush.bf16.msra.mxu0 %v5469
  %7732 = vmatpush.bf16.msra.mxu0 %v5465
  %7733 = vmatpush.bf16.msra.mxu0 %v5461
  %7734 = vmatmul.bf16.gmra.mxu0 %v1330
  %v7735 = vpop.f32.mrf.mxu0
  %v7736 = vadd.f32 %v7717, %v7735
  %v7737 = vpop.f32.mrf.mxu0
  %v7738 = vadd.f32 %v7719, %v7737
  %7739 = vmatmul.bf16.gmra.mxu0 %v1362
  %v7740 = vpop.f32.mrf.mxu0
  %v7741 = vadd.f32 %v7722, %v7740
  %v7742 = vpop.f32.mrf.mxu0
  %v7743 = vadd.f32 %v7724, %v7742
  %7744 = vdwg.mxu0
  %7745 = vmatpush.bf16.msra.mxu0 %v5521
  %7746 = vmatpush.bf16.msra.mxu0 %v5517
  %7747 = vmatpush.bf16.msra.mxu0 %v5513
  %7748 = vmatpush.bf16.msra.mxu0 %v5509
  %7749 = vmatpush.bf16.msra.mxu0 %v5505
  %7750 = vmatpush.bf16.msra.mxu0 %v5501
  %7751 = vmatpush.bf16.msra.mxu0 %v5497
  %7752 = vmatpush.bf16.msra.mxu0 %v5493
  %7753 = vmatmul.bf16.gmra.mxu0 %v1331
  %v7754 = vpop.f32.mrf.mxu0
  %v7755 = vadd.f32 %v7736, %v7754
  %v7756 = vpop.f32.mrf.mxu0
  %v7757 = vadd.f32 %v7738, %v7756
  %7758 = vmatmul.bf16.gmra.mxu0 %v1363
  %v7759 = vpop.f32.mrf.mxu0
  %v7760 = vadd.f32 %v7741, %v7759
  %v7761 = vpop.f32.mrf.mxu0
  %v7762 = vadd.f32 %v7743, %v7761
  %7763 = vdwg.mxu0
  %7764 = vmatpush.bf16.msra.mxu0 %v4530
  %7765 = vmatpush.bf16.msra.mxu0 %v4526
  %7766 = vmatpush.bf16.msra.mxu0 %v4522
  %7767 = vmatpush.bf16.msra.mxu0 %v4518
  %7768 = vmatpush.bf16.msra.mxu0 %v4514
  %7769 = vmatpush.bf16.msra.mxu0 %v4510
  %7770 = vmatpush.bf16.msra.mxu0 %v4506
  %7771 = vmatpush.bf16.msra.mxu0 %v4502
  %7772 = vmatmul.bf16.gmra.mxu0 %v1300
  %v7773 = vpop.f32.mrf.mxu0
  %v7774 = vadd.f32 0.0, %v7773
  %v7775 = vpop.f32.mrf.mxu0
  %v7776 = vadd.f32 0.0, %v7775
  %7777 = vmatmul.bf16.gmra.mxu0 %v1332
  %v7778 = vpop.f32.mrf.mxu0
  %v7779 = vadd.f32 0.0, %v7778
  %v7780 = vpop.f32.mrf.mxu0
  %v7781 = vadd.f32 0.0, %v7780
  %7782 = vdwg.mxu0
  %7783 = vmatpush.bf16.msra.mxu0 %v4562
  %7784 = vmatpush.bf16.msra.mxu0 %v4558
  %7785 = vmatpush.bf16.msra.mxu0 %v4554
  %7786 = vmatpush.bf16.msra.mxu0 %v4550
  %7787 = vmatpush.bf16.msra.mxu0 %v4546
  %7788 = vmatpush.bf16.msra.mxu0 %v4542
  %7789 = vmatpush.bf16.msra.mxu0 %v4538
  %7790 = vmatpush.bf16.msra.mxu0 %v4534
  %7791 = vmatmul.bf16.gmra.mxu0 %v1301
  %v7792 = vpop.f32.mrf.mxu0
  %v7793 = vadd.f32 %v7774, %v7792
  %v7794 = vpop.f32.mrf.mxu0
  %v7795 = vadd.f32 %v7776, %v7794
  %7796 = vmatmul.bf16.gmra.mxu0 %v1333
  %v7797 = vpop.f32.mrf.mxu0
  %v7798 = vadd.f32 %v7779, %v7797
  %v7799 = vpop.f32.mrf.mxu0
  %v7800 = vadd.f32 %v7781, %v7799
  %7801 = vdwg.mxu0
  %7802 = vmatpush.bf16.msra.mxu0 %v4594
  %7803 = vmatpush.bf16.msra.mxu0 %v4590
  %7804 = vmatpush.bf16.msra.mxu0 %v4586
  %7805 = vmatpush.bf16.msra.mxu0 %v4582
  %7806 = vmatpush.bf16.msra.mxu0 %v4578
  %7807 = vmatpush.bf16.msra.mxu0 %v4574
  %7808 = vmatpush.bf16.msra.mxu0 %v4570
  %7809 = vmatpush.bf16.msra.mxu0 %v4566
  %7810 = vmatmul.bf16.gmra.mxu0 %v1302
  %v7811 = vpop.f32.mrf.mxu0
  %v7812 = vadd.f32 %v7793, %v7811
  %v7813 = vpop.f32.mrf.mxu0
  %v7814 = vadd.f32 %v7795, %v7813
  %7815 = vmatmul.bf16.gmra.mxu0 %v1334
  %v7816 = vpop.f32.mrf.mxu0
  %v7817 = vadd.f32 %v7798, %v7816
  %v7818 = vpop.f32.mrf.mxu0
  %v7819 = vadd.f32 %v7800, %v7818
  %7820 = vdwg.mxu0
  %7821 = vmatpush.bf16.msra.mxu0 %v4626
  %7822 = vmatpush.bf16.msra.mxu0 %v4622
  %7823 = vmatpush.bf16.msra.mxu0 %v4618
  %7824 = vmatpush.bf16.msra.mxu0 %v4614
  %7825 = vmatpush.bf16.msra.mxu0 %v4610
  %7826 = vmatpush.bf16.msra.mxu0 %v4606
  %7827 = vmatpush.bf16.msra.mxu0 %v4602
  %7828 = vmatpush.bf16.msra.mxu0 %v4598
  %7829 = vmatmul.bf16.gmra.mxu0 %v1303
  %v7830 = vpop.f32.mrf.mxu0
  %v7831 = vadd.f32 %v7812, %v7830
  %v7832 = vpop.f32.mrf.mxu0
  %v7833 = vadd.f32 %v7814, %v7832
  %7834 = vmatmul.bf16.gmra.mxu0 %v1335
  %v7835 = vpop.f32.mrf.mxu0
  %v7836 = vadd.f32 %v7817, %v7835
  %v7837 = vpop.f32.mrf.mxu0
  %v7838 = vadd.f32 %v7819, %v7837
  %7839 = vdwg.mxu0
  %7840 = vmatpush.bf16.msra.mxu0 %v4658
  %7841 = vmatpush.bf16.msra.mxu0 %v4654
  %7842 = vmatpush.bf16.msra.mxu0 %v4650
  %7843 = vmatpush.bf16.msra.mxu0 %v4646
  %7844 = vmatpush.bf16.msra.mxu0 %v4642
  %7845 = vmatpush.bf16.msra.mxu0 %v4638
  %7846 = vmatpush.bf16.msra.mxu0 %v4634
  %7847 = vmatpush.bf16.msra.mxu0 %v4630
  %7848 = vmatmul.bf16.gmra.mxu0 %v1304
  %v7849 = vpop.f32.mrf.mxu0
  %v7850 = vadd.f32 %v7831, %v7849
  %v7851 = vpop.f32.mrf.mxu0
  %v7852 = vadd.f32 %v7833, %v7851
  %7853 = vmatmul.bf16.gmra.mxu0 %v1336
  %v7854 = vpop.f32.mrf.mxu0
  %v7855 = vadd.f32 %v7836, %v7854
  %v7856 = vpop.f32.mrf.mxu0
  %v7857 = vadd.f32 %v7838, %v7856
  %7858 = vdwg.mxu0
  %7859 = vmatpush.bf16.msra.mxu0 %v4690
  %7860 = vmatpush.bf16.msra.mxu0 %v4686
  %7861 = vmatpush.bf16.msra.mxu0 %v4682
  %7862 = vmatpush.bf16.msra.mxu0 %v4678
  %7863 = vmatpush.bf16.msra.mxu0 %v4674
  %7864 = vmatpush.bf16.msra.mxu0 %v4670
  %7865 = vmatpush.bf16.msra.mxu0 %v4666
  %7866 = vmatpush.bf16.msra.mxu0 %v4662
  %7867 = vmatmul.bf16.gmra.mxu0 %v1305
  %v7868 = vpop.f32.mrf.mxu0
  %v7869 = vadd.f32 %v7850, %v7868
  %v7870 = vpop.f32.mrf.mxu0
  %v7871 = vadd.f32 %v7852, %v7870
  %7872 = vmatmul.bf16.gmra.mxu0 %v1337
  %v7873 = vpop.f32.mrf.mxu0
  %v7874 = vadd.f32 %v7855, %v7873
  %v7875 = vpop.f32.mrf.mxu0
  %v7876 = vadd.f32 %v7857, %v7875
  %7877 = vdwg.mxu0
  %7878 = vmatpush.bf16.msra.mxu0 %v4722
  %7879 = vmatpush.bf16.msra.mxu0 %v4718
  %7880 = vmatpush.bf16.msra.mxu0 %v4714
  %7881 = vmatpush.bf16.msra.mxu0 %v4710
  %7882 = vmatpush.bf16.msra.mxu0 %v4706
  %7883 = vmatpush.bf16.msra.mxu0 %v4702
  %7884 = vmatpush.bf16.msra.mxu0 %v4698
  %7885 = vmatpush.bf16.msra.mxu0 %v4694
  %7886 = vmatmul.bf16.gmra.mxu0 %v1306
  %v7887 = vpop.f32.mrf.mxu0
  %v7888 = vadd.f32 %v7869, %v7887
  %v7889 = vpop.f32.mrf.mxu0
  %v7890 = vadd.f32 %v7871, %v7889
  %7891 = vmatmul.bf16.gmra.mxu0 %v1338
  %v7892 = vpop.f32.mrf.mxu0
  %v7893 = vadd.f32 %v7874, %v7892
  %v7894 = vpop.f32.mrf.mxu0
  %v7895 = vadd.f32 %v7876, %v7894
  %7896 = vdwg.mxu0
  %7897 = vmatpush.bf16.msra.mxu0 %v4754
  %7898 = vmatpush.bf16.msra.mxu0 %v4750
  %7899 = vmatpush.bf16.msra.mxu0 %v4746
  %7900 = vmatpush.bf16.msra.mxu0 %v4742
  %7901 = vmatpush.bf16.msra.mxu0 %v4738
  %7902 = vmatpush.bf16.msra.mxu0 %v4734
  %7903 = vmatpush.bf16.msra.mxu0 %v4730
  %7904 = vmatpush.bf16.msra.mxu0 %v4726
  %7905 = vmatmul.bf16.gmra.mxu0 %v1307
  %v7906 = vpop.f32.mrf.mxu0
  %v7907 = vadd.f32 %v7888, %v7906
  %v7908 = vpop.f32.mrf.mxu0
  %v7909 = vadd.f32 %v7890, %v7908
  %7910 = vmatmul.bf16.gmra.mxu0 %v1339
  %v7911 = vpop.f32.mrf.mxu0
  %v7912 = vadd.f32 %v7893, %v7911
  %v7913 = vpop.f32.mrf.mxu0
  %v7914 = vadd.f32 %v7895, %v7913
  %7915 = vdwg.mxu0
  %7916 = vmatpush.bf16.msra.mxu0 %v4786
  %7917 = vmatpush.bf16.msra.mxu0 %v4782
  %7918 = vmatpush.bf16.msra.mxu0 %v4778
  %7919 = vmatpush.bf16.msra.mxu0 %v4774
  %7920 = vmatpush.bf16.msra.mxu0 %v4770
  %7921 = vmatpush.bf16.msra.mxu0 %v4766
  %7922 = vmatpush.bf16.msra.mxu0 %v4762
  %7923 = vmatpush.bf16.msra.mxu0 %v4758
  %7924 = vmatmul.bf16.gmra.mxu0 %v1308
  %v7925 = vpop.f32.mrf.mxu0
  %v7926 = vadd.f32 %v7907, %v7925
  %v7927 = vpop.f32.mrf.mxu0
  %v7928 = vadd.f32 %v7909, %v7927
  %7929 = vmatmul.bf16.gmra.mxu0 %v1340
  %v7930 = vpop.f32.mrf.mxu0
  %v7931 = vadd.f32 %v7912, %v7930
  %v7932 = vpop.f32.mrf.mxu0
  %v7933 = vadd.f32 %v7914, %v7932
  %7934 = vdwg.mxu0
  %7935 = vmatpush.bf16.msra.mxu0 %v4818
  %7936 = vmatpush.bf16.msra.mxu0 %v4814
  %7937 = vmatpush.bf16.msra.mxu0 %v4810
  %7938 = vmatpush.bf16.msra.mxu0 %v4806
  %7939 = vmatpush.bf16.msra.mxu0 %v4802
  %7940 = vmatpush.bf16.msra.mxu0 %v4798
  %7941 = vmatpush.bf16.msra.mxu0 %v4794
  %7942 = vmatpush.bf16.msra.mxu0 %v4790
  %7943 = vmatmul.bf16.gmra.mxu0 %v1309
  %v7944 = vpop.f32.mrf.mxu0
  %v7945 = vadd.f32 %v7926, %v7944
  %v7946 = vpop.f32.mrf.mxu0
  %v7947 = vadd.f32 %v7928, %v7946
  %7948 = vmatmul.bf16.gmra.mxu0 %v1341
  %v7949 = vpop.f32.mrf.mxu0
  %v7950 = vadd.f32 %v7931, %v7949
  %v7951 = vpop.f32.mrf.mxu0
  %v7952 = vadd.f32 %v7933, %v7951
  %7953 = vdwg.mxu0
  %7954 = vmatpush.bf16.msra.mxu0 %v4850
  %7955 = vmatpush.bf16.msra.mxu0 %v4846
  %7956 = vmatpush.bf16.msra.mxu0 %v4842
  %7957 = vmatpush.bf16.msra.mxu0 %v4838
  %7958 = vmatpush.bf16.msra.mxu0 %v4834
  %7959 = vmatpush.bf16.msra.mxu0 %v4830
  %7960 = vmatpush.bf16.msra.mxu0 %v4826
  %7961 = vmatpush.bf16.msra.mxu0 %v4822
  %7962 = vmatmul.bf16.gmra.mxu0 %v1310
  %v7963 = vpop.f32.mrf.mxu0
  %v7964 = vadd.f32 %v7945, %v7963
  %v7965 = vpop.f32.mrf.mxu0
  %v7966 = vadd.f32 %v7947, %v7965
  %7967 = vmatmul.bf16.gmra.mxu0 %v1342
  %v7968 = vpop.f32.mrf.mxu0
  %v7969 = vadd.f32 %v7950, %v7968
  %v7970 = vpop.f32.mrf.mxu0
  %v7971 = vadd.f32 %v7952, %v7970
  %7972 = vdwg.mxu0
  %7973 = vmatpush.bf16.msra.mxu0 %v4882
  %7974 = vmatpush.bf16.msra.mxu0 %v4878
  %7975 = vmatpush.bf16.msra.mxu0 %v4874
  %7976 = vmatpush.bf16.msra.mxu0 %v4870
  %7977 = vmatpush.bf16.msra.mxu0 %v4866
  %7978 = vmatpush.bf16.msra.mxu0 %v4862
  %7979 = vmatpush.bf16.msra.mxu0 %v4858
  %7980 = vmatpush.bf16.msra.mxu0 %v4854
  %7981 = vmatmul.bf16.gmra.mxu0 %v1311
  %v7982 = vpop.f32.mrf.mxu0
  %v7983 = vadd.f32 %v7964, %v7982
  %v7984 = vpop.f32.mrf.mxu0
  %v7985 = vadd.f32 %v7966, %v7984
  %7986 = vmatmul.bf16.gmra.mxu0 %v1343
  %v7987 = vpop.f32.mrf.mxu0
  %v7988 = vadd.f32 %v7969, %v7987
  %v7989 = vpop.f32.mrf.mxu0
  %v7990 = vadd.f32 %v7971, %v7989
  %7991 = vdwg.mxu0
  %7992 = vmatpush.bf16.msra.mxu0 %v4914
  %7993 = vmatpush.bf16.msra.mxu0 %v4910
  %7994 = vmatpush.bf16.msra.mxu0 %v4906
  %7995 = vmatpush.bf16.msra.mxu0 %v4902
  %7996 = vmatpush.bf16.msra.mxu0 %v4898
  %7997 = vmatpush.bf16.msra.mxu0 %v4894
  %7998 = vmatpush.bf16.msra.mxu0 %v4890
  %7999 = vmatpush.bf16.msra.mxu0 %v4886
  %8000 = vmatmul.bf16.gmra.mxu0 %v1312
  %v8001 = vpop.f32.mrf.mxu0
  %v8002 = vadd.f32 %v7983, %v8001
  %v8003 = vpop.f32.mrf.mxu0
  %v8004 = vadd.f32 %v7985, %v8003
  %8005 = vmatmul.bf16.gmra.mxu0 %v1344
  %v8006 = vpop.f32.mrf.mxu0
  %v8007 = vadd.f32 %v7988, %v8006
  %v8008 = vpop.f32.mrf.mxu0
  %v8009 = vadd.f32 %v7990, %v8008
  %8010 = vdwg.mxu0
  %8011 = vmatpush.bf16.msra.mxu0 %v4946
  %8012 = vmatpush.bf16.msra.mxu0 %v4942
  %8013 = vmatpush.bf16.msra.mxu0 %v4938
  %8014 = vmatpush.bf16.msra.mxu0 %v4934
  %8015 = vmatpush.bf16.msra.mxu0 %v4930
  %8016 = vmatpush.bf16.msra.mxu0 %v4926
  %8017 = vmatpush.bf16.msra.mxu0 %v4922
  %8018 = vmatpush.bf16.msra.mxu0 %v4918
  %8019 = vmatmul.bf16.gmra.mxu0 %v1313
  %v8020 = vpop.f32.mrf.mxu0
  %v8021 = vadd.f32 %v8002, %v8020
  %v8022 = vpop.f32.mrf.mxu0
  %v8023 = vadd.f32 %v8004, %v8022
  %8024 = vmatmul.bf16.gmra.mxu0 %v1345
  %v8025 = vpop.f32.mrf.mxu0
  %v8026 = vadd.f32 %v8007, %v8025
  %v8027 = vpop.f32.mrf.mxu0
  %v8028 = vadd.f32 %v8009, %v8027
  %8029 = vdwg.mxu0
  %8030 = vmatpush.bf16.msra.mxu0 %v4978
  %8031 = vmatpush.bf16.msra.mxu0 %v4974
  %8032 = vmatpush.bf16.msra.mxu0 %v4970
  %8033 = vmatpush.bf16.msra.mxu0 %v4966
  %8034 = vmatpush.bf16.msra.mxu0 %v4962
  %8035 = vmatpush.bf16.msra.mxu0 %v4958
  %8036 = vmatpush.bf16.msra.mxu0 %v4954
  %8037 = vmatpush.bf16.msra.mxu0 %v4950
  %8038 = vmatmul.bf16.gmra.mxu0 %v1314
  %v8039 = vpop.f32.mrf.mxu0
  %v8040 = vadd.f32 %v8021, %v8039
  %v8041 = vpop.f32.mrf.mxu0
  %v8042 = vadd.f32 %v8023, %v8041
  %8043 = vmatmul.bf16.gmra.mxu0 %v1346
  %v8044 = vpop.f32.mrf.mxu0
  %v8045 = vadd.f32 %v8026, %v8044
  %v8046 = vpop.f32.mrf.mxu0
  %v8047 = vadd.f32 %v8028, %v8046
  %8048 = vdwg.mxu0
  %8049 = vmatpush.bf16.msra.mxu0 %v5010
  %8050 = vmatpush.bf16.msra.mxu0 %v5006
  %8051 = vmatpush.bf16.msra.mxu0 %v5002
  %8052 = vmatpush.bf16.msra.mxu0 %v4998
  %8053 = vmatpush.bf16.msra.mxu0 %v4994
  %8054 = vmatpush.bf16.msra.mxu0 %v4990
  %8055 = vmatpush.bf16.msra.mxu0 %v4986
  %8056 = vmatpush.bf16.msra.mxu0 %v4982
  %8057 = vmatmul.bf16.gmra.mxu0 %v1315
  %v8058 = vpop.f32.mrf.mxu0
  %v8059 = vadd.f32 %v8040, %v8058
  %v8060 = vpop.f32.mrf.mxu0
  %v8061 = vadd.f32 %v8042, %v8060
  %8062 = vmatmul.bf16.gmra.mxu0 %v1347
  %v8063 = vpop.f32.mrf.mxu0
  %v8064 = vadd.f32 %v8045, %v8063
  %v8065 = vpop.f32.mrf.mxu0
  %v8066 = vadd.f32 %v8047, %v8065
  %8067 = vdwg.mxu0
  %8068 = vmatpush.bf16.msra.mxu0 %v5042
  %8069 = vmatpush.bf16.msra.mxu0 %v5038
  %8070 = vmatpush.bf16.msra.mxu0 %v5034
  %8071 = vmatpush.bf16.msra.mxu0 %v5030
  %8072 = vmatpush.bf16.msra.mxu0 %v5026
  %8073 = vmatpush.bf16.msra.mxu0 %v5022
  %8074 = vmatpush.bf16.msra.mxu0 %v5018
  %8075 = vmatpush.bf16.msra.mxu0 %v5014
  %8076 = vmatmul.bf16.gmra.mxu0 %v1316
  %v8077 = vpop.f32.mrf.mxu0
  %v8078 = vadd.f32 %v8059, %v8077
  %v8079 = vpop.f32.mrf.mxu0
  %v8080 = vadd.f32 %v8061, %v8079
  %8081 = vmatmul.bf16.gmra.mxu0 %v1348
  %v8082 = vpop.f32.mrf.mxu0
  %v8083 = vadd.f32 %v8064, %v8082
  %v8084 = vpop.f32.mrf.mxu0
  %v8085 = vadd.f32 %v8066, %v8084
  %8086 = vdwg.mxu0
  %8087 = vmatpush.bf16.msra.mxu0 %v5074
  %8088 = vmatpush.bf16.msra.mxu0 %v5070
  %8089 = vmatpush.bf16.msra.mxu0 %v5066
  %8090 = vmatpush.bf16.msra.mxu0 %v5062
  %8091 = vmatpush.bf16.msra.mxu0 %v5058
  %8092 = vmatpush.bf16.msra.mxu0 %v5054
  %8093 = vmatpush.bf16.msra.mxu0 %v5050
  %8094 = vmatpush.bf16.msra.mxu0 %v5046
  %8095 = vmatmul.bf16.gmra.mxu0 %v1317
  %v8096 = vpop.f32.mrf.mxu0
  %v8097 = vadd.f32 %v8078, %v8096
  %v8098 = vpop.f32.mrf.mxu0
  %v8099 = vadd.f32 %v8080, %v8098
  %8100 = vmatmul.bf16.gmra.mxu0 %v1349
  %v8101 = vpop.f32.mrf.mxu0
  %v8102 = vadd.f32 %v8083, %v8101
  %v8103 = vpop.f32.mrf.mxu0
  %v8104 = vadd.f32 %v8085, %v8103
  %8105 = vdwg.mxu0
  %8106 = vmatpush.bf16.msra.mxu0 %v5106
  %8107 = vmatpush.bf16.msra.mxu0 %v5102
  %8108 = vmatpush.bf16.msra.mxu0 %v5098
  %8109 = vmatpush.bf16.msra.mxu0 %v5094
  %8110 = vmatpush.bf16.msra.mxu0 %v5090
  %8111 = vmatpush.bf16.msra.mxu0 %v5086
  %8112 = vmatpush.bf16.msra.mxu0 %v5082
  %8113 = vmatpush.bf16.msra.mxu0 %v5078
  %8114 = vmatmul.bf16.gmra.mxu0 %v1318
  %v8115 = vpop.f32.mrf.mxu0
  %v8116 = vadd.f32 %v8097, %v8115
  %v8117 = vpop.f32.mrf.mxu0
  %v8118 = vadd.f32 %v8099, %v8117
  %8119 = vmatmul.bf16.gmra.mxu0 %v1350
  %v8120 = vpop.f32.mrf.mxu0
  %v8121 = vadd.f32 %v8102, %v8120
  %v8122 = vpop.f32.mrf.mxu0
  %v8123 = vadd.f32 %v8104, %v8122
  %8124 = vdwg.mxu0
  %8125 = vmatpush.bf16.msra.mxu0 %v5138
  %8126 = vmatpush.bf16.msra.mxu0 %v5134
  %8127 = vmatpush.bf16.msra.mxu0 %v5130
  %8128 = vmatpush.bf16.msra.mxu0 %v5126
  %8129 = vmatpush.bf16.msra.mxu0 %v5122
  %8130 = vmatpush.bf16.msra.mxu0 %v5118
  %8131 = vmatpush.bf16.msra.mxu0 %v5114
  %8132 = vmatpush.bf16.msra.mxu0 %v5110
  %8133 = vmatmul.bf16.gmra.mxu0 %v1319
  %v8134 = vpop.f32.mrf.mxu0
  %v8135 = vadd.f32 %v8116, %v8134
  %v8136 = vpop.f32.mrf.mxu0
  %v8137 = vadd.f32 %v8118, %v8136
  %8138 = vmatmul.bf16.gmra.mxu0 %v1351
  %v8139 = vpop.f32.mrf.mxu0
  %v8140 = vadd.f32 %v8121, %v8139
  %v8141 = vpop.f32.mrf.mxu0
  %v8142 = vadd.f32 %v8123, %v8141
  %8143 = vdwg.mxu0
  %8144 = vmatpush.bf16.msra.mxu0 %v5170
  %8145 = vmatpush.bf16.msra.mxu0 %v5166
  %8146 = vmatpush.bf16.msra.mxu0 %v5162
  %8147 = vmatpush.bf16.msra.mxu0 %v5158
  %8148 = vmatpush.bf16.msra.mxu0 %v5154
  %8149 = vmatpush.bf16.msra.mxu0 %v5150
  %8150 = vmatpush.bf16.msra.mxu0 %v5146
  %8151 = vmatpush.bf16.msra.mxu0 %v5142
  %8152 = vmatmul.bf16.gmra.mxu0 %v1320
  %v8153 = vpop.f32.mrf.mxu0
  %v8154 = vadd.f32 %v8135, %v8153
  %v8155 = vpop.f32.mrf.mxu0
  %v8156 = vadd.f32 %v8137, %v8155
  %8157 = vmatmul.bf16.gmra.mxu0 %v1352
  %v8158 = vpop.f32.mrf.mxu0
  %v8159 = vadd.f32 %v8140, %v8158
  %v8160 = vpop.f32.mrf.mxu0
  %v8161 = vadd.f32 %v8142, %v8160
  %8162 = vdwg.mxu0
  %8163 = vmatpush.bf16.msra.mxu0 %v5202
  %8164 = vmatpush.bf16.msra.mxu0 %v5198
  %8165 = vmatpush.bf16.msra.mxu0 %v5194
  %8166 = vmatpush.bf16.msra.mxu0 %v5190
  %8167 = vmatpush.bf16.msra.mxu0 %v5186
  %8168 = vmatpush.bf16.msra.mxu0 %v5182
  %8169 = vmatpush.bf16.msra.mxu0 %v5178
  %8170 = vmatpush.bf16.msra.mxu0 %v5174
  %8171 = vmatmul.bf16.gmra.mxu0 %v1321
  %v8172 = vpop.f32.mrf.mxu0
  %v8173 = vadd.f32 %v8154, %v8172
  %v8174 = vpop.f32.mrf.mxu0
  %v8175 = vadd.f32 %v8156, %v8174
  %8176 = vmatmul.bf16.gmra.mxu0 %v1353
  %v8177 = vpop.f32.mrf.mxu0
  %v8178 = vadd.f32 %v8159, %v8177
  %v8179 = vpop.f32.mrf.mxu0
  %v8180 = vadd.f32 %v8161, %v8179
  %8181 = vdwg.mxu0
  %8182 = vmatpush.bf16.msra.mxu0 %v5234
  %8183 = vmatpush.bf16.msra.mxu0 %v5230
  %8184 = vmatpush.bf16.msra.mxu0 %v5226
  %8185 = vmatpush.bf16.msra.mxu0 %v5222
  %8186 = vmatpush.bf16.msra.mxu0 %v5218
  %8187 = vmatpush.bf16.msra.mxu0 %v5214
  %8188 = vmatpush.bf16.msra.mxu0 %v5210
  %8189 = vmatpush.bf16.msra.mxu0 %v5206
  %8190 = vmatmul.bf16.gmra.mxu0 %v1322
  %v8191 = vpop.f32.mrf.mxu0
  %v8192 = vadd.f32 %v8173, %v8191
  %v8193 = vpop.f32.mrf.mxu0
  %v8194 = vadd.f32 %v8175, %v8193
  %8195 = vmatmul.bf16.gmra.mxu0 %v1354
  %v8196 = vpop.f32.mrf.mxu0
  %v8197 = vadd.f32 %v8178, %v8196
  %v8198 = vpop.f32.mrf.mxu0
  %v8199 = vadd.f32 %v8180, %v8198
  %8200 = vdwg.mxu0
  %8201 = vmatpush.bf16.msra.mxu0 %v5266
  %8202 = vmatpush.bf16.msra.mxu0 %v5262
  %8203 = vmatpush.bf16.msra.mxu0 %v5258
  %8204 = vmatpush.bf16.msra.mxu0 %v5254
  %8205 = vmatpush.bf16.msra.mxu0 %v5250
  %8206 = vmatpush.bf16.msra.mxu0 %v5246
  %8207 = vmatpush.bf16.msra.mxu0 %v5242
  %8208 = vmatpush.bf16.msra.mxu0 %v5238
  %8209 = vmatmul.bf16.gmra.mxu0 %v1323
  %v8210 = vpop.f32.mrf.mxu0
  %v8211 = vadd.f32 %v8192, %v8210
  %v8212 = vpop.f32.mrf.mxu0
  %v8213 = vadd.f32 %v8194, %v8212
  %8214 = vmatmul.bf16.gmra.mxu0 %v1355
  %v8215 = vpop.f32.mrf.mxu0
  %v8216 = vadd.f32 %v8197, %v8215
  %v8217 = vpop.f32.mrf.mxu0
  %v8218 = vadd.f32 %v8199, %v8217
  %8219 = vdwg.mxu0
  %8220 = vmatpush.bf16.msra.mxu0 %v5298
  %8221 = vmatpush.bf16.msra.mxu0 %v5294
  %8222 = vmatpush.bf16.msra.mxu0 %v5290
  %8223 = vmatpush.bf16.msra.mxu0 %v5286
  %8224 = vmatpush.bf16.msra.mxu0 %v5282
  %8225 = vmatpush.bf16.msra.mxu0 %v5278
  %8226 = vmatpush.bf16.msra.mxu0 %v5274
  %8227 = vmatpush.bf16.msra.mxu0 %v5270
  %8228 = vmatmul.bf16.gmra.mxu0 %v1324
  %v8229 = vpop.f32.mrf.mxu0
  %v8230 = vadd.f32 %v8211, %v8229
  %v8231 = vpop.f32.mrf.mxu0
  %v8232 = vadd.f32 %v8213, %v8231
  %8233 = vmatmul.bf16.gmra.mxu0 %v1356
  %v8234 = vpop.f32.mrf.mxu0
  %v8235 = vadd.f32 %v8216, %v8234
  %v8236 = vpop.f32.mrf.mxu0
  %v8237 = vadd.f32 %v8218, %v8236
  %8238 = vdwg.mxu0
  %8239 = vmatpush.bf16.msra.mxu0 %v5330
  %8240 = vmatpush.bf16.msra.mxu0 %v5326
  %8241 = vmatpush.bf16.msra.mxu0 %v5322
  %8242 = vmatpush.bf16.msra.mxu0 %v5318
  %8243 = vmatpush.bf16.msra.mxu0 %v5314
  %8244 = vmatpush.bf16.msra.mxu0 %v5310
  %8245 = vmatpush.bf16.msra.mxu0 %v5306
  %8246 = vmatpush.bf16.msra.mxu0 %v5302
  %8247 = vmatmul.bf16.gmra.mxu0 %v1325
  %v8248 = vpop.f32.mrf.mxu0
  %v8249 = vadd.f32 %v8230, %v8248
  %v8250 = vpop.f32.mrf.mxu0
  %v8251 = vadd.f32 %v8232, %v8250
  %8252 = vmatmul.bf16.gmra.mxu0 %v1357
  %v8253 = vpop.f32.mrf.mxu0
  %v8254 = vadd.f32 %v8235, %v8253
  %v8255 = vpop.f32.mrf.mxu0
  %v8256 = vadd.f32 %v8237, %v8255
  %8257 = vdwg.mxu0
  %8258 = vmatpush.bf16.msra.mxu0 %v5362
  %8259 = vmatpush.bf16.msra.mxu0 %v5358
  %8260 = vmatpush.bf16.msra.mxu0 %v5354
  %8261 = vmatpush.bf16.msra.mxu0 %v5350
  %8262 = vmatpush.bf16.msra.mxu0 %v5346
  %8263 = vmatpush.bf16.msra.mxu0 %v5342
  %8264 = vmatpush.bf16.msra.mxu0 %v5338
  %8265 = vmatpush.bf16.msra.mxu0 %v5334
  %8266 = vmatmul.bf16.gmra.mxu0 %v1326
  %v8267 = vpop.f32.mrf.mxu0
  %v8268 = vadd.f32 %v8249, %v8267
  %v8269 = vpop.f32.mrf.mxu0
  %v8270 = vadd.f32 %v8251, %v8269
  %8271 = vmatmul.bf16.gmra.mxu0 %v1358
  %v8272 = vpop.f32.mrf.mxu0
  %v8273 = vadd.f32 %v8254, %v8272
  %v8274 = vpop.f32.mrf.mxu0
  %v8275 = vadd.f32 %v8256, %v8274
  %8276 = vdwg.mxu0
  %8277 = vmatpush.bf16.msra.mxu0 %v5394
  %8278 = vmatpush.bf16.msra.mxu0 %v5390
  %8279 = vmatpush.bf16.msra.mxu0 %v5386
  %8280 = vmatpush.bf16.msra.mxu0 %v5382
  %8281 = vmatpush.bf16.msra.mxu0 %v5378
  %8282 = vmatpush.bf16.msra.mxu0 %v5374
  %8283 = vmatpush.bf16.msra.mxu0 %v5370
  %8284 = vmatpush.bf16.msra.mxu0 %v5366
  %8285 = vmatmul.bf16.gmra.mxu0 %v1327
  %v8286 = vpop.f32.mrf.mxu0
  %v8287 = vadd.f32 %v8268, %v8286
  %v8288 = vpop.f32.mrf.mxu0
  %v8289 = vadd.f32 %v8270, %v8288
  %8290 = vmatmul.bf16.gmra.mxu0 %v1359
  %v8291 = vpop.f32.mrf.mxu0
  %v8292 = vadd.f32 %v8273, %v8291
  %v8293 = vpop.f32.mrf.mxu0
  %v8294 = vadd.f32 %v8275, %v8293
  %8295 = vdwg.mxu0
  %8296 = vmatpush.bf16.msra.mxu0 %v5426
  %8297 = vmatpush.bf16.msra.mxu0 %v5422
  %8298 = vmatpush.bf16.msra.mxu0 %v5418
  %8299 = vmatpush.bf16.msra.mxu0 %v5414
  %8300 = vmatpush.bf16.msra.mxu0 %v5410
  %8301 = vmatpush.bf16.msra.mxu0 %v5406
  %8302 = vmatpush.bf16.msra.mxu0 %v5402
  %8303 = vmatpush.bf16.msra.mxu0 %v5398
  %8304 = vmatmul.bf16.gmra.mxu0 %v1328
  %v8305 = vpop.f32.mrf.mxu0
  %v8306 = vadd.f32 %v8287, %v8305
  %v8307 = vpop.f32.mrf.mxu0
  %v8308 = vadd.f32 %v8289, %v8307
  %8309 = vmatmul.bf16.gmra.mxu0 %v1360
  %v8310 = vpop.f32.mrf.mxu0
  %v8311 = vadd.f32 %v8292, %v8310
  %v8312 = vpop.f32.mrf.mxu0
  %v8313 = vadd.f32 %v8294, %v8312
  %8314 = vdwg.mxu0
  %8315 = vmatpush.bf16.msra.mxu0 %v5458
  %8316 = vmatpush.bf16.msra.mxu0 %v5454
  %8317 = vmatpush.bf16.msra.mxu0 %v5450
  %8318 = vmatpush.bf16.msra.mxu0 %v5446
  %8319 = vmatpush.bf16.msra.mxu0 %v5442
  %8320 = vmatpush.bf16.msra.mxu0 %v5438
  %8321 = vmatpush.bf16.msra.mxu0 %v5434
  %8322 = vmatpush.bf16.msra.mxu0 %v5430
  %8323 = vmatmul.bf16.gmra.mxu0 %v1329
  %v8324 = vpop.f32.mrf.mxu0
  %v8325 = vadd.f32 %v8306, %v8324
  %v8326 = vpop.f32.mrf.mxu0
  %v8327 = vadd.f32 %v8308, %v8326
  %8328 = vmatmul.bf16.gmra.mxu0 %v1361
  %v8329 = vpop.f32.mrf.mxu0
  %v8330 = vadd.f32 %v8311, %v8329
  %v8331 = vpop.f32.mrf.mxu0
  %v8332 = vadd.f32 %v8313, %v8331
  %8333 = vdwg.mxu0
  %8334 = vmatpush.bf16.msra.mxu0 %v5490
  %8335 = vmatpush.bf16.msra.mxu0 %v5486
  %8336 = vmatpush.bf16.msra.mxu0 %v5482
  %8337 = vmatpush.bf16.msra.mxu0 %v5478
  %8338 = vmatpush.bf16.msra.mxu0 %v5474
  %8339 = vmatpush.bf16.msra.mxu0 %v5470
  %8340 = vmatpush.bf16.msra.mxu0 %v5466
  %8341 = vmatpush.bf16.msra.mxu0 %v5462
  %8342 = vmatmul.bf16.gmra.mxu0 %v1330
  %v8343 = vpop.f32.mrf.mxu0
  %v8344 = vadd.f32 %v8325, %v8343
  %v8345 = vpop.f32.mrf.mxu0
  %v8346 = vadd.f32 %v8327, %v8345
  %8347 = vmatmul.bf16.gmra.mxu0 %v1362
  %v8348 = vpop.f32.mrf.mxu0
  %v8349 = vadd.f32 %v8330, %v8348
  %v8350 = vpop.f32.mrf.mxu0
  %v8351 = vadd.f32 %v8332, %v8350
  %8352 = vdwg.mxu0
  %8353 = vmatpush.bf16.msra.mxu0 %v5522
  %8354 = vmatpush.bf16.msra.mxu0 %v5518
  %8355 = vmatpush.bf16.msra.mxu0 %v5514
  %8356 = vmatpush.bf16.msra.mxu0 %v5510
  %8357 = vmatpush.bf16.msra.mxu0 %v5506
  %8358 = vmatpush.bf16.msra.mxu0 %v5502
  %8359 = vmatpush.bf16.msra.mxu0 %v5498
  %8360 = vmatpush.bf16.msra.mxu0 %v5494
  %8361 = vmatmul.bf16.gmra.mxu0 %v1331
  %v8362 = vpop.f32.mrf.mxu0
  %v8363 = vadd.f32 %v8344, %v8362
  %v8364 = vpop.f32.mrf.mxu0
  %v8365 = vadd.f32 %v8346, %v8364
  %8366 = vmatmul.bf16.gmra.mxu0 %v1363
  %v8367 = vpop.f32.mrf.mxu0
  %v8368 = vadd.f32 %v8349, %v8367
  %v8369 = vpop.f32.mrf.mxu0
  %v8370 = vadd.f32 %v8351, %v8369
  %8371 = vdwg.mxu0
  %8372 = vmatpush.bf16.msra.mxu0 %v4531
  %8373 = vmatpush.bf16.msra.mxu0 %v4527
  %8374 = vmatpush.bf16.msra.mxu0 %v4523
  %8375 = vmatpush.bf16.msra.mxu0 %v4519
  %8376 = vmatpush.bf16.msra.mxu0 %v4515
  %8377 = vmatpush.bf16.msra.mxu0 %v4511
  %8378 = vmatpush.bf16.msra.mxu0 %v4507
  %8379 = vmatpush.bf16.msra.mxu0 %v4503
  %8380 = vmatmul.bf16.gmra.mxu0 %v1300
  %v8381 = vpop.f32.mrf.mxu0
  %v8382 = vadd.f32 0.0, %v8381
  %v8383 = vpop.f32.mrf.mxu0
  %v8384 = vadd.f32 0.0, %v8383
  %8385 = vmatmul.bf16.gmra.mxu0 %v1332
  %v8386 = vpop.f32.mrf.mxu0
  %v8387 = vadd.f32 0.0, %v8386
  %v8388 = vpop.f32.mrf.mxu0
  %v8389 = vadd.f32 0.0, %v8388
  %8390 = vdwg.mxu0
  %8391 = vmatpush.bf16.msra.mxu0 %v4563
  %8392 = vmatpush.bf16.msra.mxu0 %v4559
  %8393 = vmatpush.bf16.msra.mxu0 %v4555
  %8394 = vmatpush.bf16.msra.mxu0 %v4551
  %8395 = vmatpush.bf16.msra.mxu0 %v4547
  %8396 = vmatpush.bf16.msra.mxu0 %v4543
  %8397 = vmatpush.bf16.msra.mxu0 %v4539
  %8398 = vmatpush.bf16.msra.mxu0 %v4535
  %8399 = vmatmul.bf16.gmra.mxu0 %v1301
  %v8400 = vpop.f32.mrf.mxu0
  %v8401 = vadd.f32 %v8382, %v8400
  %v8402 = vpop.f32.mrf.mxu0
  %v8403 = vadd.f32 %v8384, %v8402
  %8404 = vmatmul.bf16.gmra.mxu0 %v1333
  %v8405 = vpop.f32.mrf.mxu0
  %v8406 = vadd.f32 %v8387, %v8405
  %v8407 = vpop.f32.mrf.mxu0
  %v8408 = vadd.f32 %v8389, %v8407
  %8409 = vdwg.mxu0
  %8410 = vmatpush.bf16.msra.mxu0 %v4595
  %8411 = vmatpush.bf16.msra.mxu0 %v4591
  %8412 = vmatpush.bf16.msra.mxu0 %v4587
  %8413 = vmatpush.bf16.msra.mxu0 %v4583
  %8414 = vmatpush.bf16.msra.mxu0 %v4579
  %8415 = vmatpush.bf16.msra.mxu0 %v4575
  %8416 = vmatpush.bf16.msra.mxu0 %v4571
  %8417 = vmatpush.bf16.msra.mxu0 %v4567
  %8418 = vmatmul.bf16.gmra.mxu0 %v1302
  %v8419 = vpop.f32.mrf.mxu0
  %v8420 = vadd.f32 %v8401, %v8419
  %v8421 = vpop.f32.mrf.mxu0
  %v8422 = vadd.f32 %v8403, %v8421
  %8423 = vmatmul.bf16.gmra.mxu0 %v1334
  %v8424 = vpop.f32.mrf.mxu0
  %v8425 = vadd.f32 %v8406, %v8424
  %v8426 = vpop.f32.mrf.mxu0
  %v8427 = vadd.f32 %v8408, %v8426
  %8428 = vdwg.mxu0
  %8429 = vmatpush.bf16.msra.mxu0 %v4627
  %8430 = vmatpush.bf16.msra.mxu0 %v4623
  %8431 = vmatpush.bf16.msra.mxu0 %v4619
  %8432 = vmatpush.bf16.msra.mxu0 %v4615
  %8433 = vmatpush.bf16.msra.mxu0 %v4611
  %8434 = vmatpush.bf16.msra.mxu0 %v4607
  %8435 = vmatpush.bf16.msra.mxu0 %v4603
  %8436 = vmatpush.bf16.msra.mxu0 %v4599
  %8437 = vmatmul.bf16.gmra.mxu0 %v1303
  %v8438 = vpop.f32.mrf.mxu0
  %v8439 = vadd.f32 %v8420, %v8438
  %v8440 = vpop.f32.mrf.mxu0
  %v8441 = vadd.f32 %v8422, %v8440
  %8442 = vmatmul.bf16.gmra.mxu0 %v1335
  %v8443 = vpop.f32.mrf.mxu0
  %v8444 = vadd.f32 %v8425, %v8443
  %v8445 = vpop.f32.mrf.mxu0
  %v8446 = vadd.f32 %v8427, %v8445
  %8447 = vdwg.mxu0
  %8448 = vmatpush.bf16.msra.mxu0 %v4659
  %8449 = vmatpush.bf16.msra.mxu0 %v4655
  %8450 = vmatpush.bf16.msra.mxu0 %v4651
  %8451 = vmatpush.bf16.msra.mxu0 %v4647
  %8452 = vmatpush.bf16.msra.mxu0 %v4643
  %8453 = vmatpush.bf16.msra.mxu0 %v4639
  %8454 = vmatpush.bf16.msra.mxu0 %v4635
  %8455 = vmatpush.bf16.msra.mxu0 %v4631
  %8456 = vmatmul.bf16.gmra.mxu0 %v1304
  %v8457 = vpop.f32.mrf.mxu0
  %v8458 = vadd.f32 %v8439, %v8457
  %v8459 = vpop.f32.mrf.mxu0
  %v8460 = vadd.f32 %v8441, %v8459
  %8461 = vmatmul.bf16.gmra.mxu0 %v1336
  %v8462 = vpop.f32.mrf.mxu0
  %v8463 = vadd.f32 %v8444, %v8462
  %v8464 = vpop.f32.mrf.mxu0
  %v8465 = vadd.f32 %v8446, %v8464
  %8466 = vdwg.mxu0
  %8467 = vmatpush.bf16.msra.mxu0 %v4691
  %8468 = vmatpush.bf16.msra.mxu0 %v4687
  %8469 = vmatpush.bf16.msra.mxu0 %v4683
  %8470 = vmatpush.bf16.msra.mxu0 %v4679
  %8471 = vmatpush.bf16.msra.mxu0 %v4675
  %8472 = vmatpush.bf16.msra.mxu0 %v4671
  %8473 = vmatpush.bf16.msra.mxu0 %v4667
  %8474 = vmatpush.bf16.msra.mxu0 %v4663
  %8475 = vmatmul.bf16.gmra.mxu0 %v1305
  %v8476 = vpop.f32.mrf.mxu0
  %v8477 = vadd.f32 %v8458, %v8476
  %v8478 = vpop.f32.mrf.mxu0
  %v8479 = vadd.f32 %v8460, %v8478
  %8480 = vmatmul.bf16.gmra.mxu0 %v1337
  %v8481 = vpop.f32.mrf.mxu0
  %v8482 = vadd.f32 %v8463, %v8481
  %v8483 = vpop.f32.mrf.mxu0
  %v8484 = vadd.f32 %v8465, %v8483
  %8485 = vdwg.mxu0
  %8486 = vmatpush.bf16.msra.mxu0 %v4723
  %8487 = vmatpush.bf16.msra.mxu0 %v4719
  %8488 = vmatpush.bf16.msra.mxu0 %v4715
  %8489 = vmatpush.bf16.msra.mxu0 %v4711
  %8490 = vmatpush.bf16.msra.mxu0 %v4707
  %8491 = vmatpush.bf16.msra.mxu0 %v4703
  %8492 = vmatpush.bf16.msra.mxu0 %v4699
  %8493 = vmatpush.bf16.msra.mxu0 %v4695
  %8494 = vmatmul.bf16.gmra.mxu0 %v1306
  %v8495 = vpop.f32.mrf.mxu0
  %v8496 = vadd.f32 %v8477, %v8495
  %v8497 = vpop.f32.mrf.mxu0
  %v8498 = vadd.f32 %v8479, %v8497
  %8499 = vmatmul.bf16.gmra.mxu0 %v1338
  %v8500 = vpop.f32.mrf.mxu0
  %v8501 = vadd.f32 %v8482, %v8500
  %v8502 = vpop.f32.mrf.mxu0
  %v8503 = vadd.f32 %v8484, %v8502
  %8504 = vdwg.mxu0
  %8505 = vmatpush.bf16.msra.mxu0 %v4755
  %8506 = vmatpush.bf16.msra.mxu0 %v4751
  %8507 = vmatpush.bf16.msra.mxu0 %v4747
  %8508 = vmatpush.bf16.msra.mxu0 %v4743
  %8509 = vmatpush.bf16.msra.mxu0 %v4739
  %8510 = vmatpush.bf16.msra.mxu0 %v4735
  %8511 = vmatpush.bf16.msra.mxu0 %v4731
  %8512 = vmatpush.bf16.msra.mxu0 %v4727
  %8513 = vmatmul.bf16.gmra.mxu0 %v1307
  %v8514 = vpop.f32.mrf.mxu0
  %v8515 = vadd.f32 %v8496, %v8514
  %v8516 = vpop.f32.mrf.mxu0
  %v8517 = vadd.f32 %v8498, %v8516
  %8518 = vmatmul.bf16.gmra.mxu0 %v1339
  %v8519 = vpop.f32.mrf.mxu0
  %v8520 = vadd.f32 %v8501, %v8519
  %v8521 = vpop.f32.mrf.mxu0
  %v8522 = vadd.f32 %v8503, %v8521
  %8523 = vdwg.mxu0
  %8524 = vmatpush.bf16.msra.mxu0 %v4787
  %8525 = vmatpush.bf16.msra.mxu0 %v4783
  %8526 = vmatpush.bf16.msra.mxu0 %v4779
  %8527 = vmatpush.bf16.msra.mxu0 %v4775
  %8528 = vmatpush.bf16.msra.mxu0 %v4771
  %8529 = vmatpush.bf16.msra.mxu0 %v4767
  %8530 = vmatpush.bf16.msra.mxu0 %v4763
  %8531 = vmatpush.bf16.msra.mxu0 %v4759
  %8532 = vmatmul.bf16.gmra.mxu0 %v1308
  %v8533 = vpop.f32.mrf.mxu0
  %v8534 = vadd.f32 %v8515, %v8533
  %v8535 = vpop.f32.mrf.mxu0
  %v8536 = vadd.f32 %v8517, %v8535
  %8537 = vmatmul.bf16.gmra.mxu0 %v1340
  %v8538 = vpop.f32.mrf.mxu0
  %v8539 = vadd.f32 %v8520, %v8538
  %v8540 = vpop.f32.mrf.mxu0
  %v8541 = vadd.f32 %v8522, %v8540
  %8542 = vdwg.mxu0
  %8543 = vmatpush.bf16.msra.mxu0 %v4819
  %8544 = vmatpush.bf16.msra.mxu0 %v4815
  %8545 = vmatpush.bf16.msra.mxu0 %v4811
  %8546 = vmatpush.bf16.msra.mxu0 %v4807
  %8547 = vmatpush.bf16.msra.mxu0 %v4803
  %8548 = vmatpush.bf16.msra.mxu0 %v4799
  %8549 = vmatpush.bf16.msra.mxu0 %v4795
  %8550 = vmatpush.bf16.msra.mxu0 %v4791
  %8551 = vmatmul.bf16.gmra.mxu0 %v1309
  %v8552 = vpop.f32.mrf.mxu0
  %v8553 = vadd.f32 %v8534, %v8552
  %v8554 = vpop.f32.mrf.mxu0
  %v8555 = vadd.f32 %v8536, %v8554
  %8556 = vmatmul.bf16.gmra.mxu0 %v1341
  %v8557 = vpop.f32.mrf.mxu0
  %v8558 = vadd.f32 %v8539, %v8557
  %v8559 = vpop.f32.mrf.mxu0
  %v8560 = vadd.f32 %v8541, %v8559
  %8561 = vdwg.mxu0
  %8562 = vmatpush.bf16.msra.mxu0 %v4851
  %8563 = vmatpush.bf16.msra.mxu0 %v4847
  %8564 = vmatpush.bf16.msra.mxu0 %v4843
  %8565 = vmatpush.bf16.msra.mxu0 %v4839
  %8566 = vmatpush.bf16.msra.mxu0 %v4835
  %8567 = vmatpush.bf16.msra.mxu0 %v4831
  %8568 = vmatpush.bf16.msra.mxu0 %v4827
  %8569 = vmatpush.bf16.msra.mxu0 %v4823
  %8570 = vmatmul.bf16.gmra.mxu0 %v1310
  %v8571 = vpop.f32.mrf.mxu0
  %v8572 = vadd.f32 %v8553, %v8571
  %v8573 = vpop.f32.mrf.mxu0
  %v8574 = vadd.f32 %v8555, %v8573
  %8575 = vmatmul.bf16.gmra.mxu0 %v1342
  %v8576 = vpop.f32.mrf.mxu0
  %v8577 = vadd.f32 %v8558, %v8576
  %v8578 = vpop.f32.mrf.mxu0
  %v8579 = vadd.f32 %v8560, %v8578
  %8580 = vdwg.mxu0
  %8581 = vmatpush.bf16.msra.mxu0 %v4883
  %8582 = vmatpush.bf16.msra.mxu0 %v4879
  %8583 = vmatpush.bf16.msra.mxu0 %v4875
  %8584 = vmatpush.bf16.msra.mxu0 %v4871
  %8585 = vmatpush.bf16.msra.mxu0 %v4867
  %8586 = vmatpush.bf16.msra.mxu0 %v4863
  %8587 = vmatpush.bf16.msra.mxu0 %v4859
  %8588 = vmatpush.bf16.msra.mxu0 %v4855
  %8589 = vmatmul.bf16.gmra.mxu0 %v1311
  %v8590 = vpop.f32.mrf.mxu0
  %v8591 = vadd.f32 %v8572, %v8590
  %v8592 = vpop.f32.mrf.mxu0
  %v8593 = vadd.f32 %v8574, %v8592
  %8594 = vmatmul.bf16.gmra.mxu0 %v1343
  %v8595 = vpop.f32.mrf.mxu0
  %v8596 = vadd.f32 %v8577, %v8595
  %v8597 = vpop.f32.mrf.mxu0
  %v8598 = vadd.f32 %v8579, %v8597
  %8599 = vdwg.mxu0
  %8600 = vmatpush.bf16.msra.mxu0 %v4915
  %8601 = vmatpush.bf16.msra.mxu0 %v4911
  %8602 = vmatpush.bf16.msra.mxu0 %v4907
  %8603 = vmatpush.bf16.msra.mxu0 %v4903
  %8604 = vmatpush.bf16.msra.mxu0 %v4899
  %8605 = vmatpush.bf16.msra.mxu0 %v4895
  %8606 = vmatpush.bf16.msra.mxu0 %v4891
  %8607 = vmatpush.bf16.msra.mxu0 %v4887
  %8608 = vmatmul.bf16.gmra.mxu0 %v1312
  %v8609 = vpop.f32.mrf.mxu0
  %v8610 = vadd.f32 %v8591, %v8609
  %v8611 = vpop.f32.mrf.mxu0
  %v8612 = vadd.f32 %v8593, %v8611
  %8613 = vmatmul.bf16.gmra.mxu0 %v1344
  %v8614 = vpop.f32.mrf.mxu0
  %v8615 = vadd.f32 %v8596, %v8614
  %v8616 = vpop.f32.mrf.mxu0
  %v8617 = vadd.f32 %v8598, %v8616
  %8618 = vdwg.mxu0
  %8619 = vmatpush.bf16.msra.mxu0 %v4947
  %8620 = vmatpush.bf16.msra.mxu0 %v4943
  %8621 = vmatpush.bf16.msra.mxu0 %v4939
  %8622 = vmatpush.bf16.msra.mxu0 %v4935
  %8623 = vmatpush.bf16.msra.mxu0 %v4931
  %8624 = vmatpush.bf16.msra.mxu0 %v4927
  %8625 = vmatpush.bf16.msra.mxu0 %v4923
  %8626 = vmatpush.bf16.msra.mxu0 %v4919
  %8627 = vmatmul.bf16.gmra.mxu0 %v1313
  %v8628 = vpop.f32.mrf.mxu0
  %v8629 = vadd.f32 %v8610, %v8628
  %v8630 = vpop.f32.mrf.mxu0
  %v8631 = vadd.f32 %v8612, %v8630
  %8632 = vmatmul.bf16.gmra.mxu0 %v1345
  %v8633 = vpop.f32.mrf.mxu0
  %v8634 = vadd.f32 %v8615, %v8633
  %v8635 = vpop.f32.mrf.mxu0
  %v8636 = vadd.f32 %v8617, %v8635
  %8637 = vdwg.mxu0
  %8638 = vmatpush.bf16.msra.mxu0 %v4979
  %8639 = vmatpush.bf16.msra.mxu0 %v4975
  %8640 = vmatpush.bf16.msra.mxu0 %v4971
  %8641 = vmatpush.bf16.msra.mxu0 %v4967
  %8642 = vmatpush.bf16.msra.mxu0 %v4963
  %8643 = vmatpush.bf16.msra.mxu0 %v4959
  %8644 = vmatpush.bf16.msra.mxu0 %v4955
  %8645 = vmatpush.bf16.msra.mxu0 %v4951
  %8646 = vmatmul.bf16.gmra.mxu0 %v1314
  %v8647 = vpop.f32.mrf.mxu0
  %v8648 = vadd.f32 %v8629, %v8647
  %v8649 = vpop.f32.mrf.mxu0
  %v8650 = vadd.f32 %v8631, %v8649
  %8651 = vmatmul.bf16.gmra.mxu0 %v1346
  %v8652 = vpop.f32.mrf.mxu0
  %v8653 = vadd.f32 %v8634, %v8652
  %v8654 = vpop.f32.mrf.mxu0
  %v8655 = vadd.f32 %v8636, %v8654
  %8656 = vdwg.mxu0
  %8657 = vmatpush.bf16.msra.mxu0 %v5011
  %8658 = vmatpush.bf16.msra.mxu0 %v5007
  %8659 = vmatpush.bf16.msra.mxu0 %v5003
  %8660 = vmatpush.bf16.msra.mxu0 %v4999
  %8661 = vmatpush.bf16.msra.mxu0 %v4995
  %8662 = vmatpush.bf16.msra.mxu0 %v4991
  %8663 = vmatpush.bf16.msra.mxu0 %v4987
  %8664 = vmatpush.bf16.msra.mxu0 %v4983
  %8665 = vmatmul.bf16.gmra.mxu0 %v1315
  %v8666 = vpop.f32.mrf.mxu0
  %v8667 = vadd.f32 %v8648, %v8666
  %v8668 = vpop.f32.mrf.mxu0
  %v8669 = vadd.f32 %v8650, %v8668
  %8670 = vmatmul.bf16.gmra.mxu0 %v1347
  %v8671 = vpop.f32.mrf.mxu0
  %v8672 = vadd.f32 %v8653, %v8671
  %v8673 = vpop.f32.mrf.mxu0
  %v8674 = vadd.f32 %v8655, %v8673
  %8675 = vdwg.mxu0
  %8676 = vmatpush.bf16.msra.mxu0 %v5043
  %8677 = vmatpush.bf16.msra.mxu0 %v5039
  %8678 = vmatpush.bf16.msra.mxu0 %v5035
  %8679 = vmatpush.bf16.msra.mxu0 %v5031
  %8680 = vmatpush.bf16.msra.mxu0 %v5027
  %8681 = vmatpush.bf16.msra.mxu0 %v5023
  %8682 = vmatpush.bf16.msra.mxu0 %v5019
  %8683 = vmatpush.bf16.msra.mxu0 %v5015
  %8684 = vmatmul.bf16.gmra.mxu0 %v1316
  %v8685 = vpop.f32.mrf.mxu0
  %v8686 = vadd.f32 %v8667, %v8685
  %v8687 = vpop.f32.mrf.mxu0
  %v8688 = vadd.f32 %v8669, %v8687
  %8689 = vmatmul.bf16.gmra.mxu0 %v1348
  %v8690 = vpop.f32.mrf.mxu0
  %v8691 = vadd.f32 %v8672, %v8690
  %v8692 = vpop.f32.mrf.mxu0
  %v8693 = vadd.f32 %v8674, %v8692
  %8694 = vdwg.mxu0
  %8695 = vmatpush.bf16.msra.mxu0 %v5075
  %8696 = vmatpush.bf16.msra.mxu0 %v5071
  %8697 = vmatpush.bf16.msra.mxu0 %v5067
  %8698 = vmatpush.bf16.msra.mxu0 %v5063
  %8699 = vmatpush.bf16.msra.mxu0 %v5059
  %8700 = vmatpush.bf16.msra.mxu0 %v5055
  %8701 = vmatpush.bf16.msra.mxu0 %v5051
  %8702 = vmatpush.bf16.msra.mxu0 %v5047
  %8703 = vmatmul.bf16.gmra.mxu0 %v1317
  %v8704 = vpop.f32.mrf.mxu0
  %v8705 = vadd.f32 %v8686, %v8704
  %v8706 = vpop.f32.mrf.mxu0
  %v8707 = vadd.f32 %v8688, %v8706
  %8708 = vmatmul.bf16.gmra.mxu0 %v1349
  %v8709 = vpop.f32.mrf.mxu0
  %v8710 = vadd.f32 %v8691, %v8709
  %v8711 = vpop.f32.mrf.mxu0
  %v8712 = vadd.f32 %v8693, %v8711
  %8713 = vdwg.mxu0
  %8714 = vmatpush.bf16.msra.mxu0 %v5107
  %8715 = vmatpush.bf16.msra.mxu0 %v5103
  %8716 = vmatpush.bf16.msra.mxu0 %v5099
  %8717 = vmatpush.bf16.msra.mxu0 %v5095
  %8718 = vmatpush.bf16.msra.mxu0 %v5091
  %8719 = vmatpush.bf16.msra.mxu0 %v5087
  %8720 = vmatpush.bf16.msra.mxu0 %v5083
  %8721 = vmatpush.bf16.msra.mxu0 %v5079
  %8722 = vmatmul.bf16.gmra.mxu0 %v1318
  %v8723 = vpop.f32.mrf.mxu0
  %v8724 = vadd.f32 %v8705, %v8723
  %v8725 = vpop.f32.mrf.mxu0
  %v8726 = vadd.f32 %v8707, %v8725
  %8727 = vmatmul.bf16.gmra.mxu0 %v1350
  %v8728 = vpop.f32.mrf.mxu0
  %v8729 = vadd.f32 %v8710, %v8728
  %v8730 = vpop.f32.mrf.mxu0
  %v8731 = vadd.f32 %v8712, %v8730
  %8732 = vdwg.mxu0
  %8733 = vmatpush.bf16.msra.mxu0 %v5139
  %8734 = vmatpush.bf16.msra.mxu0 %v5135
  %8735 = vmatpush.bf16.msra.mxu0 %v5131
  %8736 = vmatpush.bf16.msra.mxu0 %v5127
  %8737 = vmatpush.bf16.msra.mxu0 %v5123
  %8738 = vmatpush.bf16.msra.mxu0 %v5119
  %8739 = vmatpush.bf16.msra.mxu0 %v5115
  %8740 = vmatpush.bf16.msra.mxu0 %v5111
  %8741 = vmatmul.bf16.gmra.mxu0 %v1319
  %v8742 = vpop.f32.mrf.mxu0
  %v8743 = vadd.f32 %v8724, %v8742
  %v8744 = vpop.f32.mrf.mxu0
  %v8745 = vadd.f32 %v8726, %v8744
  %8746 = vmatmul.bf16.gmra.mxu0 %v1351
  %v8747 = vpop.f32.mrf.mxu0
  %v8748 = vadd.f32 %v8729, %v8747
  %v8749 = vpop.f32.mrf.mxu0
  %v8750 = vadd.f32 %v8731, %v8749
  %8751 = vdwg.mxu0
  %8752 = vmatpush.bf16.msra.mxu0 %v5171
  %8753 = vmatpush.bf16.msra.mxu0 %v5167
  %8754 = vmatpush.bf16.msra.mxu0 %v5163
  %8755 = vmatpush.bf16.msra.mxu0 %v5159
  %8756 = vmatpush.bf16.msra.mxu0 %v5155
  %8757 = vmatpush.bf16.msra.mxu0 %v5151
  %8758 = vmatpush.bf16.msra.mxu0 %v5147
  %8759 = vmatpush.bf16.msra.mxu0 %v5143
  %8760 = vmatmul.bf16.gmra.mxu0 %v1320
  %v8761 = vpop.f32.mrf.mxu0
  %v8762 = vadd.f32 %v8743, %v8761
  %v8763 = vpop.f32.mrf.mxu0
  %v8764 = vadd.f32 %v8745, %v8763
  %8765 = vmatmul.bf16.gmra.mxu0 %v1352
  %v8766 = vpop.f32.mrf.mxu0
  %v8767 = vadd.f32 %v8748, %v8766
  %v8768 = vpop.f32.mrf.mxu0
  %v8769 = vadd.f32 %v8750, %v8768
  %8770 = vdwg.mxu0
  %8771 = vmatpush.bf16.msra.mxu0 %v5203
  %8772 = vmatpush.bf16.msra.mxu0 %v5199
  %8773 = vmatpush.bf16.msra.mxu0 %v5195
  %8774 = vmatpush.bf16.msra.mxu0 %v5191
  %8775 = vmatpush.bf16.msra.mxu0 %v5187
  %8776 = vmatpush.bf16.msra.mxu0 %v5183
  %8777 = vmatpush.bf16.msra.mxu0 %v5179
  %8778 = vmatpush.bf16.msra.mxu0 %v5175
  %8779 = vmatmul.bf16.gmra.mxu0 %v1321
  %v8780 = vpop.f32.mrf.mxu0
  %v8781 = vadd.f32 %v8762, %v8780
  %v8782 = vpop.f32.mrf.mxu0
  %v8783 = vadd.f32 %v8764, %v8782
  %8784 = vmatmul.bf16.gmra.mxu0 %v1353
  %v8785 = vpop.f32.mrf.mxu0
  %v8786 = vadd.f32 %v8767, %v8785
  %v8787 = vpop.f32.mrf.mxu0
  %v8788 = vadd.f32 %v8769, %v8787
  %8789 = vdwg.mxu0
  %8790 = vmatpush.bf16.msra.mxu0 %v5235
  %8791 = vmatpush.bf16.msra.mxu0 %v5231
  %8792 = vmatpush.bf16.msra.mxu0 %v5227
  %8793 = vmatpush.bf16.msra.mxu0 %v5223
  %8794 = vmatpush.bf16.msra.mxu0 %v5219
  %8795 = vmatpush.bf16.msra.mxu0 %v5215
  %8796 = vmatpush.bf16.msra.mxu0 %v5211
  %8797 = vmatpush.bf16.msra.mxu0 %v5207
  %8798 = vmatmul.bf16.gmra.mxu0 %v1322
  %v8799 = vpop.f32.mrf.mxu0
  %v8800 = vadd.f32 %v8781, %v8799
  %v8801 = vpop.f32.mrf.mxu0
  %v8802 = vadd.f32 %v8783, %v8801
  %8803 = vmatmul.bf16.gmra.mxu0 %v1354
  %v8804 = vpop.f32.mrf.mxu0
  %v8805 = vadd.f32 %v8786, %v8804
  %v8806 = vpop.f32.mrf.mxu0
  %v8807 = vadd.f32 %v8788, %v8806
  %8808 = vdwg.mxu0
  %8809 = vmatpush.bf16.msra.mxu0 %v5267
  %8810 = vmatpush.bf16.msra.mxu0 %v5263
  %8811 = vmatpush.bf16.msra.mxu0 %v5259
  %8812 = vmatpush.bf16.msra.mxu0 %v5255
  %8813 = vmatpush.bf16.msra.mxu0 %v5251
  %8814 = vmatpush.bf16.msra.mxu0 %v5247
  %8815 = vmatpush.bf16.msra.mxu0 %v5243
  %8816 = vmatpush.bf16.msra.mxu0 %v5239
  %8817 = vmatmul.bf16.gmra.mxu0 %v1323
  %v8818 = vpop.f32.mrf.mxu0
  %v8819 = vadd.f32 %v8800, %v8818
  %v8820 = vpop.f32.mrf.mxu0
  %v8821 = vadd.f32 %v8802, %v8820
  %8822 = vmatmul.bf16.gmra.mxu0 %v1355
  %v8823 = vpop.f32.mrf.mxu0
  %v8824 = vadd.f32 %v8805, %v8823
  %v8825 = vpop.f32.mrf.mxu0
  %v8826 = vadd.f32 %v8807, %v8825
  %8827 = vdwg.mxu0
  %8828 = vmatpush.bf16.msra.mxu0 %v5299
  %8829 = vmatpush.bf16.msra.mxu0 %v5295
  %8830 = vmatpush.bf16.msra.mxu0 %v5291
  %8831 = vmatpush.bf16.msra.mxu0 %v5287
  %8832 = vmatpush.bf16.msra.mxu0 %v5283
  %8833 = vmatpush.bf16.msra.mxu0 %v5279
  %8834 = vmatpush.bf16.msra.mxu0 %v5275
  %8835 = vmatpush.bf16.msra.mxu0 %v5271
  %8836 = vmatmul.bf16.gmra.mxu0 %v1324
  %v8837 = vpop.f32.mrf.mxu0
  %v8838 = vadd.f32 %v8819, %v8837
  %v8839 = vpop.f32.mrf.mxu0
  %v8840 = vadd.f32 %v8821, %v8839
  %8841 = vmatmul.bf16.gmra.mxu0 %v1356
  %v8842 = vpop.f32.mrf.mxu0
  %v8843 = vadd.f32 %v8824, %v8842
  %v8844 = vpop.f32.mrf.mxu0
  %v8845 = vadd.f32 %v8826, %v8844
  %8846 = vdwg.mxu0
  %8847 = vmatpush.bf16.msra.mxu0 %v5331
  %8848 = vmatpush.bf16.msra.mxu0 %v5327
  %8849 = vmatpush.bf16.msra.mxu0 %v5323
  %8850 = vmatpush.bf16.msra.mxu0 %v5319
  %8851 = vmatpush.bf16.msra.mxu0 %v5315
  %8852 = vmatpush.bf16.msra.mxu0 %v5311
  %8853 = vmatpush.bf16.msra.mxu0 %v5307
  %8854 = vmatpush.bf16.msra.mxu0 %v5303
  %8855 = vmatmul.bf16.gmra.mxu0 %v1325
  %v8856 = vpop.f32.mrf.mxu0
  %v8857 = vadd.f32 %v8838, %v8856
  %v8858 = vpop.f32.mrf.mxu0
  %v8859 = vadd.f32 %v8840, %v8858
  %8860 = vmatmul.bf16.gmra.mxu0 %v1357
  %v8861 = vpop.f32.mrf.mxu0
  %v8862 = vadd.f32 %v8843, %v8861
  %v8863 = vpop.f32.mrf.mxu0
  %v8864 = vadd.f32 %v8845, %v8863
  %8865 = vdwg.mxu0
  %8866 = vmatpush.bf16.msra.mxu0 %v5363
  %8867 = vmatpush.bf16.msra.mxu0 %v5359
  %8868 = vmatpush.bf16.msra.mxu0 %v5355
  %8869 = vmatpush.bf16.msra.mxu0 %v5351
  %8870 = vmatpush.bf16.msra.mxu0 %v5347
  %8871 = vmatpush.bf16.msra.mxu0 %v5343
  %8872 = vmatpush.bf16.msra.mxu0 %v5339
  %8873 = vmatpush.bf16.msra.mxu0 %v5335
  %8874 = vmatmul.bf16.gmra.mxu0 %v1326
  %v8875 = vpop.f32.mrf.mxu0
  %v8876 = vadd.f32 %v8857, %v8875
  %v8877 = vpop.f32.mrf.mxu0
  %v8878 = vadd.f32 %v8859, %v8877
  %8879 = vmatmul.bf16.gmra.mxu0 %v1358
  %v8880 = vpop.f32.mrf.mxu0
  %v8881 = vadd.f32 %v8862, %v8880
  %v8882 = vpop.f32.mrf.mxu0
  %v8883 = vadd.f32 %v8864, %v8882
  %8884 = vdwg.mxu0
  %8885 = vmatpush.bf16.msra.mxu0 %v5395
  %8886 = vmatpush.bf16.msra.mxu0 %v5391
  %8887 = vmatpush.bf16.msra.mxu0 %v5387
  %8888 = vmatpush.bf16.msra.mxu0 %v5383
  %8889 = vmatpush.bf16.msra.mxu0 %v5379
  %8890 = vmatpush.bf16.msra.mxu0 %v5375
  %8891 = vmatpush.bf16.msra.mxu0 %v5371
  %8892 = vmatpush.bf16.msra.mxu0 %v5367
  %8893 = vmatmul.bf16.gmra.mxu0 %v1327
  %v8894 = vpop.f32.mrf.mxu0
  %v8895 = vadd.f32 %v8876, %v8894
  %v8896 = vpop.f32.mrf.mxu0
  %v8897 = vadd.f32 %v8878, %v8896
  %8898 = vmatmul.bf16.gmra.mxu0 %v1359
  %v8899 = vpop.f32.mrf.mxu0
  %v8900 = vadd.f32 %v8881, %v8899
  %v8901 = vpop.f32.mrf.mxu0
  %v8902 = vadd.f32 %v8883, %v8901
  %8903 = vdwg.mxu0
  %8904 = vmatpush.bf16.msra.mxu0 %v5427
  %8905 = vmatpush.bf16.msra.mxu0 %v5423
  %8906 = vmatpush.bf16.msra.mxu0 %v5419
  %8907 = vmatpush.bf16.msra.mxu0 %v5415
  %8908 = vmatpush.bf16.msra.mxu0 %v5411
  %8909 = vmatpush.bf16.msra.mxu0 %v5407
  %8910 = vmatpush.bf16.msra.mxu0 %v5403
  %8911 = vmatpush.bf16.msra.mxu0 %v5399
  %8912 = vmatmul.bf16.gmra.mxu0 %v1328
  %v8913 = vpop.f32.mrf.mxu0
  %v8914 = vadd.f32 %v8895, %v8913
  %v8915 = vpop.f32.mrf.mxu0
  %v8916 = vadd.f32 %v8897, %v8915
  %8917 = vmatmul.bf16.gmra.mxu0 %v1360
  %v8918 = vpop.f32.mrf.mxu0
  %v8919 = vadd.f32 %v8900, %v8918
  %v8920 = vpop.f32.mrf.mxu0
  %v8921 = vadd.f32 %v8902, %v8920
  %8922 = vdwg.mxu0
  %8923 = vmatpush.bf16.msra.mxu0 %v5459
  %8924 = vmatpush.bf16.msra.mxu0 %v5455
  %8925 = vmatpush.bf16.msra.mxu0 %v5451
  %8926 = vmatpush.bf16.msra.mxu0 %v5447
  %8927 = vmatpush.bf16.msra.mxu0 %v5443
  %8928 = vmatpush.bf16.msra.mxu0 %v5439
  %8929 = vmatpush.bf16.msra.mxu0 %v5435
  %8930 = vmatpush.bf16.msra.mxu0 %v5431
  %8931 = vmatmul.bf16.gmra.mxu0 %v1329
  %v8932 = vpop.f32.mrf.mxu0
  %v8933 = vadd.f32 %v8914, %v8932
  %v8934 = vpop.f32.mrf.mxu0
  %v8935 = vadd.f32 %v8916, %v8934
  %8936 = vmatmul.bf16.gmra.mxu0 %v1361
  %v8937 = vpop.f32.mrf.mxu0
  %v8938 = vadd.f32 %v8919, %v8937
  %v8939 = vpop.f32.mrf.mxu0
  %v8940 = vadd.f32 %v8921, %v8939
  %8941 = vdwg.mxu0
  %8942 = vmatpush.bf16.msra.mxu0 %v5491
  %8943 = vmatpush.bf16.msra.mxu0 %v5487
  %8944 = vmatpush.bf16.msra.mxu0 %v5483
  %8945 = vmatpush.bf16.msra.mxu0 %v5479
  %8946 = vmatpush.bf16.msra.mxu0 %v5475
  %8947 = vmatpush.bf16.msra.mxu0 %v5471
  %8948 = vmatpush.bf16.msra.mxu0 %v5467
  %8949 = vmatpush.bf16.msra.mxu0 %v5463
  %8950 = vmatmul.bf16.gmra.mxu0 %v1330
  %v8951 = vpop.f32.mrf.mxu0
  %v8952 = vadd.f32 %v8933, %v8951
  %v8953 = vpop.f32.mrf.mxu0
  %v8954 = vadd.f32 %v8935, %v8953
  %8955 = vmatmul.bf16.gmra.mxu0 %v1362
  %v8956 = vpop.f32.mrf.mxu0
  %v8957 = vadd.f32 %v8938, %v8956
  %v8958 = vpop.f32.mrf.mxu0
  %v8959 = vadd.f32 %v8940, %v8958
  %8960 = vdwg.mxu0
  %8961 = vmatpush.bf16.msra.mxu0 %v5523
  %8962 = vmatpush.bf16.msra.mxu0 %v5519
  %8963 = vmatpush.bf16.msra.mxu0 %v5515
  %8964 = vmatpush.bf16.msra.mxu0 %v5511
  %8965 = vmatpush.bf16.msra.mxu0 %v5507
  %8966 = vmatpush.bf16.msra.mxu0 %v5503
  %8967 = vmatpush.bf16.msra.mxu0 %v5499
  %8968 = vmatpush.bf16.msra.mxu0 %v5495
  %8969 = vmatmul.bf16.gmra.mxu0 %v1331
  %v8970 = vpop.f32.mrf.mxu0
  %v8971 = vadd.f32 %v8952, %v8970
  %v8972 = vpop.f32.mrf.mxu0
  %v8973 = vadd.f32 %v8954, %v8972
  %8974 = vmatmul.bf16.gmra.mxu0 %v1363
  %v8975 = vpop.f32.mrf.mxu0
  %v8976 = vadd.f32 %v8957, %v8975
  %v8977 = vpop.f32.mrf.mxu0
  %v8978 = vadd.f32 %v8959, %v8977
  %8979 = vdwg.mxu0
  %v8980 = vadd.f32 %v7147, %v7149
  %v8981 = vadd.f32 %v8980, %v7152
  %v8982 = vadd.f32 %v8981, %v7154
  %v8983 = vrot.slane %v8982, 4
  %v8984 = vadd.f32 %v8982, %v8983
  %v8985 = vrot.slane %v8984, 2
  %v8986 = vadd.f32 %v8984, %v8985
  %v8987 = vrot.slane %v8986, 1
  %v8988 = vadd.f32 %v8986, %v8987
  %v8989 = vadd.f32 %v7755, %v7757
  %v8990 = vadd.f32 %v8989, %v7760
  %v8991 = vadd.f32 %v8990, %v7762
  %v8992 = vrot.slane %v8991, 4
  %v8993 = vadd.f32 %v8991, %v8992
  %v8994 = vrot.slane %v8993, 2
  %v8995 = vadd.f32 %v8993, %v8994
  %v8996 = vrot.slane %v8995, 1
  %v8997 = vadd.f32 %v8995, %v8996
  %v8998 = vadd.f32 %v8363, %v8365
  %v8999 = vadd.f32 %v8998, %v8368
  %v9000 = vadd.f32 %v8999, %v8370
  %v9001 = vrot.slane %v9000, 4
  %v9002 = vadd.f32 %v9000, %v9001
  %v9003 = vrot.slane %v9002, 2
  %v9004 = vadd.f32 %v9002, %v9003
  %v9005 = vrot.slane %v9004, 1
  %v9006 = vadd.f32 %v9004, %v9005
  %v9007 = vadd.f32 %v8971, %v8973
  %v9008 = vadd.f32 %v9007, %v8976
  %v9009 = vadd.f32 %v9008, %v8978
  %v9010 = vrot.slane %v9009, 4
  %v9011 = vadd.f32 %v9009, %v9010
  %v9012 = vrot.slane %v9011, 2
  %v9013 = vadd.f32 %v9011, %v9012
  %v9014 = vrot.slane %v9013, 1
  %v9015 = vadd.f32 %v9013, %v9014
  %v9016 = vrcp.pop 32.0
  %v9017 = vmul.f32 32.0, %v9016
  %v9018 = vsub.f32 1.0, %v9017
  %v9019 = vmul.f32 %v9016, %v9018
  %v9020 = vadd.f32 %v9016, %v9019
  %vm9021 = vweird.f32 %v9016
  %v9022 = vsel %vm9021, %v9016, %v9020
  %v9023 = vmul.f32 %v8988, %v9022
  %v9024 = vmul.f32 %v8997, %v9022
  %v9025 = vmul.f32 %v9006, %v9022
  %v9026 = vmul.f32 %v9015, %v9022
  %v9027 = vmul.f32 %v7147, %v7147
  %v9028 = vmul.f32 %v7755, %v7755
  %v9029 = vmul.f32 %v8363, %v8363
  %v9030 = vmul.f32 %v8971, %v8971
  %v9031 = vmul.f32 %v7149, %v7149
  %v9032 = vmul.f32 %v7757, %v7757
  %v9033 = vmul.f32 %v8365, %v8365
  %v9034 = vmul.f32 %v8973, %v8973
  %v9035 = vmul.f32 %v7152, %v7152
  %v9036 = vmul.f32 %v7760, %v7760
  %v9037 = vmul.f32 %v8368, %v8368
  %v9038 = vmul.f32 %v8976, %v8976
  %v9039 = vmul.f32 %v7154, %v7154
  %v9040 = vmul.f32 %v7762, %v7762
  %v9041 = vmul.f32 %v8370, %v8370
  %v9042 = vmul.f32 %v8978, %v8978
  %v9043 = vadd.f32 %v9027, %v9031
  %v9044 = vadd.f32 %v9043, %v9035
  %v9045 = vadd.f32 %v9044, %v9039
  %v9046 = vrot.slane %v9045, 4
  %v9047 = vadd.f32 %v9045, %v9046
  %v9048 = vrot.slane %v9047, 2
  %v9049 = vadd.f32 %v9047, %v9048
  %v9050 = vrot.slane %v9049, 1
  %v9051 = vadd.f32 %v9049, %v9050
  %v9052 = vadd.f32 %v9028, %v9032
  %v9053 = vadd.f32 %v9052, %v9036
  %v9054 = vadd.f32 %v9053, %v9040
  %v9055 = vrot.slane %v9054, 4
  %v9056 = vadd.f32 %v9054, %v9055
  %v9057 = vrot.slane %v9056, 2
  %v9058 = vadd.f32 %v9056, %v9057
  %v9059 = vrot.slane %v9058, 1
  %v9060 = vadd.f32 %v9058, %v9059
  %v9061 = vadd.f32 %v9029, %v9033
  %v9062 = vadd.f32 %v9061, %v9037
  %v9063 = vadd.f32 %v9062, %v9041
  %v9064 = vrot.slane %v9063, 4
  %v9065 = vadd.f32 %v9063, %v9064
  %v9066 = vrot.slane %v9065, 2
  %v9067 = vadd.f32 %v9065, %v9066
  %v9068 = vrot.slane %v9067, 1
  %v9069 = vadd.f32 %v9067, %v9068
  %v9070 = vadd.f32 %v9030, %v9034
  %v9071 = vadd.f32 %v9070, %v9038
  %v9072 = vadd.f32 %v9071, %v9042
  %v9073 = vrot.slane %v9072, 4
  %v9074 = vadd.f32 %v9072, %v9073
  %v9075 = vrot.slane %v9074, 2
  %v9076 = vadd.f32 %v9074, %v9075
  %v9077 = vrot.slane %v9076, 1
  %v9078 = vadd.f32 %v9076, %v9077
  %v9079 = vmul.f32 %v9051, %v9022
  %v9080 = vmul.f32 %v9060, %v9022
  %v9081 = vmul.f32 %v9069, %v9022
  %v9082 = vmul.f32 %v9078, %v9022
  %v9083 = vmul.f32 %v9023, %v9023
  %v9084 = vmul.f32 %v9024, %v9024
  %v9085 = vmul.f32 %v9025, %v9025
  %v9086 = vmul.f32 %v9026, %v9026
  %v9087 = vsub.f32 %v9079, %v9083
  %v9088 = vsub.f32 %v9080, %v9084
  %v9089 = vsub.f32 %v9081, %v9085
  %v9090 = vsub.f32 %v9082, %v9086
  %v9091 = vmax.f32 %v9087, 0.0
  %v9092 = vmax.f32 %v9088, 0.0
  %v9093 = vmax.f32 %v9089, 0.0
  %v9094 = vmax.f32 %v9090, 0.0
  %v9095 = vsub.f32 %v7147, %v9023
  %v9096 = vsub.f32 %v7755, %v9024
  %v9097 = vsub.f32 %v8363, %v9025
  %v9098 = vsub.f32 %v8971, %v9026
  %v9099 = vsub.f32 %v7149, %v9023
  %v9100 = vsub.f32 %v7757, %v9024
  %v9101 = vsub.f32 %v8365, %v9025
  %v9102 = vsub.f32 %v8973, %v9026
  %v9103 = vsub.f32 %v7152, %v9023
  %v9104 = vsub.f32 %v7760, %v9024
  %v9105 = vsub.f32 %v8368, %v9025
  %v9106 = vsub.f32 %v8976, %v9026
  %v9107 = vsub.f32 %v7154, %v9023
  %v9108 = vsub.f32 %v7762, %v9024
  %v9109 = vsub.f32 %v8370, %v9025
  %v9110 = vsub.f32 %v8978, %v9026
  %v9111 = vadd.f32 %v9091, 1e-05
  %v9112 = vadd.f32 %v9092, 1e-05
  %v9113 = vadd.f32 %v9093, 1e-05
  %v9114 = vadd.f32 %v9094, 1e-05
  %v9115 = vrsqrt.pop %v9111
  %v9116 = vmul.f32 %v9115, %v9111
  %v9117 = vmul.f32 %v9116, %v9115
  %v9118 = vmul.f32 0.5, %v9117
  %v9119 = vsub.f32 1.5, %v9118
  %v9120 = vmul.f32 %v9115, %v9119
  %vm9121 = vweird.f32 %v9111
  %vm9122 = vweird.f32 %v9115
  %vm9123 = vmor %vm9121, %vm9122
  %v9124 = vsel %vm9123, %v9115, %v9120
  %v9125 = vrsqrt.pop %v9112
  %v9126 = vmul.f32 %v9125, %v9112
  %v9127 = vmul.f32 %v9126, %v9125
  %v9128 = vmul.f32 0.5, %v9127
  %v9129 = vsub.f32 1.5, %v9128
  %v9130 = vmul.f32 %v9125, %v9129
  %vm9131 = vweird.f32 %v9112
  %vm9132 = vweird.f32 %v9125
  %vm9133 = vmor %vm9131, %vm9132
  %v9134 = vsel %vm9133, %v9125, %v9130
  %v9135 = vrsqrt.pop %v9113
  %v9136 = vmul.f32 %v9135, %v9113
  %v9137 = vmul.f32 %v9136, %v9135
  %v9138 = vmul.f32 0.5, %v9137
  %v9139 = vsub.f32 1.5, %v9138
  %v9140 = vmul.f32 %v9135, %v9139
  %vm9141 = vweird.f32 %v9113
  %vm9142 = vweird.f32 %v9135
  %vm9143 = vmor %vm9141, %vm9142
  %v9144 = vsel %vm9143, %v9135, %v9140
  %v9145 = vrsqrt.pop %v9114
  %v9146 = vmul.f32 %v9145, %v9114
  %v9147 = vmul.f32 %v9146, %v9145
  %v9148 = vmul.f32 0.5, %v9147
  %v9149 = vsub.f32 1.5, %v9148
  %v9150 = vmul.f32 %v9145, %v9149
  %vm9151 = vweird.f32 %v9114
  %vm9152 = vweird.f32 %v9145
  %vm9153 = vmor %vm9151, %vm9152
  %v9154 = vsel %vm9153, %v9145, %v9150
  %v9155 = vmul.f32 %v9095, %v9124
  %v9156 = vmul.f32 %v9096, %v9134
  %v9157 = vmul.f32 %v9097, %v9144
  %v9158 = vmul.f32 %v9098, %v9154
  %v9159 = vmul.f32 %v9099, %v9124
  %v9160 = vmul.f32 %v9100, %v9134
  %v9161 = vmul.f32 %v9101, %v9144
  %v9162 = vmul.f32 %v9102, %v9154
  %v9163 = vmul.f32 %v9103, %v9124
  %v9164 = vmul.f32 %v9104, %v9134
  %v9165 = vmul.f32 %v9105, %v9144
  %v9166 = vmul.f32 %v9106, %v9154
  %v9167 = vmul.f32 %v9107, %v9124
  %v9168 = vmul.f32 %v9108, %v9134
  %v9169 = vmul.f32 %v9109, %v9144
  %v9170 = vmul.f32 %v9110, %v9154
  %v9171 = vld [vmem:[%s2] sm:$0xf]
  %v9173 = vperm.slane %v9171, 0
  %v9174 = vperm.slane %v9171, 1
  %v9175 = vperm.slane %v9171, 2
  %v9176 = vperm.slane %v9171, 3
  %v9181 = vmul.f32 %v9155, %v9173
  %v9182 = vmul.f32 %v9156, %v9174
  %v9183 = vmul.f32 %v9157, %v9175
  %v9184 = vmul.f32 %v9158, %v9176
  %v9185 = vmul.f32 %v9159, %v9173
  %v9186 = vmul.f32 %v9160, %v9174
  %v9187 = vmul.f32 %v9161, %v9175
  %v9188 = vmul.f32 %v9162, %v9176
  %v9189 = vmul.f32 %v9163, %v9173
  %v9190 = vmul.f32 %v9164, %v9174
  %v9191 = vmul.f32 %v9165, %v9175
  %v9192 = vmul.f32 %v9166, %v9176
  %v9193 = vmul.f32 %v9167, %v9173
  %v9194 = vmul.f32 %v9168, %v9174
  %v9195 = vmul.f32 %v9169, %v9175
  %v9196 = vmul.f32 %v9170, %v9176
  %v9197 = vld [vmem:[%s3] sm:$0xf]
  %v9199 = vperm.slane %v9197, 0
  %v9200 = vperm.slane %v9197, 1
  %v9201 = vperm.slane %v9197, 2
  %v9202 = vperm.slane %v9197, 3
  %v9207 = vadd.f32 %v9181, %v9199
  %v9208 = vadd.f32 %v9182, %v9200
  %v9209 = vadd.f32 %v9183, %v9201
  %v9210 = vadd.f32 %v9184, %v9202
  %v9211 = vadd.f32 %v9185, %v9199
  %v9212 = vadd.f32 %v9186, %v9200
  %v9213 = vadd.f32 %v9187, %v9201
  %v9214 = vadd.f32 %v9188, %v9202
  %v9215 = vadd.f32 %v9189, %v9199
  %v9216 = vadd.f32 %v9190, %v9200
  %v9217 = vadd.f32 %v9191, %v9201
  %v9218 = vadd.f32 %v9192, %v9202
  %v9219 = vadd.f32 %v9193, %v9199
  %v9220 = vadd.f32 %v9194, %v9200
  %v9221 = vadd.f32 %v9195, %v9201
  %v9222 = vadd.f32 %v9196, %v9202
  %v9223 = vmul.f32 %v9207, 0.2
  %v9224 = vmul.f32 %v9208, 0.2
  %v9225 = vmul.f32 %v9209, 0.2
  %v9226 = vmul.f32 %v9210, 0.2
  %v9227 = vmul.f32 %v9211, 0.2
  %v9228 = vmul.f32 %v9212, 0.2
  %v9229 = vmul.f32 %v9213, 0.2
  %v9230 = vmul.f32 %v9214, 0.2
  %v9231 = vmul.f32 %v9215, 0.2
  %v9232 = vmul.f32 %v9216, 0.2
  %v9233 = vmul.f32 %v9217, 0.2
  %v9234 = vmul.f32 %v9218, 0.2
  %v9235 = vmul.f32 %v9219, 0.2
  %v9236 = vmul.f32 %v9220, 0.2
  %v9237 = vmul.f32 %v9221, 0.2
  %v9238 = vmul.f32 %v9222, 0.2
  %v9239 = vmax.f32 %v9207, %v9223
  %v9240 = vmax.f32 %v9208, %v9224
  %v9241 = vmax.f32 %v9209, %v9225
  %v9242 = vmax.f32 %v9210, %v9226
  %v9243 = vmax.f32 %v9211, %v9227
  %v9244 = vmax.f32 %v9212, %v9228
  %v9245 = vmax.f32 %v9213, %v9229
  %v9246 = vmax.f32 %v9214, %v9230
  %v9247 = vmax.f32 %v9215, %v9231
  %v9248 = vmax.f32 %v9216, %v9232
  %v9249 = vmax.f32 %v9217, %v9233
  %v9250 = vmax.f32 %v9218, %v9234
  %v9251 = vmax.f32 %v9219, %v9235
  %v9252 = vmax.f32 %v9220, %v9236
  %v9253 = vmax.f32 %v9221, %v9237
  %v9254 = vmax.f32 %v9222, %v9238
  %v9255 = vld [vmem:[%s4] sm:$0xff]
  %v9256 = vld [vmem:[%s4 + $0x8] sm:$0xff]
  %v9257 = vld [vmem:[%s4 + $0x10] sm:$0xff]
  %v9258 = vld [vmem:[%s4 + $0x18] sm:$0xff]
  %v9259 = vld [vmem:[%s4 + $0x20] sm:$0xff]
  %v9260 = vld [vmem:[%s4 + $0x28] sm:$0xff]
  %v9261 = vld [vmem:[%s4 + $0x30] sm:$0xff]
  %v9262 = vld [vmem:[%s4 + $0x38] sm:$0xff]
  %v9263 = vmul.f32 %v9239, %v9255
  %v9264 = vmul.f32 %v9240, %v9256
  %v9265 = vmul.f32 %v9241, %v9257
  %v9266 = vmul.f32 %v9242, %v9258
  %v9267 = vmul.f32 %v9243, %v9259
  %v9268 = vmul.f32 %v9244, %v9260
  %v9269 = vmul.f32 %v9245, %v9261
  %v9270 = vmul.f32 %v9246, %v9262
  %v9271 = vmul.f32 %v9247, %v9255
  %v9272 = vmul.f32 %v9248, %v9256
  %v9273 = vmul.f32 %v9249, %v9257
  %v9274 = vmul.f32 %v9250, %v9258
  %v9275 = vmul.f32 %v9251, %v9259
  %v9276 = vmul.f32 %v9252, %v9260
  %v9277 = vmul.f32 %v9253, %v9261
  %v9278 = vmul.f32 %v9254, %v9262
  %v9279 = vadd.f32 %v9263, %v9264
  %v9280 = vadd.f32 %v9279, %v9265
  %v9281 = vadd.f32 %v9280, %v9266
  %9282 = vadd.xlane.f32.xlu0 %v9281
  %v9283 = vpop.xlane.xlu0 %9282
  %v9284 = vadd.f32 %v9267, %v9268
  %v9285 = vadd.f32 %v9284, %v9269
  %v9286 = vadd.f32 %v9285, %v9270
  %9287 = vadd.xlane.f32.xlu0 %v9286
  %v9288 = vpop.xlane.xlu0 %9287
  %v9289 = vadd.f32 %v9271, %v9272
  %v9290 = vadd.f32 %v9289, %v9273
  %v9291 = vadd.f32 %v9290, %v9274
  %9292 = vadd.xlane.f32.xlu0 %v9291
  %v9293 = vpop.xlane.xlu0 %9292
  %v9294 = vadd.f32 %v9275, %v9276
  %v9295 = vadd.f32 %v9294, %v9277
  %v9296 = vadd.f32 %v9295, %v9278
  %9297 = vadd.xlane.f32.xlu0 %v9296
  %v9298 = vpop.xlane.xlu0 %9297
  %v9303 = vlaneseq
  %v9304 = vand.u32 %v9303, 127
  %v9305 = vperm.slane %v9283, %v9304
  %v9306 = vadd.s32 %v9304, 4294967288
  %v9307 = vperm.slane %v9288, %v9306
  %vm9308 = vcmask 130112
  %v9309 = vsel %vm9308, %v9307, %v9305
  %v9310 = vperm.slane %v9293, %v9304
  %v9311 = vperm.slane %v9298, %v9306
  %v9312 = vsel %vm9308, %v9311, %v9310
  %vm9313 = vcmask 1041409
  %v9314 = vsel %vm9313, %v9312, %v9309
  %vm9316 = vcmask 123904
  %v9317 = vsel %vm9316, %v9314, 0.0
  %9318 = vadd.xlane.f32.xlu0 %v9317
  %v9319 = vpop.xlane.xlu0 %9318
  %v9320 = vxor.u32 %v9319, 2147483648
  %v9321 = vmul.f32 %v9320, 1.442695
  %v9322 = vpow.pop %v9321
  %v9323 = vadd.f32 %v9322, 1.0
  %v9324 = vrcp.pop %v9323
  %v9325 = vmul.f32 %v9323, %v9324
  %v9326 = vsub.f32 1.0, %v9325
  %v9327 = vmul.f32 %v9324, %v9326
  %v9328 = vadd.f32 %v9324, %v9327
  %vm9329 = vweird.f32 %v9323
  %vm9330 = vweird.f32 %v9324
  %vm9331 = vmor %vm9329, %vm9330
  %v9332 = vsel %vm9331, %v9324, %v9328
  %v9333 = vand.u32 2147483647, %v9323
  %vm9334 = vcmp.eq.f32.partialorder %v9333, 8.507059e+37
  %v9335 = vand.u32 %v9323, 2147483648
  %v9336 = vor.u32 1.1754944e-38, %v9335
  %v9337 = vsel %vm9334, %v9336, %v9332
  %v9338 = vmul.f32 1.0, %v9337
  %vm9339 = vcmask 1024
  %9340 = vst.msk [vmem:[%s5] sm:$0x3] %vm9339, %v9338
  // Predicated region
  $region22: #{cdcgan_discriminator_forward.5} parent=0 // pred_check
    _
  $region23: #{cdcgan_discriminator_forward.5} parent=0 // pred_check_branch
    %9342 = sbr.rel (0) target = $region25
  $region24: #{cdcgan_discriminator_forward.5} parent=0 // pred_region
    _
  $region25: #{cdcgan_discriminator_forward.5} parent=0 // pred_fallthru
    _
  // Predicated region
  $region26: #{cdcgan_discriminator_forward.5} parent=0 // pred_check
    _
  $region27: #{cdcgan_discriminator_forward.5} parent=0 // pred_check_branch
    %9344 = sbr.rel (0) target = $region29
  $region28: #{cdcgan_discriminator_forward.5} parent=0 // pred_region
    _
  $region29: #{cdcgan_discriminator_forward.5} parent=0 // pred_fallthru
    _

</llo_original>
